<compile_context>
chip_gen: v7x
topology: tpu7x:2x2x1
jax: 0.10.0
libtpu: 0.0.40
codegen_flags: <defaults>
</compile_context>

<pallas_src>
import functools
import math

import jax
import jax.numpy as jnp
from jax.experimental import pallas as pl
from jax.experimental.pallas import tpu as pltpu

LEAKY_SLOPE = 0.2
BN_EPS = 1e-5
CP = 128                      # lane-padded channel count (all layer widths <= 128)
MATMUL_DTYPE = jnp.bfloat16   # MXU operand dtype; jnp.float32 for exact f32 parity
_PAD = 8                      # sublane-aligned zero-halo rows in the scratch buffer


def _lrelu(y):
    return jnp.maximum(y, LEAKY_SLOPE * y)   # == LeakyReLU(0.2) for slope < 1


def _relu(y):
    return jnp.maximum(y, 0.0)


# ------------------------------ in-kernel convs -------------------------------

def _stage_padded(pad_buf, x):
    """Scratch layout: rows [0:_PAD)=0 | [_PAD:_PAD+T)=x | [_PAD+T:_PAD+T+_PAD)=0.

    All bulk stores are sublane-aligned (T is a multiple of 8 at every stage).
    """
    T, C = x.shape
    zeros8 = jnp.zeros((_PAD, C), jnp.float32)
    pad_buf[0:_PAD, :] = zeros8
    pad_buf[_PAD + T:_PAD + T + _PAD, :] = zeros8
    pad_buf[_PAD:_PAD + T, :] = x
    return T


def _conv3_bn(x, i, w_ref, s_ref, b_ref, pad_buf):
    """Conv1d(k=3,s=1,p=1) + folded-BN affine.  x:(T,CP) f32 -> (T,CP) f32."""
    T = _stage_padded(pad_buf, x)
    acc = None
    for k in range(3):                               # tap k: padded rows (_PAD-1+k)+t
        tap = pad_buf[pl.ds(_PAD - 1 + k, T), :].astype(MATMUL_DTYPE)
        y = jnp.dot(tap, w_ref[i, k], preferred_element_type=jnp.float32)
        acc = y if acc is None else acc + y
    return acc * s_ref[i] + b_ref[i]


def _conv4_s2_bn(x, i, w_ref, s_ref, b_ref, pad_buf):
    """Conv1d(k=4,s=2,p=1) + folded affine.  x:(T,CP) f32 -> (T//2,CP) f32."""
    T = _stage_padded(pad_buf, x)
    To = T // 2
    acc = None
    for k in range(4):                               # tap k: padded rows (_PAD-1+k)+2j
        tap = pad_buf[pl.ds(_PAD - 1 + k, To, stride=2), :].astype(MATMUL_DTYPE)
        y = jnp.dot(tap, w_ref[i, k], preferred_element_type=jnp.float32)
        acc = y if acc is None else acc + y
    return acc * s_ref[i] + b_ref[i]


# --------------------------------- fused kernel --------------------------------

def _audio_encoder_kernel(x_ref, w3_ref, s3_ref, b3_ref, w4_ref, s4_ref, b4_ref,
                          o_ref, pad_buf, *, num_residual_layers):
    idx = {"c3": 0, "c4": 0}

    def cnr3(h, act, res=None):
        i = idx["c3"]
        idx["c3"] += 1
        y = _conv3_bn(h, i, w3_ref, s3_ref, b3_ref, pad_buf)
        if res is not None:
            y = y + res
        return act(y)

    def res_stack(h):
        h0 = h
        for _ in range(num_residual_layers):
            h = cnr3(h, _lrelu, res=h)               # lrelu(BN(conv(h)) + h)
        return cnr3(h, _relu, res=h0)                # relu(BN(conv(h)) + stack input)

    def down(h):
        i = idx["c4"]
        idx["c4"] += 2
        y = _conv4_s2_bn(h, i, w4_ref, s4_ref, b4_ref, pad_buf)       # BN-folded main
        r = _conv4_s2_bn(h, i + 1, w4_ref, s4_ref, b4_ref, pad_buf)   # proj (bias only)
        return _lrelu(y + r)

    h = x_ref[0]                                     # (T, CP) float32
    h = cnr3(h, _lrelu)                              # project
    h = res_stack(h)                                 # _enc_1
    h = down(h)                                      # _down_1
    h = res_stack(h)                                 # _enc_2
    h = down(h)                                      # _down_2
    h = res_stack(h)                                 # _enc_3
    o_ref[0] = h.astype(o_ref.dtype)                 # lane-dense (T//4, 128) store


# ------------------------------- host-side wrapper ------------------------------

def audio_encoder_forward(x_nct, packed, *, num_hiddens, num_residual_layers):
    """x_nct: (B, C_in, T) PyTorch Conv1d layout -> (B, num_hiddens, T // 4)."""
    B, c_in, T = x_nct.shape
    assert T % 8 == 0, "T must be a multiple of 8 (two stride-2 stages + tiling)"
    assert c_in <= CP and num_hiddens <= CP
    To = T // 4
    w3, s3, b3 = packed["w3"], packed["s3"], packed["b3"]
    w4, s4, b4 = packed["w4"], packed["s4"], packed["b4"]
    n3, n4 = w3.shape[0], w4.shape[0]
    assert n3 == 3 * (num_residual_layers + 1) + 1 and n4 == 4

    # channels-last + one-time lane padding to CP (done once at entry)
    x = jnp.transpose(x_nct, (0, 2, 1)).astype(jnp.float32)
    x = jnp.pad(x, ((0, 0), (0, 0), (0, CP - c_in)))

    kernel = functools.partial(_audio_encoder_kernel,
                               num_residual_layers=num_residual_layers)
    out = pl.pallas_call(
        kernel,
        out_shape=jax.ShapeDtypeStruct((B, To, CP), jnp.float32),
        grid_spec=pltpu.PrefetchScalarGridSpec(
            num_scalar_prefetch=0,
            grid=(B,),
            in_specs=[
                pl.BlockSpec((1, T, CP), lambda b: (b, 0, 0)),
                pl.BlockSpec((n3, 3, CP, CP), lambda b: (0, 0, 0, 0)),
                pl.BlockSpec((n3, 1, CP), lambda b: (0, 0, 0)),
                pl.BlockSpec((n3, 1, CP), lambda b: (0, 0, 0)),
                pl.BlockSpec((n4, 4, CP, CP), lambda b: (0, 0, 0, 0)),
                pl.BlockSpec((n4, 1, CP), lambda b: (0, 0, 0)),
                pl.BlockSpec((n4, 1, CP), lambda b: (0, 0, 0)),
            ],
            out_specs=pl.BlockSpec((1, To, CP), lambda b: (b, 0, 0)),
            scratch_shapes=[pltpu.VMEM((T + 2 * _PAD, CP), jnp.float32)],
        ),
        compiler_params=pltpu.CompilerParams(
            dimension_semantics=("parallel",),
        ),
    )(x, w3, s3, b3, w4, s4, b4)

    # crop padded lanes, back to PyTorch (B, C, T//4) layout
    return jnp.transpose(out[:, :, :num_hiddens], (0, 2, 1))


# ------------------------------- parameter packing ------------------------------

def _fold_bn_affine(p):
    scale = p["gamma"] / jnp.sqrt(p["var"] + BN_EPS)
    shift = p["beta"] + scale * (p["bias"] - p["mean"])
    return scale, shift


def _pad_w(w):                       # (k, ci, co) -> (k, CP, CP), zero-padded
    k, ci, co = w.shape
    return jnp.pad(w, ((0, 0), (0, CP - ci), (0, CP - co)))


def _pad_row(v):                     # (co,) -> (1, CP), padded lanes = 0
    return jnp.pad(v, (0, CP - v.shape[0])).reshape(1, CP)


def pack_audio_encoder_params(params, num_residual_layers):
    """Fold BN (eval stats), zero-pad channels to CP, stack per conv kind."""
    w3, s3, b3, w4, s4, b4 = [], [], [], [], [], []

    def add3(p):
        sc, sh = _fold_bn_affine(p)
        w3.append(_pad_w(p["w"])); s3.append(_pad_row(sc)); b3.append(_pad_row(sh))

    def add4_bn(p):
        sc, sh = _fold_bn_affine(p)
        w4.append(_pad_w(p["w"])); s4.append(_pad_row(sc)); b4.append(_pad_row(sh))

    def add4_plain(p):               # residual projection: Conv1d + bias, no norm
        co = p["bias"].shape[0]
        w4.append(_pad_w(p["w"]))
        s4.append(_pad_row(jnp.ones((co,), jnp.float32)))
        b4.append(_pad_row(p["bias"]))

    def add_stack(sp):
        for lp in sp["layers"]:
            add3(lp)
        add3(sp["final"])

    add3(params["project"])
    add_stack(params["enc_1"])
    add4_bn(params["down_1"]["main"]); add4_plain(params["down_1"]["res"])
    add_stack(params["enc_2"])
    add4_bn(params["down_2"]["main"]); add4_plain(params["down_2"]["res"])
    add_stack(params["enc_3"])

    assert len(w3) == 3 * (num_residual_layers + 1) + 1 and len(w4) == 4
    return {
        "w3": jnp.stack(w3).astype(MATMUL_DTYPE),
        "s3": jnp.stack(s3).astype(jnp.float32),
        "b3": jnp.stack(b3).astype(jnp.float32),
        "w4": jnp.stack(w4).astype(MATMUL_DTYPE),
        "s4": jnp.stack(s4).astype(jnp.float32),
        "b4": jnp.stack(b4).astype(jnp.float32),
    }


# ------------------------------- deterministic init -----------------------------

def _init_cnr(key, ci, co, k):
    kw, kb, kg, kbt, km, kv = jax.random.split(key, 6)
    return {
        "w": jax.random.normal(kw, (k, ci, co), jnp.float32) / math.sqrt(ci * k),
        "bias": 0.05 * jax.random.normal(kb, (co,), jnp.float32),
        "gamma": 1.0 + 0.1 * jax.random.normal(kg, (co,), jnp.float32),
        "beta": 0.1 * jax.random.normal(kbt, (co,), jnp.float32),
        "mean": 0.1 * jax.random.normal(km, (co,), jnp.float32),
        "var": 1.0 + 0.1 * jax.random.uniform(kv, (co,), jnp.float32),
    }


def _init_conv(key, ci, co, k):
    kw, kb = jax.random.split(key)
    return {
        "w": jax.random.normal(kw, (k, ci, co), jnp.float32) / math.sqrt(ci * k),
        "bias": 0.05 * jax.random.normal(kb, (co,), jnp.float32),
    }


def init_audio_encoder_params(key, in_dim, num_hiddens, num_residual_layers):
    h4, h2, h = num_hiddens // 4, num_hiddens // 2, num_hiddens
    ki = iter(jax.random.split(key, 32))

    def stack(ch):
        return {
            "layers": [_init_cnr(next(ki), ch, ch, 3)
                       for _ in range(num_residual_layers)],
            "final": _init_cnr(next(ki), ch, ch, 3),
        }

    return {
        "project": _init_cnr(next(ki), in_dim, h4, 3),
        "enc_1": stack(h4),
        "down_1": {"main": _init_cnr(next(ki), h4, h2, 4),
                   "res": _init_conv(next(ki), h4, h2, 4)},
        "enc_2": stack(h2),
        "down_2": {"main": _init_cnr(next(ki), h2, h, 4),
                   "res": _init_conv(next(ki), h2, h, 4)},
        "enc_3": stack(h),
    }


if __name__ == "__main__":
    key = jax.random.PRNGKey(0)
    k_param, k_x = jax.random.split(key)

    B, in_dim, T = 2, 16, 32
    num_hiddens, num_residual_layers, num_residual_hiddens = 64, 2, 32
    # NOTE: num_residual_hiddens is accepted by AudioEncoder.__init__ but is not
    # used on its forward path (Res_CNR_Stack only needs channel count + depth).

    params = init_audio_encoder_params(k_param, in_dim, num_hiddens,
                                       num_residual_layers)
    packed = pack_audio_encoder_params(params, num_residual_layers)
    x = jax.random.normal(k_x, (B, in_dim, T), jnp.float32)   # PyTorch (B, C, T)

    fwd = jax.jit(functools.partial(audio_encoder_forward,
                                    num_hiddens=num_hiddens,
                                    num_residual_layers=num_residual_layers))
    out = jax.block_until_ready(fwd(x, packed))

    assert out.shape == (B, num_hiddens, T // 4), out.shape
    assert bool(jnp.all(jnp.isfinite(out)))
    print("KERNEL_OK")
</pallas_src>

<mosaic_0001>
module attributes {stable_mosaic.version = 11 : i64} {
  func.func @_audio_encoder_kernel(%arg0: i32, %arg1: memref<1x32x128xf32, #tpu.memory_space<vmem>>, %arg2: memref<10x3x128x128xbf16, #tpu.memory_space<vmem>>, %arg3: memref<10x1x128xf32, #tpu.memory_space<vmem>>, %arg4: memref<10x1x128xf32, #tpu.memory_space<vmem>>, %arg5: memref<4x4x128x128xbf16, #tpu.memory_space<vmem>>, %arg6: memref<4x1x128xf32, #tpu.memory_space<vmem>>, %arg7: memref<4x1x128xf32, #tpu.memory_space<vmem>>, %arg8: memref<1x8x128xf32, #tpu.memory_space<vmem>>, %arg9: memref<48x128xf32, #tpu.memory_space<vmem>>) attributes {dimension_semantics = [#tpu.dimension_semantics<parallel>], iteration_bounds = array<i64: 2>, scalar_prefetch = 0 : i64, scratch_operands = 1 : i64, tpu.core_type = #tpu.core_type<tc>, window_params = [{transform_indices = @transform_0, window_bounds = array<i64: 1, 32, 128>}, {pipeline_mode = #tpu.pipeline_mode<synchronous>, transform_indices = @transform_1, window_bounds = array<i64: 10, 3, 128, 128>}, {pipeline_mode = #tpu.pipeline_mode<synchronous>, transform_indices = @transform_2, window_bounds = array<i64: 10, 1, 128>}, {pipeline_mode = #tpu.pipeline_mode<synchronous>, transform_indices = @transform_3, window_bounds = array<i64: 10, 1, 128>}, {pipeline_mode = #tpu.pipeline_mode<synchronous>, transform_indices = @transform_4, window_bounds = array<i64: 4, 4, 128, 128>}, {pipeline_mode = #tpu.pipeline_mode<synchronous>, transform_indices = @transform_5, window_bounds = array<i64: 4, 1, 128>}, {pipeline_mode = #tpu.pipeline_mode<synchronous>, transform_indices = @transform_6, window_bounds = array<i64: 4, 1, 128>}, {transform_indices = @transform_7, window_bounds = array<i64: 1, 8, 128>}]} {
    %c0 = arith.constant 0 : index
    %c0_0 = arith.constant 0 : index
    %c0_1 = arith.constant 0 : index
    %0 = vector.load %arg1[%c0, %c0_0, %c0_1] : memref<1x32x128xf32, #tpu.memory_space<vmem>>, vector<1x32x128xf32>
    %1 = vector.shape_cast %0 : vector<1x32x128xf32> to vector<32x128xf32>
    %cst = arith.constant 0.000000e+00 : f32
    %2 = vector.broadcast %cst : f32 to vector<8x128xf32>
    %c0_2 = arith.constant 0 : index
    %c0_3 = arith.constant 0 : index
    %3 = vector.load %arg9[%c0_2, %c0_3] : memref<48x128xf32, #tpu.memory_space<vmem>>, vector<8x128xf32>
    tpu.vector_store %arg9[%c0_2, %c0_3], %2 {strides = array<i32>} : memref<48x128xf32, #tpu.memory_space<vmem>>, vector<8x128xf32>,
    %c40 = arith.constant 40 : index
    %c0_4 = arith.constant 0 : index
    %4 = vector.load %arg9[%c40, %c0_4] : memref<48x128xf32, #tpu.memory_space<vmem>>, vector<8x128xf32>
    tpu.vector_store %arg9[%c40, %c0_4], %2 {strides = array<i32>} : memref<48x128xf32, #tpu.memory_space<vmem>>, vector<8x128xf32>,
    %c8 = arith.constant 8 : index
    %c0_5 = arith.constant 0 : index
    %5 = vector.load %arg9[%c8, %c0_5] : memref<48x128xf32, #tpu.memory_space<vmem>>, vector<32x128xf32>
    tpu.vector_store %arg9[%c8, %c0_5], %1 {strides = array<i32>} : memref<48x128xf32, #tpu.memory_space<vmem>>, vector<32x128xf32>,
    %c7 = arith.constant 7 : index
    %c0_6 = arith.constant 0 : index
    %6 = vector.load %arg9[%c7, %c0_6] : memref<48x128xf32, #tpu.memory_space<vmem>>, vector<32x128xf32>
    %7 = arith.truncf %6 : vector<32x128xf32> to vector<32x128xbf16>
    %c0_7 = arith.constant 0 : index
    %c0_8 = arith.constant 0 : index
    %c0_9 = arith.constant 0 : index
    %c0_10 = arith.constant 0 : index
    %8 = vector.load %arg2[%c0_7, %c0_8, %c0_9, %c0_10] : memref<10x3x128x128xbf16, #tpu.memory_space<vmem>>, vector<1x1x128x128xbf16>
    %9 = vector.shape_cast %8 : vector<1x1x128x128xbf16> to vector<128x128xbf16>
    %cst_11 = arith.constant dense<0.000000e+00> : vector<32x128xf32>
    %10 = tpu.matmul %7, %9, %cst_11 {dimension_numbers = #tpu.dot_dimension_numbers<[1], [0], [0], [1], [0, 0, 1, 1], [], []>} : vector<32x128xbf16>, vector<128x128xbf16>, vector<32x128xf32> -> vector<32x128xf32>
    %c8_12 = arith.constant 8 : index
    %c0_13 = arith.constant 0 : index
    %11 = vector.load %arg9[%c8_12, %c0_13] : memref<48x128xf32, #tpu.memory_space<vmem>>, vector<32x128xf32>
    %12 = arith.truncf %11 : vector<32x128xf32> to vector<32x128xbf16>
    %c0_14 = arith.constant 0 : index
    %c1 = arith.constant 1 : index
    %c0_15 = arith.constant 0 : index
    %c0_16 = arith.constant 0 : index
    %13 = vector.load %arg2[%c0_14, %c1, %c0_15, %c0_16] : memref<10x3x128x128xbf16, #tpu.memory_space<vmem>>, vector<1x1x128x128xbf16>
    %14 = vector.shape_cast %13 : vector<1x1x128x128xbf16> to vector<128x128xbf16>
    %cst_17 = arith.constant dense<0.000000e+00> : vector<32x128xf32>
    %15 = tpu.matmul %12, %14, %cst_17 {dimension_numbers = #tpu.dot_dimension_numbers<[1], [0], [0], [1], [0, 0, 1, 1], [], []>} : vector<32x128xbf16>, vector<128x128xbf16>, vector<32x128xf32> -> vector<32x128xf32>
    %16 = arith.addf %10, %15 : vector<32x128xf32>
    %c9 = arith.constant 9 : index
    %c0_18 = arith.constant 0 : index
    %17 = vector.load %arg9[%c9, %c0_18] : memref<48x128xf32, #tpu.memory_space<vmem>>, vector<32x128xf32>
    %18 = arith.truncf %17 : vector<32x128xf32> to vector<32x128xbf16>
    %c0_19 = arith.constant 0 : index
    %c2 = arith.constant 2 : index
    %c0_20 = arith.constant 0 : index
    %c0_21 = arith.constant 0 : index
    %19 = vector.load %arg2[%c0_19, %c2, %c0_20, %c0_21] : memref<10x3x128x128xbf16, #tpu.memory_space<vmem>>, vector<1x1x128x128xbf16>
    %20 = vector.shape_cast %19 : vector<1x1x128x128xbf16> to vector<128x128xbf16>
    %cst_22 = arith.constant dense<0.000000e+00> : vector<32x128xf32>
    %21 = tpu.matmul %18, %20, %cst_22 {dimension_numbers = #tpu.dot_dimension_numbers<[1], [0], [0], [1], [0, 0, 1, 1], [], []>} : vector<32x128xbf16>, vector<128x128xbf16>, vector<32x128xf32> -> vector<32x128xf32>
    %22 = arith.addf %16, %21 : vector<32x128xf32>
    %c0_23 = arith.constant 0 : index
    %c0_24 = arith.constant 0 : index
    %c0_25 = arith.constant 0 : index
    %23 = vector.load %arg3[%c0_23, %c0_24, %c0_25] : memref<10x1x128xf32, #tpu.memory_space<vmem>>, vector<1x1x128xf32>
    %24 = vector.shape_cast %23 : vector<1x1x128xf32> to vector<1x128xf32>
    %25 = vector.broadcast %24 : vector<1x128xf32> to vector<32x128xf32>
    %26 = arith.mulf %22, %25 : vector<32x128xf32>
    %c0_26 = arith.constant 0 : index
    %c0_27 = arith.constant 0 : index
    %c0_28 = arith.constant 0 : index
    %27 = vector.load %arg4[%c0_26, %c0_27, %c0_28] : memref<10x1x128xf32, #tpu.memory_space<vmem>>, vector<1x1x128xf32>
    %28 = vector.shape_cast %27 : vector<1x1x128xf32> to vector<1x128xf32>
    %29 = vector.broadcast %28 : vector<1x128xf32> to vector<32x128xf32>
    %30 = arith.addf %26, %29 : vector<32x128xf32>
    %cst_29 = arith.constant 2.000000e-01 : f32
    %31 = vector.broadcast %cst_29 : f32 to vector<32x128xf32>
    %32 = arith.mulf %31, %30 : vector<32x128xf32>
    %33 = arith.maximumf %30, %32 : vector<32x128xf32>
    %cst_30 = arith.constant 0.000000e+00 : f32
    %34 = vector.broadcast %cst_30 : f32 to vector<8x128xf32>
    %c0_31 = arith.constant 0 : index
    %c0_32 = arith.constant 0 : index
    %35 = vector.load %arg9[%c0_31, %c0_32] : memref<48x128xf32, #tpu.memory_space<vmem>>, vector<8x128xf32>
    tpu.vector_store %arg9[%c0_31, %c0_32], %34 {strides = array<i32>} : memref<48x128xf32, #tpu.memory_space<vmem>>, vector<8x128xf32>,
    %c40_33 = arith.constant 40 : index
    %c0_34 = arith.constant 0 : index
    %36 = vector.load %arg9[%c40_33, %c0_34] : memref<48x128xf32, #tpu.memory_space<vmem>>, vector<8x128xf32>
    tpu.vector_store %arg9[%c40_33, %c0_34], %34 {strides = array<i32>} : memref<48x128xf32, #tpu.memory_space<vmem>>, vector<8x128xf32>,
    %c8_35 = arith.constant 8 : index
    %c0_36 = arith.constant 0 : index
    %37 = vector.load %arg9[%c8_35, %c0_36] : memref<48x128xf32, #tpu.memory_space<vmem>>, vector<32x128xf32>
    tpu.vector_store %arg9[%c8_35, %c0_36], %33 {strides = array<i32>} : memref<48x128xf32, #tpu.memory_space<vmem>>, vector<32x128xf32>,
    %c7_37 = arith.constant 7 : index
    %c0_38 = arith.constant 0 : index
    %38 = vector.load %arg9[%c7_37, %c0_38] : memref<48x128xf32, #tpu.memory_space<vmem>>, vector<32x128xf32>
    %39 = arith.truncf %38 : vector<32x128xf32> to vector<32x128xbf16>
    %c1_39 = arith.constant 1 : index
    %c0_40 = arith.constant 0 : index
    %c0_41 = arith.constant 0 : index
    %c0_42 = arith.constant 0 : index
    %40 = vector.load %arg2[%c1_39, %c0_40, %c0_41, %c0_42] : memref<10x3x128x128xbf16, #tpu.memory_space<vmem>>, vector<1x1x128x128xbf16>
    %41 = vector.shape_cast %40 : vector<1x1x128x128xbf16> to vector<128x128xbf16>
    %cst_43 = arith.constant dense<0.000000e+00> : vector<32x128xf32>
    %42 = tpu.matmul %39, %41, %cst_43 {dimension_numbers = #tpu.dot_dimension_numbers<[1], [0], [0], [1], [0, 0, 1, 1], [], []>} : vector<32x128xbf16>, vector<128x128xbf16>, vector<32x128xf32> -> vector<32x128xf32>
    %c8_44 = arith.constant 8 : index
    %c0_45 = arith.constant 0 : index
    %43 = vector.load %arg9[%c8_44, %c0_45] : memref<48x128xf32, #tpu.memory_space<vmem>>, vector<32x128xf32>
    %44 = arith.truncf %43 : vector<32x128xf32> to vector<32x128xbf16>
    %c1_46 = arith.constant 1 : index
    %c1_47 = arith.constant 1 : index
    %c0_48 = arith.constant 0 : index
    %c0_49 = arith.constant 0 : index
    %45 = vector.load %arg2[%c1_46, %c1_47, %c0_48, %c0_49] : memref<10x3x128x128xbf16, #tpu.memory_space<vmem>>, vector<1x1x128x128xbf16>
    %46 = vector.shape_cast %45 : vector<1x1x128x128xbf16> to vector<128x128xbf16>
    %cst_50 = arith.constant dense<0.000000e+00> : vector<32x128xf32>
    %47 = tpu.matmul %44, %46, %cst_50 {dimension_numbers = #tpu.dot_dimension_numbers<[1], [0], [0], [1], [0, 0, 1, 1], [], []>} : vector<32x128xbf16>, vector<128x128xbf16>, vector<32x128xf32> -> vector<32x128xf32>
    %48 = arith.addf %42, %47 : vector<32x128xf32>
    %c9_51 = arith.constant 9 : index
    %c0_52 = arith.constant 0 : index
    %49 = vector.load %arg9[%c9_51, %c0_52] : memref<48x128xf32, #tpu.memory_space<vmem>>, vector<32x128xf32>
    %50 = arith.truncf %49 : vector<32x128xf32> to vector<32x128xbf16>
    %c1_53 = arith.constant 1 : index
    %c2_54 = arith.constant 2 : index
    %c0_55 = arith.constant 0 : index
    %c0_56 = arith.constant 0 : index
    %51 = vector.load %arg2[%c1_53, %c2_54, %c0_55, %c0_56] : memref<10x3x128x128xbf16, #tpu.memory_space<vmem>>, vector<1x1x128x128xbf16>
    %52 = vector.shape_cast %51 : vector<1x1x128x128xbf16> to vector<128x128xbf16>
    %cst_57 = arith.constant dense<0.000000e+00> : vector<32x128xf32>
    %53 = tpu.matmul %50, %52, %cst_57 {dimension_numbers = #tpu.dot_dimension_numbers<[1], [0], [0], [1], [0, 0, 1, 1], [], []>} : vector<32x128xbf16>, vector<128x128xbf16>, vector<32x128xf32> -> vector<32x128xf32>
    %54 = arith.addf %48, %53 : vector<32x128xf32>
    %c1_58 = arith.constant 1 : index
    %c0_59 = arith.constant 0 : index
    %c0_60 = arith.constant 0 : index
    %55 = vector.load %arg3[%c1_58, %c0_59, %c0_60] : memref<10x1x128xf32, #tpu.memory_space<vmem>>, vector<1x1x128xf32>
    %56 = vector.shape_cast %55 : vector<1x1x128xf32> to vector<1x128xf32>
    %57 = vector.broadcast %56 : vector<1x128xf32> to vector<32x128xf32>
    %58 = arith.mulf %54, %57 : vector<32x128xf32>
    %c1_61 = arith.constant 1 : index
    %c0_62 = arith.constant 0 : index
    %c0_63 = arith.constant 0 : index
    %59 = vector.load %arg4[%c1_61, %c0_62, %c0_63] : memref<10x1x128xf32, #tpu.memory_space<vmem>>, vector<1x1x128xf32>
    %60 = vector.shape_cast %59 : vector<1x1x128xf32> to vector<1x128xf32>
    %61 = vector.broadcast %60 : vector<1x128xf32> to vector<32x128xf32>
    %62 = arith.addf %58, %61 : vector<32x128xf32>
    %63 = arith.addf %62, %33 : vector<32x128xf32>
    %cst_64 = arith.constant 2.000000e-01 : f32
    %64 = vector.broadcast %cst_64 : f32 to vector<32x128xf32>
    %65 = arith.mulf %64, %63 : vector<32x128xf32>
    %66 = arith.maximumf %63, %65 : vector<32x128xf32>
    %cst_65 = arith.constant 0.000000e+00 : f32
    %67 = vector.broadcast %cst_65 : f32 to vector<8x128xf32>
    %c0_66 = arith.constant 0 : index
    %c0_67 = arith.constant 0 : index
    %68 = vector.load %arg9[%c0_66, %c0_67] : memref<48x128xf32, #tpu.memory_space<vmem>>, vector<8x128xf32>
    tpu.vector_store %arg9[%c0_66, %c0_67], %67 {strides = array<i32>} : memref<48x128xf32, #tpu.memory_space<vmem>>, vector<8x128xf32>,
    %c40_68 = arith.constant 40 : index
    %c0_69 = arith.constant 0 : index
    %69 = vector.load %arg9[%c40_68, %c0_69] : memref<48x128xf32, #tpu.memory_space<vmem>>, vector<8x128xf32>
    tpu.vector_store %arg9[%c40_68, %c0_69], %67 {strides = array<i32>} : memref<48x128xf32, #tpu.memory_space<vmem>>, vector<8x128xf32>,
    %c8_70 = arith.constant 8 : index
    %c0_71 = arith.constant 0 : index
    %70 = vector.load %arg9[%c8_70, %c0_71] : memref<48x128xf32, #tpu.memory_space<vmem>>, vector<32x128xf32>
    tpu.vector_store %arg9[%c8_70, %c0_71], %66 {strides = array<i32>} : memref<48x128xf32, #tpu.memory_space<vmem>>, vector<32x128xf32>,
    %c7_72 = arith.constant 7 : index
    %c0_73 = arith.constant 0 : index
    %71 = vector.load %arg9[%c7_72, %c0_73] : memref<48x128xf32, #tpu.memory_space<vmem>>, vector<32x128xf32>
    %72 = arith.truncf %71 : vector<32x128xf32> to vector<32x128xbf16>
    %c2_74 = arith.constant 2 : index
    %c0_75 = arith.constant 0 : index
    %c0_76 = arith.constant 0 : index
    %c0_77 = arith.constant 0 : index
    %73 = vector.load %arg2[%c2_74, %c0_75, %c0_76, %c0_77] : memref<10x3x128x128xbf16, #tpu.memory_space<vmem>>, vector<1x1x128x128xbf16>
    %74 = vector.shape_cast %73 : vector<1x1x128x128xbf16> to vector<128x128xbf16>
    %cst_78 = arith.constant dense<0.000000e+00> : vector<32x128xf32>
    %75 = tpu.matmul %72, %74, %cst_78 {dimension_numbers = #tpu.dot_dimension_numbers<[1], [0], [0], [1], [0, 0, 1, 1], [], []>} : vector<32x128xbf16>, vector<128x128xbf16>, vector<32x128xf32> -> vector<32x128xf32>
    %c8_79 = arith.constant 8 : index
    %c0_80 = arith.constant 0 : index
    %76 = vector.load %arg9[%c8_79, %c0_80] : memref<48x128xf32, #tpu.memory_space<vmem>>, vector<32x128xf32>
    %77 = arith.truncf %76 : vector<32x128xf32> to vector<32x128xbf16>
    %c2_81 = arith.constant 2 : index
    %c1_82 = arith.constant 1 : index
    %c0_83 = arith.constant 0 : index
    %c0_84 = arith.constant 0 : index
    %78 = vector.load %arg2[%c2_81, %c1_82, %c0_83, %c0_84] : memref<10x3x128x128xbf16, #tpu.memory_space<vmem>>, vector<1x1x128x128xbf16>
    %79 = vector.shape_cast %78 : vector<1x1x128x128xbf16> to vector<128x128xbf16>
    %cst_85 = arith.constant dense<0.000000e+00> : vector<32x128xf32>
    %80 = tpu.matmul %77, %79, %cst_85 {dimension_numbers = #tpu.dot_dimension_numbers<[1], [0], [0], [1], [0, 0, 1, 1], [], []>} : vector<32x128xbf16>, vector<128x128xbf16>, vector<32x128xf32> -> vector<32x128xf32>
    %81 = arith.addf %75, %80 : vector<32x128xf32>
    %c9_86 = arith.constant 9 : index
    %c0_87 = arith.constant 0 : index
    %82 = vector.load %arg9[%c9_86, %c0_87] : memref<48x128xf32, #tpu.memory_space<vmem>>, vector<32x128xf32>
    %83 = arith.truncf %82 : vector<32x128xf32> to vector<32x128xbf16>
    %c2_88 = arith.constant 2 : index
    %c2_89 = arith.constant 2 : index
    %c0_90 = arith.constant 0 : index
    %c0_91 = arith.constant 0 : index
    %84 = vector.load %arg2[%c2_88, %c2_89, %c0_90, %c0_91] : memref<10x3x128x128xbf16, #tpu.memory_space<vmem>>, vector<1x1x128x128xbf16>
    %85 = vector.shape_cast %84 : vector<1x1x128x128xbf16> to vector<128x128xbf16>
    %cst_92 = arith.constant dense<0.000000e+00> : vector<32x128xf32>
    %86 = tpu.matmul %83, %85, %cst_92 {dimension_numbers = #tpu.dot_dimension_numbers<[1], [0], [0], [1], [0, 0, 1, 1], [], []>} : vector<32x128xbf16>, vector<128x128xbf16>, vector<32x128xf32> -> vector<32x128xf32>
    %87 = arith.addf %81, %86 : vector<32x128xf32>
    %c2_93 = arith.constant 2 : index
    %c0_94 = arith.constant 0 : index
    %c0_95 = arith.constant 0 : index
    %88 = vector.load %arg3[%c2_93, %c0_94, %c0_95] : memref<10x1x128xf32, #tpu.memory_space<vmem>>, vector<1x1x128xf32>
    %89 = vector.shape_cast %88 : vector<1x1x128xf32> to vector<1x128xf32>
    %90 = vector.broadcast %89 : vector<1x128xf32> to vector<32x128xf32>
    %91 = arith.mulf %87, %90 : vector<32x128xf32>
    %c2_96 = arith.constant 2 : index
    %c0_97 = arith.constant 0 : index
    %c0_98 = arith.constant 0 : index
    %92 = vector.load %arg4[%c2_96, %c0_97, %c0_98] : memref<10x1x128xf32, #tpu.memory_space<vmem>>, vector<1x1x128xf32>
    %93 = vector.shape_cast %92 : vector<1x1x128xf32> to vector<1x128xf32>
    %94 = vector.broadcast %93 : vector<1x128xf32> to vector<32x128xf32>
    %95 = arith.addf %91, %94 : vector<32x128xf32>
    %96 = arith.addf %95, %66 : vector<32x128xf32>
    %cst_99 = arith.constant 2.000000e-01 : f32
    %97 = vector.broadcast %cst_99 : f32 to vector<32x128xf32>
    %98 = arith.mulf %97, %96 : vector<32x128xf32>
    %99 = arith.maximumf %96, %98 : vector<32x128xf32>
    %cst_100 = arith.constant 0.000000e+00 : f32
    %100 = vector.broadcast %cst_100 : f32 to vector<8x128xf32>
    %c0_101 = arith.constant 0 : index
    %c0_102 = arith.constant 0 : index
    %101 = vector.load %arg9[%c0_101, %c0_102] : memref<48x128xf32, #tpu.memory_space<vmem>>, vector<8x128xf32>
    tpu.vector_store %arg9[%c0_101, %c0_102], %100 {strides = array<i32>} : memref<48x128xf32, #tpu.memory_space<vmem>>, vector<8x128xf32>,
    %c40_103 = arith.constant 40 : index
    %c0_104 = arith.constant 0 : index
    %102 = vector.load %arg9[%c40_103, %c0_104] : memref<48x128xf32, #tpu.memory_space<vmem>>, vector<8x128xf32>
    tpu.vector_store %arg9[%c40_103, %c0_104], %100 {strides = array<i32>} : memref<48x128xf32, #tpu.memory_space<vmem>>, vector<8x128xf32>,
    %c8_105 = arith.constant 8 : index
    %c0_106 = arith.constant 0 : index
    %103 = vector.load %arg9[%c8_105, %c0_106] : memref<48x128xf32, #tpu.memory_space<vmem>>, vector<32x128xf32>
    tpu.vector_store %arg9[%c8_105, %c0_106], %99 {strides = array<i32>} : memref<48x128xf32, #tpu.memory_space<vmem>>, vector<32x128xf32>,
    %c7_107 = arith.constant 7 : index
    %c0_108 = arith.constant 0 : index
    %104 = vector.load %arg9[%c7_107, %c0_108] : memref<48x128xf32, #tpu.memory_space<vmem>>, vector<32x128xf32>
    %105 = arith.truncf %104 : vector<32x128xf32> to vector<32x128xbf16>
    %c3 = arith.constant 3 : index
    %c0_109 = arith.constant 0 : index
    %c0_110 = arith.constant 0 : index
    %c0_111 = arith.constant 0 : index
    %106 = vector.load %arg2[%c3, %c0_109, %c0_110, %c0_111] : memref<10x3x128x128xbf16, #tpu.memory_space<vmem>>, vector<1x1x128x128xbf16>
    %107 = vector.shape_cast %106 : vector<1x1x128x128xbf16> to vector<128x128xbf16>
    %cst_112 = arith.constant dense<0.000000e+00> : vector<32x128xf32>
    %108 = tpu.matmul %105, %107, %cst_112 {dimension_numbers = #tpu.dot_dimension_numbers<[1], [0], [0], [1], [0, 0, 1, 1], [], []>} : vector<32x128xbf16>, vector<128x128xbf16>, vector<32x128xf32> -> vector<32x128xf32>
    %c8_113 = arith.constant 8 : index
    %c0_114 = arith.constant 0 : index
    %109 = vector.load %arg9[%c8_113, %c0_114] : memref<48x128xf32, #tpu.memory_space<vmem>>, vector<32x128xf32>
    %110 = arith.truncf %109 : vector<32x128xf32> to vector<32x128xbf16>
    %c3_115 = arith.constant 3 : index
    %c1_116 = arith.constant 1 : index
    %c0_117 = arith.constant 0 : index
    %c0_118 = arith.constant 0 : index
    %111 = vector.load %arg2[%c3_115, %c1_116, %c0_117, %c0_118] : memref<10x3x128x128xbf16, #tpu.memory_space<vmem>>, vector<1x1x128x128xbf16>
    %112 = vector.shape_cast %111 : vector<1x1x128x128xbf16> to vector<128x128xbf16>
    %cst_119 = arith.constant dense<0.000000e+00> : vector<32x128xf32>
    %113 = tpu.matmul %110, %112, %cst_119 {dimension_numbers = #tpu.dot_dimension_numbers<[1], [0], [0], [1], [0, 0, 1, 1], [], []>} : vector<32x128xbf16>, vector<128x128xbf16>, vector<32x128xf32> -> vector<32x128xf32>
    %114 = arith.addf %108, %113 : vector<32x128xf32>
    %c9_120 = arith.constant 9 : index
    %c0_121 = arith.constant 0 : index
    %115 = vector.load %arg9[%c9_120, %c0_121] : memref<48x128xf32, #tpu.memory_space<vmem>>, vector<32x128xf32>
    %116 = arith.truncf %115 : vector<32x128xf32> to vector<32x128xbf16>
    %c3_122 = arith.constant 3 : index
    %c2_123 = arith.constant 2 : index
    %c0_124 = arith.constant 0 : index
    %c0_125 = arith.constant 0 : index
    %117 = vector.load %arg2[%c3_122, %c2_123, %c0_124, %c0_125] : memref<10x3x128x128xbf16, #tpu.memory_space<vmem>>, vector<1x1x128x128xbf16>
    %118 = vector.shape_cast %117 : vector<1x1x128x128xbf16> to vector<128x128xbf16>
    %cst_126 = arith.constant dense<0.000000e+00> : vector<32x128xf32>
    %119 = tpu.matmul %116, %118, %cst_126 {dimension_numbers = #tpu.dot_dimension_numbers<[1], [0], [0], [1], [0, 0, 1, 1], [], []>} : vector<32x128xbf16>, vector<128x128xbf16>, vector<32x128xf32> -> vector<32x128xf32>
    %120 = arith.addf %114, %119 : vector<32x128xf32>
    %c3_127 = arith.constant 3 : index
    %c0_128 = arith.constant 0 : index
    %c0_129 = arith.constant 0 : index
    %121 = vector.load %arg3[%c3_127, %c0_128, %c0_129] : memref<10x1x128xf32, #tpu.memory_space<vmem>>, vector<1x1x128xf32>
    %122 = vector.shape_cast %121 : vector<1x1x128xf32> to vector<1x128xf32>
    %123 = vector.broadcast %122 : vector<1x128xf32> to vector<32x128xf32>
    %124 = arith.mulf %120, %123 : vector<32x128xf32>
    %c3_130 = arith.constant 3 : index
    %c0_131 = arith.constant 0 : index
    %c0_132 = arith.constant 0 : index
    %125 = vector.load %arg4[%c3_130, %c0_131, %c0_132] : memref<10x1x128xf32, #tpu.memory_space<vmem>>, vector<1x1x128xf32>
    %126 = vector.shape_cast %125 : vector<1x1x128xf32> to vector<1x128xf32>
    %127 = vector.broadcast %126 : vector<1x128xf32> to vector<32x128xf32>
    %128 = arith.addf %124, %127 : vector<32x128xf32>
    %129 = arith.addf %128, %33 : vector<32x128xf32>
    %cst_133 = arith.constant 0.000000e+00 : f32
    %130 = vector.broadcast %cst_133 : f32 to vector<32x128xf32>
    %131 = arith.maximumf %129, %130 : vector<32x128xf32>
    %cst_134 = arith.constant 0.000000e+00 : f32
    %132 = vector.broadcast %cst_134 : f32 to vector<8x128xf32>
    %c0_135 = arith.constant 0 : index
    %c0_136 = arith.constant 0 : index
    %133 = vector.load %arg9[%c0_135, %c0_136] : memref<48x128xf32, #tpu.memory_space<vmem>>, vector<8x128xf32>
    tpu.vector_store %arg9[%c0_135, %c0_136], %132 {strides = array<i32>} : memref<48x128xf32, #tpu.memory_space<vmem>>, vector<8x128xf32>,
    %c40_137 = arith.constant 40 : index
    %c0_138 = arith.constant 0 : index
    %134 = vector.load %arg9[%c40_137, %c0_138] : memref<48x128xf32, #tpu.memory_space<vmem>>, vector<8x128xf32>
    tpu.vector_store %arg9[%c40_137, %c0_138], %132 {strides = array<i32>} : memref<48x128xf32, #tpu.memory_space<vmem>>, vector<8x128xf32>,
    %c8_139 = arith.constant 8 : index
    %c0_140 = arith.constant 0 : index
    %135 = vector.load %arg9[%c8_139, %c0_140] : memref<48x128xf32, #tpu.memory_space<vmem>>, vector<32x128xf32>
    tpu.vector_store %arg9[%c8_139, %c0_140], %131 {strides = array<i32>} : memref<48x128xf32, #tpu.memory_space<vmem>>, vector<32x128xf32>,
    %c7_141 = arith.constant 7 : index
    %c0_142 = arith.constant 0 : index
    %136 = tpu.strided_load %arg9[%c7_141, %c0_142] {strides = array<i32: 2, 1>} : memref<48x128xf32, #tpu.memory_space<vmem>>, vector<16x128xf32>
    %137 = arith.truncf %136 : vector<16x128xf32> to vector<16x128xbf16>
    %c0_143 = arith.constant 0 : index
    %c0_144 = arith.constant 0 : index
    %c0_145 = arith.constant 0 : index
    %c0_146 = arith.constant 0 : index
    %138 = vector.load %arg5[%c0_143, %c0_144, %c0_145, %c0_146] : memref<4x4x128x128xbf16, #tpu.memory_space<vmem>>, vector<1x1x128x128xbf16>
    %139 = vector.shape_cast %138 : vector<1x1x128x128xbf16> to vector<128x128xbf16>
    %cst_147 = arith.constant dense<0.000000e+00> : vector<16x128xf32>
    %140 = tpu.matmul %137, %139, %cst_147 {dimension_numbers = #tpu.dot_dimension_numbers<[1], [0], [0], [1], [0, 0, 1, 1], [], []>} : vector<16x128xbf16>, vector<128x128xbf16>, vector<16x128xf32> -> vector<16x128xf32>
    %c8_148 = arith.constant 8 : index
    %c0_149 = arith.constant 0 : index
    %141 = tpu.strided_load %arg9[%c8_148, %c0_149] {strides = array<i32: 2, 1>} : memref<48x128xf32, #tpu.memory_space<vmem>>, vector<16x128xf32>
    %142 = arith.truncf %141 : vector<16x128xf32> to vector<16x128xbf16>
    %c0_150 = arith.constant 0 : index
    %c1_151 = arith.constant 1 : index
    %c0_152 = arith.constant 0 : index
    %c0_153 = arith.constant 0 : index
    %143 = vector.load %arg5[%c0_150, %c1_151, %c0_152, %c0_153] : memref<4x4x128x128xbf16, #tpu.memory_space<vmem>>, vector<1x1x128x128xbf16>
    %144 = vector.shape_cast %143 : vector<1x1x128x128xbf16> to vector<128x128xbf16>
    %cst_154 = arith.constant dense<0.000000e+00> : vector<16x128xf32>
    %145 = tpu.matmul %142, %144, %cst_154 {dimension_numbers = #tpu.dot_dimension_numbers<[1], [0], [0], [1], [0, 0, 1, 1], [], []>} : vector<16x128xbf16>, vector<128x128xbf16>, vector<16x128xf32> -> vector<16x128xf32>
    %146 = arith.addf %140, %145 : vector<16x128xf32>
    %c9_155 = arith.constant 9 : index
    %c0_156 = arith.constant 0 : index
    %147 = tpu.strided_load %arg9[%c9_155, %c0_156] {strides = array<i32: 2, 1>} : memref<48x128xf32, #tpu.memory_space<vmem>>, vector<16x128xf32>
    %148 = arith.truncf %147 : vector<16x128xf32> to vector<16x128xbf16>
    %c0_157 = arith.constant 0 : index
    %c2_158 = arith.constant 2 : index
    %c0_159 = arith.constant 0 : index
    %c0_160 = arith.constant 0 : index
    %149 = vector.load %arg5[%c0_157, %c2_158, %c0_159, %c0_160] : memref<4x4x128x128xbf16, #tpu.memory_space<vmem>>, vector<1x1x128x128xbf16>
    %150 = vector.shape_cast %149 : vector<1x1x128x128xbf16> to vector<128x128xbf16>
    %cst_161 = arith.constant dense<0.000000e+00> : vector<16x128xf32>
    %151 = tpu.matmul %148, %150, %cst_161 {dimension_numbers = #tpu.dot_dimension_numbers<[1], [0], [0], [1], [0, 0, 1, 1], [], []>} : vector<16x128xbf16>, vector<128x128xbf16>, vector<16x128xf32> -> vector<16x128xf32>
    %152 = arith.addf %146, %151 : vector<16x128xf32>
    %c10 = arith.constant 10 : index
    %c0_162 = arith.constant 0 : index
    %153 = tpu.strided_load %arg9[%c10, %c0_162] {strides = array<i32: 2, 1>} : memref<48x128xf32, #tpu.memory_space<vmem>>, vector<16x128xf32>
    %154 = arith.truncf %153 : vector<16x128xf32> to vector<16x128xbf16>
    %c0_163 = arith.constant 0 : index
    %c3_164 = arith.constant 3 : index
    %c0_165 = arith.constant 0 : index
    %c0_166 = arith.constant 0 : index
    %155 = vector.load %arg5[%c0_163, %c3_164, %c0_165, %c0_166] : memref<4x4x128x128xbf16, #tpu.memory_space<vmem>>, vector<1x1x128x128xbf16>
    %156 = vector.shape_cast %155 : vector<1x1x128x128xbf16> to vector<128x128xbf16>
    %cst_167 = arith.constant dense<0.000000e+00> : vector<16x128xf32>
    %157 = tpu.matmul %154, %156, %cst_167 {dimension_numbers = #tpu.dot_dimension_numbers<[1], [0], [0], [1], [0, 0, 1, 1], [], []>} : vector<16x128xbf16>, vector<128x128xbf16>, vector<16x128xf32> -> vector<16x128xf32>
    %158 = arith.addf %152, %157 : vector<16x128xf32>
    %c0_168 = arith.constant 0 : index
    %c0_169 = arith.constant 0 : index
    %c0_170 = arith.constant 0 : index
    %159 = vector.load %arg6[%c0_168, %c0_169, %c0_170] : memref<4x1x128xf32, #tpu.memory_space<vmem>>, vector<1x1x128xf32>
    %160 = vector.shape_cast %159 : vector<1x1x128xf32> to vector<1x128xf32>
    %161 = vector.broadcast %160 : vector<1x128xf32> to vector<16x128xf32>
    %162 = arith.mulf %158, %161 : vector<16x128xf32>
    %c0_171 = arith.constant 0 : index
    %c0_172 = arith.constant 0 : index
    %c0_173 = arith.constant 0 : index
    %163 = vector.load %arg7[%c0_171, %c0_172, %c0_173] : memref<4x1x128xf32, #tpu.memory_space<vmem>>, vector<1x1x128xf32>
    %164 = vector.shape_cast %163 : vector<1x1x128xf32> to vector<1x128xf32>
    %165 = vector.broadcast %164 : vector<1x128xf32> to vector<16x128xf32>
    %166 = arith.addf %162, %165 : vector<16x128xf32>
    %cst_174 = arith.constant 0.000000e+00 : f32
    %167 = vector.broadcast %cst_174 : f32 to vector<8x128xf32>
    %c0_175 = arith.constant 0 : index
    %c0_176 = arith.constant 0 : index
    %168 = vector.load %arg9[%c0_175, %c0_176] : memref<48x128xf32, #tpu.memory_space<vmem>>, vector<8x128xf32>
    tpu.vector_store %arg9[%c0_175, %c0_176], %167 {strides = array<i32>} : memref<48x128xf32, #tpu.memory_space<vmem>>, vector<8x128xf32>,
    %c40_177 = arith.constant 40 : index
    %c0_178 = arith.constant 0 : index
    %169 = vector.load %arg9[%c40_177, %c0_178] : memref<48x128xf32, #tpu.memory_space<vmem>>, vector<8x128xf32>
    tpu.vector_store %arg9[%c40_177, %c0_178], %167 {strides = array<i32>} : memref<48x128xf32, #tpu.memory_space<vmem>>, vector<8x128xf32>,
    %c8_179 = arith.constant 8 : index
    %c0_180 = arith.constant 0 : index
    %170 = vector.load %arg9[%c8_179, %c0_180] : memref<48x128xf32, #tpu.memory_space<vmem>>, vector<32x128xf32>
    tpu.vector_store %arg9[%c8_179, %c0_180], %131 {strides = array<i32>} : memref<48x128xf32, #tpu.memory_space<vmem>>, vector<32x128xf32>,
    %c7_181 = arith.constant 7 : index
    %c0_182 = arith.constant 0 : index
    %171 = tpu.strided_load %arg9[%c7_181, %c0_182] {strides = array<i32: 2, 1>} : memref<48x128xf32, #tpu.memory_space<vmem>>, vector<16x128xf32>
    %172 = arith.truncf %171 : vector<16x128xf32> to vector<16x128xbf16>
    %c1_183 = arith.constant 1 : index
    %c0_184 = arith.constant 0 : index
    %c0_185 = arith.constant 0 : index
    %c0_186 = arith.constant 0 : index
    %173 = vector.load %arg5[%c1_183, %c0_184, %c0_185, %c0_186] : memref<4x4x128x128xbf16, #tpu.memory_space<vmem>>, vector<1x1x128x128xbf16>
    %174 = vector.shape_cast %173 : vector<1x1x128x128xbf16> to vector<128x128xbf16>
    %cst_187 = arith.constant dense<0.000000e+00> : vector<16x128xf32>
    %175 = tpu.matmul %172, %174, %cst_187 {dimension_numbers = #tpu.dot_dimension_numbers<[1], [0], [0], [1], [0, 0, 1, 1], [], []>} : vector<16x128xbf16>, vector<128x128xbf16>, vector<16x128xf32> -> vector<16x128xf32>
    %c8_188 = arith.constant 8 : index
    %c0_189 = arith.constant 0 : index
    %176 = tpu.strided_load %arg9[%c8_188, %c0_189] {strides = array<i32: 2, 1>} : memref<48x128xf32, #tpu.memory_space<vmem>>, vector<16x128xf32>
    %177 = arith.truncf %176 : vector<16x128xf32> to vector<16x128xbf16>
    %c1_190 = arith.constant 1 : index
    %c1_191 = arith.constant 1 : index
    %c0_192 = arith.constant 0 : index
    %c0_193 = arith.constant 0 : index
    %178 = vector.load %arg5[%c1_190, %c1_191, %c0_192, %c0_193] : memref<4x4x128x128xbf16, #tpu.memory_space<vmem>>, vector<1x1x128x128xbf16>
    %179 = vector.shape_cast %178 : vector<1x1x128x128xbf16> to vector<128x128xbf16>
    %cst_194 = arith.constant dense<0.000000e+00> : vector<16x128xf32>
    %180 = tpu.matmul %177, %179, %cst_194 {dimension_numbers = #tpu.dot_dimension_numbers<[1], [0], [0], [1], [0, 0, 1, 1], [], []>} : vector<16x128xbf16>, vector<128x128xbf16>, vector<16x128xf32> -> vector<16x128xf32>
    %181 = arith.addf %175, %180 : vector<16x128xf32>
    %c9_195 = arith.constant 9 : index
    %c0_196 = arith.constant 0 : index
    %182 = tpu.strided_load %arg9[%c9_195, %c0_196] {strides = array<i32: 2, 1>} : memref<48x128xf32, #tpu.memory_space<vmem>>, vector<16x128xf32>
    %183 = arith.truncf %182 : vector<16x128xf32> to vector<16x128xbf16>
    %c1_197 = arith.constant 1 : index
    %c2_198 = arith.constant 2 : index
    %c0_199 = arith.constant 0 : index
    %c0_200 = arith.constant 0 : index
    %184 = vector.load %arg5[%c1_197, %c2_198, %c0_199, %c0_200] : memref<4x4x128x128xbf16, #tpu.memory_space<vmem>>, vector<1x1x128x128xbf16>
    %185 = vector.shape_cast %184 : vector<1x1x128x128xbf16> to vector<128x128xbf16>
    %cst_201 = arith.constant dense<0.000000e+00> : vector<16x128xf32>
    %186 = tpu.matmul %183, %185, %cst_201 {dimension_numbers = #tpu.dot_dimension_numbers<[1], [0], [0], [1], [0, 0, 1, 1], [], []>} : vector<16x128xbf16>, vector<128x128xbf16>, vector<16x128xf32> -> vector<16x128xf32>
    %187 = arith.addf %181, %186 : vector<16x128xf32>
    %c10_202 = arith.constant 10 : index
    %c0_203 = arith.constant 0 : index
    %188 = tpu.strided_load %arg9[%c10_202, %c0_203] {strides = array<i32: 2, 1>} : memref<48x128xf32, #tpu.memory_space<vmem>>, vector<16x128xf32>
    %189 = arith.truncf %188 : vector<16x128xf32> to vector<16x128xbf16>
    %c1_204 = arith.constant 1 : index
    %c3_205 = arith.constant 3 : index
    %c0_206 = arith.constant 0 : index
    %c0_207 = arith.constant 0 : index
    %190 = vector.load %arg5[%c1_204, %c3_205, %c0_206, %c0_207] : memref<4x4x128x128xbf16, #tpu.memory_space<vmem>>, vector<1x1x128x128xbf16>
    %191 = vector.shape_cast %190 : vector<1x1x128x128xbf16> to vector<128x128xbf16>
    %cst_208 = arith.constant dense<0.000000e+00> : vector<16x128xf32>
    %192 = tpu.matmul %189, %191, %cst_208 {dimension_numbers = #tpu.dot_dimension_numbers<[1], [0], [0], [1], [0, 0, 1, 1], [], []>} : vector<16x128xbf16>, vector<128x128xbf16>, vector<16x128xf32> -> vector<16x128xf32>
    %193 = arith.addf %187, %192 : vector<16x128xf32>
    %c1_209 = arith.constant 1 : index
    %c0_210 = arith.constant 0 : index
    %c0_211 = arith.constant 0 : index
    %194 = vector.load %arg6[%c1_209, %c0_210, %c0_211] : memref<4x1x128xf32, #tpu.memory_space<vmem>>, vector<1x1x128xf32>
    %195 = vector.shape_cast %194 : vector<1x1x128xf32> to vector<1x128xf32>
    %196 = vector.broadcast %195 : vector<1x128xf32> to vector<16x128xf32>
    %197 = arith.mulf %193, %196 : vector<16x128xf32>
    %c1_212 = arith.constant 1 : index
    %c0_213 = arith.constant 0 : index
    %c0_214 = arith.constant 0 : index
    %198 = vector.load %arg7[%c1_212, %c0_213, %c0_214] : memref<4x1x128xf32, #tpu.memory_space<vmem>>, vector<1x1x128xf32>
    %199 = vector.shape_cast %198 : vector<1x1x128xf32> to vector<1x128xf32>
    %200 = vector.broadcast %199 : vector<1x128xf32> to vector<16x128xf32>
    %201 = arith.addf %197, %200 : vector<16x128xf32>
    %202 = arith.addf %166, %201 : vector<16x128xf32>
    %cst_215 = arith.constant 2.000000e-01 : f32
    %203 = vector.broadcast %cst_215 : f32 to vector<16x128xf32>
    %204 = arith.mulf %203, %202 : vector<16x128xf32>
    %205 = arith.maximumf %202, %204 : vector<16x128xf32>
    %cst_216 = arith.constant 0.000000e+00 : f32
    %206 = vector.broadcast %cst_216 : f32 to vector<8x128xf32>
    %c0_217 = arith.constant 0 : index
    %c0_218 = arith.constant 0 : index
    %207 = vector.load %arg9[%c0_217, %c0_218] : memref<48x128xf32, #tpu.memory_space<vmem>>, vector<8x128xf32>
    tpu.vector_store %arg9[%c0_217, %c0_218], %206 {strides = array<i32>} : memref<48x128xf32, #tpu.memory_space<vmem>>, vector<8x128xf32>,
    %c24 = arith.constant 24 : index
    %c0_219 = arith.constant 0 : index
    %208 = vector.load %arg9[%c24, %c0_219] : memref<48x128xf32, #tpu.memory_space<vmem>>, vector<8x128xf32>
    tpu.vector_store %arg9[%c24, %c0_219], %206 {strides = array<i32>} : memref<48x128xf32, #tpu.memory_space<vmem>>, vector<8x128xf32>,
    %c8_220 = arith.constant 8 : index
    %c0_221 = arith.constant 0 : index
    %209 = vector.load %arg9[%c8_220, %c0_221] : memref<48x128xf32, #tpu.memory_space<vmem>>, vector<16x128xf32>
    tpu.vector_store %arg9[%c8_220, %c0_221], %205 {strides = array<i32>} : memref<48x128xf32, #tpu.memory_space<vmem>>, vector<16x128xf32>,
    %c7_222 = arith.constant 7 : index
    %c0_223 = arith.constant 0 : index
    %210 = vector.load %arg9[%c7_222, %c0_223] : memref<48x128xf32, #tpu.memory_space<vmem>>, vector<16x128xf32>
    %211 = arith.truncf %210 : vector<16x128xf32> to vector<16x128xbf16>
    %c4 = arith.constant 4 : index
    %c0_224 = arith.constant 0 : index
    %c0_225 = arith.constant 0 : index
    %c0_226 = arith.constant 0 : index
    %212 = vector.load %arg2[%c4, %c0_224, %c0_225, %c0_226] : memref<10x3x128x128xbf16, #tpu.memory_space<vmem>>, vector<1x1x128x128xbf16>
    %213 = vector.shape_cast %212 : vector<1x1x128x128xbf16> to vector<128x128xbf16>
    %cst_227 = arith.constant dense<0.000000e+00> : vector<16x128xf32>
    %214 = tpu.matmul %211, %213, %cst_227 {dimension_numbers = #tpu.dot_dimension_numbers<[1], [0], [0], [1], [0, 0, 1, 1], [], []>} : vector<16x128xbf16>, vector<128x128xbf16>, vector<16x128xf32> -> vector<16x128xf32>
    %c8_228 = arith.constant 8 : index
    %c0_229 = arith.constant 0 : index
    %215 = vector.load %arg9[%c8_228, %c0_229] : memref<48x128xf32, #tpu.memory_space<vmem>>, vector<16x128xf32>
    %216 = arith.truncf %215 : vector<16x128xf32> to vector<16x128xbf16>
    %c4_230 = arith.constant 4 : index
    %c1_231 = arith.constant 1 : index
    %c0_232 = arith.constant 0 : index
    %c0_233 = arith.constant 0 : index
    %217 = vector.load %arg2[%c4_230, %c1_231, %c0_232, %c0_233] : memref<10x3x128x128xbf16, #tpu.memory_space<vmem>>, vector<1x1x128x128xbf16>
    %218 = vector.shape_cast %217 : vector<1x1x128x128xbf16> to vector<128x128xbf16>
    %cst_234 = arith.constant dense<0.000000e+00> : vector<16x128xf32>
    %219 = tpu.matmul %216, %218, %cst_234 {dimension_numbers = #tpu.dot_dimension_numbers<[1], [0], [0], [1], [0, 0, 1, 1], [], []>} : vector<16x128xbf16>, vector<128x128xbf16>, vector<16x128xf32> -> vector<16x128xf32>
    %220 = arith.addf %214, %219 : vector<16x128xf32>
    %c9_235 = arith.constant 9 : index
    %c0_236 = arith.constant 0 : index
    %221 = vector.load %arg9[%c9_235, %c0_236] : memref<48x128xf32, #tpu.memory_space<vmem>>, vector<16x128xf32>
    %222 = arith.truncf %221 : vector<16x128xf32> to vector<16x128xbf16>
    %c4_237 = arith.constant 4 : index
    %c2_238 = arith.constant 2 : index
    %c0_239 = arith.constant 0 : index
    %c0_240 = arith.constant 0 : index
    %223 = vector.load %arg2[%c4_237, %c2_238, %c0_239, %c0_240] : memref<10x3x128x128xbf16, #tpu.memory_space<vmem>>, vector<1x1x128x128xbf16>
    %224 = vector.shape_cast %223 : vector<1x1x128x128xbf16> to vector<128x128xbf16>
    %cst_241 = arith.constant dense<0.000000e+00> : vector<16x128xf32>
    %225 = tpu.matmul %222, %224, %cst_241 {dimension_numbers = #tpu.dot_dimension_numbers<[1], [0], [0], [1], [0, 0, 1, 1], [], []>} : vector<16x128xbf16>, vector<128x128xbf16>, vector<16x128xf32> -> vector<16x128xf32>
    %226 = arith.addf %220, %225 : vector<16x128xf32>
    %c4_242 = arith.constant 4 : index
    %c0_243 = arith.constant 0 : index
    %c0_244 = arith.constant 0 : index
    %227 = vector.load %arg3[%c4_242, %c0_243, %c0_244] : memref<10x1x128xf32, #tpu.memory_space<vmem>>, vector<1x1x128xf32>
    %228 = vector.shape_cast %227 : vector<1x1x128xf32> to vector<1x128xf32>
    %229 = vector.broadcast %228 : vector<1x128xf32> to vector<16x128xf32>
    %230 = arith.mulf %226, %229 : vector<16x128xf32>
    %c4_245 = arith.constant 4 : index
    %c0_246 = arith.constant 0 : index
    %c0_247 = arith.constant 0 : index
    %231 = vector.load %arg4[%c4_245, %c0_246, %c0_247] : memref<10x1x128xf32, #tpu.memory_space<vmem>>, vector<1x1x128xf32>
    %232 = vector.shape_cast %231 : vector<1x1x128xf32> to vector<1x128xf32>
    %233 = vector.broadcast %232 : vector<1x128xf32> to vector<16x128xf32>
    %234 = arith.addf %230, %233 : vector<16x128xf32>
    %235 = arith.addf %234, %205 : vector<16x128xf32>
    %cst_248 = arith.constant 2.000000e-01 : f32
    %236 = vector.broadcast %cst_248 : f32 to vector<16x128xf32>
    %237 = arith.mulf %236, %235 : vector<16x128xf32>
    %238 = arith.maximumf %235, %237 : vector<16x128xf32>
    %cst_249 = arith.constant 0.000000e+00 : f32
    %239 = vector.broadcast %cst_249 : f32 to vector<8x128xf32>
    %c0_250 = arith.constant 0 : index
    %c0_251 = arith.constant 0 : index
    %240 = vector.load %arg9[%c0_250, %c0_251] : memref<48x128xf32, #tpu.memory_space<vmem>>, vector<8x128xf32>
    tpu.vector_store %arg9[%c0_250, %c0_251], %239 {strides = array<i32>} : memref<48x128xf32, #tpu.memory_space<vmem>>, vector<8x128xf32>,
    %c24_252 = arith.constant 24 : index
    %c0_253 = arith.constant 0 : index
    %241 = vector.load %arg9[%c24_252, %c0_253] : memref<48x128xf32, #tpu.memory_space<vmem>>, vector<8x128xf32>
    tpu.vector_store %arg9[%c24_252, %c0_253], %239 {strides = array<i32>} : memref<48x128xf32, #tpu.memory_space<vmem>>, vector<8x128xf32>,
    %c8_254 = arith.constant 8 : index
    %c0_255 = arith.constant 0 : index
    %242 = vector.load %arg9[%c8_254, %c0_255] : memref<48x128xf32, #tpu.memory_space<vmem>>, vector<16x128xf32>
    tpu.vector_store %arg9[%c8_254, %c0_255], %238 {strides = array<i32>} : memref<48x128xf32, #tpu.memory_space<vmem>>, vector<16x128xf32>,
    %c7_256 = arith.constant 7 : index
    %c0_257 = arith.constant 0 : index
    %243 = vector.load %arg9[%c7_256, %c0_257] : memref<48x128xf32, #tpu.memory_space<vmem>>, vector<16x128xf32>
    %244 = arith.truncf %243 : vector<16x128xf32> to vector<16x128xbf16>
    %c5 = arith.constant 5 : index
    %c0_258 = arith.constant 0 : index
    %c0_259 = arith.constant 0 : index
    %c0_260 = arith.constant 0 : index
    %245 = vector.load %arg2[%c5, %c0_258, %c0_259, %c0_260] : memref<10x3x128x128xbf16, #tpu.memory_space<vmem>>, vector<1x1x128x128xbf16>
    %246 = vector.shape_cast %245 : vector<1x1x128x128xbf16> to vector<128x128xbf16>
    %cst_261 = arith.constant dense<0.000000e+00> : vector<16x128xf32>
    %247 = tpu.matmul %244, %246, %cst_261 {dimension_numbers = #tpu.dot_dimension_numbers<[1], [0], [0], [1], [0, 0, 1, 1], [], []>} : vector<16x128xbf16>, vector<128x128xbf16>, vector<16x128xf32> -> vector<16x128xf32>
    %c8_262 = arith.constant 8 : index
    %c0_263 = arith.constant 0 : index
    %248 = vector.load %arg9[%c8_262, %c0_263] : memref<48x128xf32, #tpu.memory_space<vmem>>, vector<16x128xf32>
    %249 = arith.truncf %248 : vector<16x128xf32> to vector<16x128xbf16>
    %c5_264 = arith.constant 5 : index
    %c1_265 = arith.constant 1 : index
    %c0_266 = arith.constant 0 : index
    %c0_267 = arith.constant 0 : index
    %250 = vector.load %arg2[%c5_264, %c1_265, %c0_266, %c0_267] : memref<10x3x128x128xbf16, #tpu.memory_space<vmem>>, vector<1x1x128x128xbf16>
    %251 = vector.shape_cast %250 : vector<1x1x128x128xbf16> to vector<128x128xbf16>
    %cst_268 = arith.constant dense<0.000000e+00> : vector<16x128xf32>
    %252 = tpu.matmul %249, %251, %cst_268 {dimension_numbers = #tpu.dot_dimension_numbers<[1], [0], [0], [1], [0, 0, 1, 1], [], []>} : vector<16x128xbf16>, vector<128x128xbf16>, vector<16x128xf32> -> vector<16x128xf32>
    %253 = arith.addf %247, %252 : vector<16x128xf32>
    %c9_269 = arith.constant 9 : index
    %c0_270 = arith.constant 0 : index
    %254 = vector.load %arg9[%c9_269, %c0_270] : memref<48x128xf32, #tpu.memory_space<vmem>>, vector<16x128xf32>
    %255 = arith.truncf %254 : vector<16x128xf32> to vector<16x128xbf16>
    %c5_271 = arith.constant 5 : index
    %c2_272 = arith.constant 2 : index
    %c0_273 = arith.constant 0 : index
    %c0_274 = arith.constant 0 : index
    %256 = vector.load %arg2[%c5_271, %c2_272, %c0_273, %c0_274] : memref<10x3x128x128xbf16, #tpu.memory_space<vmem>>, vector<1x1x128x128xbf16>
    %257 = vector.shape_cast %256 : vector<1x1x128x128xbf16> to vector<128x128xbf16>
    %cst_275 = arith.constant dense<0.000000e+00> : vector<16x128xf32>
    %258 = tpu.matmul %255, %257, %cst_275 {dimension_numbers = #tpu.dot_dimension_numbers<[1], [0], [0], [1], [0, 0, 1, 1], [], []>} : vector<16x128xbf16>, vector<128x128xbf16>, vector<16x128xf32> -> vector<16x128xf32>
    %259 = arith.addf %253, %258 : vector<16x128xf32>
    %c5_276 = arith.constant 5 : index
    %c0_277 = arith.constant 0 : index
    %c0_278 = arith.constant 0 : index
    %260 = vector.load %arg3[%c5_276, %c0_277, %c0_278] : memref<10x1x128xf32, #tpu.memory_space<vmem>>, vector<1x1x128xf32>
    %261 = vector.shape_cast %260 : vector<1x1x128xf32> to vector<1x128xf32>
    %262 = vector.broadcast %261 : vector<1x128xf32> to vector<16x128xf32>
    %263 = arith.mulf %259, %262 : vector<16x128xf32>
    %c5_279 = arith.constant 5 : index
    %c0_280 = arith.constant 0 : index
    %c0_281 = arith.constant 0 : index
    %264 = vector.load %arg4[%c5_279, %c0_280, %c0_281] : memref<10x1x128xf32, #tpu.memory_space<vmem>>, vector<1x1x128xf32>
    %265 = vector.shape_cast %264 : vector<1x1x128xf32> to vector<1x128xf32>
    %266 = vector.broadcast %265 : vector<1x128xf32> to vector<16x128xf32>
    %267 = arith.addf %263, %266 : vector<16x128xf32>
    %268 = arith.addf %267, %238 : vector<16x128xf32>
    %cst_282 = arith.constant 2.000000e-01 : f32
    %269 = vector.broadcast %cst_282 : f32 to vector<16x128xf32>
    %270 = arith.mulf %269, %268 : vector<16x128xf32>
    %271 = arith.maximumf %268, %270 : vector<16x128xf32>
    %cst_283 = arith.constant 0.000000e+00 : f32
    %272 = vector.broadcast %cst_283 : f32 to vector<8x128xf32>
    %c0_284 = arith.constant 0 : index
    %c0_285 = arith.constant 0 : index
    %273 = vector.load %arg9[%c0_284, %c0_285] : memref<48x128xf32, #tpu.memory_space<vmem>>, vector<8x128xf32>
    tpu.vector_store %arg9[%c0_284, %c0_285], %272 {strides = array<i32>} : memref<48x128xf32, #tpu.memory_space<vmem>>, vector<8x128xf32>,
    %c24_286 = arith.constant 24 : index
    %c0_287 = arith.constant 0 : index
    %274 = vector.load %arg9[%c24_286, %c0_287] : memref<48x128xf32, #tpu.memory_space<vmem>>, vector<8x128xf32>
    tpu.vector_store %arg9[%c24_286, %c0_287], %272 {strides = array<i32>} : memref<48x128xf32, #tpu.memory_space<vmem>>, vector<8x128xf32>,
    %c8_288 = arith.constant 8 : index
    %c0_289 = arith.constant 0 : index
    %275 = vector.load %arg9[%c8_288, %c0_289] : memref<48x128xf32, #tpu.memory_space<vmem>>, vector<16x128xf32>
    tpu.vector_store %arg9[%c8_288, %c0_289], %271 {strides = array<i32>} : memref<48x128xf32, #tpu.memory_space<vmem>>, vector<16x128xf32>,
    %c7_290 = arith.constant 7 : index
    %c0_291 = arith.constant 0 : index
    %276 = vector.load %arg9[%c7_290, %c0_291] : memref<48x128xf32, #tpu.memory_space<vmem>>, vector<16x128xf32>
    %277 = arith.truncf %276 : vector<16x128xf32> to vector<16x128xbf16>
    %c6 = arith.constant 6 : index
    %c0_292 = arith.constant 0 : index
    %c0_293 = arith.constant 0 : index
    %c0_294 = arith.constant 0 : index
    %278 = vector.load %arg2[%c6, %c0_292, %c0_293, %c0_294] : memref<10x3x128x128xbf16, #tpu.memory_space<vmem>>, vector<1x1x128x128xbf16>
    %279 = vector.shape_cast %278 : vector<1x1x128x128xbf16> to vector<128x128xbf16>
    %cst_295 = arith.constant dense<0.000000e+00> : vector<16x128xf32>
    %280 = tpu.matmul %277, %279, %cst_295 {dimension_numbers = #tpu.dot_dimension_numbers<[1], [0], [0], [1], [0, 0, 1, 1], [], []>} : vector<16x128xbf16>, vector<128x128xbf16>, vector<16x128xf32> -> vector<16x128xf32>
    %c8_296 = arith.constant 8 : index
    %c0_297 = arith.constant 0 : index
    %281 = vector.load %arg9[%c8_296, %c0_297] : memref<48x128xf32, #tpu.memory_space<vmem>>, vector<16x128xf32>
    %282 = arith.truncf %281 : vector<16x128xf32> to vector<16x128xbf16>
    %c6_298 = arith.constant 6 : index
    %c1_299 = arith.constant 1 : index
    %c0_300 = arith.constant 0 : index
    %c0_301 = arith.constant 0 : index
    %283 = vector.load %arg2[%c6_298, %c1_299, %c0_300, %c0_301] : memref<10x3x128x128xbf16, #tpu.memory_space<vmem>>, vector<1x1x128x128xbf16>
    %284 = vector.shape_cast %283 : vector<1x1x128x128xbf16> to vector<128x128xbf16>
    %cst_302 = arith.constant dense<0.000000e+00> : vector<16x128xf32>
    %285 = tpu.matmul %282, %284, %cst_302 {dimension_numbers = #tpu.dot_dimension_numbers<[1], [0], [0], [1], [0, 0, 1, 1], [], []>} : vector<16x128xbf16>, vector<128x128xbf16>, vector<16x128xf32> -> vector<16x128xf32>
    %286 = arith.addf %280, %285 : vector<16x128xf32>
    %c9_303 = arith.constant 9 : index
    %c0_304 = arith.constant 0 : index
    %287 = vector.load %arg9[%c9_303, %c0_304] : memref<48x128xf32, #tpu.memory_space<vmem>>, vector<16x128xf32>
    %288 = arith.truncf %287 : vector<16x128xf32> to vector<16x128xbf16>
    %c6_305 = arith.constant 6 : index
    %c2_306 = arith.constant 2 : index
    %c0_307 = arith.constant 0 : index
    %c0_308 = arith.constant 0 : index
    %289 = vector.load %arg2[%c6_305, %c2_306, %c0_307, %c0_308] : memref<10x3x128x128xbf16, #tpu.memory_space<vmem>>, vector<1x1x128x128xbf16>
    %290 = vector.shape_cast %289 : vector<1x1x128x128xbf16> to vector<128x128xbf16>
    %cst_309 = arith.constant dense<0.000000e+00> : vector<16x128xf32>
    %291 = tpu.matmul %288, %290, %cst_309 {dimension_numbers = #tpu.dot_dimension_numbers<[1], [0], [0], [1], [0, 0, 1, 1], [], []>} : vector<16x128xbf16>, vector<128x128xbf16>, vector<16x128xf32> -> vector<16x128xf32>
    %292 = arith.addf %286, %291 : vector<16x128xf32>
    %c6_310 = arith.constant 6 : index
    %c0_311 = arith.constant 0 : index
    %c0_312 = arith.constant 0 : index
    %293 = vector.load %arg3[%c6_310, %c0_311, %c0_312] : memref<10x1x128xf32, #tpu.memory_space<vmem>>, vector<1x1x128xf32>
    %294 = vector.shape_cast %293 : vector<1x1x128xf32> to vector<1x128xf32>
    %295 = vector.broadcast %294 : vector<1x128xf32> to vector<16x128xf32>
    %296 = arith.mulf %292, %295 : vector<16x128xf32>
    %c6_313 = arith.constant 6 : index
    %c0_314 = arith.constant 0 : index
    %c0_315 = arith.constant 0 : index
    %297 = vector.load %arg4[%c6_313, %c0_314, %c0_315] : memref<10x1x128xf32, #tpu.memory_space<vmem>>, vector<1x1x128xf32>
    %298 = vector.shape_cast %297 : vector<1x1x128xf32> to vector<1x128xf32>
    %299 = vector.broadcast %298 : vector<1x128xf32> to vector<16x128xf32>
    %300 = arith.addf %296, %299 : vector<16x128xf32>
    %301 = arith.addf %300, %205 : vector<16x128xf32>
    %cst_316 = arith.constant 0.000000e+00 : f32
    %302 = vector.broadcast %cst_316 : f32 to vector<16x128xf32>
    %303 = arith.maximumf %301, %302 : vector<16x128xf32>
    %cst_317 = arith.constant 0.000000e+00 : f32
    %304 = vector.broadcast %cst_317 : f32 to vector<8x128xf32>
    %c0_318 = arith.constant 0 : index
    %c0_319 = arith.constant 0 : index
    %305 = vector.load %arg9[%c0_318, %c0_319] : memref<48x128xf32, #tpu.memory_space<vmem>>, vector<8x128xf32>
    tpu.vector_store %arg9[%c0_318, %c0_319], %304 {strides = array<i32>} : memref<48x128xf32, #tpu.memory_space<vmem>>, vector<8x128xf32>,
    %c24_320 = arith.constant 24 : index
    %c0_321 = arith.constant 0 : index
    %306 = vector.load %arg9[%c24_320, %c0_321] : memref<48x128xf32, #tpu.memory_space<vmem>>, vector<8x128xf32>
    tpu.vector_store %arg9[%c24_320, %c0_321], %304 {strides = array<i32>} : memref<48x128xf32, #tpu.memory_space<vmem>>, vector<8x128xf32>,
    %c8_322 = arith.constant 8 : index
    %c0_323 = arith.constant 0 : index
    %307 = vector.load %arg9[%c8_322, %c0_323] : memref<48x128xf32, #tpu.memory_space<vmem>>, vector<16x128xf32>
    tpu.vector_store %arg9[%c8_322, %c0_323], %303 {strides = array<i32>} : memref<48x128xf32, #tpu.memory_space<vmem>>, vector<16x128xf32>,
    %c7_324 = arith.constant 7 : index
    %c0_325 = arith.constant 0 : index
    %308 = tpu.strided_load %arg9[%c7_324, %c0_325] {strides = array<i32: 2, 1>} : memref<48x128xf32, #tpu.memory_space<vmem>>, vector<8x128xf32>
    %309 = arith.truncf %308 : vector<8x128xf32> to vector<8x128xbf16>
    %c2_326 = arith.constant 2 : index
    %c0_327 = arith.constant 0 : index
    %c0_328 = arith.constant 0 : index
    %c0_329 = arith.constant 0 : index
    %310 = vector.load %arg5[%c2_326, %c0_327, %c0_328, %c0_329] : memref<4x4x128x128xbf16, #tpu.memory_space<vmem>>, vector<1x1x128x128xbf16>
    %311 = vector.shape_cast %310 : vector<1x1x128x128xbf16> to vector<128x128xbf16>
    %cst_330 = arith.constant dense<0.000000e+00> : vector<8x128xf32>
    %312 = tpu.matmul %309, %311, %cst_330 {dimension_numbers = #tpu.dot_dimension_numbers<[1], [0], [0], [1], [0, 0, 1, 1], [], []>} : vector<8x128xbf16>, vector<128x128xbf16>, vector<8x128xf32> -> vector<8x128xf32>
    %c8_331 = arith.constant 8 : index
    %c0_332 = arith.constant 0 : index
    %313 = tpu.strided_load %arg9[%c8_331, %c0_332] {strides = array<i32: 2, 1>} : memref<48x128xf32, #tpu.memory_space<vmem>>, vector<8x128xf32>
    %314 = arith.truncf %313 : vector<8x128xf32> to vector<8x128xbf16>
    %c2_333 = arith.constant 2 : index
    %c1_334 = arith.constant 1 : index
    %c0_335 = arith.constant 0 : index
    %c0_336 = arith.constant 0 : index
    %315 = vector.load %arg5[%c2_333, %c1_334, %c0_335, %c0_336] : memref<4x4x128x128xbf16, #tpu.memory_space<vmem>>, vector<1x1x128x128xbf16>
    %316 = vector.shape_cast %315 : vector<1x1x128x128xbf16> to vector<128x128xbf16>
    %cst_337 = arith.constant dense<0.000000e+00> : vector<8x128xf32>
    %317 = tpu.matmul %314, %316, %cst_337 {dimension_numbers = #tpu.dot_dimension_numbers<[1], [0], [0], [1], [0, 0, 1, 1], [], []>} : vector<8x128xbf16>, vector<128x128xbf16>, vector<8x128xf32> -> vector<8x128xf32>
    %318 = arith.addf %312, %317 : vector<8x128xf32>
    %c9_338 = arith.constant 9 : index
    %c0_339 = arith.constant 0 : index
    %319 = tpu.strided_load %arg9[%c9_338, %c0_339] {strides = array<i32: 2, 1>} : memref<48x128xf32, #tpu.memory_space<vmem>>, vector<8x128xf32>
    %320 = arith.truncf %319 : vector<8x128xf32> to vector<8x128xbf16>
    %c2_340 = arith.constant 2 : index
    %c2_341 = arith.constant 2 : index
    %c0_342 = arith.constant 0 : index
    %c0_343 = arith.constant 0 : index
    %321 = vector.load %arg5[%c2_340, %c2_341, %c0_342, %c0_343] : memref<4x4x128x128xbf16, #tpu.memory_space<vmem>>, vector<1x1x128x128xbf16>
    %322 = vector.shape_cast %321 : vector<1x1x128x128xbf16> to vector<128x128xbf16>
    %cst_344 = arith.constant dense<0.000000e+00> : vector<8x128xf32>
    %323 = tpu.matmul %320, %322, %cst_344 {dimension_numbers = #tpu.dot_dimension_numbers<[1], [0], [0], [1], [0, 0, 1, 1], [], []>} : vector<8x128xbf16>, vector<128x128xbf16>, vector<8x128xf32> -> vector<8x128xf32>
    %324 = arith.addf %318, %323 : vector<8x128xf32>
    %c10_345 = arith.constant 10 : index
    %c0_346 = arith.constant 0 : index
    %325 = tpu.strided_load %arg9[%c10_345, %c0_346] {strides = array<i32: 2, 1>} : memref<48x128xf32, #tpu.memory_space<vmem>>, vector<8x128xf32>
    %326 = arith.truncf %325 : vector<8x128xf32> to vector<8x128xbf16>
    %c2_347 = arith.constant 2 : index
    %c3_348 = arith.constant 3 : index
    %c0_349 = arith.constant 0 : index
    %c0_350 = arith.constant 0 : index
    %327 = vector.load %arg5[%c2_347, %c3_348, %c0_349, %c0_350] : memref<4x4x128x128xbf16, #tpu.memory_space<vmem>>, vector<1x1x128x128xbf16>
    %328 = vector.shape_cast %327 : vector<1x1x128x128xbf16> to vector<128x128xbf16>
    %cst_351 = arith.constant dense<0.000000e+00> : vector<8x128xf32>
    %329 = tpu.matmul %326, %328, %cst_351 {dimension_numbers = #tpu.dot_dimension_numbers<[1], [0], [0], [1], [0, 0, 1, 1], [], []>} : vector<8x128xbf16>, vector<128x128xbf16>, vector<8x128xf32> -> vector<8x128xf32>
    %330 = arith.addf %324, %329 : vector<8x128xf32>
    %c2_352 = arith.constant 2 : index
    %c0_353 = arith.constant 0 : index
    %c0_354 = arith.constant 0 : index
    %331 = vector.load %arg6[%c2_352, %c0_353, %c0_354] : memref<4x1x128xf32, #tpu.memory_space<vmem>>, vector<1x1x128xf32>
    %332 = vector.shape_cast %331 : vector<1x1x128xf32> to vector<1x128xf32>
    %333 = vector.broadcast %332 : vector<1x128xf32> to vector<8x128xf32>
    %334 = arith.mulf %330, %333 : vector<8x128xf32>
    %c2_355 = arith.constant 2 : index
    %c0_356 = arith.constant 0 : index
    %c0_357 = arith.constant 0 : index
    %335 = vector.load %arg7[%c2_355, %c0_356, %c0_357] : memref<4x1x128xf32, #tpu.memory_space<vmem>>, vector<1x1x128xf32>
    %336 = vector.shape_cast %335 : vector<1x1x128xf32> to vector<1x128xf32>
    %337 = vector.broadcast %336 : vector<1x128xf32> to vector<8x128xf32>
    %338 = arith.addf %334, %337 : vector<8x128xf32>
    %cst_358 = arith.constant 0.000000e+00 : f32
    %339 = vector.broadcast %cst_358 : f32 to vector<8x128xf32>
    %c0_359 = arith.constant 0 : index
    %c0_360 = arith.constant 0 : index
    %340 = vector.load %arg9[%c0_359, %c0_360] : memref<48x128xf32, #tpu.memory_space<vmem>>, vector<8x128xf32>
    tpu.vector_store %arg9[%c0_359, %c0_360], %339 {strides = array<i32>} : memref<48x128xf32, #tpu.memory_space<vmem>>, vector<8x128xf32>,
    %c24_361 = arith.constant 24 : index
    %c0_362 = arith.constant 0 : index
    %341 = vector.load %arg9[%c24_361, %c0_362] : memref<48x128xf32, #tpu.memory_space<vmem>>, vector<8x128xf32>
    tpu.vector_store %arg9[%c24_361, %c0_362], %339 {strides = array<i32>} : memref<48x128xf32, #tpu.memory_space<vmem>>, vector<8x128xf32>,
    %c8_363 = arith.constant 8 : index
    %c0_364 = arith.constant 0 : index
    %342 = vector.load %arg9[%c8_363, %c0_364] : memref<48x128xf32, #tpu.memory_space<vmem>>, vector<16x128xf32>
    tpu.vector_store %arg9[%c8_363, %c0_364], %303 {strides = array<i32>} : memref<48x128xf32, #tpu.memory_space<vmem>>, vector<16x128xf32>,
    %c7_365 = arith.constant 7 : index
    %c0_366 = arith.constant 0 : index
    %343 = tpu.strided_load %arg9[%c7_365, %c0_366] {strides = array<i32: 2, 1>} : memref<48x128xf32, #tpu.memory_space<vmem>>, vector<8x128xf32>
    %344 = arith.truncf %343 : vector<8x128xf32> to vector<8x128xbf16>
    %c3_367 = arith.constant 3 : index
    %c0_368 = arith.constant 0 : index
    %c0_369 = arith.constant 0 : index
    %c0_370 = arith.constant 0 : index
    %345 = vector.load %arg5[%c3_367, %c0_368, %c0_369, %c0_370] : memref<4x4x128x128xbf16, #tpu.memory_space<vmem>>, vector<1x1x128x128xbf16>
    %346 = vector.shape_cast %345 : vector<1x1x128x128xbf16> to vector<128x128xbf16>
    %cst_371 = arith.constant dense<0.000000e+00> : vector<8x128xf32>
    %347 = tpu.matmul %344, %346, %cst_371 {dimension_numbers = #tpu.dot_dimension_numbers<[1], [0], [0], [1], [0, 0, 1, 1], [], []>} : vector<8x128xbf16>, vector<128x128xbf16>, vector<8x128xf32> -> vector<8x128xf32>
    %c8_372 = arith.constant 8 : index
    %c0_373 = arith.constant 0 : index
    %348 = tpu.strided_load %arg9[%c8_372, %c0_373] {strides = array<i32: 2, 1>} : memref<48x128xf32, #tpu.memory_space<vmem>>, vector<8x128xf32>
    %349 = arith.truncf %348 : vector<8x128xf32> to vector<8x128xbf16>
    %c3_374 = arith.constant 3 : index
    %c1_375 = arith.constant 1 : index
    %c0_376 = arith.constant 0 : index
    %c0_377 = arith.constant 0 : index
    %350 = vector.load %arg5[%c3_374, %c1_375, %c0_376, %c0_377] : memref<4x4x128x128xbf16, #tpu.memory_space<vmem>>, vector<1x1x128x128xbf16>
    %351 = vector.shape_cast %350 : vector<1x1x128x128xbf16> to vector<128x128xbf16>
    %cst_378 = arith.constant dense<0.000000e+00> : vector<8x128xf32>
    %352 = tpu.matmul %349, %351, %cst_378 {dimension_numbers = #tpu.dot_dimension_numbers<[1], [0], [0], [1], [0, 0, 1, 1], [], []>} : vector<8x128xbf16>, vector<128x128xbf16>, vector<8x128xf32> -> vector<8x128xf32>
    %353 = arith.addf %347, %352 : vector<8x128xf32>
    %c9_379 = arith.constant 9 : index
    %c0_380 = arith.constant 0 : index
    %354 = tpu.strided_load %arg9[%c9_379, %c0_380] {strides = array<i32: 2, 1>} : memref<48x128xf32, #tpu.memory_space<vmem>>, vector<8x128xf32>
    %355 = arith.truncf %354 : vector<8x128xf32> to vector<8x128xbf16>
    %c3_381 = arith.constant 3 : index
    %c2_382 = arith.constant 2 : index
    %c0_383 = arith.constant 0 : index
    %c0_384 = arith.constant 0 : index
    %356 = vector.load %arg5[%c3_381, %c2_382, %c0_383, %c0_384] : memref<4x4x128x128xbf16, #tpu.memory_space<vmem>>, vector<1x1x128x128xbf16>
    %357 = vector.shape_cast %356 : vector<1x1x128x128xbf16> to vector<128x128xbf16>
    %cst_385 = arith.constant dense<0.000000e+00> : vector<8x128xf32>
    %358 = tpu.matmul %355, %357, %cst_385 {dimension_numbers = #tpu.dot_dimension_numbers<[1], [0], [0], [1], [0, 0, 1, 1], [], []>} : vector<8x128xbf16>, vector<128x128xbf16>, vector<8x128xf32> -> vector<8x128xf32>
    %359 = arith.addf %353, %358 : vector<8x128xf32>
    %c10_386 = arith.constant 10 : index
    %c0_387 = arith.constant 0 : index
    %360 = tpu.strided_load %arg9[%c10_386, %c0_387] {strides = array<i32: 2, 1>} : memref<48x128xf32, #tpu.memory_space<vmem>>, vector<8x128xf32>
    %361 = arith.truncf %360 : vector<8x128xf32> to vector<8x128xbf16>
    %c3_388 = arith.constant 3 : index
    %c3_389 = arith.constant 3 : index
    %c0_390 = arith.constant 0 : index
    %c0_391 = arith.constant 0 : index
    %362 = vector.load %arg5[%c3_388, %c3_389, %c0_390, %c0_391] : memref<4x4x128x128xbf16, #tpu.memory_space<vmem>>, vector<1x1x128x128xbf16>
    %363 = vector.shape_cast %362 : vector<1x1x128x128xbf16> to vector<128x128xbf16>
    %cst_392 = arith.constant dense<0.000000e+00> : vector<8x128xf32>
    %364 = tpu.matmul %361, %363, %cst_392 {dimension_numbers = #tpu.dot_dimension_numbers<[1], [0], [0], [1], [0, 0, 1, 1], [], []>} : vector<8x128xbf16>, vector<128x128xbf16>, vector<8x128xf32> -> vector<8x128xf32>
    %365 = arith.addf %359, %364 : vector<8x128xf32>
    %c3_393 = arith.constant 3 : index
    %c0_394 = arith.constant 0 : index
    %c0_395 = arith.constant 0 : index
    %366 = vector.load %arg6[%c3_393, %c0_394, %c0_395] : memref<4x1x128xf32, #tpu.memory_space<vmem>>, vector<1x1x128xf32>
    %367 = vector.shape_cast %366 : vector<1x1x128xf32> to vector<1x128xf32>
    %368 = vector.broadcast %367 : vector<1x128xf32> to vector<8x128xf32>
    %369 = arith.mulf %365, %368 : vector<8x128xf32>
    %c3_396 = arith.constant 3 : index
    %c0_397 = arith.constant 0 : index
    %c0_398 = arith.constant 0 : index
    %370 = vector.load %arg7[%c3_396, %c0_397, %c0_398] : memref<4x1x128xf32, #tpu.memory_space<vmem>>, vector<1x1x128xf32>
    %371 = vector.shape_cast %370 : vector<1x1x128xf32> to vector<1x128xf32>
    %372 = vector.broadcast %371 : vector<1x128xf32> to vector<8x128xf32>
    %373 = arith.addf %369, %372 : vector<8x128xf32>
    %374 = arith.addf %338, %373 : vector<8x128xf32>
    %cst_399 = arith.constant 2.000000e-01 : f32
    %375 = vector.broadcast %cst_399 : f32 to vector<8x128xf32>
    %376 = arith.mulf %375, %374 : vector<8x128xf32>
    %377 = arith.maximumf %374, %376 : vector<8x128xf32>
    %cst_400 = arith.constant 0.000000e+00 : f32
    %378 = vector.broadcast %cst_400 : f32 to vector<8x128xf32>
    %c0_401 = arith.constant 0 : index
    %c0_402 = arith.constant 0 : index
    %379 = vector.load %arg9[%c0_401, %c0_402] : memref<48x128xf32, #tpu.memory_space<vmem>>, vector<8x128xf32>
    tpu.vector_store %arg9[%c0_401, %c0_402], %378 {strides = array<i32>} : memref<48x128xf32, #tpu.memory_space<vmem>>, vector<8x128xf32>,
    %c16 = arith.constant 16 : index
    %c0_403 = arith.constant 0 : index
    %380 = vector.load %arg9[%c16, %c0_403] : memref<48x128xf32, #tpu.memory_space<vmem>>, vector<8x128xf32>
    tpu.vector_store %arg9[%c16, %c0_403], %378 {strides = array<i32>} : memref<48x128xf32, #tpu.memory_space<vmem>>, vector<8x128xf32>,
    %c8_404 = arith.constant 8 : index
    %c0_405 = arith.constant 0 : index
    %381 = vector.load %arg9[%c8_404, %c0_405] : memref<48x128xf32, #tpu.memory_space<vmem>>, vector<8x128xf32>
    tpu.vector_store %arg9[%c8_404, %c0_405], %377 {strides = array<i32>} : memref<48x128xf32, #tpu.memory_space<vmem>>, vector<8x128xf32>,
    %c7_406 = arith.constant 7 : index
    %c0_407 = arith.constant 0 : index
    %382 = vector.load %arg9[%c7_406, %c0_407] : memref<48x128xf32, #tpu.memory_space<vmem>>, vector<8x128xf32>
    %383 = arith.truncf %382 : vector<8x128xf32> to vector<8x128xbf16>
    %c7_408 = arith.constant 7 : index
    %c0_409 = arith.constant 0 : index
    %c0_410 = arith.constant 0 : index
    %c0_411 = arith.constant 0 : index
    %384 = vector.load %arg2[%c7_408, %c0_409, %c0_410, %c0_411] : memref<10x3x128x128xbf16, #tpu.memory_space<vmem>>, vector<1x1x128x128xbf16>
    %385 = vector.shape_cast %384 : vector<1x1x128x128xbf16> to vector<128x128xbf16>
    %cst_412 = arith.constant dense<0.000000e+00> : vector<8x128xf32>
    %386 = tpu.matmul %383, %385, %cst_412 {dimension_numbers = #tpu.dot_dimension_numbers<[1], [0], [0], [1], [0, 0, 1, 1], [], []>} : vector<8x128xbf16>, vector<128x128xbf16>, vector<8x128xf32> -> vector<8x128xf32>
    %c8_413 = arith.constant 8 : index
    %c0_414 = arith.constant 0 : index
    %387 = vector.load %arg9[%c8_413, %c0_414] : memref<48x128xf32, #tpu.memory_space<vmem>>, vector<8x128xf32>
    %388 = arith.truncf %387 : vector<8x128xf32> to vector<8x128xbf16>
    %c7_415 = arith.constant 7 : index
    %c1_416 = arith.constant 1 : index
    %c0_417 = arith.constant 0 : index
    %c0_418 = arith.constant 0 : index
    %389 = vector.load %arg2[%c7_415, %c1_416, %c0_417, %c0_418] : memref<10x3x128x128xbf16, #tpu.memory_space<vmem>>, vector<1x1x128x128xbf16>
    %390 = vector.shape_cast %389 : vector<1x1x128x128xbf16> to vector<128x128xbf16>
    %cst_419 = arith.constant dense<0.000000e+00> : vector<8x128xf32>
    %391 = tpu.matmul %388, %390, %cst_419 {dimension_numbers = #tpu.dot_dimension_numbers<[1], [0], [0], [1], [0, 0, 1, 1], [], []>} : vector<8x128xbf16>, vector<128x128xbf16>, vector<8x128xf32> -> vector<8x128xf32>
    %392 = arith.addf %386, %391 : vector<8x128xf32>
    %c9_420 = arith.constant 9 : index
    %c0_421 = arith.constant 0 : index
    %393 = vector.load %arg9[%c9_420, %c0_421] : memref<48x128xf32, #tpu.memory_space<vmem>>, vector<8x128xf32>
    %394 = arith.truncf %393 : vector<8x128xf32> to vector<8x128xbf16>
    %c7_422 = arith.constant 7 : index
    %c2_423 = arith.constant 2 : index
    %c0_424 = arith.constant 0 : index
    %c0_425 = arith.constant 0 : index
    %395 = vector.load %arg2[%c7_422, %c2_423, %c0_424, %c0_425] : memref<10x3x128x128xbf16, #tpu.memory_space<vmem>>, vector<1x1x128x128xbf16>
    %396 = vector.shape_cast %395 : vector<1x1x128x128xbf16> to vector<128x128xbf16>
    %cst_426 = arith.constant dense<0.000000e+00> : vector<8x128xf32>
    %397 = tpu.matmul %394, %396, %cst_426 {dimension_numbers = #tpu.dot_dimension_numbers<[1], [0], [0], [1], [0, 0, 1, 1], [], []>} : vector<8x128xbf16>, vector<128x128xbf16>, vector<8x128xf32> -> vector<8x128xf32>
    %398 = arith.addf %392, %397 : vector<8x128xf32>
    %c7_427 = arith.constant 7 : index
    %c0_428 = arith.constant 0 : index
    %c0_429 = arith.constant 0 : index
    %399 = vector.load %arg3[%c7_427, %c0_428, %c0_429] : memref<10x1x128xf32, #tpu.memory_space<vmem>>, vector<1x1x128xf32>
    %400 = vector.shape_cast %399 : vector<1x1x128xf32> to vector<1x128xf32>
    %401 = vector.broadcast %400 : vector<1x128xf32> to vector<8x128xf32>
    %402 = arith.mulf %398, %401 : vector<8x128xf32>
    %c7_430 = arith.constant 7 : index
    %c0_431 = arith.constant 0 : index
    %c0_432 = arith.constant 0 : index
    %403 = vector.load %arg4[%c7_430, %c0_431, %c0_432] : memref<10x1x128xf32, #tpu.memory_space<vmem>>, vector<1x1x128xf32>
    %404 = vector.shape_cast %403 : vector<1x1x128xf32> to vector<1x128xf32>
    %405 = vector.broadcast %404 : vector<1x128xf32> to vector<8x128xf32>
    %406 = arith.addf %402, %405 : vector<8x128xf32>
    %407 = arith.addf %406, %377 : vector<8x128xf32>
    %cst_433 = arith.constant 2.000000e-01 : f32
    %408 = vector.broadcast %cst_433 : f32 to vector<8x128xf32>
    %409 = arith.mulf %408, %407 : vector<8x128xf32>
    %410 = arith.maximumf %407, %409 : vector<8x128xf32>
    %cst_434 = arith.constant 0.000000e+00 : f32
    %411 = vector.broadcast %cst_434 : f32 to vector<8x128xf32>
    %c0_435 = arith.constant 0 : index
    %c0_436 = arith.constant 0 : index
    %412 = vector.load %arg9[%c0_435, %c0_436] : memref<48x128xf32, #tpu.memory_space<vmem>>, vector<8x128xf32>
    tpu.vector_store %arg9[%c0_435, %c0_436], %411 {strides = array<i32>} : memref<48x128xf32, #tpu.memory_space<vmem>>, vector<8x128xf32>,
    %c16_437 = arith.constant 16 : index
    %c0_438 = arith.constant 0 : index
    %413 = vector.load %arg9[%c16_437, %c0_438] : memref<48x128xf32, #tpu.memory_space<vmem>>, vector<8x128xf32>
    tpu.vector_store %arg9[%c16_437, %c0_438], %411 {strides = array<i32>} : memref<48x128xf32, #tpu.memory_space<vmem>>, vector<8x128xf32>,
    %c8_439 = arith.constant 8 : index
    %c0_440 = arith.constant 0 : index
    %414 = vector.load %arg9[%c8_439, %c0_440] : memref<48x128xf32, #tpu.memory_space<vmem>>, vector<8x128xf32>
    tpu.vector_store %arg9[%c8_439, %c0_440], %410 {strides = array<i32>} : memref<48x128xf32, #tpu.memory_space<vmem>>, vector<8x128xf32>,
    %c7_441 = arith.constant 7 : index
    %c0_442 = arith.constant 0 : index
    %415 = vector.load %arg9[%c7_441, %c0_442] : memref<48x128xf32, #tpu.memory_space<vmem>>, vector<8x128xf32>
    %416 = arith.truncf %415 : vector<8x128xf32> to vector<8x128xbf16>
    %c8_443 = arith.constant 8 : index
    %c0_444 = arith.constant 0 : index
    %c0_445 = arith.constant 0 : index
    %c0_446 = arith.constant 0 : index
    %417 = vector.load %arg2[%c8_443, %c0_444, %c0_445, %c0_446] : memref<10x3x128x128xbf16, #tpu.memory_space<vmem>>, vector<1x1x128x128xbf16>
    %418 = vector.shape_cast %417 : vector<1x1x128x128xbf16> to vector<128x128xbf16>
    %cst_447 = arith.constant dense<0.000000e+00> : vector<8x128xf32>
    %419 = tpu.matmul %416, %418, %cst_447 {dimension_numbers = #tpu.dot_dimension_numbers<[1], [0], [0], [1], [0, 0, 1, 1], [], []>} : vector<8x128xbf16>, vector<128x128xbf16>, vector<8x128xf32> -> vector<8x128xf32>
    %c8_448 = arith.constant 8 : index
    %c0_449 = arith.constant 0 : index
    %420 = vector.load %arg9[%c8_448, %c0_449] : memref<48x128xf32, #tpu.memory_space<vmem>>, vector<8x128xf32>
    %421 = arith.truncf %420 : vector<8x128xf32> to vector<8x128xbf16>
    %c8_450 = arith.constant 8 : index
    %c1_451 = arith.constant 1 : index
    %c0_452 = arith.constant 0 : index
    %c0_453 = arith.constant 0 : index
    %422 = vector.load %arg2[%c8_450, %c1_451, %c0_452, %c0_453] : memref<10x3x128x128xbf16, #tpu.memory_space<vmem>>, vector<1x1x128x128xbf16>
    %423 = vector.shape_cast %422 : vector<1x1x128x128xbf16> to vector<128x128xbf16>
    %cst_454 = arith.constant dense<0.000000e+00> : vector<8x128xf32>
    %424 = tpu.matmul %421, %423, %cst_454 {dimension_numbers = #tpu.dot_dimension_numbers<[1], [0], [0], [1], [0, 0, 1, 1], [], []>} : vector<8x128xbf16>, vector<128x128xbf16>, vector<8x128xf32> -> vector<8x128xf32>
    %425 = arith.addf %419, %424 : vector<8x128xf32>
    %c9_455 = arith.constant 9 : index
    %c0_456 = arith.constant 0 : index
    %426 = vector.load %arg9[%c9_455, %c0_456] : memref<48x128xf32, #tpu.memory_space<vmem>>, vector<8x128xf32>
    %427 = arith.truncf %426 : vector<8x128xf32> to vector<8x128xbf16>
    %c8_457 = arith.constant 8 : index
    %c2_458 = arith.constant 2 : index
    %c0_459 = arith.constant 0 : index
    %c0_460 = arith.constant 0 : index
    %428 = vector.load %arg2[%c8_457, %c2_458, %c0_459, %c0_460] : memref<10x3x128x128xbf16, #tpu.memory_space<vmem>>, vector<1x1x128x128xbf16>
    %429 = vector.shape_cast %428 : vector<1x1x128x128xbf16> to vector<128x128xbf16>
    %cst_461 = arith.constant dense<0.000000e+00> : vector<8x128xf32>
    %430 = tpu.matmul %427, %429, %cst_461 {dimension_numbers = #tpu.dot_dimension_numbers<[1], [0], [0], [1], [0, 0, 1, 1], [], []>} : vector<8x128xbf16>, vector<128x128xbf16>, vector<8x128xf32> -> vector<8x128xf32>
    %431 = arith.addf %425, %430 : vector<8x128xf32>
    %c8_462 = arith.constant 8 : index
    %c0_463 = arith.constant 0 : index
    %c0_464 = arith.constant 0 : index
    %432 = vector.load %arg3[%c8_462, %c0_463, %c0_464] : memref<10x1x128xf32, #tpu.memory_space<vmem>>, vector<1x1x128xf32>
    %433 = vector.shape_cast %432 : vector<1x1x128xf32> to vector<1x128xf32>
    %434 = vector.broadcast %433 : vector<1x128xf32> to vector<8x128xf32>
    %435 = arith.mulf %431, %434 : vector<8x128xf32>
    %c8_465 = arith.constant 8 : index
    %c0_466 = arith.constant 0 : index
    %c0_467 = arith.constant 0 : index
    %436 = vector.load %arg4[%c8_465, %c0_466, %c0_467] : memref<10x1x128xf32, #tpu.memory_space<vmem>>, vector<1x1x128xf32>
    %437 = vector.shape_cast %436 : vector<1x1x128xf32> to vector<1x128xf32>
    %438 = vector.broadcast %437 : vector<1x128xf32> to vector<8x128xf32>
    %439 = arith.addf %435, %438 : vector<8x128xf32>
    %440 = arith.addf %439, %410 : vector<8x128xf32>
    %cst_468 = arith.constant 2.000000e-01 : f32
    %441 = vector.broadcast %cst_468 : f32 to vector<8x128xf32>
    %442 = arith.mulf %441, %440 : vector<8x128xf32>
    %443 = arith.maximumf %440, %442 : vector<8x128xf32>
    %cst_469 = arith.constant 0.000000e+00 : f32
    %444 = vector.broadcast %cst_469 : f32 to vector<8x128xf32>
    %c0_470 = arith.constant 0 : index
    %c0_471 = arith.constant 0 : index
    %445 = vector.load %arg9[%c0_470, %c0_471] : memref<48x128xf32, #tpu.memory_space<vmem>>, vector<8x128xf32>
    tpu.vector_store %arg9[%c0_470, %c0_471], %444 {strides = array<i32>} : memref<48x128xf32, #tpu.memory_space<vmem>>, vector<8x128xf32>,
    %c16_472 = arith.constant 16 : index
    %c0_473 = arith.constant 0 : index
    %446 = vector.load %arg9[%c16_472, %c0_473] : memref<48x128xf32, #tpu.memory_space<vmem>>, vector<8x128xf32>
    tpu.vector_store %arg9[%c16_472, %c0_473], %444 {strides = array<i32>} : memref<48x128xf32, #tpu.memory_space<vmem>>, vector<8x128xf32>,
    %c8_474 = arith.constant 8 : index
    %c0_475 = arith.constant 0 : index
    %447 = vector.load %arg9[%c8_474, %c0_475] : memref<48x128xf32, #tpu.memory_space<vmem>>, vector<8x128xf32>
    tpu.vector_store %arg9[%c8_474, %c0_475], %443 {strides = array<i32>} : memref<48x128xf32, #tpu.memory_space<vmem>>, vector<8x128xf32>,
    %c7_476 = arith.constant 7 : index
    %c0_477 = arith.constant 0 : index
    %448 = vector.load %arg9[%c7_476, %c0_477] : memref<48x128xf32, #tpu.memory_space<vmem>>, vector<8x128xf32>
    %449 = arith.truncf %448 : vector<8x128xf32> to vector<8x128xbf16>
    %c9_478 = arith.constant 9 : index
    %c0_479 = arith.constant 0 : index
    %c0_480 = arith.constant 0 : index
    %c0_481 = arith.constant 0 : index
    %450 = vector.load %arg2[%c9_478, %c0_479, %c0_480, %c0_481] : memref<10x3x128x128xbf16, #tpu.memory_space<vmem>>, vector<1x1x128x128xbf16>
    %451 = vector.shape_cast %450 : vector<1x1x128x128xbf16> to vector<128x128xbf16>
    %cst_482 = arith.constant dense<0.000000e+00> : vector<8x128xf32>
    %452 = tpu.matmul %449, %451, %cst_482 {dimension_numbers = #tpu.dot_dimension_numbers<[1], [0], [0], [1], [0, 0, 1, 1], [], []>} : vector<8x128xbf16>, vector<128x128xbf16>, vector<8x128xf32> -> vector<8x128xf32>
    %c8_483 = arith.constant 8 : index
    %c0_484 = arith.constant 0 : index
    %453 = vector.load %arg9[%c8_483, %c0_484] : memref<48x128xf32, #tpu.memory_space<vmem>>, vector<8x128xf32>
    %454 = arith.truncf %453 : vector<8x128xf32> to vector<8x128xbf16>
    %c9_485 = arith.constant 9 : index
    %c1_486 = arith.constant 1 : index
    %c0_487 = arith.constant 0 : index
    %c0_488 = arith.constant 0 : index
    %455 = vector.load %arg2[%c9_485, %c1_486, %c0_487, %c0_488] : memref<10x3x128x128xbf16, #tpu.memory_space<vmem>>, vector<1x1x128x128xbf16>
    %456 = vector.shape_cast %455 : vector<1x1x128x128xbf16> to vector<128x128xbf16>
    %cst_489 = arith.constant dense<0.000000e+00> : vector<8x128xf32>
    %457 = tpu.matmul %454, %456, %cst_489 {dimension_numbers = #tpu.dot_dimension_numbers<[1], [0], [0], [1], [0, 0, 1, 1], [], []>} : vector<8x128xbf16>, vector<128x128xbf16>, vector<8x128xf32> -> vector<8x128xf32>
    %458 = arith.addf %452, %457 : vector<8x128xf32>
    %c9_490 = arith.constant 9 : index
    %c0_491 = arith.constant 0 : index
    %459 = vector.load %arg9[%c9_490, %c0_491] : memref<48x128xf32, #tpu.memory_space<vmem>>, vector<8x128xf32>
    %460 = arith.truncf %459 : vector<8x128xf32> to vector<8x128xbf16>
    %c9_492 = arith.constant 9 : index
    %c2_493 = arith.constant 2 : index
    %c0_494 = arith.constant 0 : index
    %c0_495 = arith.constant 0 : index
    %461 = vector.load %arg2[%c9_492, %c2_493, %c0_494, %c0_495] : memref<10x3x128x128xbf16, #tpu.memory_space<vmem>>, vector<1x1x128x128xbf16>
    %462 = vector.shape_cast %461 : vector<1x1x128x128xbf16> to vector<128x128xbf16>
    %cst_496 = arith.constant dense<0.000000e+00> : vector<8x128xf32>
    %463 = tpu.matmul %460, %462, %cst_496 {dimension_numbers = #tpu.dot_dimension_numbers<[1], [0], [0], [1], [0, 0, 1, 1], [], []>} : vector<8x128xbf16>, vector<128x128xbf16>, vector<8x128xf32> -> vector<8x128xf32>
    %464 = arith.addf %458, %463 : vector<8x128xf32>
    %c9_497 = arith.constant 9 : index
    %c0_498 = arith.constant 0 : index
    %c0_499 = arith.constant 0 : index
    %465 = vector.load %arg3[%c9_497, %c0_498, %c0_499] : memref<10x1x128xf32, #tpu.memory_space<vmem>>, vector<1x1x128xf32>
    %466 = vector.shape_cast %465 : vector<1x1x128xf32> to vector<1x128xf32>
    %467 = vector.broadcast %466 : vector<1x128xf32> to vector<8x128xf32>
    %468 = arith.mulf %464, %467 : vector<8x128xf32>
    %c9_500 = arith.constant 9 : index
    %c0_501 = arith.constant 0 : index
    %c0_502 = arith.constant 0 : index
    %469 = vector.load %arg4[%c9_500, %c0_501, %c0_502] : memref<10x1x128xf32, #tpu.memory_space<vmem>>, vector<1x1x128xf32>
    %470 = vector.shape_cast %469 : vector<1x1x128xf32> to vector<1x128xf32>
    %471 = vector.broadcast %470 : vector<1x128xf32> to vector<8x128xf32>
    %472 = arith.addf %468, %471 : vector<8x128xf32>
    %473 = arith.addf %472, %377 : vector<8x128xf32>
    %cst_503 = arith.constant 0.000000e+00 : f32
    %474 = vector.broadcast %cst_503 : f32 to vector<8x128xf32>
    %475 = arith.maximumf %473, %474 : vector<8x128xf32>
    %c0_504 = arith.constant 0 : index
    %c0_505 = arith.constant 0 : index
    %c0_506 = arith.constant 0 : index
    %476 = vector.load %arg8[%c0_504, %c0_505, %c0_506] : memref<1x8x128xf32, #tpu.memory_space<vmem>>, vector<1x8x128xf32>
    %477 = vector.shape_cast %476 : vector<1x8x128xf32> to vector<8x128xf32>
    %478 = vector.shape_cast %475 : vector<8x128xf32> to vector<1x8x128xf32>
    tpu.vector_store %arg8[%c0_504, %c0_505, %c0_506], %478 {strides = array<i32>} : memref<1x8x128xf32, #tpu.memory_space<vmem>>, vector<1x8x128xf32>,
    return
  }
  func.func @transform_0(%arg0: i32) -> (i32, i32, i32) {
    %c0_i32 = arith.constant 0 : i32
    %c0_i32_0 = arith.constant 0 : i32
    %c0_i32_1 = arith.constant 0 : i32
    return %arg0, %c0_i32, %c0_i32_0 : i32, i32, i32
  }
  func.func @transform_1(%arg0: i32) -> (i32, i32, i32, i32) {
    %c0_i32 = arith.constant 0 : i32
    %c0_i32_0 = arith.constant 0 : i32
    %c0_i32_1 = arith.constant 0 : i32
    %c0_i32_2 = arith.constant 0 : i32
    %c0_i32_3 = arith.constant 0 : i32
    return %c0_i32, %c0_i32_0, %c0_i32_1, %c0_i32_2 : i32, i32, i32, i32
  }
  func.func @transform_2(%arg0: i32) -> (i32, i32, i32) {
    %c0_i32 = arith.constant 0 : i32
    %c0_i32_0 = arith.constant 0 : i32
    %c0_i32_1 = arith.constant 0 : i32
    %c0_i32_2 = arith.constant 0 : i32
    return %c0_i32, %c0_i32_0, %c0_i32_1 : i32, i32, i32
  }
  func.func @transform_3(%arg0: i32) -> (i32, i32, i32) {
    %c0_i32 = arith.constant 0 : i32
    %c0_i32_0 = arith.constant 0 : i32
    %c0_i32_1 = arith.constant 0 : i32
    %c0_i32_2 = arith.constant 0 : i32
    return %c0_i32, %c0_i32_0, %c0_i32_1 : i32, i32, i32
  }
  func.func @transform_4(%arg0: i32) -> (i32, i32, i32, i32) {
    %c0_i32 = arith.constant 0 : i32
    %c0_i32_0 = arith.constant 0 : i32
    %c0_i32_1 = arith.constant 0 : i32
    %c0_i32_2 = arith.constant 0 : i32
    %c0_i32_3 = arith.constant 0 : i32
    return %c0_i32, %c0_i32_0, %c0_i32_1, %c0_i32_2 : i32, i32, i32, i32
  }
  func.func @transform_5(%arg0: i32) -> (i32, i32, i32) {
    %c0_i32 = arith.constant 0 : i32
    %c0_i32_0 = arith.constant 0 : i32
    %c0_i32_1 = arith.constant 0 : i32
    %c0_i32_2 = arith.constant 0 : i32
    return %c0_i32, %c0_i32_0, %c0_i32_1 : i32, i32, i32
  }
  func.func @transform_6(%arg0: i32) -> (i32, i32, i32) {
    %c0_i32 = arith.constant 0 : i32
    %c0_i32_0 = arith.constant 0 : i32
    %c0_i32_1 = arith.constant 0 : i32
    %c0_i32_2 = arith.constant 0 : i32
    return %c0_i32, %c0_i32_0, %c0_i32_1 : i32, i32, i32
  }
  func.func @transform_7(%arg0: i32) -> (i32, i32, i32) {
    %c0_i32 = arith.constant 0 : i32
    %c0_i32_0 = arith.constant 0 : i32
    %c0_i32_1 = arith.constant 0 : i32
    return %arg0, %c0_i32, %c0_i32_0 : i32, i32, i32
  }
}

</mosaic_0001>

<llo_original>
// kernel: audio_encoder_forward.1
$region0: #{audio_encoder_forward.1}
  #allocation0 [shape = 'u32[]', space=smem, size = 0x4, offset = 0x4, fixed_abs, tag = 'smem constant byte address 0x4 - core index']
  #allocation1 [shape = 'u32[144,128]{1,0:T(1,128)}', space=vmem, size = 0x12000, scoped, tag = 'internal scratch']
  #allocation2 [shape = 'f32[48,128]{1,0:T(8,128)}', space=vmem, size = 0x6000, scoped, tag = 'scratch operand']
  %s0 = inlined_call_operand.vmem [shape: f32[2,32,128], index: 0, kind: input, shape index: {}]
  %s1 = inlined_call_operand.hbm [shape: bf16[10,3,128,128], index: 1, kind: input, shape index: {}]
  %s2 = inlined_call_operand.vmem [shape: f32[10,1,128], index: 2, kind: input, shape index: {}]
  %s3 = inlined_call_operand.vmem [shape: f32[10,1,128], index: 3, kind: input, shape index: {}]
  %s4 = inlined_call_operand.hbm [shape: bf16[4,4,128,128], index: 4, kind: input, shape index: {}]
  %s5 = inlined_call_operand.vmem [shape: f32[4,1,128], index: 5, kind: input, shape index: {}]
  %s6 = inlined_call_operand.vmem [shape: f32[4,1,128], index: 6, kind: input, shape index: {}]
  %s7 = inlined_call_operand.vmem [shape: f32[2,8,128], index: 7, kind: output, shape index: {}]
  %s8 = sld [smem:[#allocation0]]
  $region69: #{audio_encoder_forward.1} parent=0
    _
  %s10 = ssub.s32 1, %s8
  %s11 = scalar_select 0, %s10, %s8
  $region1: #{audio_encoder_forward.1} parent=0
    #allocation3 [shape = 'u8[983040]{0}', space=vmem, size = 0xf0000, scoped, tag = 'input window, operand 1, single buffered']
    #allocation4 [shape = 's32[2]{0}', space=sflag, size = 0x8, scoped, tag = 'scoped memory for audio_encoder_forward.1']
    #allocation5 [shape = 'u8[524288]{0}', space=vmem, size = 0x80000, scoped, tag = 'input window, operand 4, single buffered']
    #allocation6 [shape = 's32[1]{0}', space=sflag, size = 0x4, scoped, tag = 'scoped memory for audio_encoder_forward.1']
    %12 = vsyncpa [#allocation4], 0
    %13 = vsyncpa [#allocation6], 0
    loop: start=0, step=1, limit=4
    $region2: #{audio_encoder_forward.1} parent=1 // loop_pre_header
      _
    $region3: #{audio_encoder_forward.1} parent=1 // loop_header
      %s15 = sphi 0, %s19
      %p16 = scmp.ge.s32.totalorder %s15, 4
      %s25 = sphi 0, %s27
      %s28 = sphi 0, %s25
      %s29 = sphi 0, %s28
      %s45 = sphi 0, %s29
      %s49 = sphi 0, %s49
      %s51 = sphi 0, %s49
      %s52 = sphi 0, %s51
      %s66 = sphi 0, %s52
      %s70 = sphi 0, %s70
      %s72 = sphi 0, %s70
      %s73 = sphi 0, %s72
      %s87 = sphi 0, %s73
      %s91 = sphi 0, %s91
      %s93 = sphi 0, %s91
      %s94 = sphi 0, %s93
      %s108 = sphi 0, %s94
      %s112 = sphi 0, %s112
      %s114 = sphi 0, %s112
      %s115 = sphi 0, %s114
      %s129 = sphi 0, %s115
      %s133 = sphi 0, %s133
      %s135 = sphi 0, %s133
      %s136 = sphi 0, %s135
      %s150 = sphi 0, %s136
      %s154 = sphi 0, %s154
      %s156 = sphi 0, %s154
      %s157 = sphi 0, %s156
      %s171 = sphi 0, %s157
      %s177 = sphi 0, %s179
      %s180 = sphi 0, %s177
      %s181 = sphi 0, %s180
      %s197 = sphi 0, %s181
    $region4: #{audio_encoder_forward.1} parent=1 // loop_header_branch
      %18 = sbr.rel (%p16) target = $region8
    $region5: #{audio_encoder_forward.1} parent=1 // loop_body
      %s20 = ssub.s32 %s15, 1
      %s21 = ssub.s32 %s15, 2
      %s22 = sadd.s32 %s15, 1
      %s23 = ssub.s32 %s15, %s22
      %p24 = scmp.eq.s32.totalorder %s23, 0
      %s26 = sadd.s32 %s25, 1
      %s27 = scalar_select %p24, %s25, %s26
      %p30 = pneg %p24
      %p31 = scmp.eq.s32.totalorder %s15, 1
      %p32 = por %p30, %p31
      %p33 = scmp.ne.s32.totalorder %s25, %s28
      %p34 = scmp.eq.s32.totalorder %s15, 0
      %p35 = por %p33, %p34
      %p36 = scmp.ne.s32.totalorder %s25, %s28
      %p37 = scmp.eq.s32.totalorder %s20, 1
      %p38 = por %p36, %p37
      %p39 = scmp.ne.s32.totalorder %s28, %s29
      %p40 = scmp.eq.s32.totalorder %s20, 0
      %p41 = por %p39, %p40
      %p42 = scmp.ne.s32.totalorder %s28, %s29
      %p43 = scmp.eq.s32.totalorder %s21, 1
      %p44 = por %p42, %p43
      %p46 = scmp.ne.s32.totalorder %s29, %s45
      %p47 = scmp.eq.s32.totalorder %s21, 0
      %p48 = por %p46, %p47
      %s50 = sadd.s32 %s49, 1
      %p53 = scmp.eq.s32.totalorder %s15, 1
      %p54 = scmp.ne.s32.totalorder %s49, %s51
      %p55 = scmp.eq.s32.totalorder %s15, 0
      %p56 = por %p54, %p55
      %p57 = scmp.ne.s32.totalorder %s49, %s51
      %p58 = scmp.eq.s32.totalorder %s20, 1
      %p59 = por %p57, %p58
      %p60 = scmp.ne.s32.totalorder %s51, %s52
      %p61 = scmp.eq.s32.totalorder %s20, 0
      %p62 = por %p60, %p61
      %p63 = scmp.ne.s32.totalorder %s51, %s52
      %p64 = scmp.eq.s32.totalorder %s21, 1
      %p65 = por %p63, %p64
      %p67 = scmp.ne.s32.totalorder %s52, %s66
      %p68 = scmp.eq.s32.totalorder %s21, 0
      %p69 = por %p67, %p68
      %s71 = sadd.s32 %s70, 1
      %p74 = scmp.eq.s32.totalorder %s15, 1
      %p75 = scmp.ne.s32.totalorder %s70, %s72
      %p76 = scmp.eq.s32.totalorder %s15, 0
      %p77 = por %p75, %p76
      %p78 = scmp.ne.s32.totalorder %s70, %s72
      %p79 = scmp.eq.s32.totalorder %s20, 1
      %p80 = por %p78, %p79
      %p81 = scmp.ne.s32.totalorder %s72, %s73
      %p82 = scmp.eq.s32.totalorder %s20, 0
      %p83 = por %p81, %p82
      %p84 = scmp.ne.s32.totalorder %s72, %s73
      %p85 = scmp.eq.s32.totalorder %s21, 1
      %p86 = por %p84, %p85
      %p88 = scmp.ne.s32.totalorder %s73, %s87
      %p89 = scmp.eq.s32.totalorder %s21, 0
      %p90 = por %p88, %p89
      %s92 = sadd.s32 %s91, 1
      %p95 = scmp.eq.s32.totalorder %s15, 1
      %p96 = scmp.ne.s32.totalorder %s91, %s93
      %p97 = scmp.eq.s32.totalorder %s15, 0
      %p98 = por %p96, %p97
      %p99 = scmp.ne.s32.totalorder %s91, %s93
      %p100 = scmp.eq.s32.totalorder %s20, 1
      %p101 = por %p99, %p100
      %p102 = scmp.ne.s32.totalorder %s93, %s94
      %p103 = scmp.eq.s32.totalorder %s20, 0
      %p104 = por %p102, %p103
      %p105 = scmp.ne.s32.totalorder %s93, %s94
      %p106 = scmp.eq.s32.totalorder %s21, 1
      %p107 = por %p105, %p106
      %p109 = scmp.ne.s32.totalorder %s94, %s108
      %p110 = scmp.eq.s32.totalorder %s21, 0
      %p111 = por %p109, %p110
      %s113 = sadd.s32 %s112, 1
      %p116 = scmp.eq.s32.totalorder %s15, 1
      %p117 = scmp.ne.s32.totalorder %s112, %s114
      %p118 = scmp.eq.s32.totalorder %s15, 0
      %p119 = por %p117, %p118
      %p120 = scmp.ne.s32.totalorder %s112, %s114
      %p121 = scmp.eq.s32.totalorder %s20, 1
      %p122 = por %p120, %p121
      %p123 = scmp.ne.s32.totalorder %s114, %s115
      %p124 = scmp.eq.s32.totalorder %s20, 0
      %p125 = por %p123, %p124
      %p126 = scmp.ne.s32.totalorder %s114, %s115
      %p127 = scmp.eq.s32.totalorder %s21, 1
      %p128 = por %p126, %p127
      %p130 = scmp.ne.s32.totalorder %s115, %s129
      %p131 = scmp.eq.s32.totalorder %s21, 0
      %p132 = por %p130, %p131
      %s134 = sadd.s32 %s133, 1
      %p137 = scmp.eq.s32.totalorder %s15, 1
      %p138 = scmp.ne.s32.totalorder %s133, %s135
      %p139 = scmp.eq.s32.totalorder %s15, 0
      %p140 = por %p138, %p139
      %p141 = scmp.ne.s32.totalorder %s133, %s135
      %p142 = scmp.eq.s32.totalorder %s20, 1
      %p143 = por %p141, %p142
      %p144 = scmp.ne.s32.totalorder %s135, %s136
      %p145 = scmp.eq.s32.totalorder %s20, 0
      %p146 = por %p144, %p145
      %p147 = scmp.ne.s32.totalorder %s135, %s136
      %p148 = scmp.eq.s32.totalorder %s21, 1
      %p149 = por %p147, %p148
      %p151 = scmp.ne.s32.totalorder %s136, %s150
      %p152 = scmp.eq.s32.totalorder %s21, 0
      %p153 = por %p151, %p152
      %s155 = sadd.s32 %s154, 1
      %p158 = scmp.eq.s32.totalorder %s15, 1
      %p159 = scmp.ne.s32.totalorder %s154, %s156
      %p160 = scmp.eq.s32.totalorder %s15, 0
      %p161 = por %p159, %p160
      %p162 = scmp.ne.s32.totalorder %s154, %s156
      %p163 = scmp.eq.s32.totalorder %s20, 1
      %p164 = por %p162, %p163
      %p165 = scmp.ne.s32.totalorder %s156, %s157
      %p166 = scmp.eq.s32.totalorder %s20, 0
      %p167 = por %p165, %p166
      %p168 = scmp.ne.s32.totalorder %s156, %s157
      %p169 = scmp.eq.s32.totalorder %s21, 1
      %p170 = por %p168, %p169
      %p172 = scmp.ne.s32.totalorder %s157, %s171
      %p173 = scmp.eq.s32.totalorder %s21, 0
      %p174 = por %p172, %p173
      %s175 = ssub.s32 %s15, %s22
      %p176 = scmp.eq.s32.totalorder %s175, 0
      %s178 = sadd.s32 %s177, 1
      %s179 = scalar_select %p176, %s177, %s178
      %p182 = pneg %p176
      %p183 = scmp.eq.s32.totalorder %s15, 1
      %p184 = por %p182, %p183
      %p185 = scmp.ne.s32.totalorder %s177, %s180
      %p186 = scmp.eq.s32.totalorder %s15, 0
      %p187 = por %p185, %p186
      %p188 = scmp.ne.s32.totalorder %s177, %s180
      %p189 = scmp.eq.s32.totalorder %s20, 1
      %p190 = por %p188, %p189
      %p191 = scmp.ne.s32.totalorder %s180, %s181
      %p192 = scmp.eq.s32.totalorder %s20, 0
      %p193 = por %p191, %p192
      %p194 = scmp.ne.s32.totalorder %s180, %s181
      %p195 = scmp.eq.s32.totalorder %s21, 1
      %p196 = por %p194, %p195
      %p198 = scmp.ne.s32.totalorder %s181, %s197
      %p199 = scmp.eq.s32.totalorder %s21, 0
      %p200 = por %p198, %p199
      %p201 = scmp.le.s32.totalorder 1, %s15
      %p202 = scmp.lt.s32.totalorder %s15, 3
      %p203 = pnand %p201, %p202
      %p204 = pneg %p203
      // Predicated region
      $region9: #{audio_encoder_forward.1} parent=5 // pred_check
        _
      $region10: #{audio_encoder_forward.1} parent=5 // pred_check_branch
        %206 = sbr.rel (%p203) target = $region12
      $region11: #{audio_encoder_forward.1} parent=5 // pred_region
        %s207 = ssub.s32 %s15, 1
        // Predicated region
        $region13: #{audio_encoder_forward.1} parent=11 // pred_check
          %p208 = pneg %p62
        $region14: #{audio_encoder_forward.1} parent=11 // pred_check_branch
          %210 = sbr.rel (%p208) target = $region16
        $region15: #{audio_encoder_forward.1} parent=11 // pred_region
          %s212 = ssub.s32 30720, 30720
          %213 = vsyncadd [#allocation4], %s212
          %s214 = sshll.u32 [#allocation3], 4
          %s215 = int_to_ptr.vmem [resolvable:$true] %s214
          %220 = dma.hbm_to_vmem [thread:$0]  %s1, 30720, %s215, [#allocation4], 64, 64, 4
        $region16: #{audio_encoder_forward.1} parent=11 // pred_fallthru
          _
        // Predicated region
        $region17: #{audio_encoder_forward.1} parent=11 // pred_check
          %p221 = pneg %p83
        $region18: #{audio_encoder_forward.1} parent=11 // pred_check_branch
          %223 = sbr.rel (%p221) target = $region20
        $region19: #{audio_encoder_forward.1} parent=11 // pred_region
          _
        $region20: #{audio_encoder_forward.1} parent=11 // pred_fallthru
          _
        // Predicated region
        $region21: #{audio_encoder_forward.1} parent=11 // pred_check
          %p224 = pneg %p104
        $region22: #{audio_encoder_forward.1} parent=11 // pred_check_branch
          %226 = sbr.rel (%p224) target = $region24
        $region23: #{audio_encoder_forward.1} parent=11 // pred_region
          _
        $region24: #{audio_encoder_forward.1} parent=11 // pred_fallthru
          _
        // Predicated region
        $region25: #{audio_encoder_forward.1} parent=11 // pred_check
          %p227 = pneg %p125
        $region26: #{audio_encoder_forward.1} parent=11 // pred_check_branch
          %229 = sbr.rel (%p227) target = $region28
        $region27: #{audio_encoder_forward.1} parent=11 // pred_region
          %s231 = ssub.s32 16384, 16384
          %232 = vsyncadd [#allocation6], %s231
          %s233 = sshll.u32 [#allocation5], 4
          %s234 = int_to_ptr.vmem [resolvable:$true] %s233
          %239 = dma.hbm_to_vmem [thread:$0]  %s4, 16384, %s234, [#allocation6], 64, 64, 4
        $region28: #{audio_encoder_forward.1} parent=11 // pred_fallthru
          _
        // Predicated region
        $region29: #{audio_encoder_forward.1} parent=11 // pred_check
          %p240 = pneg %p146
        $region30: #{audio_encoder_forward.1} parent=11 // pred_check_branch
          %242 = sbr.rel (%p240) target = $region32
        $region31: #{audio_encoder_forward.1} parent=11 // pred_region
          _
        $region32: #{audio_encoder_forward.1} parent=11 // pred_fallthru
          _
        // Predicated region
        $region33: #{audio_encoder_forward.1} parent=11 // pred_check
          %p243 = pneg %p167
        $region34: #{audio_encoder_forward.1} parent=11 // pred_check_branch
          %245 = sbr.rel (%p243) target = $region36
        $region35: #{audio_encoder_forward.1} parent=11 // pred_region
          _
        $region36: #{audio_encoder_forward.1} parent=11 // pred_fallthru
          _
      $region12: #{audio_encoder_forward.1} parent=5 // pred_fallthru
        _
      %p246 = scmp.lt.s32.totalorder %s15, 2
      // Predicated region
      $region37: #{audio_encoder_forward.1} parent=5 // pred_check
        %p247 = pneg %p246
      $region38: #{audio_encoder_forward.1} parent=5 // pred_check_branch
        %249 = sbr.rel (%p247) target = $region40
      $region39: #{audio_encoder_forward.1} parent=5 // pred_region
        // Predicated region
        $region41: #{audio_encoder_forward.1} parent=39 // pred_check
          %p250 = pneg %p35
        $region42: #{audio_encoder_forward.1} parent=39 // pred_check_branch
          %252 = sbr.rel (%p250) target = $region44
        $region43: #{audio_encoder_forward.1} parent=39 // pred_region
          %p253 = scmp.lt.s32.totalorder %s15, 1
          %s254 = scalar_select %p253, %s15, 1
          %s255 = smul.addr %s254, 4
          %s256 = smul.addr %s255, 8
          %s257 = scalar_lea.vmem %s0, %s256
        $region44: #{audio_encoder_forward.1} parent=39 // pred_fallthru
          _
      $region40: #{audio_encoder_forward.1} parent=5 // pred_fallthru
        _
      %p258 = scmp.le.s32.totalorder 1, %s15
      %p259 = scmp.lt.s32.totalorder %s15, 3
      %p260 = pnand %p258, %p259
      %p261 = pneg %p260
      // Predicated region
      $region45: #{audio_encoder_forward.1} parent=5 // pred_check
        _
      $region46: #{audio_encoder_forward.1} parent=5 // pred_check_branch
        %263 = sbr.rel (%p260) target = $region48
      $region47: #{audio_encoder_forward.1} parent=5 // pred_region
        %s264 = ssub.s32 %s15, 1
        // Predicated region
        $region49: #{audio_encoder_forward.1} parent=47 // pred_check
          %p265 = pneg %p62
        $region50: #{audio_encoder_forward.1} parent=47 // pred_check_branch
          %267 = sbr.rel (%p265) target = $region52
        $region51: #{audio_encoder_forward.1} parent=47 // pred_region
          %268 = dma.done [#allocation4], 30720
        $region52: #{audio_encoder_forward.1} parent=47 // pred_fallthru
          _
        // Predicated region
        $region53: #{audio_encoder_forward.1} parent=47 // pred_check
          %p269 = pneg %p125
        $region54: #{audio_encoder_forward.1} parent=47 // pred_check_branch
          %271 = sbr.rel (%p269) target = $region56
        $region55: #{audio_encoder_forward.1} parent=47 // pred_region
          %272 = dma.done [#allocation6], 16384
        $region56: #{audio_encoder_forward.1} parent=47 // pred_fallthru
          _
        %p273 = scmp.lt.s32.totalorder %s20, 1
        %s274 = scalar_select %p273, %s20, 1
        %s275 = smul.addr %s274, 4
        %s276 = smul.addr %s275, 8
        %s277 = scalar_lea.vmem %s0, %s276
        %p278 = pneg %p41
        %p279 = pneg %p38
        %p280 = pneg %p62
        %p281 = pneg %p59
        %p282 = pneg %p83
        %p283 = pneg %p80
        %p284 = pneg %p104
        %p285 = pneg %p101
        %p286 = pneg %p125
        %p287 = pneg %p122
        %p288 = pneg %p146
        %p289 = pneg %p143
        %p290 = pneg %p167
        %p291 = pneg %p164
        %p292 = pneg %p193
        %p293 = pneg %p190
        %p294 = scmp.lt.s32.totalorder %s20, 1
        %s295 = scalar_select %p294, %s20, 1
        %s296 = smul.addr %s295, 8
        %s297 = scalar_lea.vmem %s7, %s296
        %p298 = scmp.lt.s32.totalorder %s20, 1
        %s299 = scalar_select %p298, %s20, 1
        %s300 = smul.addr %s299, 4
        %s301 = smul.addr %s300, 8
        %s302 = scalar_lea.vmem %s0, %s301
        %p303 = scmp.lt.s32.totalorder %s20, 1
        %s304 = scalar_select %p303, %s20, 1
        %s305 = smul.addr %s304, 8
        %s306 = scalar_lea.vmem %s7, %s305
        %v308 = vld [vmem:[%s302] sm:$0xff]
        %v309 = vld [vmem:[%s302 + $0x8] sm:$0xff]
        %v310 = vld [vmem:[%s302 + $0x10] sm:$0xff]
        %v311 = vld [vmem:[%s302 + $0x18] sm:$0xff]
        %312 = vst [vmem:[#allocation2] sm:$0xff] 0.0
        %313 = vst [vmem:[#allocation2 + $0x28] sm:$0xff] 0.0
        %314 = vst [vmem:[#allocation2 + $0x8] sm:$0xff] %v308
        %315 = vst [vmem:[#allocation2 + $0x10] sm:$0xff] %v309
        %316 = vst [vmem:[#allocation2 + $0x18] sm:$0xff] %v310
        %317 = vst [vmem:[#allocation2 + $0x20] sm:$0xff] %v311
        %v318 = vld [vmem:[#allocation2 + $0x7] sm:$0xff]
        %v319 = vld [vmem:[#allocation2 + $0xf] sm:$0xff]
        %v320 = vld [vmem:[#allocation2 + $0x17] sm:$0xff]
        %v321 = vld [vmem:[#allocation2 + $0x1f] sm:$0xff]
        %v322 = vpack.c.bf16 %v319, %v318
        %v323 = vpack.c.bf16 %v321, %v320
        %v324 = vld [vmem:[#allocation3] sm:$0xf]
        %v325 = vld [vmem:[#allocation3 + $0x4] sm:$0xf]
        %v326 = vld [vmem:[#allocation3 + $0x8] sm:$0xf]
        %v327 = vld [vmem:[#allocation3 + $0xc] sm:$0xf]
        %v328 = vld [vmem:[#allocation3 + $0x10] sm:$0xf]
        %v329 = vld [vmem:[#allocation3 + $0x14] sm:$0xf]
        %v330 = vld [vmem:[#allocation3 + $0x18] sm:$0xf]
        %v331 = vld [vmem:[#allocation3 + $0x1c] sm:$0xf]
        %v332 = vld [vmem:[#allocation3 + $0x20] sm:$0xf]
        %v333 = vld [vmem:[#allocation3 + $0x24] sm:$0xf]
        %v334 = vld [vmem:[#allocation3 + $0x28] sm:$0xf]
        %v335 = vld [vmem:[#allocation3 + $0x2c] sm:$0xf]
        %v336 = vld [vmem:[#allocation3 + $0x30] sm:$0xf]
        %v337 = vld [vmem:[#allocation3 + $0x34] sm:$0xf]
        %v338 = vld [vmem:[#allocation3 + $0x38] sm:$0xf]
        %v339 = vld [vmem:[#allocation3 + $0x3c] sm:$0xf]
        %v340 = vld [vmem:[#allocation2 + $0x8] sm:$0xff]
        %v341 = vld [vmem:[#allocation2 + $0x10] sm:$0xff]
        %v342 = vld [vmem:[#allocation2 + $0x18] sm:$0xff]
        %v343 = vld [vmem:[#allocation2 + $0x20] sm:$0xff]
        %v344 = vpack.c.bf16 %v341, %v340
        %v345 = vpack.c.bf16 %v343, %v342
        %s346 = scalar_lea.vmem [#allocation3], 64
        %v347 = vld [vmem:[%s346] sm:$0xf]
        %v348 = vld [vmem:[%s346 + $0x4] sm:$0xf]
        %v349 = vld [vmem:[%s346 + $0x8] sm:$0xf]
        %v350 = vld [vmem:[%s346 + $0xc] sm:$0xf]
        %v351 = vld [vmem:[%s346 + $0x10] sm:$0xf]
        %v352 = vld [vmem:[%s346 + $0x14] sm:$0xf]
        %v353 = vld [vmem:[%s346 + $0x18] sm:$0xf]
        %v354 = vld [vmem:[%s346 + $0x1c] sm:$0xf]
        %v355 = vld [vmem:[%s346 + $0x20] sm:$0xf]
        %v356 = vld [vmem:[%s346 + $0x24] sm:$0xf]
        %v357 = vld [vmem:[%s346 + $0x28] sm:$0xf]
        %v358 = vld [vmem:[%s346 + $0x2c] sm:$0xf]
        %v359 = vld [vmem:[%s346 + $0x30] sm:$0xf]
        %v360 = vld [vmem:[%s346 + $0x34] sm:$0xf]
        %v361 = vld [vmem:[%s346 + $0x38] sm:$0xf]
        %v362 = vld [vmem:[%s346 + $0x3c] sm:$0xf]
        %v379 = vunpack.c.l.b16 %v347
        %v380 = vunpack.c.l.b16 %v348
        %v381 = vunpack.c.l.b16 %v349
        %v382 = vunpack.c.l.b16 %v350
        %v383 = vunpack.c.l.b16 %v351
        %v384 = vunpack.c.l.b16 %v352
        %v385 = vunpack.c.l.b16 %v353
        %v386 = vunpack.c.l.b16 %v354
        %v387 = vunpack.c.l.b16 %v355
        %v388 = vunpack.c.l.b16 %v356
        %v389 = vunpack.c.l.b16 %v357
        %v390 = vunpack.c.l.b16 %v358
        %v391 = vunpack.c.l.b16 %v359
        %v392 = vunpack.c.l.b16 %v360
        %v393 = vunpack.c.l.b16 %v361
        %v394 = vunpack.c.l.b16 %v362
        %v395 = vpack.c.b16 %v380, %v379
        %v396 = vpack.c.b16 %v382, %v381
        %v397 = vpack.c.b16 %v384, %v383
        %v398 = vpack.c.b16 %v386, %v385
        %v399 = vpack.c.b16 %v388, %v387
        %v400 = vpack.c.b16 %v390, %v389
        %v401 = vpack.c.b16 %v392, %v391
        %v402 = vpack.c.b16 %v394, %v393
        %411 = vmatprep.subr.bf16.mxu0 0
        %412 = vmatpush1.bf16.msra.mxu0 %v395
        %413 = vmatprep.subr.bf16.mxu0 0
        %414 = vmatpush1.bf16.msra.mxu0 %v396
        %415 = vmatprep.subr.bf16.mxu0 0
        %416 = vmatpush1.bf16.msra.mxu0 %v397
        %417 = vmatprep.subr.bf16.mxu0 0
        %418 = vmatpush1.bf16.msra.mxu0 %v398
        %419 = vmatprep.subr.bf16.mxu0 0
        %420 = vmatpush1.bf16.msra.mxu0 %v399
        %421 = vmatprep.subr.bf16.mxu0 0
        %422 = vmatpush1.bf16.msra.mxu0 %v400
        %423 = vmatprep.subr.bf16.mxu0 0
        %424 = vmatpush1.bf16.msra.mxu0 %v401
        %425 = vmatprep.subr.bf16.mxu0 0
        %426 = vmatpush1.bf16.msra.mxu0 %v402
        %427 = vmatprep.subr.bf16.mxu0 0
        %428 = vmatpush1.bf16.msra.mxu0 0
        %429 = vmatprep.subr.bf16.mxu0 0
        %430 = vmatpush1.bf16.msra.mxu0 0
        %431 = vmatprep.subr.bf16.mxu0 0
        %432 = vmatpush1.bf16.msra.mxu0 0
        %433 = vmatprep.subr.bf16.mxu0 0
        %434 = vmatpush1.bf16.msra.mxu0 0
        %435 = vmatprep.subr.bf16.mxu0 0
        %436 = vmatpush1.bf16.msra.mxu0 0
        %437 = vmatprep.subr.bf16.mxu0 0
        %438 = vmatpush1.bf16.msra.mxu0 0
        %439 = vmatprep.subr.bf16.mxu0 0
        %440 = vmatpush1.bf16.msra.mxu0 0
        %441 = vmatprep.subr.bf16.mxu0 0
        %442 = vmatpush1.bf16.msra.mxu0 0
        %443 = vmatprep.mubr.bf16.mxu0 0
        %444 = vmatmul.mubr.bf16.gmra.mrb[0].mxu0 %v344
        %v445 = vpop.f32.mrb[0].mxu0
        %v446 = vadd.f32 0.0, %v445
        %v447 = vpop.f32.mrb[0].mxu0
        %v448 = vpop.f32.mrb[0].mxu0
        %v449 = vadd.f32 0.0, %v448
        %v450 = vpop.f32.mrb[0].mxu0
        %451 = vmatprep.mubr.bf16.mxu0 0
        %452 = vmatmul.mubr.bf16.gmra.mrb[0].mxu0 %v345
        %v453 = vpop.f32.mrb[0].mxu0
        %v454 = vadd.f32 0.0, %v453
        %v455 = vpop.f32.mrb[0].mxu0
        %v456 = vpop.f32.mrb[0].mxu0
        %v457 = vadd.f32 0.0, %v456
        %v458 = vpop.f32.mrb[0].mxu0
        %459 = vdwg.mxu0
        %v476 = vunpack.c.l.b16 %v324
        %v477 = vunpack.c.l.b16 %v325
        %v478 = vunpack.c.l.b16 %v326
        %v479 = vunpack.c.l.b16 %v327
        %v480 = vunpack.c.l.b16 %v328
        %v481 = vunpack.c.l.b16 %v329
        %v482 = vunpack.c.l.b16 %v330
        %v483 = vunpack.c.l.b16 %v331
        %v484 = vunpack.c.l.b16 %v332
        %v485 = vunpack.c.l.b16 %v333
        %v486 = vunpack.c.l.b16 %v334
        %v487 = vunpack.c.l.b16 %v335
        %v488 = vunpack.c.l.b16 %v336
        %v489 = vunpack.c.l.b16 %v337
        %v490 = vunpack.c.l.b16 %v338
        %v491 = vunpack.c.l.b16 %v339
        %v492 = vpack.c.b16 %v477, %v476
        %v493 = vpack.c.b16 %v479, %v478
        %v494 = vpack.c.b16 %v481, %v480
        %v495 = vpack.c.b16 %v483, %v482
        %v496 = vpack.c.b16 %v485, %v484
        %v497 = vpack.c.b16 %v487, %v486
        %v498 = vpack.c.b16 %v489, %v488
        %v499 = vpack.c.b16 %v491, %v490
        %508 = vmatprep.subr.bf16.mxu0 0
        %509 = vmatpush1.bf16.msra.mxu0 %v492
        %510 = vmatprep.subr.bf16.mxu0 0
        %511 = vmatpush1.bf16.msra.mxu0 %v493
        %512 = vmatprep.subr.bf16.mxu0 0
        %513 = vmatpush1.bf16.msra.mxu0 %v494
        %514 = vmatprep.subr.bf16.mxu0 0
        %515 = vmatpush1.bf16.msra.mxu0 %v495
        %516 = vmatprep.subr.bf16.mxu0 0
        %517 = vmatpush1.bf16.msra.mxu0 %v496
        %518 = vmatprep.subr.bf16.mxu0 0
        %519 = vmatpush1.bf16.msra.mxu0 %v497
        %520 = vmatprep.subr.bf16.mxu0 0
        %521 = vmatpush1.bf16.msra.mxu0 %v498
        %522 = vmatprep.subr.bf16.mxu0 0
        %523 = vmatpush1.bf16.msra.mxu0 %v499
        %524 = vmatprep.subr.bf16.mxu0 0
        %525 = vmatpush1.bf16.msra.mxu0 0
        %526 = vmatprep.subr.bf16.mxu0 0
        %527 = vmatpush1.bf16.msra.mxu0 0
        %528 = vmatprep.subr.bf16.mxu0 0
        %529 = vmatpush1.bf16.msra.mxu0 0
        %530 = vmatprep.subr.bf16.mxu0 0
        %531 = vmatpush1.bf16.msra.mxu0 0
        %532 = vmatprep.subr.bf16.mxu0 0
        %533 = vmatpush1.bf16.msra.mxu0 0
        %534 = vmatprep.subr.bf16.mxu0 0
        %535 = vmatpush1.bf16.msra.mxu0 0
        %536 = vmatprep.subr.bf16.mxu0 0
        %537 = vmatpush1.bf16.msra.mxu0 0
        %538 = vmatprep.subr.bf16.mxu0 0
        %539 = vmatpush1.bf16.msra.mxu0 0
        %540 = vmatprep.mubr.bf16.mxu0 0
        %541 = vmatmul.mubr.bf16.gmra.mrb[0].mxu0 %v322
        %v542 = vpop.f32.mrb[0].mxu0
        %v543 = vadd.f32 %v446, %v542
        %v544 = vpop.f32.mrb[0].mxu0
        %v545 = vpop.f32.mrb[0].mxu0
        %v546 = vadd.f32 %v449, %v545
        %v547 = vpop.f32.mrb[0].mxu0
        %548 = vmatprep.mubr.bf16.mxu0 0
        %549 = vmatmul.mubr.bf16.gmra.mrb[0].mxu0 %v323
        %v550 = vpop.f32.mrb[0].mxu0
        %v551 = vadd.f32 %v454, %v550
        %v552 = vpop.f32.mrb[0].mxu0
        %v553 = vpop.f32.mrb[0].mxu0
        %v554 = vadd.f32 %v457, %v553
        %v555 = vpop.f32.mrb[0].mxu0
        %556 = vdwg.mxu0
        %v557 = vld [vmem:[#allocation2 + $0x9] sm:$0xff]
        %v558 = vld [vmem:[#allocation2 + $0x11] sm:$0xff]
        %v559 = vld [vmem:[#allocation2 + $0x19] sm:$0xff]
        %v560 = vld [vmem:[#allocation2 + $0x21] sm:$0xff]
        %v561 = vpack.c.bf16 %v558, %v557
        %v562 = vpack.c.bf16 %v560, %v559
        %s563 = scalar_lea.vmem [#allocation3], 128
        %v564 = vld [vmem:[%s563] sm:$0xf]
        %v565 = vld [vmem:[%s563 + $0x4] sm:$0xf]
        %v566 = vld [vmem:[%s563 + $0x8] sm:$0xf]
        %v567 = vld [vmem:[%s563 + $0xc] sm:$0xf]
        %v568 = vld [vmem:[%s563 + $0x10] sm:$0xf]
        %v569 = vld [vmem:[%s563 + $0x14] sm:$0xf]
        %v570 = vld [vmem:[%s563 + $0x18] sm:$0xf]
        %v571 = vld [vmem:[%s563 + $0x1c] sm:$0xf]
        %v572 = vld [vmem:[%s563 + $0x20] sm:$0xf]
        %v573 = vld [vmem:[%s563 + $0x24] sm:$0xf]
        %v574 = vld [vmem:[%s563 + $0x28] sm:$0xf]
        %v575 = vld [vmem:[%s563 + $0x2c] sm:$0xf]
        %v576 = vld [vmem:[%s563 + $0x30] sm:$0xf]
        %v577 = vld [vmem:[%s563 + $0x34] sm:$0xf]
        %v578 = vld [vmem:[%s563 + $0x38] sm:$0xf]
        %v579 = vld [vmem:[%s563 + $0x3c] sm:$0xf]
        %v596 = vunpack.c.l.b16 %v564
        %v597 = vunpack.c.l.b16 %v565
        %v598 = vunpack.c.l.b16 %v566
        %v599 = vunpack.c.l.b16 %v567
        %v600 = vunpack.c.l.b16 %v568
        %v601 = vunpack.c.l.b16 %v569
        %v602 = vunpack.c.l.b16 %v570
        %v603 = vunpack.c.l.b16 %v571
        %v604 = vunpack.c.l.b16 %v572
        %v605 = vunpack.c.l.b16 %v573
        %v606 = vunpack.c.l.b16 %v574
        %v607 = vunpack.c.l.b16 %v575
        %v608 = vunpack.c.l.b16 %v576
        %v609 = vunpack.c.l.b16 %v577
        %v610 = vunpack.c.l.b16 %v578
        %v611 = vunpack.c.l.b16 %v579
        %v612 = vpack.c.b16 %v597, %v596
        %v613 = vpack.c.b16 %v599, %v598
        %v614 = vpack.c.b16 %v601, %v600
        %v615 = vpack.c.b16 %v603, %v602
        %v616 = vpack.c.b16 %v605, %v604
        %v617 = vpack.c.b16 %v607, %v606
        %v618 = vpack.c.b16 %v609, %v608
        %v619 = vpack.c.b16 %v611, %v610
        %628 = vmatprep.subr.bf16.mxu0 0
        %629 = vmatpush1.bf16.msra.mxu0 %v612
        %630 = vmatprep.subr.bf16.mxu0 0
        %631 = vmatpush1.bf16.msra.mxu0 %v613
        %632 = vmatprep.subr.bf16.mxu0 0
        %633 = vmatpush1.bf16.msra.mxu0 %v614
        %634 = vmatprep.subr.bf16.mxu0 0
        %635 = vmatpush1.bf16.msra.mxu0 %v615
        %636 = vmatprep.subr.bf16.mxu0 0
        %637 = vmatpush1.bf16.msra.mxu0 %v616
        %638 = vmatprep.subr.bf16.mxu0 0
        %639 = vmatpush1.bf16.msra.mxu0 %v617
        %640 = vmatprep.subr.bf16.mxu0 0
        %641 = vmatpush1.bf16.msra.mxu0 %v618
        %642 = vmatprep.subr.bf16.mxu0 0
        %643 = vmatpush1.bf16.msra.mxu0 %v619
        %644 = vmatprep.subr.bf16.mxu0 0
        %645 = vmatpush1.bf16.msra.mxu0 0
        %646 = vmatprep.subr.bf16.mxu0 0
        %647 = vmatpush1.bf16.msra.mxu0 0
        %648 = vmatprep.subr.bf16.mxu0 0
        %649 = vmatpush1.bf16.msra.mxu0 0
        %650 = vmatprep.subr.bf16.mxu0 0
        %651 = vmatpush1.bf16.msra.mxu0 0
        %652 = vmatprep.subr.bf16.mxu0 0
        %653 = vmatpush1.bf16.msra.mxu0 0
        %654 = vmatprep.subr.bf16.mxu0 0
        %655 = vmatpush1.bf16.msra.mxu0 0
        %656 = vmatprep.subr.bf16.mxu0 0
        %657 = vmatpush1.bf16.msra.mxu0 0
        %658 = vmatprep.subr.bf16.mxu0 0
        %659 = vmatpush1.bf16.msra.mxu0 0
        %660 = vmatprep.mubr.bf16.mxu0 0
        %661 = vmatmul.mubr.bf16.gmra.mrb[0].mxu0 %v561
        %v662 = vpop.f32.mrb[0].mxu0
        %v663 = vadd.f32 0.0, %v662
        %v664 = vpop.f32.mrb[0].mxu0
        %v665 = vpop.f32.mrb[0].mxu0
        %v666 = vadd.f32 0.0, %v665
        %v667 = vpop.f32.mrb[0].mxu0
        %668 = vmatprep.mubr.bf16.mxu0 0
        %669 = vmatmul.mubr.bf16.gmra.mrb[0].mxu0 %v562
        %v670 = vpop.f32.mrb[0].mxu0
        %v671 = vadd.f32 0.0, %v670
        %v672 = vpop.f32.mrb[0].mxu0
        %v673 = vpop.f32.mrb[0].mxu0
        %v674 = vadd.f32 0.0, %v673
        %v675 = vpop.f32.mrb[0].mxu0
        %676 = vdwg.mxu0
        %v677 = vadd.f32 %v543, %v663
        %v678 = vadd.f32 %v546, %v666
        %v679 = vadd.f32 %v551, %v671
        %v680 = vadd.f32 %v554, %v674
        %v681 = vld [vmem:[%s2] sm:$0x1]
        %v683 = vlaneseq
        %v684 = vshrl.u32 %v683, 7
        %v685 = vsub.s32 0, %v684
        %v686 = vrot.slane %v681, %v685
        %v688 = vmul.f32 %v677, %v686
        %v689 = vmul.f32 %v678, %v686
        %v690 = vmul.f32 %v679, %v686
        %v691 = vmul.f32 %v680, %v686
        %v692 = vld [vmem:[%s3] sm:$0x1]
        %v694 = vlaneseq
        %v695 = vshrl.u32 %v694, 7
        %v696 = vsub.s32 0, %v695
        %v697 = vrot.slane %v692, %v696
        %v699 = vadd.f32 %v688, %v697
        %v700 = vadd.f32 %v689, %v697
        %v701 = vadd.f32 %v690, %v697
        %v702 = vadd.f32 %v691, %v697
        %v703 = vmul.f32 %v699, 0.2
        %v704 = vmul.f32 %v700, 0.2
        %v705 = vmul.f32 %v701, 0.2
        %v706 = vmul.f32 %v702, 0.2
        %v707 = vmax.f32 %v699, %v703
        %v708 = vmax.f32 %v700, %v704
        %v709 = vmax.f32 %v701, %v705
        %v710 = vmax.f32 %v702, %v706
        %711 = vst [vmem:[#allocation2] sm:$0xff] 0.0
        %712 = vst [vmem:[#allocation2 + $0x28] sm:$0xff] 0.0
        %713 = vst [vmem:[#allocation2 + $0x8] sm:$0xff] %v707
        %714 = vst [vmem:[#allocation2 + $0x10] sm:$0xff] %v708
        %715 = vst [vmem:[#allocation2 + $0x18] sm:$0xff] %v709
        %716 = vst [vmem:[#allocation2 + $0x20] sm:$0xff] %v710
        %v717 = vld [vmem:[#allocation2 + $0x7] sm:$0xff]
        %v718 = vld [vmem:[#allocation2 + $0xf] sm:$0xff]
        %v719 = vld [vmem:[#allocation2 + $0x17] sm:$0xff]
        %v720 = vld [vmem:[#allocation2 + $0x1f] sm:$0xff]
        %v721 = vpack.c.bf16 %v718, %v717
        %v722 = vpack.c.bf16 %v720, %v719
        %s723 = scalar_lea.vmem [#allocation3], 192
        %v724 = vld [vmem:[%s723] sm:$0xf]
        %v725 = vld [vmem:[%s723 + $0x4] sm:$0xf]
        %v726 = vld [vmem:[%s723 + $0x8] sm:$0xf]
        %v727 = vld [vmem:[%s723 + $0xc] sm:$0xf]
        %v728 = vld [vmem:[%s723 + $0x10] sm:$0xf]
        %v729 = vld [vmem:[%s723 + $0x14] sm:$0xf]
        %v730 = vld [vmem:[%s723 + $0x18] sm:$0xf]
        %v731 = vld [vmem:[%s723 + $0x1c] sm:$0xf]
        %v732 = vld [vmem:[%s723 + $0x20] sm:$0xf]
        %v733 = vld [vmem:[%s723 + $0x24] sm:$0xf]
        %v734 = vld [vmem:[%s723 + $0x28] sm:$0xf]
        %v735 = vld [vmem:[%s723 + $0x2c] sm:$0xf]
        %v736 = vld [vmem:[%s723 + $0x30] sm:$0xf]
        %v737 = vld [vmem:[%s723 + $0x34] sm:$0xf]
        %v738 = vld [vmem:[%s723 + $0x38] sm:$0xf]
        %v739 = vld [vmem:[%s723 + $0x3c] sm:$0xf]
        %v740 = vld [vmem:[#allocation2 + $0x8] sm:$0xff]
        %v741 = vld [vmem:[#allocation2 + $0x10] sm:$0xff]
        %v742 = vld [vmem:[#allocation2 + $0x18] sm:$0xff]
        %v743 = vld [vmem:[#allocation2 + $0x20] sm:$0xff]
        %v744 = vpack.c.bf16 %v741, %v740
        %v745 = vpack.c.bf16 %v743, %v742
        %s746 = scalar_lea.vmem [#allocation3], 256
        %v747 = vld [vmem:[%s746] sm:$0xf]
        %v748 = vld [vmem:[%s746 + $0x4] sm:$0xf]
        %v749 = vld [vmem:[%s746 + $0x8] sm:$0xf]
        %v750 = vld [vmem:[%s746 + $0xc] sm:$0xf]
        %v751 = vld [vmem:[%s746 + $0x10] sm:$0xf]
        %v752 = vld [vmem:[%s746 + $0x14] sm:$0xf]
        %v753 = vld [vmem:[%s746 + $0x18] sm:$0xf]
        %v754 = vld [vmem:[%s746 + $0x1c] sm:$0xf]
        %v755 = vld [vmem:[%s746 + $0x20] sm:$0xf]
        %v756 = vld [vmem:[%s746 + $0x24] sm:$0xf]
        %v757 = vld [vmem:[%s746 + $0x28] sm:$0xf]
        %v758 = vld [vmem:[%s746 + $0x2c] sm:$0xf]
        %v759 = vld [vmem:[%s746 + $0x30] sm:$0xf]
        %v760 = vld [vmem:[%s746 + $0x34] sm:$0xf]
        %v761 = vld [vmem:[%s746 + $0x38] sm:$0xf]
        %v762 = vld [vmem:[%s746 + $0x3c] sm:$0xf]
        %v779 = vunpack.c.l.b16 %v747
        %v780 = vunpack.c.l.b16 %v748
        %v781 = vunpack.c.l.b16 %v749
        %v782 = vunpack.c.l.b16 %v750
        %v783 = vunpack.c.l.b16 %v751
        %v784 = vunpack.c.l.b16 %v752
        %v785 = vunpack.c.l.b16 %v753
        %v786 = vunpack.c.l.b16 %v754
        %v787 = vunpack.c.l.b16 %v755
        %v788 = vunpack.c.l.b16 %v756
        %v789 = vunpack.c.l.b16 %v757
        %v790 = vunpack.c.l.b16 %v758
        %v791 = vunpack.c.l.b16 %v759
        %v792 = vunpack.c.l.b16 %v760
        %v793 = vunpack.c.l.b16 %v761
        %v794 = vunpack.c.l.b16 %v762
        %v795 = vpack.c.b16 %v780, %v779
        %v796 = vpack.c.b16 %v782, %v781
        %v797 = vpack.c.b16 %v784, %v783
        %v798 = vpack.c.b16 %v786, %v785
        %v799 = vpack.c.b16 %v788, %v787
        %v800 = vpack.c.b16 %v790, %v789
        %v801 = vpack.c.b16 %v792, %v791
        %v802 = vpack.c.b16 %v794, %v793
        %811 = vmatprep.subr.bf16.mxu0 0
        %812 = vmatpush1.bf16.msra.mxu0 %v795
        %813 = vmatprep.subr.bf16.mxu0 0
        %814 = vmatpush1.bf16.msra.mxu0 %v796
        %815 = vmatprep.subr.bf16.mxu0 0
        %816 = vmatpush1.bf16.msra.mxu0 %v797
        %817 = vmatprep.subr.bf16.mxu0 0
        %818 = vmatpush1.bf16.msra.mxu0 %v798
        %819 = vmatprep.subr.bf16.mxu0 0
        %820 = vmatpush1.bf16.msra.mxu0 %v799
        %821 = vmatprep.subr.bf16.mxu0 0
        %822 = vmatpush1.bf16.msra.mxu0 %v800
        %823 = vmatprep.subr.bf16.mxu0 0
        %824 = vmatpush1.bf16.msra.mxu0 %v801
        %825 = vmatprep.subr.bf16.mxu0 0
        %826 = vmatpush1.bf16.msra.mxu0 %v802
        %827 = vmatprep.subr.bf16.mxu0 0
        %828 = vmatpush1.bf16.msra.mxu0 0
        %829 = vmatprep.subr.bf16.mxu0 0
        %830 = vmatpush1.bf16.msra.mxu0 0
        %831 = vmatprep.subr.bf16.mxu0 0
        %832 = vmatpush1.bf16.msra.mxu0 0
        %833 = vmatprep.subr.bf16.mxu0 0
        %834 = vmatpush1.bf16.msra.mxu0 0
        %835 = vmatprep.subr.bf16.mxu0 0
        %836 = vmatpush1.bf16.msra.mxu0 0
        %837 = vmatprep.subr.bf16.mxu0 0
        %838 = vmatpush1.bf16.msra.mxu0 0
        %839 = vmatprep.subr.bf16.mxu0 0
        %840 = vmatpush1.bf16.msra.mxu0 0
        %841 = vmatprep.subr.bf16.mxu0 0
        %842 = vmatpush1.bf16.msra.mxu0 0
        %843 = vmatprep.mubr.bf16.mxu0 0
        %844 = vmatmul.mubr.bf16.gmra.mrb[0].mxu0 %v744
        %v845 = vpop.f32.mrb[0].mxu0
        %v846 = vadd.f32 0.0, %v845
        %v847 = vpop.f32.mrb[0].mxu0
        %v848 = vpop.f32.mrb[0].mxu0
        %v849 = vadd.f32 0.0, %v848
        %v850 = vpop.f32.mrb[0].mxu0
        %851 = vmatprep.mubr.bf16.mxu0 0
        %852 = vmatmul.mubr.bf16.gmra.mrb[0].mxu0 %v745
        %v853 = vpop.f32.mrb[0].mxu0
        %v854 = vadd.f32 0.0, %v853
        %v855 = vpop.f32.mrb[0].mxu0
        %v856 = vpop.f32.mrb[0].mxu0
        %v857 = vadd.f32 0.0, %v856
        %v858 = vpop.f32.mrb[0].mxu0
        %859 = vdwg.mxu0
        %v876 = vunpack.c.l.b16 %v724
        %v877 = vunpack.c.l.b16 %v725
        %v878 = vunpack.c.l.b16 %v726
        %v879 = vunpack.c.l.b16 %v727
        %v880 = vunpack.c.l.b16 %v728
        %v881 = vunpack.c.l.b16 %v729
        %v882 = vunpack.c.l.b16 %v730
        %v883 = vunpack.c.l.b16 %v731
        %v884 = vunpack.c.l.b16 %v732
        %v885 = vunpack.c.l.b16 %v733
        %v886 = vunpack.c.l.b16 %v734
        %v887 = vunpack.c.l.b16 %v735
        %v888 = vunpack.c.l.b16 %v736
        %v889 = vunpack.c.l.b16 %v737
        %v890 = vunpack.c.l.b16 %v738
        %v891 = vunpack.c.l.b16 %v739
        %v892 = vpack.c.b16 %v877, %v876
        %v893 = vpack.c.b16 %v879, %v878
        %v894 = vpack.c.b16 %v881, %v880
        %v895 = vpack.c.b16 %v883, %v882
        %v896 = vpack.c.b16 %v885, %v884
        %v897 = vpack.c.b16 %v887, %v886
        %v898 = vpack.c.b16 %v889, %v888
        %v899 = vpack.c.b16 %v891, %v890
        %908 = vmatprep.subr.bf16.mxu0 0
        %909 = vmatpush1.bf16.msra.mxu0 %v892
        %910 = vmatprep.subr.bf16.mxu0 0
        %911 = vmatpush1.bf16.msra.mxu0 %v893
        %912 = vmatprep.subr.bf16.mxu0 0
        %913 = vmatpush1.bf16.msra.mxu0 %v894
        %914 = vmatprep.subr.bf16.mxu0 0
        %915 = vmatpush1.bf16.msra.mxu0 %v895
        %916 = vmatprep.subr.bf16.mxu0 0
        %917 = vmatpush1.bf16.msra.mxu0 %v896
        %918 = vmatprep.subr.bf16.mxu0 0
        %919 = vmatpush1.bf16.msra.mxu0 %v897
        %920 = vmatprep.subr.bf16.mxu0 0
        %921 = vmatpush1.bf16.msra.mxu0 %v898
        %922 = vmatprep.subr.bf16.mxu0 0
        %923 = vmatpush1.bf16.msra.mxu0 %v899
        %924 = vmatprep.subr.bf16.mxu0 0
        %925 = vmatpush1.bf16.msra.mxu0 0
        %926 = vmatprep.subr.bf16.mxu0 0
        %927 = vmatpush1.bf16.msra.mxu0 0
        %928 = vmatprep.subr.bf16.mxu0 0
        %929 = vmatpush1.bf16.msra.mxu0 0
        %930 = vmatprep.subr.bf16.mxu0 0
        %931 = vmatpush1.bf16.msra.mxu0 0
        %932 = vmatprep.subr.bf16.mxu0 0
        %933 = vmatpush1.bf16.msra.mxu0 0
        %934 = vmatprep.subr.bf16.mxu0 0
        %935 = vmatpush1.bf16.msra.mxu0 0
        %936 = vmatprep.subr.bf16.mxu0 0
        %937 = vmatpush1.bf16.msra.mxu0 0
        %938 = vmatprep.subr.bf16.mxu0 0
        %939 = vmatpush1.bf16.msra.mxu0 0
        %940 = vmatprep.mubr.bf16.mxu0 0
        %941 = vmatmul.mubr.bf16.gmra.mrb[0].mxu0 %v721
        %v942 = vpop.f32.mrb[0].mxu0
        %v943 = vadd.f32 %v846, %v942
        %v944 = vpop.f32.mrb[0].mxu0
        %v945 = vpop.f32.mrb[0].mxu0
        %v946 = vadd.f32 %v849, %v945
        %v947 = vpop.f32.mrb[0].mxu0
        %948 = vmatprep.mubr.bf16.mxu0 0
        %949 = vmatmul.mubr.bf16.gmra.mrb[0].mxu0 %v722
        %v950 = vpop.f32.mrb[0].mxu0
        %v951 = vadd.f32 %v854, %v950
        %v952 = vpop.f32.mrb[0].mxu0
        %v953 = vpop.f32.mrb[0].mxu0
        %v954 = vadd.f32 %v857, %v953
        %v955 = vpop.f32.mrb[0].mxu0
        %956 = vdwg.mxu0
        %v957 = vld [vmem:[#allocation2 + $0x9] sm:$0xff]
        %v958 = vld [vmem:[#allocation2 + $0x11] sm:$0xff]
        %v959 = vld [vmem:[#allocation2 + $0x19] sm:$0xff]
        %v960 = vld [vmem:[#allocation2 + $0x21] sm:$0xff]
        %v961 = vpack.c.bf16 %v958, %v957
        %v962 = vpack.c.bf16 %v960, %v959
        %s963 = scalar_lea.vmem [#allocation3], 320
        %v964 = vld [vmem:[%s963] sm:$0xf]
        %v965 = vld [vmem:[%s963 + $0x4] sm:$0xf]
        %v966 = vld [vmem:[%s963 + $0x8] sm:$0xf]
        %v967 = vld [vmem:[%s963 + $0xc] sm:$0xf]
        %v968 = vld [vmem:[%s963 + $0x10] sm:$0xf]
        %v969 = vld [vmem:[%s963 + $0x14] sm:$0xf]
        %v970 = vld [vmem:[%s963 + $0x18] sm:$0xf]
        %v971 = vld [vmem:[%s963 + $0x1c] sm:$0xf]
        %v972 = vld [vmem:[%s963 + $0x20] sm:$0xf]
        %v973 = vld [vmem:[%s963 + $0x24] sm:$0xf]
        %v974 = vld [vmem:[%s963 + $0x28] sm:$0xf]
        %v975 = vld [vmem:[%s963 + $0x2c] sm:$0xf]
        %v976 = vld [vmem:[%s963 + $0x30] sm:$0xf]
        %v977 = vld [vmem:[%s963 + $0x34] sm:$0xf]
        %v978 = vld [vmem:[%s963 + $0x38] sm:$0xf]
        %v979 = vld [vmem:[%s963 + $0x3c] sm:$0xf]
        %v996 = vunpack.c.l.b16 %v964
        %v997 = vunpack.c.l.b16 %v965
        %v998 = vunpack.c.l.b16 %v966
        %v999 = vunpack.c.l.b16 %v967
        %v1000 = vunpack.c.l.b16 %v968
        %v1001 = vunpack.c.l.b16 %v969
        %v1002 = vunpack.c.l.b16 %v970
        %v1003 = vunpack.c.l.b16 %v971
        %v1004 = vunpack.c.l.b16 %v972
        %v1005 = vunpack.c.l.b16 %v973
        %v1006 = vunpack.c.l.b16 %v974
        %v1007 = vunpack.c.l.b16 %v975
        %v1008 = vunpack.c.l.b16 %v976
        %v1009 = vunpack.c.l.b16 %v977
        %v1010 = vunpack.c.l.b16 %v978
        %v1011 = vunpack.c.l.b16 %v979
        %v1012 = vpack.c.b16 %v997, %v996
        %v1013 = vpack.c.b16 %v999, %v998
        %v1014 = vpack.c.b16 %v1001, %v1000
        %v1015 = vpack.c.b16 %v1003, %v1002
        %v1016 = vpack.c.b16 %v1005, %v1004
        %v1017 = vpack.c.b16 %v1007, %v1006
        %v1018 = vpack.c.b16 %v1009, %v1008
        %v1019 = vpack.c.b16 %v1011, %v1010
        %1028 = vmatprep.subr.bf16.mxu0 0
        %1029 = vmatpush1.bf16.msra.mxu0 %v1012
        %1030 = vmatprep.subr.bf16.mxu0 0
        %1031 = vmatpush1.bf16.msra.mxu0 %v1013
        %1032 = vmatprep.subr.bf16.mxu0 0
        %1033 = vmatpush1.bf16.msra.mxu0 %v1014
        %1034 = vmatprep.subr.bf16.mxu0 0
        %1035 = vmatpush1.bf16.msra.mxu0 %v1015
        %1036 = vmatprep.subr.bf16.mxu0 0
        %1037 = vmatpush1.bf16.msra.mxu0 %v1016
        %1038 = vmatprep.subr.bf16.mxu0 0
        %1039 = vmatpush1.bf16.msra.mxu0 %v1017
        %1040 = vmatprep.subr.bf16.mxu0 0
        %1041 = vmatpush1.bf16.msra.mxu0 %v1018
        %1042 = vmatprep.subr.bf16.mxu0 0
        %1043 = vmatpush1.bf16.msra.mxu0 %v1019
        %1044 = vmatprep.subr.bf16.mxu0 0
        %1045 = vmatpush1.bf16.msra.mxu0 0
        %1046 = vmatprep.subr.bf16.mxu0 0
        %1047 = vmatpush1.bf16.msra.mxu0 0
        %1048 = vmatprep.subr.bf16.mxu0 0
        %1049 = vmatpush1.bf16.msra.mxu0 0
        %1050 = vmatprep.subr.bf16.mxu0 0
        %1051 = vmatpush1.bf16.msra.mxu0 0
        %1052 = vmatprep.subr.bf16.mxu0 0
        %1053 = vmatpush1.bf16.msra.mxu0 0
        %1054 = vmatprep.subr.bf16.mxu0 0
        %1055 = vmatpush1.bf16.msra.mxu0 0
        %1056 = vmatprep.subr.bf16.mxu0 0
        %1057 = vmatpush1.bf16.msra.mxu0 0
        %1058 = vmatprep.subr.bf16.mxu0 0
        %1059 = vmatpush1.bf16.msra.mxu0 0
        %1060 = vmatprep.mubr.bf16.mxu0 0
        %1061 = vmatmul.mubr.bf16.gmra.mrb[0].mxu0 %v961
        %v1062 = vpop.f32.mrb[0].mxu0
        %v1063 = vadd.f32 0.0, %v1062
        %v1064 = vpop.f32.mrb[0].mxu0
        %v1065 = vpop.f32.mrb[0].mxu0
        %v1066 = vadd.f32 0.0, %v1065
        %v1067 = vpop.f32.mrb[0].mxu0
        %1068 = vmatprep.mubr.bf16.mxu0 0
        %1069 = vmatmul.mubr.bf16.gmra.mrb[0].mxu0 %v962
        %v1070 = vpop.f32.mrb[0].mxu0
        %v1071 = vadd.f32 0.0, %v1070
        %v1072 = vpop.f32.mrb[0].mxu0
        %v1073 = vpop.f32.mrb[0].mxu0
        %v1074 = vadd.f32 0.0, %v1073
        %v1075 = vpop.f32.mrb[0].mxu0
        %1076 = vdwg.mxu0
        %v1077 = vadd.f32 %v943, %v1063
        %v1078 = vadd.f32 %v946, %v1066
        %v1079 = vadd.f32 %v951, %v1071
        %v1080 = vadd.f32 %v954, %v1074
        %s1081 = scalar_lea.vmem %s2, 1
        %v1082 = vld [vmem:[%s1081] sm:$0x1]
        %v1084 = vlaneseq
        %v1085 = vshrl.u32 %v1084, 7
        %v1086 = vsub.s32 0, %v1085
        %v1087 = vrot.slane %v1082, %v1086
        %v1089 = vmul.f32 %v1077, %v1087
        %v1090 = vmul.f32 %v1078, %v1087
        %v1091 = vmul.f32 %v1079, %v1087
        %v1092 = vmul.f32 %v1080, %v1087
        %s1093 = scalar_lea.vmem %s3, 1
        %v1094 = vld [vmem:[%s1093] sm:$0x1]
        %v1096 = vlaneseq
        %v1097 = vshrl.u32 %v1096, 7
        %v1098 = vsub.s32 0, %v1097
        %v1099 = vrot.slane %v1094, %v1098
        %v1101 = vadd.f32 %v1089, %v1099
        %v1102 = vadd.f32 %v1090, %v1099
        %v1103 = vadd.f32 %v1091, %v1099
        %v1104 = vadd.f32 %v1092, %v1099
        %v1105 = vadd.f32 %v1101, %v707
        %v1106 = vadd.f32 %v1102, %v708
        %v1107 = vadd.f32 %v1103, %v709
        %v1108 = vadd.f32 %v1104, %v710
        %v1109 = vmul.f32 %v1105, 0.2
        %v1110 = vmul.f32 %v1106, 0.2
        %v1111 = vmul.f32 %v1107, 0.2
        %v1112 = vmul.f32 %v1108, 0.2
        %v1113 = vmax.f32 %v1105, %v1109
        %v1114 = vmax.f32 %v1106, %v1110
        %v1115 = vmax.f32 %v1107, %v1111
        %v1116 = vmax.f32 %v1108, %v1112
        %1117 = vst [vmem:[#allocation2] sm:$0xff] 0.0
        %1118 = vst [vmem:[#allocation2 + $0x28] sm:$0xff] 0.0
        %1119 = vst [vmem:[#allocation2 + $0x8] sm:$0xff] %v1113
        %1120 = vst [vmem:[#allocation2 + $0x10] sm:$0xff] %v1114
        %1121 = vst [vmem:[#allocation2 + $0x18] sm:$0xff] %v1115
        %1122 = vst [vmem:[#allocation2 + $0x20] sm:$0xff] %v1116
        %v1123 = vld [vmem:[#allocation2 + $0x7] sm:$0xff]
        %v1124 = vld [vmem:[#allocation2 + $0xf] sm:$0xff]
        %v1125 = vld [vmem:[#allocation2 + $0x17] sm:$0xff]
        %v1126 = vld [vmem:[#allocation2 + $0x1f] sm:$0xff]
        %v1127 = vpack.c.bf16 %v1124, %v1123
        %v1128 = vpack.c.bf16 %v1126, %v1125
        %s1129 = scalar_lea.vmem [#allocation3], 384
        %v1130 = vld [vmem:[%s1129] sm:$0xf]
        %v1131 = vld [vmem:[%s1129 + $0x4] sm:$0xf]
        %v1132 = vld [vmem:[%s1129 + $0x8] sm:$0xf]
        %v1133 = vld [vmem:[%s1129 + $0xc] sm:$0xf]
        %v1134 = vld [vmem:[%s1129 + $0x10] sm:$0xf]
        %v1135 = vld [vmem:[%s1129 + $0x14] sm:$0xf]
        %v1136 = vld [vmem:[%s1129 + $0x18] sm:$0xf]
        %v1137 = vld [vmem:[%s1129 + $0x1c] sm:$0xf]
        %v1138 = vld [vmem:[%s1129 + $0x20] sm:$0xf]
        %v1139 = vld [vmem:[%s1129 + $0x24] sm:$0xf]
        %v1140 = vld [vmem:[%s1129 + $0x28] sm:$0xf]
        %v1141 = vld [vmem:[%s1129 + $0x2c] sm:$0xf]
        %v1142 = vld [vmem:[%s1129 + $0x30] sm:$0xf]
        %v1143 = vld [vmem:[%s1129 + $0x34] sm:$0xf]
        %v1144 = vld [vmem:[%s1129 + $0x38] sm:$0xf]
        %v1145 = vld [vmem:[%s1129 + $0x3c] sm:$0xf]
        %v1146 = vld [vmem:[#allocation2 + $0x8] sm:$0xff]
        %v1147 = vld [vmem:[#allocation2 + $0x10] sm:$0xff]
        %v1148 = vld [vmem:[#allocation2 + $0x18] sm:$0xff]
        %v1149 = vld [vmem:[#allocation2 + $0x20] sm:$0xff]
        %v1150 = vpack.c.bf16 %v1147, %v1146
        %v1151 = vpack.c.bf16 %v1149, %v1148
        %s1152 = scalar_lea.vmem [#allocation3], 448
        %v1153 = vld [vmem:[%s1152] sm:$0xf]
        %v1154 = vld [vmem:[%s1152 + $0x4] sm:$0xf]
        %v1155 = vld [vmem:[%s1152 + $0x8] sm:$0xf]
        %v1156 = vld [vmem:[%s1152 + $0xc] sm:$0xf]
        %v1157 = vld [vmem:[%s1152 + $0x10] sm:$0xf]
        %v1158 = vld [vmem:[%s1152 + $0x14] sm:$0xf]
        %v1159 = vld [vmem:[%s1152 + $0x18] sm:$0xf]
        %v1160 = vld [vmem:[%s1152 + $0x1c] sm:$0xf]
        %v1161 = vld [vmem:[%s1152 + $0x20] sm:$0xf]
        %v1162 = vld [vmem:[%s1152 + $0x24] sm:$0xf]
        %v1163 = vld [vmem:[%s1152 + $0x28] sm:$0xf]
        %v1164 = vld [vmem:[%s1152 + $0x2c] sm:$0xf]
        %v1165 = vld [vmem:[%s1152 + $0x30] sm:$0xf]
        %v1166 = vld [vmem:[%s1152 + $0x34] sm:$0xf]
        %v1167 = vld [vmem:[%s1152 + $0x38] sm:$0xf]
        %v1168 = vld [vmem:[%s1152 + $0x3c] sm:$0xf]
        %v1185 = vunpack.c.l.b16 %v1153
        %v1186 = vunpack.c.l.b16 %v1154
        %v1187 = vunpack.c.l.b16 %v1155
        %v1188 = vunpack.c.l.b16 %v1156
        %v1189 = vunpack.c.l.b16 %v1157
        %v1190 = vunpack.c.l.b16 %v1158
        %v1191 = vunpack.c.l.b16 %v1159
        %v1192 = vunpack.c.l.b16 %v1160
        %v1193 = vunpack.c.l.b16 %v1161
        %v1194 = vunpack.c.l.b16 %v1162
        %v1195 = vunpack.c.l.b16 %v1163
        %v1196 = vunpack.c.l.b16 %v1164
        %v1197 = vunpack.c.l.b16 %v1165
        %v1198 = vunpack.c.l.b16 %v1166
        %v1199 = vunpack.c.l.b16 %v1167
        %v1200 = vunpack.c.l.b16 %v1168
        %v1201 = vpack.c.b16 %v1186, %v1185
        %v1202 = vpack.c.b16 %v1188, %v1187
        %v1203 = vpack.c.b16 %v1190, %v1189
        %v1204 = vpack.c.b16 %v1192, %v1191
        %v1205 = vpack.c.b16 %v1194, %v1193
        %v1206 = vpack.c.b16 %v1196, %v1195
        %v1207 = vpack.c.b16 %v1198, %v1197
        %v1208 = vpack.c.b16 %v1200, %v1199
        %1217 = vmatprep.subr.bf16.mxu0 0
        %1218 = vmatpush1.bf16.msra.mxu0 %v1201
        %1219 = vmatprep.subr.bf16.mxu0 0
        %1220 = vmatpush1.bf16.msra.mxu0 %v1202
        %1221 = vmatprep.subr.bf16.mxu0 0
        %1222 = vmatpush1.bf16.msra.mxu0 %v1203
        %1223 = vmatprep.subr.bf16.mxu0 0
        %1224 = vmatpush1.bf16.msra.mxu0 %v1204
        %1225 = vmatprep.subr.bf16.mxu0 0
        %1226 = vmatpush1.bf16.msra.mxu0 %v1205
        %1227 = vmatprep.subr.bf16.mxu0 0
        %1228 = vmatpush1.bf16.msra.mxu0 %v1206
        %1229 = vmatprep.subr.bf16.mxu0 0
        %1230 = vmatpush1.bf16.msra.mxu0 %v1207
        %1231 = vmatprep.subr.bf16.mxu0 0
        %1232 = vmatpush1.bf16.msra.mxu0 %v1208
        %1233 = vmatprep.subr.bf16.mxu0 0
        %1234 = vmatpush1.bf16.msra.mxu0 0
        %1235 = vmatprep.subr.bf16.mxu0 0
        %1236 = vmatpush1.bf16.msra.mxu0 0
        %1237 = vmatprep.subr.bf16.mxu0 0
        %1238 = vmatpush1.bf16.msra.mxu0 0
        %1239 = vmatprep.subr.bf16.mxu0 0
        %1240 = vmatpush1.bf16.msra.mxu0 0
        %1241 = vmatprep.subr.bf16.mxu0 0
        %1242 = vmatpush1.bf16.msra.mxu0 0
        %1243 = vmatprep.subr.bf16.mxu0 0
        %1244 = vmatpush1.bf16.msra.mxu0 0
        %1245 = vmatprep.subr.bf16.mxu0 0
        %1246 = vmatpush1.bf16.msra.mxu0 0
        %1247 = vmatprep.subr.bf16.mxu0 0
        %1248 = vmatpush1.bf16.msra.mxu0 0
        %1249 = vmatprep.mubr.bf16.mxu0 0
        %1250 = vmatmul.mubr.bf16.gmra.mrb[0].mxu0 %v1150
        %v1251 = vpop.f32.mrb[0].mxu0
        %v1252 = vadd.f32 0.0, %v1251
        %v1253 = vpop.f32.mrb[0].mxu0
        %v1254 = vpop.f32.mrb[0].mxu0
        %v1255 = vadd.f32 0.0, %v1254
        %v1256 = vpop.f32.mrb[0].mxu0
        %1257 = vmatprep.mubr.bf16.mxu0 0
        %1258 = vmatmul.mubr.bf16.gmra.mrb[0].mxu0 %v1151
        %v1259 = vpop.f32.mrb[0].mxu0
        %v1260 = vadd.f32 0.0, %v1259
        %v1261 = vpop.f32.mrb[0].mxu0
        %v1262 = vpop.f32.mrb[0].mxu0
        %v1263 = vadd.f32 0.0, %v1262
        %v1264 = vpop.f32.mrb[0].mxu0
        %1265 = vdwg.mxu0
        %v1282 = vunpack.c.l.b16 %v1130
        %v1283 = vunpack.c.l.b16 %v1131
        %v1284 = vunpack.c.l.b16 %v1132
        %v1285 = vunpack.c.l.b16 %v1133
        %v1286 = vunpack.c.l.b16 %v1134
        %v1287 = vunpack.c.l.b16 %v1135
        %v1288 = vunpack.c.l.b16 %v1136
        %v1289 = vunpack.c.l.b16 %v1137
        %v1290 = vunpack.c.l.b16 %v1138
        %v1291 = vunpack.c.l.b16 %v1139
        %v1292 = vunpack.c.l.b16 %v1140
        %v1293 = vunpack.c.l.b16 %v1141
        %v1294 = vunpack.c.l.b16 %v1142
        %v1295 = vunpack.c.l.b16 %v1143
        %v1296 = vunpack.c.l.b16 %v1144
        %v1297 = vunpack.c.l.b16 %v1145
        %v1298 = vpack.c.b16 %v1283, %v1282
        %v1299 = vpack.c.b16 %v1285, %v1284
        %v1300 = vpack.c.b16 %v1287, %v1286
        %v1301 = vpack.c.b16 %v1289, %v1288
        %v1302 = vpack.c.b16 %v1291, %v1290
        %v1303 = vpack.c.b16 %v1293, %v1292
        %v1304 = vpack.c.b16 %v1295, %v1294
        %v1305 = vpack.c.b16 %v1297, %v1296
        %1314 = vmatprep.subr.bf16.mxu0 0
        %1315 = vmatpush1.bf16.msra.mxu0 %v1298
        %1316 = vmatprep.subr.bf16.mxu0 0
        %1317 = vmatpush1.bf16.msra.mxu0 %v1299
        %1318 = vmatprep.subr.bf16.mxu0 0
        %1319 = vmatpush1.bf16.msra.mxu0 %v1300
        %1320 = vmatprep.subr.bf16.mxu0 0
        %1321 = vmatpush1.bf16.msra.mxu0 %v1301
        %1322 = vmatprep.subr.bf16.mxu0 0
        %1323 = vmatpush1.bf16.msra.mxu0 %v1302
        %1324 = vmatprep.subr.bf16.mxu0 0
        %1325 = vmatpush1.bf16.msra.mxu0 %v1303
        %1326 = vmatprep.subr.bf16.mxu0 0
        %1327 = vmatpush1.bf16.msra.mxu0 %v1304
        %1328 = vmatprep.subr.bf16.mxu0 0
        %1329 = vmatpush1.bf16.msra.mxu0 %v1305
        %1330 = vmatprep.subr.bf16.mxu0 0
        %1331 = vmatpush1.bf16.msra.mxu0 0
        %1332 = vmatprep.subr.bf16.mxu0 0
        %1333 = vmatpush1.bf16.msra.mxu0 0
        %1334 = vmatprep.subr.bf16.mxu0 0
        %1335 = vmatpush1.bf16.msra.mxu0 0
        %1336 = vmatprep.subr.bf16.mxu0 0
        %1337 = vmatpush1.bf16.msra.mxu0 0
        %1338 = vmatprep.subr.bf16.mxu0 0
        %1339 = vmatpush1.bf16.msra.mxu0 0
        %1340 = vmatprep.subr.bf16.mxu0 0
        %1341 = vmatpush1.bf16.msra.mxu0 0
        %1342 = vmatprep.subr.bf16.mxu0 0
        %1343 = vmatpush1.bf16.msra.mxu0 0
        %1344 = vmatprep.subr.bf16.mxu0 0
        %1345 = vmatpush1.bf16.msra.mxu0 0
        %1346 = vmatprep.mubr.bf16.mxu0 0
        %1347 = vmatmul.mubr.bf16.gmra.mrb[0].mxu0 %v1127
        %v1348 = vpop.f32.mrb[0].mxu0
        %v1349 = vadd.f32 %v1252, %v1348
        %v1350 = vpop.f32.mrb[0].mxu0
        %v1351 = vpop.f32.mrb[0].mxu0
        %v1352 = vadd.f32 %v1255, %v1351
        %v1353 = vpop.f32.mrb[0].mxu0
        %1354 = vmatprep.mubr.bf16.mxu0 0
        %1355 = vmatmul.mubr.bf16.gmra.mrb[0].mxu0 %v1128
        %v1356 = vpop.f32.mrb[0].mxu0
        %v1357 = vadd.f32 %v1260, %v1356
        %v1358 = vpop.f32.mrb[0].mxu0
        %v1359 = vpop.f32.mrb[0].mxu0
        %v1360 = vadd.f32 %v1263, %v1359
        %v1361 = vpop.f32.mrb[0].mxu0
        %1362 = vdwg.mxu0
        %v1363 = vld [vmem:[#allocation2 + $0x9] sm:$0xff]
        %v1364 = vld [vmem:[#allocation2 + $0x11] sm:$0xff]
        %v1365 = vld [vmem:[#allocation2 + $0x19] sm:$0xff]
        %v1366 = vld [vmem:[#allocation2 + $0x21] sm:$0xff]
        %v1367 = vpack.c.bf16 %v1364, %v1363
        %v1368 = vpack.c.bf16 %v1366, %v1365
        %s1369 = scalar_lea.vmem [#allocation3], 512
        %v1370 = vld [vmem:[%s1369] sm:$0xf]
        %v1371 = vld [vmem:[%s1369 + $0x4] sm:$0xf]
        %v1372 = vld [vmem:[%s1369 + $0x8] sm:$0xf]
        %v1373 = vld [vmem:[%s1369 + $0xc] sm:$0xf]
        %v1374 = vld [vmem:[%s1369 + $0x10] sm:$0xf]
        %v1375 = vld [vmem:[%s1369 + $0x14] sm:$0xf]
        %v1376 = vld [vmem:[%s1369 + $0x18] sm:$0xf]
        %v1377 = vld [vmem:[%s1369 + $0x1c] sm:$0xf]
        %v1378 = vld [vmem:[%s1369 + $0x20] sm:$0xf]
        %v1379 = vld [vmem:[%s1369 + $0x24] sm:$0xf]
        %v1380 = vld [vmem:[%s1369 + $0x28] sm:$0xf]
        %v1381 = vld [vmem:[%s1369 + $0x2c] sm:$0xf]
        %v1382 = vld [vmem:[%s1369 + $0x30] sm:$0xf]
        %v1383 = vld [vmem:[%s1369 + $0x34] sm:$0xf]
        %v1384 = vld [vmem:[%s1369 + $0x38] sm:$0xf]
        %v1385 = vld [vmem:[%s1369 + $0x3c] sm:$0xf]
        %v1402 = vunpack.c.l.b16 %v1370
        %v1403 = vunpack.c.l.b16 %v1371
        %v1404 = vunpack.c.l.b16 %v1372
        %v1405 = vunpack.c.l.b16 %v1373
        %v1406 = vunpack.c.l.b16 %v1374
        %v1407 = vunpack.c.l.b16 %v1375
        %v1408 = vunpack.c.l.b16 %v1376
        %v1409 = vunpack.c.l.b16 %v1377
        %v1410 = vunpack.c.l.b16 %v1378
        %v1411 = vunpack.c.l.b16 %v1379
        %v1412 = vunpack.c.l.b16 %v1380
        %v1413 = vunpack.c.l.b16 %v1381
        %v1414 = vunpack.c.l.b16 %v1382
        %v1415 = vunpack.c.l.b16 %v1383
        %v1416 = vunpack.c.l.b16 %v1384
        %v1417 = vunpack.c.l.b16 %v1385
        %v1418 = vpack.c.b16 %v1403, %v1402
        %v1419 = vpack.c.b16 %v1405, %v1404
        %v1420 = vpack.c.b16 %v1407, %v1406
        %v1421 = vpack.c.b16 %v1409, %v1408
        %v1422 = vpack.c.b16 %v1411, %v1410
        %v1423 = vpack.c.b16 %v1413, %v1412
        %v1424 = vpack.c.b16 %v1415, %v1414
        %v1425 = vpack.c.b16 %v1417, %v1416
        %1434 = vmatprep.subr.bf16.mxu0 0
        %1435 = vmatpush1.bf16.msra.mxu0 %v1418
        %1436 = vmatprep.subr.bf16.mxu0 0
        %1437 = vmatpush1.bf16.msra.mxu0 %v1419
        %1438 = vmatprep.subr.bf16.mxu0 0
        %1439 = vmatpush1.bf16.msra.mxu0 %v1420
        %1440 = vmatprep.subr.bf16.mxu0 0
        %1441 = vmatpush1.bf16.msra.mxu0 %v1421
        %1442 = vmatprep.subr.bf16.mxu0 0
        %1443 = vmatpush1.bf16.msra.mxu0 %v1422
        %1444 = vmatprep.subr.bf16.mxu0 0
        %1445 = vmatpush1.bf16.msra.mxu0 %v1423
        %1446 = vmatprep.subr.bf16.mxu0 0
        %1447 = vmatpush1.bf16.msra.mxu0 %v1424
        %1448 = vmatprep.subr.bf16.mxu0 0
        %1449 = vmatpush1.bf16.msra.mxu0 %v1425
        %1450 = vmatprep.subr.bf16.mxu0 0
        %1451 = vmatpush1.bf16.msra.mxu0 0
        %1452 = vmatprep.subr.bf16.mxu0 0
        %1453 = vmatpush1.bf16.msra.mxu0 0
        %1454 = vmatprep.subr.bf16.mxu0 0
        %1455 = vmatpush1.bf16.msra.mxu0 0
        %1456 = vmatprep.subr.bf16.mxu0 0
        %1457 = vmatpush1.bf16.msra.mxu0 0
        %1458 = vmatprep.subr.bf16.mxu0 0
        %1459 = vmatpush1.bf16.msra.mxu0 0
        %1460 = vmatprep.subr.bf16.mxu0 0
        %1461 = vmatpush1.bf16.msra.mxu0 0
        %1462 = vmatprep.subr.bf16.mxu0 0
        %1463 = vmatpush1.bf16.msra.mxu0 0
        %1464 = vmatprep.subr.bf16.mxu0 0
        %1465 = vmatpush1.bf16.msra.mxu0 0
        %1466 = vmatprep.mubr.bf16.mxu0 0
        %1467 = vmatmul.mubr.bf16.gmra.mrb[0].mxu0 %v1367
        %v1468 = vpop.f32.mrb[0].mxu0
        %v1469 = vadd.f32 0.0, %v1468
        %v1470 = vpop.f32.mrb[0].mxu0
        %v1471 = vpop.f32.mrb[0].mxu0
        %v1472 = vadd.f32 0.0, %v1471
        %v1473 = vpop.f32.mrb[0].mxu0
        %1474 = vmatprep.mubr.bf16.mxu0 0
        %1475 = vmatmul.mubr.bf16.gmra.mrb[0].mxu0 %v1368
        %v1476 = vpop.f32.mrb[0].mxu0
        %v1477 = vadd.f32 0.0, %v1476
        %v1478 = vpop.f32.mrb[0].mxu0
        %v1479 = vpop.f32.mrb[0].mxu0
        %v1480 = vadd.f32 0.0, %v1479
        %v1481 = vpop.f32.mrb[0].mxu0
        %1482 = vdwg.mxu0
        %v1483 = vadd.f32 %v1349, %v1469
        %v1484 = vadd.f32 %v1352, %v1472
        %v1485 = vadd.f32 %v1357, %v1477
        %v1486 = vadd.f32 %v1360, %v1480
        %s1487 = scalar_lea.vmem %s2, 2
        %v1488 = vld [vmem:[%s1487] sm:$0x1]
        %v1490 = vlaneseq
        %v1491 = vshrl.u32 %v1490, 7
        %v1492 = vsub.s32 0, %v1491
        %v1493 = vrot.slane %v1488, %v1492
        %v1495 = vmul.f32 %v1483, %v1493
        %v1496 = vmul.f32 %v1484, %v1493
        %v1497 = vmul.f32 %v1485, %v1493
        %v1498 = vmul.f32 %v1486, %v1493
        %s1499 = scalar_lea.vmem %s3, 2
        %v1500 = vld [vmem:[%s1499] sm:$0x1]
        %v1502 = vlaneseq
        %v1503 = vshrl.u32 %v1502, 7
        %v1504 = vsub.s32 0, %v1503
        %v1505 = vrot.slane %v1500, %v1504
        %v1507 = vadd.f32 %v1495, %v1505
        %v1508 = vadd.f32 %v1496, %v1505
        %v1509 = vadd.f32 %v1497, %v1505
        %v1510 = vadd.f32 %v1498, %v1505
        %v1511 = vadd.f32 %v1507, %v1113
        %v1512 = vadd.f32 %v1508, %v1114
        %v1513 = vadd.f32 %v1509, %v1115
        %v1514 = vadd.f32 %v1510, %v1116
        %v1515 = vmul.f32 %v1511, 0.2
        %v1516 = vmul.f32 %v1512, 0.2
        %v1517 = vmul.f32 %v1513, 0.2
        %v1518 = vmul.f32 %v1514, 0.2
        %v1519 = vmax.f32 %v1511, %v1515
        %v1520 = vmax.f32 %v1512, %v1516
        %v1521 = vmax.f32 %v1513, %v1517
        %v1522 = vmax.f32 %v1514, %v1518
        %1523 = vst [vmem:[#allocation2] sm:$0xff] 0.0
        %1524 = vst [vmem:[#allocation2 + $0x28] sm:$0xff] 0.0
        %1525 = vst [vmem:[#allocation2 + $0x8] sm:$0xff] %v1519
        %1526 = vst [vmem:[#allocation2 + $0x10] sm:$0xff] %v1520
        %1527 = vst [vmem:[#allocation2 + $0x18] sm:$0xff] %v1521
        %1528 = vst [vmem:[#allocation2 + $0x20] sm:$0xff] %v1522
        %v1529 = vld [vmem:[#allocation2 + $0x7] sm:$0xff]
        %v1530 = vld [vmem:[#allocation2 + $0xf] sm:$0xff]
        %v1531 = vld [vmem:[#allocation2 + $0x17] sm:$0xff]
        %v1532 = vld [vmem:[#allocation2 + $0x1f] sm:$0xff]
        %v1533 = vpack.c.bf16 %v1530, %v1529
        %v1534 = vpack.c.bf16 %v1532, %v1531
        %s1535 = scalar_lea.vmem [#allocation3], 576
        %v1536 = vld [vmem:[%s1535] sm:$0xf]
        %v1537 = vld [vmem:[%s1535 + $0x4] sm:$0xf]
        %v1538 = vld [vmem:[%s1535 + $0x8] sm:$0xf]
        %v1539 = vld [vmem:[%s1535 + $0xc] sm:$0xf]
        %v1540 = vld [vmem:[%s1535 + $0x10] sm:$0xf]
        %v1541 = vld [vmem:[%s1535 + $0x14] sm:$0xf]
        %v1542 = vld [vmem:[%s1535 + $0x18] sm:$0xf]
        %v1543 = vld [vmem:[%s1535 + $0x1c] sm:$0xf]
        %v1544 = vld [vmem:[%s1535 + $0x20] sm:$0xf]
        %v1545 = vld [vmem:[%s1535 + $0x24] sm:$0xf]
        %v1546 = vld [vmem:[%s1535 + $0x28] sm:$0xf]
        %v1547 = vld [vmem:[%s1535 + $0x2c] sm:$0xf]
        %v1548 = vld [vmem:[%s1535 + $0x30] sm:$0xf]
        %v1549 = vld [vmem:[%s1535 + $0x34] sm:$0xf]
        %v1550 = vld [vmem:[%s1535 + $0x38] sm:$0xf]
        %v1551 = vld [vmem:[%s1535 + $0x3c] sm:$0xf]
        %v1552 = vld [vmem:[#allocation2 + $0x8] sm:$0xff]
        %v1553 = vld [vmem:[#allocation2 + $0x10] sm:$0xff]
        %v1554 = vld [vmem:[#allocation2 + $0x18] sm:$0xff]
        %v1555 = vld [vmem:[#allocation2 + $0x20] sm:$0xff]
        %v1556 = vpack.c.bf16 %v1553, %v1552
        %v1557 = vpack.c.bf16 %v1555, %v1554
        %s1558 = scalar_lea.vmem [#allocation3], 640
        %v1559 = vld [vmem:[%s1558] sm:$0xf]
        %v1560 = vld [vmem:[%s1558 + $0x4] sm:$0xf]
        %v1561 = vld [vmem:[%s1558 + $0x8] sm:$0xf]
        %v1562 = vld [vmem:[%s1558 + $0xc] sm:$0xf]
        %v1563 = vld [vmem:[%s1558 + $0x10] sm:$0xf]
        %v1564 = vld [vmem:[%s1558 + $0x14] sm:$0xf]
        %v1565 = vld [vmem:[%s1558 + $0x18] sm:$0xf]
        %v1566 = vld [vmem:[%s1558 + $0x1c] sm:$0xf]
        %v1567 = vld [vmem:[%s1558 + $0x20] sm:$0xf]
        %v1568 = vld [vmem:[%s1558 + $0x24] sm:$0xf]
        %v1569 = vld [vmem:[%s1558 + $0x28] sm:$0xf]
        %v1570 = vld [vmem:[%s1558 + $0x2c] sm:$0xf]
        %v1571 = vld [vmem:[%s1558 + $0x30] sm:$0xf]
        %v1572 = vld [vmem:[%s1558 + $0x34] sm:$0xf]
        %v1573 = vld [vmem:[%s1558 + $0x38] sm:$0xf]
        %v1574 = vld [vmem:[%s1558 + $0x3c] sm:$0xf]
        %v1591 = vunpack.c.l.b16 %v1559
        %v1592 = vunpack.c.l.b16 %v1560
        %v1593 = vunpack.c.l.b16 %v1561
        %v1594 = vunpack.c.l.b16 %v1562
        %v1595 = vunpack.c.l.b16 %v1563
        %v1596 = vunpack.c.l.b16 %v1564
        %v1597 = vunpack.c.l.b16 %v1565
        %v1598 = vunpack.c.l.b16 %v1566
        %v1599 = vunpack.c.l.b16 %v1567
        %v1600 = vunpack.c.l.b16 %v1568
        %v1601 = vunpack.c.l.b16 %v1569
        %v1602 = vunpack.c.l.b16 %v1570
        %v1603 = vunpack.c.l.b16 %v1571
        %v1604 = vunpack.c.l.b16 %v1572
        %v1605 = vunpack.c.l.b16 %v1573
        %v1606 = vunpack.c.l.b16 %v1574
        %v1607 = vpack.c.b16 %v1592, %v1591
        %v1608 = vpack.c.b16 %v1594, %v1593
        %v1609 = vpack.c.b16 %v1596, %v1595
        %v1610 = vpack.c.b16 %v1598, %v1597
        %v1611 = vpack.c.b16 %v1600, %v1599
        %v1612 = vpack.c.b16 %v1602, %v1601
        %v1613 = vpack.c.b16 %v1604, %v1603
        %v1614 = vpack.c.b16 %v1606, %v1605
        %1623 = vmatprep.subr.bf16.mxu0 0
        %1624 = vmatpush1.bf16.msra.mxu0 %v1607
        %1625 = vmatprep.subr.bf16.mxu0 0
        %1626 = vmatpush1.bf16.msra.mxu0 %v1608
        %1627 = vmatprep.subr.bf16.mxu0 0
        %1628 = vmatpush1.bf16.msra.mxu0 %v1609
        %1629 = vmatprep.subr.bf16.mxu0 0
        %1630 = vmatpush1.bf16.msra.mxu0 %v1610
        %1631 = vmatprep.subr.bf16.mxu0 0
        %1632 = vmatpush1.bf16.msra.mxu0 %v1611
        %1633 = vmatprep.subr.bf16.mxu0 0
        %1634 = vmatpush1.bf16.msra.mxu0 %v1612
        %1635 = vmatprep.subr.bf16.mxu0 0
        %1636 = vmatpush1.bf16.msra.mxu0 %v1613
        %1637 = vmatprep.subr.bf16.mxu0 0
        %1638 = vmatpush1.bf16.msra.mxu0 %v1614
        %1639 = vmatprep.subr.bf16.mxu0 0
        %1640 = vmatpush1.bf16.msra.mxu0 0
        %1641 = vmatprep.subr.bf16.mxu0 0
        %1642 = vmatpush1.bf16.msra.mxu0 0
        %1643 = vmatprep.subr.bf16.mxu0 0
        %1644 = vmatpush1.bf16.msra.mxu0 0
        %1645 = vmatprep.subr.bf16.mxu0 0
        %1646 = vmatpush1.bf16.msra.mxu0 0
        %1647 = vmatprep.subr.bf16.mxu0 0
        %1648 = vmatpush1.bf16.msra.mxu0 0
        %1649 = vmatprep.subr.bf16.mxu0 0
        %1650 = vmatpush1.bf16.msra.mxu0 0
        %1651 = vmatprep.subr.bf16.mxu0 0
        %1652 = vmatpush1.bf16.msra.mxu0 0
        %1653 = vmatprep.subr.bf16.mxu0 0
        %1654 = vmatpush1.bf16.msra.mxu0 0
        %1655 = vmatprep.mubr.bf16.mxu0 0
        %1656 = vmatmul.mubr.bf16.gmra.mrb[0].mxu0 %v1556
        %v1657 = vpop.f32.mrb[0].mxu0
        %v1658 = vadd.f32 0.0, %v1657
        %v1659 = vpop.f32.mrb[0].mxu0
        %v1660 = vpop.f32.mrb[0].mxu0
        %v1661 = vadd.f32 0.0, %v1660
        %v1662 = vpop.f32.mrb[0].mxu0
        %1663 = vmatprep.mubr.bf16.mxu0 0
        %1664 = vmatmul.mubr.bf16.gmra.mrb[0].mxu0 %v1557
        %v1665 = vpop.f32.mrb[0].mxu0
        %v1666 = vadd.f32 0.0, %v1665
        %v1667 = vpop.f32.mrb[0].mxu0
        %v1668 = vpop.f32.mrb[0].mxu0
        %v1669 = vadd.f32 0.0, %v1668
        %v1670 = vpop.f32.mrb[0].mxu0
        %1671 = vdwg.mxu0
        %v1688 = vunpack.c.l.b16 %v1536
        %v1689 = vunpack.c.l.b16 %v1537
        %v1690 = vunpack.c.l.b16 %v1538
        %v1691 = vunpack.c.l.b16 %v1539
        %v1692 = vunpack.c.l.b16 %v1540
        %v1693 = vunpack.c.l.b16 %v1541
        %v1694 = vunpack.c.l.b16 %v1542
        %v1695 = vunpack.c.l.b16 %v1543
        %v1696 = vunpack.c.l.b16 %v1544
        %v1697 = vunpack.c.l.b16 %v1545
        %v1698 = vunpack.c.l.b16 %v1546
        %v1699 = vunpack.c.l.b16 %v1547
        %v1700 = vunpack.c.l.b16 %v1548
        %v1701 = vunpack.c.l.b16 %v1549
        %v1702 = vunpack.c.l.b16 %v1550
        %v1703 = vunpack.c.l.b16 %v1551
        %v1704 = vpack.c.b16 %v1689, %v1688
        %v1705 = vpack.c.b16 %v1691, %v1690
        %v1706 = vpack.c.b16 %v1693, %v1692
        %v1707 = vpack.c.b16 %v1695, %v1694
        %v1708 = vpack.c.b16 %v1697, %v1696
        %v1709 = vpack.c.b16 %v1699, %v1698
        %v1710 = vpack.c.b16 %v1701, %v1700
        %v1711 = vpack.c.b16 %v1703, %v1702
        %1720 = vmatprep.subr.bf16.mxu0 0
        %1721 = vmatpush1.bf16.msra.mxu0 %v1704
        %1722 = vmatprep.subr.bf16.mxu0 0
        %1723 = vmatpush1.bf16.msra.mxu0 %v1705
        %1724 = vmatprep.subr.bf16.mxu0 0
        %1725 = vmatpush1.bf16.msra.mxu0 %v1706
        %1726 = vmatprep.subr.bf16.mxu0 0
        %1727 = vmatpush1.bf16.msra.mxu0 %v1707
        %1728 = vmatprep.subr.bf16.mxu0 0
        %1729 = vmatpush1.bf16.msra.mxu0 %v1708
        %1730 = vmatprep.subr.bf16.mxu0 0
        %1731 = vmatpush1.bf16.msra.mxu0 %v1709
        %1732 = vmatprep.subr.bf16.mxu0 0
        %1733 = vmatpush1.bf16.msra.mxu0 %v1710
        %1734 = vmatprep.subr.bf16.mxu0 0
        %1735 = vmatpush1.bf16.msra.mxu0 %v1711
        %1736 = vmatprep.subr.bf16.mxu0 0
        %1737 = vmatpush1.bf16.msra.mxu0 0
        %1738 = vmatprep.subr.bf16.mxu0 0
        %1739 = vmatpush1.bf16.msra.mxu0 0
        %1740 = vmatprep.subr.bf16.mxu0 0
        %1741 = vmatpush1.bf16.msra.mxu0 0
        %1742 = vmatprep.subr.bf16.mxu0 0
        %1743 = vmatpush1.bf16.msra.mxu0 0
        %1744 = vmatprep.subr.bf16.mxu0 0
        %1745 = vmatpush1.bf16.msra.mxu0 0
        %1746 = vmatprep.subr.bf16.mxu0 0
        %1747 = vmatpush1.bf16.msra.mxu0 0
        %1748 = vmatprep.subr.bf16.mxu0 0
        %1749 = vmatpush1.bf16.msra.mxu0 0
        %1750 = vmatprep.subr.bf16.mxu0 0
        %1751 = vmatpush1.bf16.msra.mxu0 0
        %1752 = vmatprep.mubr.bf16.mxu0 0
        %1753 = vmatmul.mubr.bf16.gmra.mrb[0].mxu0 %v1533
        %v1754 = vpop.f32.mrb[0].mxu0
        %v1755 = vadd.f32 %v1658, %v1754
        %v1756 = vpop.f32.mrb[0].mxu0
        %v1757 = vpop.f32.mrb[0].mxu0
        %v1758 = vadd.f32 %v1661, %v1757
        %v1759 = vpop.f32.mrb[0].mxu0
        %1760 = vmatprep.mubr.bf16.mxu0 0
        %1761 = vmatmul.mubr.bf16.gmra.mrb[0].mxu0 %v1534
        %v1762 = vpop.f32.mrb[0].mxu0
        %v1763 = vadd.f32 %v1666, %v1762
        %v1764 = vpop.f32.mrb[0].mxu0
        %v1765 = vpop.f32.mrb[0].mxu0
        %v1766 = vadd.f32 %v1669, %v1765
        %v1767 = vpop.f32.mrb[0].mxu0
        %1768 = vdwg.mxu0
        %v1769 = vld [vmem:[#allocation2 + $0x9] sm:$0xff]
        %v1770 = vld [vmem:[#allocation2 + $0x11] sm:$0xff]
        %v1771 = vld [vmem:[#allocation2 + $0x19] sm:$0xff]
        %v1772 = vld [vmem:[#allocation2 + $0x21] sm:$0xff]
        %v1773 = vpack.c.bf16 %v1770, %v1769
        %v1774 = vpack.c.bf16 %v1772, %v1771
        %s1775 = scalar_lea.vmem [#allocation3], 704
        %v1776 = vld [vmem:[%s1775] sm:$0xf]
        %v1777 = vld [vmem:[%s1775 + $0x4] sm:$0xf]
        %v1778 = vld [vmem:[%s1775 + $0x8] sm:$0xf]
        %v1779 = vld [vmem:[%s1775 + $0xc] sm:$0xf]
        %v1780 = vld [vmem:[%s1775 + $0x10] sm:$0xf]
        %v1781 = vld [vmem:[%s1775 + $0x14] sm:$0xf]
        %v1782 = vld [vmem:[%s1775 + $0x18] sm:$0xf]
        %v1783 = vld [vmem:[%s1775 + $0x1c] sm:$0xf]
        %v1784 = vld [vmem:[%s1775 + $0x20] sm:$0xf]
        %v1785 = vld [vmem:[%s1775 + $0x24] sm:$0xf]
        %v1786 = vld [vmem:[%s1775 + $0x28] sm:$0xf]
        %v1787 = vld [vmem:[%s1775 + $0x2c] sm:$0xf]
        %v1788 = vld [vmem:[%s1775 + $0x30] sm:$0xf]
        %v1789 = vld [vmem:[%s1775 + $0x34] sm:$0xf]
        %v1790 = vld [vmem:[%s1775 + $0x38] sm:$0xf]
        %v1791 = vld [vmem:[%s1775 + $0x3c] sm:$0xf]
        %v1808 = vunpack.c.l.b16 %v1776
        %v1809 = vunpack.c.l.b16 %v1777
        %v1810 = vunpack.c.l.b16 %v1778
        %v1811 = vunpack.c.l.b16 %v1779
        %v1812 = vunpack.c.l.b16 %v1780
        %v1813 = vunpack.c.l.b16 %v1781
        %v1814 = vunpack.c.l.b16 %v1782
        %v1815 = vunpack.c.l.b16 %v1783
        %v1816 = vunpack.c.l.b16 %v1784
        %v1817 = vunpack.c.l.b16 %v1785
        %v1818 = vunpack.c.l.b16 %v1786
        %v1819 = vunpack.c.l.b16 %v1787
        %v1820 = vunpack.c.l.b16 %v1788
        %v1821 = vunpack.c.l.b16 %v1789
        %v1822 = vunpack.c.l.b16 %v1790
        %v1823 = vunpack.c.l.b16 %v1791
        %v1824 = vpack.c.b16 %v1809, %v1808
        %v1825 = vpack.c.b16 %v1811, %v1810
        %v1826 = vpack.c.b16 %v1813, %v1812
        %v1827 = vpack.c.b16 %v1815, %v1814
        %v1828 = vpack.c.b16 %v1817, %v1816
        %v1829 = vpack.c.b16 %v1819, %v1818
        %v1830 = vpack.c.b16 %v1821, %v1820
        %v1831 = vpack.c.b16 %v1823, %v1822
        %1840 = vmatprep.subr.bf16.mxu0 0
        %1841 = vmatpush1.bf16.msra.mxu0 %v1824
        %1842 = vmatprep.subr.bf16.mxu0 0
        %1843 = vmatpush1.bf16.msra.mxu0 %v1825
        %1844 = vmatprep.subr.bf16.mxu0 0
        %1845 = vmatpush1.bf16.msra.mxu0 %v1826
        %1846 = vmatprep.subr.bf16.mxu0 0
        %1847 = vmatpush1.bf16.msra.mxu0 %v1827
        %1848 = vmatprep.subr.bf16.mxu0 0
        %1849 = vmatpush1.bf16.msra.mxu0 %v1828
        %1850 = vmatprep.subr.bf16.mxu0 0
        %1851 = vmatpush1.bf16.msra.mxu0 %v1829
        %1852 = vmatprep.subr.bf16.mxu0 0
        %1853 = vmatpush1.bf16.msra.mxu0 %v1830
        %1854 = vmatprep.subr.bf16.mxu0 0
        %1855 = vmatpush1.bf16.msra.mxu0 %v1831
        %1856 = vmatprep.subr.bf16.mxu0 0
        %1857 = vmatpush1.bf16.msra.mxu0 0
        %1858 = vmatprep.subr.bf16.mxu0 0
        %1859 = vmatpush1.bf16.msra.mxu0 0
        %1860 = vmatprep.subr.bf16.mxu0 0
        %1861 = vmatpush1.bf16.msra.mxu0 0
        %1862 = vmatprep.subr.bf16.mxu0 0
        %1863 = vmatpush1.bf16.msra.mxu0 0
        %1864 = vmatprep.subr.bf16.mxu0 0
        %1865 = vmatpush1.bf16.msra.mxu0 0
        %1866 = vmatprep.subr.bf16.mxu0 0
        %1867 = vmatpush1.bf16.msra.mxu0 0
        %1868 = vmatprep.subr.bf16.mxu0 0
        %1869 = vmatpush1.bf16.msra.mxu0 0
        %1870 = vmatprep.subr.bf16.mxu0 0
        %1871 = vmatpush1.bf16.msra.mxu0 0
        %1872 = vmatprep.mubr.bf16.mxu0 0
        %1873 = vmatmul.mubr.bf16.gmra.mrb[0].mxu0 %v1773
        %v1874 = vpop.f32.mrb[0].mxu0
        %v1875 = vadd.f32 0.0, %v1874
        %v1876 = vpop.f32.mrb[0].mxu0
        %v1877 = vpop.f32.mrb[0].mxu0
        %v1878 = vadd.f32 0.0, %v1877
        %v1879 = vpop.f32.mrb[0].mxu0
        %1880 = vmatprep.mubr.bf16.mxu0 0
        %1881 = vmatmul.mubr.bf16.gmra.mrb[0].mxu0 %v1774
        %v1882 = vpop.f32.mrb[0].mxu0
        %v1883 = vadd.f32 0.0, %v1882
        %v1884 = vpop.f32.mrb[0].mxu0
        %v1885 = vpop.f32.mrb[0].mxu0
        %v1886 = vadd.f32 0.0, %v1885
        %v1887 = vpop.f32.mrb[0].mxu0
        %1888 = vdwg.mxu0
        %v1889 = vadd.f32 %v1755, %v1875
        %v1890 = vadd.f32 %v1758, %v1878
        %v1891 = vadd.f32 %v1763, %v1883
        %v1892 = vadd.f32 %v1766, %v1886
        %s1893 = scalar_lea.vmem %s2, 3
        %v1894 = vld [vmem:[%s1893] sm:$0x1]
        %v1896 = vlaneseq
        %v1897 = vshrl.u32 %v1896, 7
        %v1898 = vsub.s32 0, %v1897
        %v1899 = vrot.slane %v1894, %v1898
        %v1901 = vmul.f32 %v1889, %v1899
        %v1902 = vmul.f32 %v1890, %v1899
        %v1903 = vmul.f32 %v1891, %v1899
        %v1904 = vmul.f32 %v1892, %v1899
        %s1905 = scalar_lea.vmem %s3, 3
        %v1906 = vld [vmem:[%s1905] sm:$0x1]
        %v1908 = vlaneseq
        %v1909 = vshrl.u32 %v1908, 7
        %v1910 = vsub.s32 0, %v1909
        %v1911 = vrot.slane %v1906, %v1910
        %v1913 = vadd.f32 %v1901, %v1911
        %v1914 = vadd.f32 %v1902, %v1911
        %v1915 = vadd.f32 %v1903, %v1911
        %v1916 = vadd.f32 %v1904, %v1911
        %v1917 = vadd.f32 %v1913, %v707
        %v1918 = vadd.f32 %v1914, %v708
        %v1919 = vadd.f32 %v1915, %v709
        %v1920 = vadd.f32 %v1916, %v710
        %v1921 = vmax.f32 %v1917, 0.0
        %v1922 = vmax.f32 %v1918, 0.0
        %v1923 = vmax.f32 %v1919, 0.0
        %v1924 = vmax.f32 %v1920, 0.0
        %1925 = vst [vmem:[#allocation2] sm:$0xff] 0.0
        %1926 = vst [vmem:[#allocation2 + $0x28] sm:$0xff] 0.0
        %1927 = vst [vmem:[#allocation2 + $0x8] sm:$0xff] %v1921
        %1928 = vst [vmem:[#allocation2 + $0x10] sm:$0xff] %v1922
        %1929 = vst [vmem:[#allocation2 + $0x18] sm:$0xff] %v1923
        %1930 = vst [vmem:[#allocation2 + $0x20] sm:$0xff] %v1924
        %s1931 = scalar_lea.vmem [#allocation2], 7
        %v1932 = vld [vmem:[%s1931] ss:$2 sm:$0xff]
        %s1933 = scalar_lea.vmem [#allocation2], 23
        %v1934 = vld [vmem:[%s1933] ss:$2 sm:$0xff]
        %v1935 = vpack.c.bf16 %v1934, %v1932
        %v1936 = vld [vmem:[#allocation5] sm:$0xf]
        %v1937 = vld [vmem:[#allocation5 + $0x4] sm:$0xf]
        %v1938 = vld [vmem:[#allocation5 + $0x8] sm:$0xf]
        %v1939 = vld [vmem:[#allocation5 + $0xc] sm:$0xf]
        %v1940 = vld [vmem:[#allocation5 + $0x10] sm:$0xf]
        %v1941 = vld [vmem:[#allocation5 + $0x14] sm:$0xf]
        %v1942 = vld [vmem:[#allocation5 + $0x18] sm:$0xf]
        %v1943 = vld [vmem:[#allocation5 + $0x1c] sm:$0xf]
        %v1944 = vld [vmem:[#allocation5 + $0x20] sm:$0xf]
        %v1945 = vld [vmem:[#allocation5 + $0x24] sm:$0xf]
        %v1946 = vld [vmem:[#allocation5 + $0x28] sm:$0xf]
        %v1947 = vld [vmem:[#allocation5 + $0x2c] sm:$0xf]
        %v1948 = vld [vmem:[#allocation5 + $0x30] sm:$0xf]
        %v1949 = vld [vmem:[#allocation5 + $0x34] sm:$0xf]
        %v1950 = vld [vmem:[#allocation5 + $0x38] sm:$0xf]
        %v1951 = vld [vmem:[#allocation5 + $0x3c] sm:$0xf]
        %s1952 = scalar_lea.vmem [#allocation2], 8
        %v1953 = vld [vmem:[%s1952] ss:$2 sm:$0xff]
        %s1954 = scalar_lea.vmem [#allocation2], 24
        %v1955 = vld [vmem:[%s1954] ss:$2 sm:$0xff]
        %v1956 = vpack.c.bf16 %v1955, %v1953
        %s1957 = scalar_lea.vmem [#allocation5], 64
        %v1958 = vld [vmem:[%s1957] sm:$0xf]
        %v1959 = vld [vmem:[%s1957 + $0x4] sm:$0xf]
        %v1960 = vld [vmem:[%s1957 + $0x8] sm:$0xf]
        %v1961 = vld [vmem:[%s1957 + $0xc] sm:$0xf]
        %v1962 = vld [vmem:[%s1957 + $0x10] sm:$0xf]
        %v1963 = vld [vmem:[%s1957 + $0x14] sm:$0xf]
        %v1964 = vld [vmem:[%s1957 + $0x18] sm:$0xf]
        %v1965 = vld [vmem:[%s1957 + $0x1c] sm:$0xf]
        %v1966 = vld [vmem:[%s1957 + $0x20] sm:$0xf]
        %v1967 = vld [vmem:[%s1957 + $0x24] sm:$0xf]
        %v1968 = vld [vmem:[%s1957 + $0x28] sm:$0xf]
        %v1969 = vld [vmem:[%s1957 + $0x2c] sm:$0xf]
        %v1970 = vld [vmem:[%s1957 + $0x30] sm:$0xf]
        %v1971 = vld [vmem:[%s1957 + $0x34] sm:$0xf]
        %v1972 = vld [vmem:[%s1957 + $0x38] sm:$0xf]
        %v1973 = vld [vmem:[%s1957 + $0x3c] sm:$0xf]
        %v1990 = vunpack.c.l.b16 %v1958
        %v1991 = vunpack.c.l.b16 %v1959
        %v1992 = vunpack.c.l.b16 %v1960
        %v1993 = vunpack.c.l.b16 %v1961
        %v1994 = vunpack.c.l.b16 %v1962
        %v1995 = vunpack.c.l.b16 %v1963
        %v1996 = vunpack.c.l.b16 %v1964
        %v1997 = vunpack.c.l.b16 %v1965
        %v1998 = vunpack.c.l.b16 %v1966
        %v1999 = vunpack.c.l.b16 %v1967
        %v2000 = vunpack.c.l.b16 %v1968
        %v2001 = vunpack.c.l.b16 %v1969
        %v2002 = vunpack.c.l.b16 %v1970
        %v2003 = vunpack.c.l.b16 %v1971
        %v2004 = vunpack.c.l.b16 %v1972
        %v2005 = vunpack.c.l.b16 %v1973
        %v2006 = vpack.c.b16 %v1991, %v1990
        %v2007 = vpack.c.b16 %v1993, %v1992
        %v2008 = vpack.c.b16 %v1995, %v1994
        %v2009 = vpack.c.b16 %v1997, %v1996
        %v2010 = vpack.c.b16 %v1999, %v1998
        %v2011 = vpack.c.b16 %v2001, %v2000
        %v2012 = vpack.c.b16 %v2003, %v2002
        %v2013 = vpack.c.b16 %v2005, %v2004
        %2022 = vmatprep.subr.bf16.mxu0 0
        %2023 = vmatpush1.bf16.msra.mxu0 %v2006
        %2024 = vmatprep.subr.bf16.mxu0 0
        %2025 = vmatpush1.bf16.msra.mxu0 %v2007
        %2026 = vmatprep.subr.bf16.mxu0 0
        %2027 = vmatpush1.bf16.msra.mxu0 %v2008
        %2028 = vmatprep.subr.bf16.mxu0 0
        %2029 = vmatpush1.bf16.msra.mxu0 %v2009
        %2030 = vmatprep.subr.bf16.mxu0 0
        %2031 = vmatpush1.bf16.msra.mxu0 %v2010
        %2032 = vmatprep.subr.bf16.mxu0 0
        %2033 = vmatpush1.bf16.msra.mxu0 %v2011
        %2034 = vmatprep.subr.bf16.mxu0 0
        %2035 = vmatpush1.bf16.msra.mxu0 %v2012
        %2036 = vmatprep.subr.bf16.mxu0 0
        %2037 = vmatpush1.bf16.msra.mxu0 %v2013
        %2038 = vmatprep.subr.bf16.mxu0 0
        %2039 = vmatpush1.bf16.msra.mxu0 0
        %2040 = vmatprep.subr.bf16.mxu0 0
        %2041 = vmatpush1.bf16.msra.mxu0 0
        %2042 = vmatprep.subr.bf16.mxu0 0
        %2043 = vmatpush1.bf16.msra.mxu0 0
        %2044 = vmatprep.subr.bf16.mxu0 0
        %2045 = vmatpush1.bf16.msra.mxu0 0
        %2046 = vmatprep.subr.bf16.mxu0 0
        %2047 = vmatpush1.bf16.msra.mxu0 0
        %2048 = vmatprep.subr.bf16.mxu0 0
        %2049 = vmatpush1.bf16.msra.mxu0 0
        %2050 = vmatprep.subr.bf16.mxu0 0
        %2051 = vmatpush1.bf16.msra.mxu0 0
        %2052 = vmatprep.subr.bf16.mxu0 0
        %2053 = vmatpush1.bf16.msra.mxu0 0
        %2054 = vmatprep.mubr.bf16.mxu0 0
        %2055 = vmatmul.mubr.bf16.gmra.mrb[0].mxu0 %v1956
        %v2056 = vpop.f32.mrb[0].mxu0
        %v2057 = vadd.f32 0.0, %v2056
        %v2058 = vpop.f32.mrb[0].mxu0
        %v2059 = vpop.f32.mrb[0].mxu0
        %v2060 = vadd.f32 0.0, %v2059
        %v2061 = vpop.f32.mrb[0].mxu0
        %2062 = vdwg.mxu0
        %v2079 = vunpack.c.l.b16 %v1936
        %v2080 = vunpack.c.l.b16 %v1937
        %v2081 = vunpack.c.l.b16 %v1938
        %v2082 = vunpack.c.l.b16 %v1939
        %v2083 = vunpack.c.l.b16 %v1940
        %v2084 = vunpack.c.l.b16 %v1941
        %v2085 = vunpack.c.l.b16 %v1942
        %v2086 = vunpack.c.l.b16 %v1943
        %v2087 = vunpack.c.l.b16 %v1944
        %v2088 = vunpack.c.l.b16 %v1945
        %v2089 = vunpack.c.l.b16 %v1946
        %v2090 = vunpack.c.l.b16 %v1947
        %v2091 = vunpack.c.l.b16 %v1948
        %v2092 = vunpack.c.l.b16 %v1949
        %v2093 = vunpack.c.l.b16 %v1950
        %v2094 = vunpack.c.l.b16 %v1951
        %v2095 = vpack.c.b16 %v2080, %v2079
        %v2096 = vpack.c.b16 %v2082, %v2081
        %v2097 = vpack.c.b16 %v2084, %v2083
        %v2098 = vpack.c.b16 %v2086, %v2085
        %v2099 = vpack.c.b16 %v2088, %v2087
        %v2100 = vpack.c.b16 %v2090, %v2089
        %v2101 = vpack.c.b16 %v2092, %v2091
        %v2102 = vpack.c.b16 %v2094, %v2093
        %2111 = vmatprep.subr.bf16.mxu0 0
        %2112 = vmatpush1.bf16.msra.mxu0 %v2095
        %2113 = vmatprep.subr.bf16.mxu0 0
        %2114 = vmatpush1.bf16.msra.mxu0 %v2096
        %2115 = vmatprep.subr.bf16.mxu0 0
        %2116 = vmatpush1.bf16.msra.mxu0 %v2097
        %2117 = vmatprep.subr.bf16.mxu0 0
        %2118 = vmatpush1.bf16.msra.mxu0 %v2098
        %2119 = vmatprep.subr.bf16.mxu0 0
        %2120 = vmatpush1.bf16.msra.mxu0 %v2099
        %2121 = vmatprep.subr.bf16.mxu0 0
        %2122 = vmatpush1.bf16.msra.mxu0 %v2100
        %2123 = vmatprep.subr.bf16.mxu0 0
        %2124 = vmatpush1.bf16.msra.mxu0 %v2101
        %2125 = vmatprep.subr.bf16.mxu0 0
        %2126 = vmatpush1.bf16.msra.mxu0 %v2102
        %2127 = vmatprep.subr.bf16.mxu0 0
        %2128 = vmatpush1.bf16.msra.mxu0 0
        %2129 = vmatprep.subr.bf16.mxu0 0
        %2130 = vmatpush1.bf16.msra.mxu0 0
        %2131 = vmatprep.subr.bf16.mxu0 0
        %2132 = vmatpush1.bf16.msra.mxu0 0
        %2133 = vmatprep.subr.bf16.mxu0 0
        %2134 = vmatpush1.bf16.msra.mxu0 0
        %2135 = vmatprep.subr.bf16.mxu0 0
        %2136 = vmatpush1.bf16.msra.mxu0 0
        %2137 = vmatprep.subr.bf16.mxu0 0
        %2138 = vmatpush1.bf16.msra.mxu0 0
        %2139 = vmatprep.subr.bf16.mxu0 0
        %2140 = vmatpush1.bf16.msra.mxu0 0
        %2141 = vmatprep.subr.bf16.mxu0 0
        %2142 = vmatpush1.bf16.msra.mxu0 0
        %2143 = vmatprep.mubr.bf16.mxu0 0
        %2144 = vmatmul.mubr.bf16.gmra.mrb[0].mxu0 %v1935
        %v2145 = vpop.f32.mrb[0].mxu0
        %v2146 = vadd.f32 %v2057, %v2145
        %v2147 = vpop.f32.mrb[0].mxu0
        %v2148 = vpop.f32.mrb[0].mxu0
        %v2149 = vadd.f32 %v2060, %v2148
        %v2150 = vpop.f32.mrb[0].mxu0
        %2151 = vdwg.mxu0
        %s2152 = scalar_lea.vmem [#allocation2], 9
        %v2153 = vld [vmem:[%s2152] ss:$2 sm:$0xff]
        %s2154 = scalar_lea.vmem [#allocation2], 25
        %v2155 = vld [vmem:[%s2154] ss:$2 sm:$0xff]
        %v2156 = vpack.c.bf16 %v2155, %v2153
        %s2157 = scalar_lea.vmem [#allocation5], 128
        %v2158 = vld [vmem:[%s2157] sm:$0xf]
        %v2159 = vld [vmem:[%s2157 + $0x4] sm:$0xf]
        %v2160 = vld [vmem:[%s2157 + $0x8] sm:$0xf]
        %v2161 = vld [vmem:[%s2157 + $0xc] sm:$0xf]
        %v2162 = vld [vmem:[%s2157 + $0x10] sm:$0xf]
        %v2163 = vld [vmem:[%s2157 + $0x14] sm:$0xf]
        %v2164 = vld [vmem:[%s2157 + $0x18] sm:$0xf]
        %v2165 = vld [vmem:[%s2157 + $0x1c] sm:$0xf]
        %v2166 = vld [vmem:[%s2157 + $0x20] sm:$0xf]
        %v2167 = vld [vmem:[%s2157 + $0x24] sm:$0xf]
        %v2168 = vld [vmem:[%s2157 + $0x28] sm:$0xf]
        %v2169 = vld [vmem:[%s2157 + $0x2c] sm:$0xf]
        %v2170 = vld [vmem:[%s2157 + $0x30] sm:$0xf]
        %v2171 = vld [vmem:[%s2157 + $0x34] sm:$0xf]
        %v2172 = vld [vmem:[%s2157 + $0x38] sm:$0xf]
        %v2173 = vld [vmem:[%s2157 + $0x3c] sm:$0xf]
        %v2190 = vunpack.c.l.b16 %v2158
        %v2191 = vunpack.c.l.b16 %v2159
        %v2192 = vunpack.c.l.b16 %v2160
        %v2193 = vunpack.c.l.b16 %v2161
        %v2194 = vunpack.c.l.b16 %v2162
        %v2195 = vunpack.c.l.b16 %v2163
        %v2196 = vunpack.c.l.b16 %v2164
        %v2197 = vunpack.c.l.b16 %v2165
        %v2198 = vunpack.c.l.b16 %v2166
        %v2199 = vunpack.c.l.b16 %v2167
        %v2200 = vunpack.c.l.b16 %v2168
        %v2201 = vunpack.c.l.b16 %v2169
        %v2202 = vunpack.c.l.b16 %v2170
        %v2203 = vunpack.c.l.b16 %v2171
        %v2204 = vunpack.c.l.b16 %v2172
        %v2205 = vunpack.c.l.b16 %v2173
        %v2206 = vpack.c.b16 %v2191, %v2190
        %v2207 = vpack.c.b16 %v2193, %v2192
        %v2208 = vpack.c.b16 %v2195, %v2194
        %v2209 = vpack.c.b16 %v2197, %v2196
        %v2210 = vpack.c.b16 %v2199, %v2198
        %v2211 = vpack.c.b16 %v2201, %v2200
        %v2212 = vpack.c.b16 %v2203, %v2202
        %v2213 = vpack.c.b16 %v2205, %v2204
        %2222 = vmatprep.subr.bf16.mxu0 0
        %2223 = vmatpush1.bf16.msra.mxu0 %v2206
        %2224 = vmatprep.subr.bf16.mxu0 0
        %2225 = vmatpush1.bf16.msra.mxu0 %v2207
        %2226 = vmatprep.subr.bf16.mxu0 0
        %2227 = vmatpush1.bf16.msra.mxu0 %v2208
        %2228 = vmatprep.subr.bf16.mxu0 0
        %2229 = vmatpush1.bf16.msra.mxu0 %v2209
        %2230 = vmatprep.subr.bf16.mxu0 0
        %2231 = vmatpush1.bf16.msra.mxu0 %v2210
        %2232 = vmatprep.subr.bf16.mxu0 0
        %2233 = vmatpush1.bf16.msra.mxu0 %v2211
        %2234 = vmatprep.subr.bf16.mxu0 0
        %2235 = vmatpush1.bf16.msra.mxu0 %v2212
        %2236 = vmatprep.subr.bf16.mxu0 0
        %2237 = vmatpush1.bf16.msra.mxu0 %v2213
        %2238 = vmatprep.subr.bf16.mxu0 0
        %2239 = vmatpush1.bf16.msra.mxu0 0
        %2240 = vmatprep.subr.bf16.mxu0 0
        %2241 = vmatpush1.bf16.msra.mxu0 0
        %2242 = vmatprep.subr.bf16.mxu0 0
        %2243 = vmatpush1.bf16.msra.mxu0 0
        %2244 = vmatprep.subr.bf16.mxu0 0
        %2245 = vmatpush1.bf16.msra.mxu0 0
        %2246 = vmatprep.subr.bf16.mxu0 0
        %2247 = vmatpush1.bf16.msra.mxu0 0
        %2248 = vmatprep.subr.bf16.mxu0 0
        %2249 = vmatpush1.bf16.msra.mxu0 0
        %2250 = vmatprep.subr.bf16.mxu0 0
        %2251 = vmatpush1.bf16.msra.mxu0 0
        %2252 = vmatprep.subr.bf16.mxu0 0
        %2253 = vmatpush1.bf16.msra.mxu0 0
        %2254 = vmatprep.mubr.bf16.mxu0 0
        %2255 = vmatmul.mubr.bf16.gmra.mrb[0].mxu0 %v2156
        %v2256 = vpop.f32.mrb[0].mxu0
        %v2257 = vadd.f32 0.0, %v2256
        %v2258 = vpop.f32.mrb[0].mxu0
        %v2259 = vpop.f32.mrb[0].mxu0
        %v2260 = vadd.f32 0.0, %v2259
        %v2261 = vpop.f32.mrb[0].mxu0
        %2262 = vdwg.mxu0
        %v2263 = vadd.f32 %v2146, %v2257
        %v2264 = vadd.f32 %v2149, %v2260
        %s2265 = scalar_lea.vmem [#allocation2], 10
        %v2266 = vld [vmem:[%s2265] ss:$2 sm:$0xff]
        %s2267 = scalar_lea.vmem [#allocation2], 26
        %v2268 = vld [vmem:[%s2267] ss:$2 sm:$0xff]
        %v2269 = vpack.c.bf16 %v2268, %v2266
        %s2270 = scalar_lea.vmem [#allocation5], 192
        %v2271 = vld [vmem:[%s2270] sm:$0xf]
        %v2272 = vld [vmem:[%s2270 + $0x4] sm:$0xf]
        %v2273 = vld [vmem:[%s2270 + $0x8] sm:$0xf]
        %v2274 = vld [vmem:[%s2270 + $0xc] sm:$0xf]
        %v2275 = vld [vmem:[%s2270 + $0x10] sm:$0xf]
        %v2276 = vld [vmem:[%s2270 + $0x14] sm:$0xf]
        %v2277 = vld [vmem:[%s2270 + $0x18] sm:$0xf]
        %v2278 = vld [vmem:[%s2270 + $0x1c] sm:$0xf]
        %v2279 = vld [vmem:[%s2270 + $0x20] sm:$0xf]
        %v2280 = vld [vmem:[%s2270 + $0x24] sm:$0xf]
        %v2281 = vld [vmem:[%s2270 + $0x28] sm:$0xf]
        %v2282 = vld [vmem:[%s2270 + $0x2c] sm:$0xf]
        %v2283 = vld [vmem:[%s2270 + $0x30] sm:$0xf]
        %v2284 = vld [vmem:[%s2270 + $0x34] sm:$0xf]
        %v2285 = vld [vmem:[%s2270 + $0x38] sm:$0xf]
        %v2286 = vld [vmem:[%s2270 + $0x3c] sm:$0xf]
        %v2303 = vunpack.c.l.b16 %v2271
        %v2304 = vunpack.c.l.b16 %v2272
        %v2305 = vunpack.c.l.b16 %v2273
        %v2306 = vunpack.c.l.b16 %v2274
        %v2307 = vunpack.c.l.b16 %v2275
        %v2308 = vunpack.c.l.b16 %v2276
        %v2309 = vunpack.c.l.b16 %v2277
        %v2310 = vunpack.c.l.b16 %v2278
        %v2311 = vunpack.c.l.b16 %v2279
        %v2312 = vunpack.c.l.b16 %v2280
        %v2313 = vunpack.c.l.b16 %v2281
        %v2314 = vunpack.c.l.b16 %v2282
        %v2315 = vunpack.c.l.b16 %v2283
        %v2316 = vunpack.c.l.b16 %v2284
        %v2317 = vunpack.c.l.b16 %v2285
        %v2318 = vunpack.c.l.b16 %v2286
        %v2319 = vpack.c.b16 %v2304, %v2303
        %v2320 = vpack.c.b16 %v2306, %v2305
        %v2321 = vpack.c.b16 %v2308, %v2307
        %v2322 = vpack.c.b16 %v2310, %v2309
        %v2323 = vpack.c.b16 %v2312, %v2311
        %v2324 = vpack.c.b16 %v2314, %v2313
        %v2325 = vpack.c.b16 %v2316, %v2315
        %v2326 = vpack.c.b16 %v2318, %v2317
        %2335 = vmatprep.subr.bf16.mxu0 0
        %2336 = vmatpush1.bf16.msra.mxu0 %v2319
        %2337 = vmatprep.subr.bf16.mxu0 0
        %2338 = vmatpush1.bf16.msra.mxu0 %v2320
        %2339 = vmatprep.subr.bf16.mxu0 0
        %2340 = vmatpush1.bf16.msra.mxu0 %v2321
        %2341 = vmatprep.subr.bf16.mxu0 0
        %2342 = vmatpush1.bf16.msra.mxu0 %v2322
        %2343 = vmatprep.subr.bf16.mxu0 0
        %2344 = vmatpush1.bf16.msra.mxu0 %v2323
        %2345 = vmatprep.subr.bf16.mxu0 0
        %2346 = vmatpush1.bf16.msra.mxu0 %v2324
        %2347 = vmatprep.subr.bf16.mxu0 0
        %2348 = vmatpush1.bf16.msra.mxu0 %v2325
        %2349 = vmatprep.subr.bf16.mxu0 0
        %2350 = vmatpush1.bf16.msra.mxu0 %v2326
        %2351 = vmatprep.subr.bf16.mxu0 0
        %2352 = vmatpush1.bf16.msra.mxu0 0
        %2353 = vmatprep.subr.bf16.mxu0 0
        %2354 = vmatpush1.bf16.msra.mxu0 0
        %2355 = vmatprep.subr.bf16.mxu0 0
        %2356 = vmatpush1.bf16.msra.mxu0 0
        %2357 = vmatprep.subr.bf16.mxu0 0
        %2358 = vmatpush1.bf16.msra.mxu0 0
        %2359 = vmatprep.subr.bf16.mxu0 0
        %2360 = vmatpush1.bf16.msra.mxu0 0
        %2361 = vmatprep.subr.bf16.mxu0 0
        %2362 = vmatpush1.bf16.msra.mxu0 0
        %2363 = vmatprep.subr.bf16.mxu0 0
        %2364 = vmatpush1.bf16.msra.mxu0 0
        %2365 = vmatprep.subr.bf16.mxu0 0
        %2366 = vmatpush1.bf16.msra.mxu0 0
        %2367 = vmatprep.mubr.bf16.mxu0 0
        %2368 = vmatmul.mubr.bf16.gmra.mrb[0].mxu0 %v2269
        %v2369 = vpop.f32.mrb[0].mxu0
        %v2370 = vadd.f32 0.0, %v2369
        %v2371 = vpop.f32.mrb[0].mxu0
        %v2372 = vpop.f32.mrb[0].mxu0
        %v2373 = vadd.f32 0.0, %v2372
        %v2374 = vpop.f32.mrb[0].mxu0
        %2375 = vdwg.mxu0
        %v2376 = vadd.f32 %v2263, %v2370
        %v2377 = vadd.f32 %v2264, %v2373
        %v2378 = vld [vmem:[%s5] sm:$0x1]
        %v2380 = vlaneseq
        %v2381 = vshrl.u32 %v2380, 7
        %v2382 = vsub.s32 0, %v2381
        %v2383 = vrot.slane %v2378, %v2382
        %v2385 = vmul.f32 %v2376, %v2383
        %v2386 = vmul.f32 %v2377, %v2383
        %v2387 = vld [vmem:[%s6] sm:$0x1]
        %v2389 = vlaneseq
        %v2390 = vshrl.u32 %v2389, 7
        %v2391 = vsub.s32 0, %v2390
        %v2392 = vrot.slane %v2387, %v2391
        %v2394 = vadd.f32 %v2385, %v2392
        %v2395 = vadd.f32 %v2386, %v2392
        %2396 = vst [vmem:[#allocation2] sm:$0xff] 0.0
        %2397 = vst [vmem:[#allocation2 + $0x28] sm:$0xff] 0.0
        %2398 = vst [vmem:[#allocation2 + $0x8] sm:$0xff] %v1921
        %2399 = vst [vmem:[#allocation2 + $0x10] sm:$0xff] %v1922
        %2400 = vst [vmem:[#allocation2 + $0x18] sm:$0xff] %v1923
        %2401 = vst [vmem:[#allocation2 + $0x20] sm:$0xff] %v1924
        %v2402 = vld [vmem:[%s1931] ss:$2 sm:$0xff]
        %v2403 = vld [vmem:[%s1933] ss:$2 sm:$0xff]
        %v2404 = vpack.c.bf16 %v2403, %v2402
        %s2405 = scalar_lea.vmem [#allocation5], 256
        %v2406 = vld [vmem:[%s2405] sm:$0xf]
        %v2407 = vld [vmem:[%s2405 + $0x4] sm:$0xf]
        %v2408 = vld [vmem:[%s2405 + $0x8] sm:$0xf]
        %v2409 = vld [vmem:[%s2405 + $0xc] sm:$0xf]
        %v2410 = vld [vmem:[%s2405 + $0x10] sm:$0xf]
        %v2411 = vld [vmem:[%s2405 + $0x14] sm:$0xf]
        %v2412 = vld [vmem:[%s2405 + $0x18] sm:$0xf]
        %v2413 = vld [vmem:[%s2405 + $0x1c] sm:$0xf]
        %v2414 = vld [vmem:[%s2405 + $0x20] sm:$0xf]
        %v2415 = vld [vmem:[%s2405 + $0x24] sm:$0xf]
        %v2416 = vld [vmem:[%s2405 + $0x28] sm:$0xf]
        %v2417 = vld [vmem:[%s2405 + $0x2c] sm:$0xf]
        %v2418 = vld [vmem:[%s2405 + $0x30] sm:$0xf]
        %v2419 = vld [vmem:[%s2405 + $0x34] sm:$0xf]
        %v2420 = vld [vmem:[%s2405 + $0x38] sm:$0xf]
        %v2421 = vld [vmem:[%s2405 + $0x3c] sm:$0xf]
        %v2422 = vld [vmem:[%s1952] ss:$2 sm:$0xff]
        %v2423 = vld [vmem:[%s1954] ss:$2 sm:$0xff]
        %v2424 = vpack.c.bf16 %v2423, %v2422
        %s2425 = scalar_lea.vmem [#allocation5], 320
        %v2426 = vld [vmem:[%s2425] sm:$0xf]
        %v2427 = vld [vmem:[%s2425 + $0x4] sm:$0xf]
        %v2428 = vld [vmem:[%s2425 + $0x8] sm:$0xf]
        %v2429 = vld [vmem:[%s2425 + $0xc] sm:$0xf]
        %v2430 = vld [vmem:[%s2425 + $0x10] sm:$0xf]
        %v2431 = vld [vmem:[%s2425 + $0x14] sm:$0xf]
        %v2432 = vld [vmem:[%s2425 + $0x18] sm:$0xf]
        %v2433 = vld [vmem:[%s2425 + $0x1c] sm:$0xf]
        %v2434 = vld [vmem:[%s2425 + $0x20] sm:$0xf]
        %v2435 = vld [vmem:[%s2425 + $0x24] sm:$0xf]
        %v2436 = vld [vmem:[%s2425 + $0x28] sm:$0xf]
        %v2437 = vld [vmem:[%s2425 + $0x2c] sm:$0xf]
        %v2438 = vld [vmem:[%s2425 + $0x30] sm:$0xf]
        %v2439 = vld [vmem:[%s2425 + $0x34] sm:$0xf]
        %v2440 = vld [vmem:[%s2425 + $0x38] sm:$0xf]
        %v2441 = vld [vmem:[%s2425 + $0x3c] sm:$0xf]
        %v2458 = vunpack.c.l.b16 %v2426
        %v2459 = vunpack.c.l.b16 %v2427
        %v2460 = vunpack.c.l.b16 %v2428
        %v2461 = vunpack.c.l.b16 %v2429
        %v2462 = vunpack.c.l.b16 %v2430
        %v2463 = vunpack.c.l.b16 %v2431
        %v2464 = vunpack.c.l.b16 %v2432
        %v2465 = vunpack.c.l.b16 %v2433
        %v2466 = vunpack.c.l.b16 %v2434
        %v2467 = vunpack.c.l.b16 %v2435
        %v2468 = vunpack.c.l.b16 %v2436
        %v2469 = vunpack.c.l.b16 %v2437
        %v2470 = vunpack.c.l.b16 %v2438
        %v2471 = vunpack.c.l.b16 %v2439
        %v2472 = vunpack.c.l.b16 %v2440
        %v2473 = vunpack.c.l.b16 %v2441
        %v2474 = vpack.c.b16 %v2459, %v2458
        %v2475 = vpack.c.b16 %v2461, %v2460
        %v2476 = vpack.c.b16 %v2463, %v2462
        %v2477 = vpack.c.b16 %v2465, %v2464
        %v2478 = vpack.c.b16 %v2467, %v2466
        %v2479 = vpack.c.b16 %v2469, %v2468
        %v2480 = vpack.c.b16 %v2471, %v2470
        %v2481 = vpack.c.b16 %v2473, %v2472
        %2490 = vmatprep.subr.bf16.mxu0 0
        %2491 = vmatpush1.bf16.msra.mxu0 %v2474
        %2492 = vmatprep.subr.bf16.mxu0 0
        %2493 = vmatpush1.bf16.msra.mxu0 %v2475
        %2494 = vmatprep.subr.bf16.mxu0 0
        %2495 = vmatpush1.bf16.msra.mxu0 %v2476
        %2496 = vmatprep.subr.bf16.mxu0 0
        %2497 = vmatpush1.bf16.msra.mxu0 %v2477
        %2498 = vmatprep.subr.bf16.mxu0 0
        %2499 = vmatpush1.bf16.msra.mxu0 %v2478
        %2500 = vmatprep.subr.bf16.mxu0 0
        %2501 = vmatpush1.bf16.msra.mxu0 %v2479
        %2502 = vmatprep.subr.bf16.mxu0 0
        %2503 = vmatpush1.bf16.msra.mxu0 %v2480
        %2504 = vmatprep.subr.bf16.mxu0 0
        %2505 = vmatpush1.bf16.msra.mxu0 %v2481
        %2506 = vmatprep.subr.bf16.mxu0 0
        %2507 = vmatpush1.bf16.msra.mxu0 0
        %2508 = vmatprep.subr.bf16.mxu0 0
        %2509 = vmatpush1.bf16.msra.mxu0 0
        %2510 = vmatprep.subr.bf16.mxu0 0
        %2511 = vmatpush1.bf16.msra.mxu0 0
        %2512 = vmatprep.subr.bf16.mxu0 0
        %2513 = vmatpush1.bf16.msra.mxu0 0
        %2514 = vmatprep.subr.bf16.mxu0 0
        %2515 = vmatpush1.bf16.msra.mxu0 0
        %2516 = vmatprep.subr.bf16.mxu0 0
        %2517 = vmatpush1.bf16.msra.mxu0 0
        %2518 = vmatprep.subr.bf16.mxu0 0
        %2519 = vmatpush1.bf16.msra.mxu0 0
        %2520 = vmatprep.subr.bf16.mxu0 0
        %2521 = vmatpush1.bf16.msra.mxu0 0
        %2522 = vmatprep.mubr.bf16.mxu0 0
        %2523 = vmatmul.mubr.bf16.gmra.mrb[0].mxu0 %v2424
        %v2524 = vpop.f32.mrb[0].mxu0
        %v2525 = vadd.f32 0.0, %v2524
        %v2526 = vpop.f32.mrb[0].mxu0
        %v2527 = vpop.f32.mrb[0].mxu0
        %v2528 = vadd.f32 0.0, %v2527
        %v2529 = vpop.f32.mrb[0].mxu0
        %2530 = vdwg.mxu0
        %v2547 = vunpack.c.l.b16 %v2406
        %v2548 = vunpack.c.l.b16 %v2407
        %v2549 = vunpack.c.l.b16 %v2408
        %v2550 = vunpack.c.l.b16 %v2409
        %v2551 = vunpack.c.l.b16 %v2410
        %v2552 = vunpack.c.l.b16 %v2411
        %v2553 = vunpack.c.l.b16 %v2412
        %v2554 = vunpack.c.l.b16 %v2413
        %v2555 = vunpack.c.l.b16 %v2414
        %v2556 = vunpack.c.l.b16 %v2415
        %v2557 = vunpack.c.l.b16 %v2416
        %v2558 = vunpack.c.l.b16 %v2417
        %v2559 = vunpack.c.l.b16 %v2418
        %v2560 = vunpack.c.l.b16 %v2419
        %v2561 = vunpack.c.l.b16 %v2420
        %v2562 = vunpack.c.l.b16 %v2421
        %v2563 = vpack.c.b16 %v2548, %v2547
        %v2564 = vpack.c.b16 %v2550, %v2549
        %v2565 = vpack.c.b16 %v2552, %v2551
        %v2566 = vpack.c.b16 %v2554, %v2553
        %v2567 = vpack.c.b16 %v2556, %v2555
        %v2568 = vpack.c.b16 %v2558, %v2557
        %v2569 = vpack.c.b16 %v2560, %v2559
        %v2570 = vpack.c.b16 %v2562, %v2561
        %2579 = vmatprep.subr.bf16.mxu0 0
        %2580 = vmatpush1.bf16.msra.mxu0 %v2563
        %2581 = vmatprep.subr.bf16.mxu0 0
        %2582 = vmatpush1.bf16.msra.mxu0 %v2564
        %2583 = vmatprep.subr.bf16.mxu0 0
        %2584 = vmatpush1.bf16.msra.mxu0 %v2565
        %2585 = vmatprep.subr.bf16.mxu0 0
        %2586 = vmatpush1.bf16.msra.mxu0 %v2566
        %2587 = vmatprep.subr.bf16.mxu0 0
        %2588 = vmatpush1.bf16.msra.mxu0 %v2567
        %2589 = vmatprep.subr.bf16.mxu0 0
        %2590 = vmatpush1.bf16.msra.mxu0 %v2568
        %2591 = vmatprep.subr.bf16.mxu0 0
        %2592 = vmatpush1.bf16.msra.mxu0 %v2569
        %2593 = vmatprep.subr.bf16.mxu0 0
        %2594 = vmatpush1.bf16.msra.mxu0 %v2570
        %2595 = vmatprep.subr.bf16.mxu0 0
        %2596 = vmatpush1.bf16.msra.mxu0 0
        %2597 = vmatprep.subr.bf16.mxu0 0
        %2598 = vmatpush1.bf16.msra.mxu0 0
        %2599 = vmatprep.subr.bf16.mxu0 0
        %2600 = vmatpush1.bf16.msra.mxu0 0
        %2601 = vmatprep.subr.bf16.mxu0 0
        %2602 = vmatpush1.bf16.msra.mxu0 0
        %2603 = vmatprep.subr.bf16.mxu0 0
        %2604 = vmatpush1.bf16.msra.mxu0 0
        %2605 = vmatprep.subr.bf16.mxu0 0
        %2606 = vmatpush1.bf16.msra.mxu0 0
        %2607 = vmatprep.subr.bf16.mxu0 0
        %2608 = vmatpush1.bf16.msra.mxu0 0
        %2609 = vmatprep.subr.bf16.mxu0 0
        %2610 = vmatpush1.bf16.msra.mxu0 0
        %2611 = vmatprep.mubr.bf16.mxu0 0
        %2612 = vmatmul.mubr.bf16.gmra.mrb[0].mxu0 %v2404
        %v2613 = vpop.f32.mrb[0].mxu0
        %v2614 = vadd.f32 %v2525, %v2613
        %v2615 = vpop.f32.mrb[0].mxu0
        %v2616 = vpop.f32.mrb[0].mxu0
        %v2617 = vadd.f32 %v2528, %v2616
        %v2618 = vpop.f32.mrb[0].mxu0
        %2619 = vdwg.mxu0
        %v2620 = vld [vmem:[%s2152] ss:$2 sm:$0xff]
        %v2621 = vld [vmem:[%s2154] ss:$2 sm:$0xff]
        %v2622 = vpack.c.bf16 %v2621, %v2620
        %s2623 = scalar_lea.vmem [#allocation5], 384
        %v2624 = vld [vmem:[%s2623] sm:$0xf]
        %v2625 = vld [vmem:[%s2623 + $0x4] sm:$0xf]
        %v2626 = vld [vmem:[%s2623 + $0x8] sm:$0xf]
        %v2627 = vld [vmem:[%s2623 + $0xc] sm:$0xf]
        %v2628 = vld [vmem:[%s2623 + $0x10] sm:$0xf]
        %v2629 = vld [vmem:[%s2623 + $0x14] sm:$0xf]
        %v2630 = vld [vmem:[%s2623 + $0x18] sm:$0xf]
        %v2631 = vld [vmem:[%s2623 + $0x1c] sm:$0xf]
        %v2632 = vld [vmem:[%s2623 + $0x20] sm:$0xf]
        %v2633 = vld [vmem:[%s2623 + $0x24] sm:$0xf]
        %v2634 = vld [vmem:[%s2623 + $0x28] sm:$0xf]
        %v2635 = vld [vmem:[%s2623 + $0x2c] sm:$0xf]
        %v2636 = vld [vmem:[%s2623 + $0x30] sm:$0xf]
        %v2637 = vld [vmem:[%s2623 + $0x34] sm:$0xf]
        %v2638 = vld [vmem:[%s2623 + $0x38] sm:$0xf]
        %v2639 = vld [vmem:[%s2623 + $0x3c] sm:$0xf]
        %v2656 = vunpack.c.l.b16 %v2624
        %v2657 = vunpack.c.l.b16 %v2625
        %v2658 = vunpack.c.l.b16 %v2626
        %v2659 = vunpack.c.l.b16 %v2627
        %v2660 = vunpack.c.l.b16 %v2628
        %v2661 = vunpack.c.l.b16 %v2629
        %v2662 = vunpack.c.l.b16 %v2630
        %v2663 = vunpack.c.l.b16 %v2631
        %v2664 = vunpack.c.l.b16 %v2632
        %v2665 = vunpack.c.l.b16 %v2633
        %v2666 = vunpack.c.l.b16 %v2634
        %v2667 = vunpack.c.l.b16 %v2635
        %v2668 = vunpack.c.l.b16 %v2636
        %v2669 = vunpack.c.l.b16 %v2637
        %v2670 = vunpack.c.l.b16 %v2638
        %v2671 = vunpack.c.l.b16 %v2639
        %v2672 = vpack.c.b16 %v2657, %v2656
        %v2673 = vpack.c.b16 %v2659, %v2658
        %v2674 = vpack.c.b16 %v2661, %v2660
        %v2675 = vpack.c.b16 %v2663, %v2662
        %v2676 = vpack.c.b16 %v2665, %v2664
        %v2677 = vpack.c.b16 %v2667, %v2666
        %v2678 = vpack.c.b16 %v2669, %v2668
        %v2679 = vpack.c.b16 %v2671, %v2670
        %2688 = vmatprep.subr.bf16.mxu0 0
        %2689 = vmatpush1.bf16.msra.mxu0 %v2672
        %2690 = vmatprep.subr.bf16.mxu0 0
        %2691 = vmatpush1.bf16.msra.mxu0 %v2673
        %2692 = vmatprep.subr.bf16.mxu0 0
        %2693 = vmatpush1.bf16.msra.mxu0 %v2674
        %2694 = vmatprep.subr.bf16.mxu0 0
        %2695 = vmatpush1.bf16.msra.mxu0 %v2675
        %2696 = vmatprep.subr.bf16.mxu0 0
        %2697 = vmatpush1.bf16.msra.mxu0 %v2676
        %2698 = vmatprep.subr.bf16.mxu0 0
        %2699 = vmatpush1.bf16.msra.mxu0 %v2677
        %2700 = vmatprep.subr.bf16.mxu0 0
        %2701 = vmatpush1.bf16.msra.mxu0 %v2678
        %2702 = vmatprep.subr.bf16.mxu0 0
        %2703 = vmatpush1.bf16.msra.mxu0 %v2679
        %2704 = vmatprep.subr.bf16.mxu0 0
        %2705 = vmatpush1.bf16.msra.mxu0 0
        %2706 = vmatprep.subr.bf16.mxu0 0
        %2707 = vmatpush1.bf16.msra.mxu0 0
        %2708 = vmatprep.subr.bf16.mxu0 0
        %2709 = vmatpush1.bf16.msra.mxu0 0
        %2710 = vmatprep.subr.bf16.mxu0 0
        %2711 = vmatpush1.bf16.msra.mxu0 0
        %2712 = vmatprep.subr.bf16.mxu0 0
        %2713 = vmatpush1.bf16.msra.mxu0 0
        %2714 = vmatprep.subr.bf16.mxu0 0
        %2715 = vmatpush1.bf16.msra.mxu0 0
        %2716 = vmatprep.subr.bf16.mxu0 0
        %2717 = vmatpush1.bf16.msra.mxu0 0
        %2718 = vmatprep.subr.bf16.mxu0 0
        %2719 = vmatpush1.bf16.msra.mxu0 0
        %2720 = vmatprep.mubr.bf16.mxu0 0
        %2721 = vmatmul.mubr.bf16.gmra.mrb[0].mxu0 %v2622
        %v2722 = vpop.f32.mrb[0].mxu0
        %v2723 = vadd.f32 0.0, %v2722
        %v2724 = vpop.f32.mrb[0].mxu0
        %v2725 = vpop.f32.mrb[0].mxu0
        %v2726 = vadd.f32 0.0, %v2725
        %v2727 = vpop.f32.mrb[0].mxu0
        %2728 = vdwg.mxu0
        %v2729 = vadd.f32 %v2614, %v2723
        %v2730 = vadd.f32 %v2617, %v2726
        %v2731 = vld [vmem:[%s2265] ss:$2 sm:$0xff]
        %v2732 = vld [vmem:[%s2267] ss:$2 sm:$0xff]
        %v2733 = vpack.c.bf16 %v2732, %v2731
        %s2734 = scalar_lea.vmem [#allocation5], 448
        %v2735 = vld [vmem:[%s2734] sm:$0xf]
        %v2736 = vld [vmem:[%s2734 + $0x4] sm:$0xf]
        %v2737 = vld [vmem:[%s2734 + $0x8] sm:$0xf]
        %v2738 = vld [vmem:[%s2734 + $0xc] sm:$0xf]
        %v2739 = vld [vmem:[%s2734 + $0x10] sm:$0xf]
        %v2740 = vld [vmem:[%s2734 + $0x14] sm:$0xf]
        %v2741 = vld [vmem:[%s2734 + $0x18] sm:$0xf]
        %v2742 = vld [vmem:[%s2734 + $0x1c] sm:$0xf]
        %v2743 = vld [vmem:[%s2734 + $0x20] sm:$0xf]
        %v2744 = vld [vmem:[%s2734 + $0x24] sm:$0xf]
        %v2745 = vld [vmem:[%s2734 + $0x28] sm:$0xf]
        %v2746 = vld [vmem:[%s2734 + $0x2c] sm:$0xf]
        %v2747 = vld [vmem:[%s2734 + $0x30] sm:$0xf]
        %v2748 = vld [vmem:[%s2734 + $0x34] sm:$0xf]
        %v2749 = vld [vmem:[%s2734 + $0x38] sm:$0xf]
        %v2750 = vld [vmem:[%s2734 + $0x3c] sm:$0xf]
        %v2767 = vunpack.c.l.b16 %v2735
        %v2768 = vunpack.c.l.b16 %v2736
        %v2769 = vunpack.c.l.b16 %v2737
        %v2770 = vunpack.c.l.b16 %v2738
        %v2771 = vunpack.c.l.b16 %v2739
        %v2772 = vunpack.c.l.b16 %v2740
        %v2773 = vunpack.c.l.b16 %v2741
        %v2774 = vunpack.c.l.b16 %v2742
        %v2775 = vunpack.c.l.b16 %v2743
        %v2776 = vunpack.c.l.b16 %v2744
        %v2777 = vunpack.c.l.b16 %v2745
        %v2778 = vunpack.c.l.b16 %v2746
        %v2779 = vunpack.c.l.b16 %v2747
        %v2780 = vunpack.c.l.b16 %v2748
        %v2781 = vunpack.c.l.b16 %v2749
        %v2782 = vunpack.c.l.b16 %v2750
        %v2783 = vpack.c.b16 %v2768, %v2767
        %v2784 = vpack.c.b16 %v2770, %v2769
        %v2785 = vpack.c.b16 %v2772, %v2771
        %v2786 = vpack.c.b16 %v2774, %v2773
        %v2787 = vpack.c.b16 %v2776, %v2775
        %v2788 = vpack.c.b16 %v2778, %v2777
        %v2789 = vpack.c.b16 %v2780, %v2779
        %v2790 = vpack.c.b16 %v2782, %v2781
        %2799 = vmatprep.subr.bf16.mxu0 0
        %2800 = vmatpush1.bf16.msra.mxu0 %v2783
        %2801 = vmatprep.subr.bf16.mxu0 0
        %2802 = vmatpush1.bf16.msra.mxu0 %v2784
        %2803 = vmatprep.subr.bf16.mxu0 0
        %2804 = vmatpush1.bf16.msra.mxu0 %v2785
        %2805 = vmatprep.subr.bf16.mxu0 0
        %2806 = vmatpush1.bf16.msra.mxu0 %v2786
        %2807 = vmatprep.subr.bf16.mxu0 0
        %2808 = vmatpush1.bf16.msra.mxu0 %v2787
        %2809 = vmatprep.subr.bf16.mxu0 0
        %2810 = vmatpush1.bf16.msra.mxu0 %v2788
        %2811 = vmatprep.subr.bf16.mxu0 0
        %2812 = vmatpush1.bf16.msra.mxu0 %v2789
        %2813 = vmatprep.subr.bf16.mxu0 0
        %2814 = vmatpush1.bf16.msra.mxu0 %v2790
        %2815 = vmatprep.subr.bf16.mxu0 0
        %2816 = vmatpush1.bf16.msra.mxu0 0
        %2817 = vmatprep.subr.bf16.mxu0 0
        %2818 = vmatpush1.bf16.msra.mxu0 0
        %2819 = vmatprep.subr.bf16.mxu0 0
        %2820 = vmatpush1.bf16.msra.mxu0 0
        %2821 = vmatprep.subr.bf16.mxu0 0
        %2822 = vmatpush1.bf16.msra.mxu0 0
        %2823 = vmatprep.subr.bf16.mxu0 0
        %2824 = vmatpush1.bf16.msra.mxu0 0
        %2825 = vmatprep.subr.bf16.mxu0 0
        %2826 = vmatpush1.bf16.msra.mxu0 0
        %2827 = vmatprep.subr.bf16.mxu0 0
        %2828 = vmatpush1.bf16.msra.mxu0 0
        %2829 = vmatprep.subr.bf16.mxu0 0
        %2830 = vmatpush1.bf16.msra.mxu0 0
        %2831 = vmatprep.mubr.bf16.mxu0 0
        %2832 = vmatmul.mubr.bf16.gmra.mrb[0].mxu0 %v2733
        %v2833 = vpop.f32.mrb[0].mxu0
        %v2834 = vadd.f32 0.0, %v2833
        %v2835 = vpop.f32.mrb[0].mxu0
        %v2836 = vpop.f32.mrb[0].mxu0
        %v2837 = vadd.f32 0.0, %v2836
        %v2838 = vpop.f32.mrb[0].mxu0
        %2839 = vdwg.mxu0
        %v2840 = vadd.f32 %v2729, %v2834
        %v2841 = vadd.f32 %v2730, %v2837
        %s2842 = scalar_lea.vmem %s5, 1
        %v2843 = vld [vmem:[%s2842] sm:$0x1]
        %v2845 = vlaneseq
        %v2846 = vshrl.u32 %v2845, 7
        %v2847 = vsub.s32 0, %v2846
        %v2848 = vrot.slane %v2843, %v2847
        %v2850 = vmul.f32 %v2840, %v2848
        %v2851 = vmul.f32 %v2841, %v2848
        %s2852 = scalar_lea.vmem %s6, 1
        %v2853 = vld [vmem:[%s2852] sm:$0x1]
        %v2855 = vlaneseq
        %v2856 = vshrl.u32 %v2855, 7
        %v2857 = vsub.s32 0, %v2856
        %v2858 = vrot.slane %v2853, %v2857
        %v2860 = vadd.f32 %v2850, %v2858
        %v2861 = vadd.f32 %v2851, %v2858
        %v2862 = vadd.f32 %v2394, %v2860
        %v2863 = vadd.f32 %v2395, %v2861
        %v2864 = vmul.f32 %v2862, 0.2
        %v2865 = vmul.f32 %v2863, 0.2
        %v2866 = vmax.f32 %v2862, %v2864
        %v2867 = vmax.f32 %v2863, %v2865
        %2868 = vst [vmem:[#allocation2] sm:$0xff] 0.0
        %2869 = vst [vmem:[#allocation2 + $0x18] sm:$0xff] 0.0
        %2870 = vst [vmem:[#allocation2 + $0x8] sm:$0xff] %v2866
        %2871 = vst [vmem:[#allocation2 + $0x10] sm:$0xff] %v2867
        %v2872 = vld [vmem:[#allocation2 + $0x7] sm:$0xff]
        %v2873 = vld [vmem:[#allocation2 + $0xf] sm:$0xff]
        %v2874 = vpack.c.bf16 %v2873, %v2872
        %s2875 = scalar_lea.vmem [#allocation3], 768
        %v2876 = vld [vmem:[%s2875] sm:$0xf]
        %v2877 = vld [vmem:[%s2875 + $0x4] sm:$0xf]
        %v2878 = vld [vmem:[%s2875 + $0x8] sm:$0xf]
        %v2879 = vld [vmem:[%s2875 + $0xc] sm:$0xf]
        %v2880 = vld [vmem:[%s2875 + $0x10] sm:$0xf]
        %v2881 = vld [vmem:[%s2875 + $0x14] sm:$0xf]
        %v2882 = vld [vmem:[%s2875 + $0x18] sm:$0xf]
        %v2883 = vld [vmem:[%s2875 + $0x1c] sm:$0xf]
        %v2884 = vld [vmem:[%s2875 + $0x20] sm:$0xf]
        %v2885 = vld [vmem:[%s2875 + $0x24] sm:$0xf]
        %v2886 = vld [vmem:[%s2875 + $0x28] sm:$0xf]
        %v2887 = vld [vmem:[%s2875 + $0x2c] sm:$0xf]
        %v2888 = vld [vmem:[%s2875 + $0x30] sm:$0xf]
        %v2889 = vld [vmem:[%s2875 + $0x34] sm:$0xf]
        %v2890 = vld [vmem:[%s2875 + $0x38] sm:$0xf]
        %v2891 = vld [vmem:[%s2875 + $0x3c] sm:$0xf]
        %v2892 = vld [vmem:[#allocation2 + $0x8] sm:$0xff]
        %v2893 = vld [vmem:[#allocation2 + $0x10] sm:$0xff]
        %v2894 = vpack.c.bf16 %v2893, %v2892
        %s2895 = scalar_lea.vmem [#allocation3], 832
        %v2896 = vld [vmem:[%s2895] sm:$0xf]
        %v2897 = vld [vmem:[%s2895 + $0x4] sm:$0xf]
        %v2898 = vld [vmem:[%s2895 + $0x8] sm:$0xf]
        %v2899 = vld [vmem:[%s2895 + $0xc] sm:$0xf]
        %v2900 = vld [vmem:[%s2895 + $0x10] sm:$0xf]
        %v2901 = vld [vmem:[%s2895 + $0x14] sm:$0xf]
        %v2902 = vld [vmem:[%s2895 + $0x18] sm:$0xf]
        %v2903 = vld [vmem:[%s2895 + $0x1c] sm:$0xf]
        %v2904 = vld [vmem:[%s2895 + $0x20] sm:$0xf]
        %v2905 = vld [vmem:[%s2895 + $0x24] sm:$0xf]
        %v2906 = vld [vmem:[%s2895 + $0x28] sm:$0xf]
        %v2907 = vld [vmem:[%s2895 + $0x2c] sm:$0xf]
        %v2908 = vld [vmem:[%s2895 + $0x30] sm:$0xf]
        %v2909 = vld [vmem:[%s2895 + $0x34] sm:$0xf]
        %v2910 = vld [vmem:[%s2895 + $0x38] sm:$0xf]
        %v2911 = vld [vmem:[%s2895 + $0x3c] sm:$0xf]
        %v2928 = vunpack.c.l.b16 %v2896
        %v2929 = vunpack.c.l.b16 %v2897
        %v2930 = vunpack.c.l.b16 %v2898
        %v2931 = vunpack.c.l.b16 %v2899
        %v2932 = vunpack.c.l.b16 %v2900
        %v2933 = vunpack.c.l.b16 %v2901
        %v2934 = vunpack.c.l.b16 %v2902
        %v2935 = vunpack.c.l.b16 %v2903
        %v2936 = vunpack.c.l.b16 %v2904
        %v2937 = vunpack.c.l.b16 %v2905
        %v2938 = vunpack.c.l.b16 %v2906
        %v2939 = vunpack.c.l.b16 %v2907
        %v2940 = vunpack.c.l.b16 %v2908
        %v2941 = vunpack.c.l.b16 %v2909
        %v2942 = vunpack.c.l.b16 %v2910
        %v2943 = vunpack.c.l.b16 %v2911
        %v2944 = vpack.c.b16 %v2929, %v2928
        %v2945 = vpack.c.b16 %v2931, %v2930
        %v2946 = vpack.c.b16 %v2933, %v2932
        %v2947 = vpack.c.b16 %v2935, %v2934
        %v2948 = vpack.c.b16 %v2937, %v2936
        %v2949 = vpack.c.b16 %v2939, %v2938
        %v2950 = vpack.c.b16 %v2941, %v2940
        %v2951 = vpack.c.b16 %v2943, %v2942
        %2960 = vmatprep.subr.bf16.mxu0 0
        %2961 = vmatpush1.bf16.msra.mxu0 %v2944
        %2962 = vmatprep.subr.bf16.mxu0 0
        %2963 = vmatpush1.bf16.msra.mxu0 %v2945
        %2964 = vmatprep.subr.bf16.mxu0 0
        %2965 = vmatpush1.bf16.msra.mxu0 %v2946
        %2966 = vmatprep.subr.bf16.mxu0 0
        %2967 = vmatpush1.bf16.msra.mxu0 %v2947
        %2968 = vmatprep.subr.bf16.mxu0 0
        %2969 = vmatpush1.bf16.msra.mxu0 %v2948
        %2970 = vmatprep.subr.bf16.mxu0 0
        %2971 = vmatpush1.bf16.msra.mxu0 %v2949
        %2972 = vmatprep.subr.bf16.mxu0 0
        %2973 = vmatpush1.bf16.msra.mxu0 %v2950
        %2974 = vmatprep.subr.bf16.mxu0 0
        %2975 = vmatpush1.bf16.msra.mxu0 %v2951
        %2976 = vmatprep.subr.bf16.mxu0 0
        %2977 = vmatpush1.bf16.msra.mxu0 0
        %2978 = vmatprep.subr.bf16.mxu0 0
        %2979 = vmatpush1.bf16.msra.mxu0 0
        %2980 = vmatprep.subr.bf16.mxu0 0
        %2981 = vmatpush1.bf16.msra.mxu0 0
        %2982 = vmatprep.subr.bf16.mxu0 0
        %2983 = vmatpush1.bf16.msra.mxu0 0
        %2984 = vmatprep.subr.bf16.mxu0 0
        %2985 = vmatpush1.bf16.msra.mxu0 0
        %2986 = vmatprep.subr.bf16.mxu0 0
        %2987 = vmatpush1.bf16.msra.mxu0 0
        %2988 = vmatprep.subr.bf16.mxu0 0
        %2989 = vmatpush1.bf16.msra.mxu0 0
        %2990 = vmatprep.subr.bf16.mxu0 0
        %2991 = vmatpush1.bf16.msra.mxu0 0
        %2992 = vmatprep.mubr.bf16.mxu0 0
        %2993 = vmatmul.mubr.bf16.gmra.mrb[0].mxu0 %v2894
        %v2994 = vpop.f32.mrb[0].mxu0
        %v2995 = vadd.f32 0.0, %v2994
        %v2996 = vpop.f32.mrb[0].mxu0
        %v2997 = vpop.f32.mrb[0].mxu0
        %v2998 = vadd.f32 0.0, %v2997
        %v2999 = vpop.f32.mrb[0].mxu0
        %3000 = vdwg.mxu0
        %v3017 = vunpack.c.l.b16 %v2876
        %v3018 = vunpack.c.l.b16 %v2877
        %v3019 = vunpack.c.l.b16 %v2878
        %v3020 = vunpack.c.l.b16 %v2879
        %v3021 = vunpack.c.l.b16 %v2880
        %v3022 = vunpack.c.l.b16 %v2881
        %v3023 = vunpack.c.l.b16 %v2882
        %v3024 = vunpack.c.l.b16 %v2883
        %v3025 = vunpack.c.l.b16 %v2884
        %v3026 = vunpack.c.l.b16 %v2885
        %v3027 = vunpack.c.l.b16 %v2886
        %v3028 = vunpack.c.l.b16 %v2887
        %v3029 = vunpack.c.l.b16 %v2888
        %v3030 = vunpack.c.l.b16 %v2889
        %v3031 = vunpack.c.l.b16 %v2890
        %v3032 = vunpack.c.l.b16 %v2891
        %v3033 = vpack.c.b16 %v3018, %v3017
        %v3034 = vpack.c.b16 %v3020, %v3019
        %v3035 = vpack.c.b16 %v3022, %v3021
        %v3036 = vpack.c.b16 %v3024, %v3023
        %v3037 = vpack.c.b16 %v3026, %v3025
        %v3038 = vpack.c.b16 %v3028, %v3027
        %v3039 = vpack.c.b16 %v3030, %v3029
        %v3040 = vpack.c.b16 %v3032, %v3031
        %3049 = vmatprep.subr.bf16.mxu0 0
        %3050 = vmatpush1.bf16.msra.mxu0 %v3033
        %3051 = vmatprep.subr.bf16.mxu0 0
        %3052 = vmatpush1.bf16.msra.mxu0 %v3034
        %3053 = vmatprep.subr.bf16.mxu0 0
        %3054 = vmatpush1.bf16.msra.mxu0 %v3035
        %3055 = vmatprep.subr.bf16.mxu0 0
        %3056 = vmatpush1.bf16.msra.mxu0 %v3036
        %3057 = vmatprep.subr.bf16.mxu0 0
        %3058 = vmatpush1.bf16.msra.mxu0 %v3037
        %3059 = vmatprep.subr.bf16.mxu0 0
        %3060 = vmatpush1.bf16.msra.mxu0 %v3038
        %3061 = vmatprep.subr.bf16.mxu0 0
        %3062 = vmatpush1.bf16.msra.mxu0 %v3039
        %3063 = vmatprep.subr.bf16.mxu0 0
        %3064 = vmatpush1.bf16.msra.mxu0 %v3040
        %3065 = vmatprep.subr.bf16.mxu0 0
        %3066 = vmatpush1.bf16.msra.mxu0 0
        %3067 = vmatprep.subr.bf16.mxu0 0
        %3068 = vmatpush1.bf16.msra.mxu0 0
        %3069 = vmatprep.subr.bf16.mxu0 0
        %3070 = vmatpush1.bf16.msra.mxu0 0
        %3071 = vmatprep.subr.bf16.mxu0 0
        %3072 = vmatpush1.bf16.msra.mxu0 0
        %3073 = vmatprep.subr.bf16.mxu0 0
        %3074 = vmatpush1.bf16.msra.mxu0 0
        %3075 = vmatprep.subr.bf16.mxu0 0
        %3076 = vmatpush1.bf16.msra.mxu0 0
        %3077 = vmatprep.subr.bf16.mxu0 0
        %3078 = vmatpush1.bf16.msra.mxu0 0
        %3079 = vmatprep.subr.bf16.mxu0 0
        %3080 = vmatpush1.bf16.msra.mxu0 0
        %3081 = vmatprep.mubr.bf16.mxu0 0
        %3082 = vmatmul.mubr.bf16.gmra.mrb[0].mxu0 %v2874
        %v3083 = vpop.f32.mrb[0].mxu0
        %v3084 = vadd.f32 %v2995, %v3083
        %v3085 = vpop.f32.mrb[0].mxu0
        %v3086 = vpop.f32.mrb[0].mxu0
        %v3087 = vadd.f32 %v2998, %v3086
        %v3088 = vpop.f32.mrb[0].mxu0
        %3089 = vdwg.mxu0
        %v3090 = vld [vmem:[#allocation2 + $0x9] sm:$0xff]
        %v3091 = vld [vmem:[#allocation2 + $0x11] sm:$0xff]
        %v3092 = vpack.c.bf16 %v3091, %v3090
        %s3093 = scalar_lea.vmem [#allocation3], 896
        %v3094 = vld [vmem:[%s3093] sm:$0xf]
        %v3095 = vld [vmem:[%s3093 + $0x4] sm:$0xf]
        %v3096 = vld [vmem:[%s3093 + $0x8] sm:$0xf]
        %v3097 = vld [vmem:[%s3093 + $0xc] sm:$0xf]
        %v3098 = vld [vmem:[%s3093 + $0x10] sm:$0xf]
        %v3099 = vld [vmem:[%s3093 + $0x14] sm:$0xf]
        %v3100 = vld [vmem:[%s3093 + $0x18] sm:$0xf]
        %v3101 = vld [vmem:[%s3093 + $0x1c] sm:$0xf]
        %v3102 = vld [vmem:[%s3093 + $0x20] sm:$0xf]
        %v3103 = vld [vmem:[%s3093 + $0x24] sm:$0xf]
        %v3104 = vld [vmem:[%s3093 + $0x28] sm:$0xf]
        %v3105 = vld [vmem:[%s3093 + $0x2c] sm:$0xf]
        %v3106 = vld [vmem:[%s3093 + $0x30] sm:$0xf]
        %v3107 = vld [vmem:[%s3093 + $0x34] sm:$0xf]
        %v3108 = vld [vmem:[%s3093 + $0x38] sm:$0xf]
        %v3109 = vld [vmem:[%s3093 + $0x3c] sm:$0xf]
        %v3126 = vunpack.c.l.b16 %v3094
        %v3127 = vunpack.c.l.b16 %v3095
        %v3128 = vunpack.c.l.b16 %v3096
        %v3129 = vunpack.c.l.b16 %v3097
        %v3130 = vunpack.c.l.b16 %v3098
        %v3131 = vunpack.c.l.b16 %v3099
        %v3132 = vunpack.c.l.b16 %v3100
        %v3133 = vunpack.c.l.b16 %v3101
        %v3134 = vunpack.c.l.b16 %v3102
        %v3135 = vunpack.c.l.b16 %v3103
        %v3136 = vunpack.c.l.b16 %v3104
        %v3137 = vunpack.c.l.b16 %v3105
        %v3138 = vunpack.c.l.b16 %v3106
        %v3139 = vunpack.c.l.b16 %v3107
        %v3140 = vunpack.c.l.b16 %v3108
        %v3141 = vunpack.c.l.b16 %v3109
        %v3142 = vpack.c.b16 %v3127, %v3126
        %v3143 = vpack.c.b16 %v3129, %v3128
        %v3144 = vpack.c.b16 %v3131, %v3130
        %v3145 = vpack.c.b16 %v3133, %v3132
        %v3146 = vpack.c.b16 %v3135, %v3134
        %v3147 = vpack.c.b16 %v3137, %v3136
        %v3148 = vpack.c.b16 %v3139, %v3138
        %v3149 = vpack.c.b16 %v3141, %v3140
        %3158 = vmatprep.subr.bf16.mxu0 0
        %3159 = vmatpush1.bf16.msra.mxu0 %v3142
        %3160 = vmatprep.subr.bf16.mxu0 0
        %3161 = vmatpush1.bf16.msra.mxu0 %v3143
        %3162 = vmatprep.subr.bf16.mxu0 0
        %3163 = vmatpush1.bf16.msra.mxu0 %v3144
        %3164 = vmatprep.subr.bf16.mxu0 0
        %3165 = vmatpush1.bf16.msra.mxu0 %v3145
        %3166 = vmatprep.subr.bf16.mxu0 0
        %3167 = vmatpush1.bf16.msra.mxu0 %v3146
        %3168 = vmatprep.subr.bf16.mxu0 0
        %3169 = vmatpush1.bf16.msra.mxu0 %v3147
        %3170 = vmatprep.subr.bf16.mxu0 0
        %3171 = vmatpush1.bf16.msra.mxu0 %v3148
        %3172 = vmatprep.subr.bf16.mxu0 0
        %3173 = vmatpush1.bf16.msra.mxu0 %v3149
        %3174 = vmatprep.subr.bf16.mxu0 0
        %3175 = vmatpush1.bf16.msra.mxu0 0
        %3176 = vmatprep.subr.bf16.mxu0 0
        %3177 = vmatpush1.bf16.msra.mxu0 0
        %3178 = vmatprep.subr.bf16.mxu0 0
        %3179 = vmatpush1.bf16.msra.mxu0 0
        %3180 = vmatprep.subr.bf16.mxu0 0
        %3181 = vmatpush1.bf16.msra.mxu0 0
        %3182 = vmatprep.subr.bf16.mxu0 0
        %3183 = vmatpush1.bf16.msra.mxu0 0
        %3184 = vmatprep.subr.bf16.mxu0 0
        %3185 = vmatpush1.bf16.msra.mxu0 0
        %3186 = vmatprep.subr.bf16.mxu0 0
        %3187 = vmatpush1.bf16.msra.mxu0 0
        %3188 = vmatprep.subr.bf16.mxu0 0
        %3189 = vmatpush1.bf16.msra.mxu0 0
        %3190 = vmatprep.mubr.bf16.mxu0 0
        %3191 = vmatmul.mubr.bf16.gmra.mrb[0].mxu0 %v3092
        %v3192 = vpop.f32.mrb[0].mxu0
        %v3193 = vadd.f32 0.0, %v3192
        %v3194 = vpop.f32.mrb[0].mxu0
        %v3195 = vpop.f32.mrb[0].mxu0
        %v3196 = vadd.f32 0.0, %v3195
        %v3197 = vpop.f32.mrb[0].mxu0
        %3198 = vdwg.mxu0
        %v3199 = vadd.f32 %v3084, %v3193
        %v3200 = vadd.f32 %v3087, %v3196
        %s3201 = scalar_lea.vmem %s2, 4
        %v3202 = vld [vmem:[%s3201] sm:$0x1]
        %v3204 = vlaneseq
        %v3205 = vshrl.u32 %v3204, 7
        %v3206 = vsub.s32 0, %v3205
        %v3207 = vrot.slane %v3202, %v3206
        %v3209 = vmul.f32 %v3199, %v3207
        %v3210 = vmul.f32 %v3200, %v3207
        %s3211 = scalar_lea.vmem %s3, 4
        %v3212 = vld [vmem:[%s3211] sm:$0x1]
        %v3214 = vlaneseq
        %v3215 = vshrl.u32 %v3214, 7
        %v3216 = vsub.s32 0, %v3215
        %v3217 = vrot.slane %v3212, %v3216
        %v3219 = vadd.f32 %v3209, %v3217
        %v3220 = vadd.f32 %v3210, %v3217
        %v3221 = vadd.f32 %v3219, %v2866
        %v3222 = vadd.f32 %v3220, %v2867
        %v3223 = vmul.f32 %v3221, 0.2
        %v3224 = vmul.f32 %v3222, 0.2
        %v3225 = vmax.f32 %v3221, %v3223
        %v3226 = vmax.f32 %v3222, %v3224
        %3227 = vst [vmem:[#allocation2] sm:$0xff] 0.0
        %3228 = vst [vmem:[#allocation2 + $0x18] sm:$0xff] 0.0
        %3229 = vst [vmem:[#allocation2 + $0x8] sm:$0xff] %v3225
        %3230 = vst [vmem:[#allocation2 + $0x10] sm:$0xff] %v3226
        %v3231 = vld [vmem:[#allocation2 + $0x7] sm:$0xff]
        %v3232 = vld [vmem:[#allocation2 + $0xf] sm:$0xff]
        %v3233 = vpack.c.bf16 %v3232, %v3231
        %s3234 = scalar_lea.vmem [#allocation3], 960
        %v3235 = vld [vmem:[%s3234] sm:$0xf]
        %v3236 = vld [vmem:[%s3234 + $0x4] sm:$0xf]
        %v3237 = vld [vmem:[%s3234 + $0x8] sm:$0xf]
        %v3238 = vld [vmem:[%s3234 + $0xc] sm:$0xf]
        %v3239 = vld [vmem:[%s3234 + $0x10] sm:$0xf]
        %v3240 = vld [vmem:[%s3234 + $0x14] sm:$0xf]
        %v3241 = vld [vmem:[%s3234 + $0x18] sm:$0xf]
        %v3242 = vld [vmem:[%s3234 + $0x1c] sm:$0xf]
        %v3243 = vld [vmem:[%s3234 + $0x20] sm:$0xf]
        %v3244 = vld [vmem:[%s3234 + $0x24] sm:$0xf]
        %v3245 = vld [vmem:[%s3234 + $0x28] sm:$0xf]
        %v3246 = vld [vmem:[%s3234 + $0x2c] sm:$0xf]
        %v3247 = vld [vmem:[%s3234 + $0x30] sm:$0xf]
        %v3248 = vld [vmem:[%s3234 + $0x34] sm:$0xf]
        %v3249 = vld [vmem:[%s3234 + $0x38] sm:$0xf]
        %v3250 = vld [vmem:[%s3234 + $0x3c] sm:$0xf]
        %v3251 = vld [vmem:[#allocation2 + $0x8] sm:$0xff]
        %v3252 = vld [vmem:[#allocation2 + $0x10] sm:$0xff]
        %v3253 = vpack.c.bf16 %v3252, %v3251
        %s3254 = scalar_lea.vmem [#allocation3], 1024
        %v3255 = vld [vmem:[%s3254] sm:$0xf]
        %v3256 = vld [vmem:[%s3254 + $0x4] sm:$0xf]
        %v3257 = vld [vmem:[%s3254 + $0x8] sm:$0xf]
        %v3258 = vld [vmem:[%s3254 + $0xc] sm:$0xf]
        %v3259 = vld [vmem:[%s3254 + $0x10] sm:$0xf]
        %v3260 = vld [vmem:[%s3254 + $0x14] sm:$0xf]
        %v3261 = vld [vmem:[%s3254 + $0x18] sm:$0xf]
        %v3262 = vld [vmem:[%s3254 + $0x1c] sm:$0xf]
        %v3263 = vld [vmem:[%s3254 + $0x20] sm:$0xf]
        %v3264 = vld [vmem:[%s3254 + $0x24] sm:$0xf]
        %v3265 = vld [vmem:[%s3254 + $0x28] sm:$0xf]
        %v3266 = vld [vmem:[%s3254 + $0x2c] sm:$0xf]
        %v3267 = vld [vmem:[%s3254 + $0x30] sm:$0xf]
        %v3268 = vld [vmem:[%s3254 + $0x34] sm:$0xf]
        %v3269 = vld [vmem:[%s3254 + $0x38] sm:$0xf]
        %v3270 = vld [vmem:[%s3254 + $0x3c] sm:$0xf]
        %v3287 = vunpack.c.l.b16 %v3255
        %v3288 = vunpack.c.l.b16 %v3256
        %v3289 = vunpack.c.l.b16 %v3257
        %v3290 = vunpack.c.l.b16 %v3258
        %v3291 = vunpack.c.l.b16 %v3259
        %v3292 = vunpack.c.l.b16 %v3260
        %v3293 = vunpack.c.l.b16 %v3261
        %v3294 = vunpack.c.l.b16 %v3262
        %v3295 = vunpack.c.l.b16 %v3263
        %v3296 = vunpack.c.l.b16 %v3264
        %v3297 = vunpack.c.l.b16 %v3265
        %v3298 = vunpack.c.l.b16 %v3266
        %v3299 = vunpack.c.l.b16 %v3267
        %v3300 = vunpack.c.l.b16 %v3268
        %v3301 = vunpack.c.l.b16 %v3269
        %v3302 = vunpack.c.l.b16 %v3270
        %v3303 = vpack.c.b16 %v3288, %v3287
        %v3304 = vpack.c.b16 %v3290, %v3289
        %v3305 = vpack.c.b16 %v3292, %v3291
        %v3306 = vpack.c.b16 %v3294, %v3293
        %v3307 = vpack.c.b16 %v3296, %v3295
        %v3308 = vpack.c.b16 %v3298, %v3297
        %v3309 = vpack.c.b16 %v3300, %v3299
        %v3310 = vpack.c.b16 %v3302, %v3301
        %3319 = vmatprep.subr.bf16.mxu0 0
        %3320 = vmatpush1.bf16.msra.mxu0 %v3303
        %3321 = vmatprep.subr.bf16.mxu0 0
        %3322 = vmatpush1.bf16.msra.mxu0 %v3304
        %3323 = vmatprep.subr.bf16.mxu0 0
        %3324 = vmatpush1.bf16.msra.mxu0 %v3305
        %3325 = vmatprep.subr.bf16.mxu0 0
        %3326 = vmatpush1.bf16.msra.mxu0 %v3306
        %3327 = vmatprep.subr.bf16.mxu0 0
        %3328 = vmatpush1.bf16.msra.mxu0 %v3307
        %3329 = vmatprep.subr.bf16.mxu0 0
        %3330 = vmatpush1.bf16.msra.mxu0 %v3308
        %3331 = vmatprep.subr.bf16.mxu0 0
        %3332 = vmatpush1.bf16.msra.mxu0 %v3309
        %3333 = vmatprep.subr.bf16.mxu0 0
        %3334 = vmatpush1.bf16.msra.mxu0 %v3310
        %3335 = vmatprep.subr.bf16.mxu0 0
        %3336 = vmatpush1.bf16.msra.mxu0 0
        %3337 = vmatprep.subr.bf16.mxu0 0
        %3338 = vmatpush1.bf16.msra.mxu0 0
        %3339 = vmatprep.subr.bf16.mxu0 0
        %3340 = vmatpush1.bf16.msra.mxu0 0
        %3341 = vmatprep.subr.bf16.mxu0 0
        %3342 = vmatpush1.bf16.msra.mxu0 0
        %3343 = vmatprep.subr.bf16.mxu0 0
        %3344 = vmatpush1.bf16.msra.mxu0 0
        %3345 = vmatprep.subr.bf16.mxu0 0
        %3346 = vmatpush1.bf16.msra.mxu0 0
        %3347 = vmatprep.subr.bf16.mxu0 0
        %3348 = vmatpush1.bf16.msra.mxu0 0
        %3349 = vmatprep.subr.bf16.mxu0 0
        %3350 = vmatpush1.bf16.msra.mxu0 0
        %3351 = vmatprep.mubr.bf16.mxu0 0
        %3352 = vmatmul.mubr.bf16.gmra.mrb[0].mxu0 %v3253
        %v3353 = vpop.f32.mrb[0].mxu0
        %v3354 = vadd.f32 0.0, %v3353
        %v3355 = vpop.f32.mrb[0].mxu0
        %v3356 = vpop.f32.mrb[0].mxu0
        %v3357 = vadd.f32 0.0, %v3356
        %v3358 = vpop.f32.mrb[0].mxu0
        %3359 = vdwg.mxu0
        %v3376 = vunpack.c.l.b16 %v3235
        %v3377 = vunpack.c.l.b16 %v3236
        %v3378 = vunpack.c.l.b16 %v3237
        %v3379 = vunpack.c.l.b16 %v3238
        %v3380 = vunpack.c.l.b16 %v3239
        %v3381 = vunpack.c.l.b16 %v3240
        %v3382 = vunpack.c.l.b16 %v3241
        %v3383 = vunpack.c.l.b16 %v3242
        %v3384 = vunpack.c.l.b16 %v3243
        %v3385 = vunpack.c.l.b16 %v3244
        %v3386 = vunpack.c.l.b16 %v3245
        %v3387 = vunpack.c.l.b16 %v3246
        %v3388 = vunpack.c.l.b16 %v3247
        %v3389 = vunpack.c.l.b16 %v3248
        %v3390 = vunpack.c.l.b16 %v3249
        %v3391 = vunpack.c.l.b16 %v3250
        %v3392 = vpack.c.b16 %v3377, %v3376
        %v3393 = vpack.c.b16 %v3379, %v3378
        %v3394 = vpack.c.b16 %v3381, %v3380
        %v3395 = vpack.c.b16 %v3383, %v3382
        %v3396 = vpack.c.b16 %v3385, %v3384
        %v3397 = vpack.c.b16 %v3387, %v3386
        %v3398 = vpack.c.b16 %v3389, %v3388
        %v3399 = vpack.c.b16 %v3391, %v3390
        %3408 = vmatprep.subr.bf16.mxu0 0
        %3409 = vmatpush1.bf16.msra.mxu0 %v3392
        %3410 = vmatprep.subr.bf16.mxu0 0
        %3411 = vmatpush1.bf16.msra.mxu0 %v3393
        %3412 = vmatprep.subr.bf16.mxu0 0
        %3413 = vmatpush1.bf16.msra.mxu0 %v3394
        %3414 = vmatprep.subr.bf16.mxu0 0
        %3415 = vmatpush1.bf16.msra.mxu0 %v3395
        %3416 = vmatprep.subr.bf16.mxu0 0
        %3417 = vmatpush1.bf16.msra.mxu0 %v3396
        %3418 = vmatprep.subr.bf16.mxu0 0
        %3419 = vmatpush1.bf16.msra.mxu0 %v3397
        %3420 = vmatprep.subr.bf16.mxu0 0
        %3421 = vmatpush1.bf16.msra.mxu0 %v3398
        %3422 = vmatprep.subr.bf16.mxu0 0
        %3423 = vmatpush1.bf16.msra.mxu0 %v3399
        %3424 = vmatprep.subr.bf16.mxu0 0
        %3425 = vmatpush1.bf16.msra.mxu0 0
        %3426 = vmatprep.subr.bf16.mxu0 0
        %3427 = vmatpush1.bf16.msra.mxu0 0
        %3428 = vmatprep.subr.bf16.mxu0 0
        %3429 = vmatpush1.bf16.msra.mxu0 0
        %3430 = vmatprep.subr.bf16.mxu0 0
        %3431 = vmatpush1.bf16.msra.mxu0 0
        %3432 = vmatprep.subr.bf16.mxu0 0
        %3433 = vmatpush1.bf16.msra.mxu0 0
        %3434 = vmatprep.subr.bf16.mxu0 0
        %3435 = vmatpush1.bf16.msra.mxu0 0
        %3436 = vmatprep.subr.bf16.mxu0 0
        %3437 = vmatpush1.bf16.msra.mxu0 0
        %3438 = vmatprep.subr.bf16.mxu0 0
        %3439 = vmatpush1.bf16.msra.mxu0 0
        %3440 = vmatprep.mubr.bf16.mxu0 0
        %3441 = vmatmul.mubr.bf16.gmra.mrb[0].mxu0 %v3233
        %v3442 = vpop.f32.mrb[0].mxu0
        %v3443 = vadd.f32 %v3354, %v3442
        %v3444 = vpop.f32.mrb[0].mxu0
        %v3445 = vpop.f32.mrb[0].mxu0
        %v3446 = vadd.f32 %v3357, %v3445
        %v3447 = vpop.f32.mrb[0].mxu0
        %3448 = vdwg.mxu0
        %v3449 = vld [vmem:[#allocation2 + $0x9] sm:$0xff]
        %v3450 = vld [vmem:[#allocation2 + $0x11] sm:$0xff]
        %v3451 = vpack.c.bf16 %v3450, %v3449
        %s3452 = scalar_lea.vmem [#allocation3], 1088
        %v3453 = vld [vmem:[%s3452] sm:$0xf]
        %v3454 = vld [vmem:[%s3452 + $0x4] sm:$0xf]
        %v3455 = vld [vmem:[%s3452 + $0x8] sm:$0xf]
        %v3456 = vld [vmem:[%s3452 + $0xc] sm:$0xf]
        %v3457 = vld [vmem:[%s3452 + $0x10] sm:$0xf]
        %v3458 = vld [vmem:[%s3452 + $0x14] sm:$0xf]
        %v3459 = vld [vmem:[%s3452 + $0x18] sm:$0xf]
        %v3460 = vld [vmem:[%s3452 + $0x1c] sm:$0xf]
        %v3461 = vld [vmem:[%s3452 + $0x20] sm:$0xf]
        %v3462 = vld [vmem:[%s3452 + $0x24] sm:$0xf]
        %v3463 = vld [vmem:[%s3452 + $0x28] sm:$0xf]
        %v3464 = vld [vmem:[%s3452 + $0x2c] sm:$0xf]
        %v3465 = vld [vmem:[%s3452 + $0x30] sm:$0xf]
        %v3466 = vld [vmem:[%s3452 + $0x34] sm:$0xf]
        %v3467 = vld [vmem:[%s3452 + $0x38] sm:$0xf]
        %v3468 = vld [vmem:[%s3452 + $0x3c] sm:$0xf]
        %v3485 = vunpack.c.l.b16 %v3453
        %v3486 = vunpack.c.l.b16 %v3454
        %v3487 = vunpack.c.l.b16 %v3455
        %v3488 = vunpack.c.l.b16 %v3456
        %v3489 = vunpack.c.l.b16 %v3457
        %v3490 = vunpack.c.l.b16 %v3458
        %v3491 = vunpack.c.l.b16 %v3459
        %v3492 = vunpack.c.l.b16 %v3460
        %v3493 = vunpack.c.l.b16 %v3461
        %v3494 = vunpack.c.l.b16 %v3462
        %v3495 = vunpack.c.l.b16 %v3463
        %v3496 = vunpack.c.l.b16 %v3464
        %v3497 = vunpack.c.l.b16 %v3465
        %v3498 = vunpack.c.l.b16 %v3466
        %v3499 = vunpack.c.l.b16 %v3467
        %v3500 = vunpack.c.l.b16 %v3468
        %v3501 = vpack.c.b16 %v3486, %v3485
        %v3502 = vpack.c.b16 %v3488, %v3487
        %v3503 = vpack.c.b16 %v3490, %v3489
        %v3504 = vpack.c.b16 %v3492, %v3491
        %v3505 = vpack.c.b16 %v3494, %v3493
        %v3506 = vpack.c.b16 %v3496, %v3495
        %v3507 = vpack.c.b16 %v3498, %v3497
        %v3508 = vpack.c.b16 %v3500, %v3499
        %3517 = vmatprep.subr.bf16.mxu0 0
        %3518 = vmatpush1.bf16.msra.mxu0 %v3501
        %3519 = vmatprep.subr.bf16.mxu0 0
        %3520 = vmatpush1.bf16.msra.mxu0 %v3502
        %3521 = vmatprep.subr.bf16.mxu0 0
        %3522 = vmatpush1.bf16.msra.mxu0 %v3503
        %3523 = vmatprep.subr.bf16.mxu0 0
        %3524 = vmatpush1.bf16.msra.mxu0 %v3504
        %3525 = vmatprep.subr.bf16.mxu0 0
        %3526 = vmatpush1.bf16.msra.mxu0 %v3505
        %3527 = vmatprep.subr.bf16.mxu0 0
        %3528 = vmatpush1.bf16.msra.mxu0 %v3506
        %3529 = vmatprep.subr.bf16.mxu0 0
        %3530 = vmatpush1.bf16.msra.mxu0 %v3507
        %3531 = vmatprep.subr.bf16.mxu0 0
        %3532 = vmatpush1.bf16.msra.mxu0 %v3508
        %3533 = vmatprep.subr.bf16.mxu0 0
        %3534 = vmatpush1.bf16.msra.mxu0 0
        %3535 = vmatprep.subr.bf16.mxu0 0
        %3536 = vmatpush1.bf16.msra.mxu0 0
        %3537 = vmatprep.subr.bf16.mxu0 0
        %3538 = vmatpush1.bf16.msra.mxu0 0
        %3539 = vmatprep.subr.bf16.mxu0 0
        %3540 = vmatpush1.bf16.msra.mxu0 0
        %3541 = vmatprep.subr.bf16.mxu0 0
        %3542 = vmatpush1.bf16.msra.mxu0 0
        %3543 = vmatprep.subr.bf16.mxu0 0
        %3544 = vmatpush1.bf16.msra.mxu0 0
        %3545 = vmatprep.subr.bf16.mxu0 0
        %3546 = vmatpush1.bf16.msra.mxu0 0
        %3547 = vmatprep.subr.bf16.mxu0 0
        %3548 = vmatpush1.bf16.msra.mxu0 0
        %3549 = vmatprep.mubr.bf16.mxu0 0
        %3550 = vmatmul.mubr.bf16.gmra.mrb[0].mxu0 %v3451
        %v3551 = vpop.f32.mrb[0].mxu0
        %v3552 = vadd.f32 0.0, %v3551
        %v3553 = vpop.f32.mrb[0].mxu0
        %v3554 = vpop.f32.mrb[0].mxu0
        %v3555 = vadd.f32 0.0, %v3554
        %v3556 = vpop.f32.mrb[0].mxu0
        %3557 = vdwg.mxu0
        %v3558 = vadd.f32 %v3443, %v3552
        %v3559 = vadd.f32 %v3446, %v3555
        %s3560 = scalar_lea.vmem %s2, 5
        %v3561 = vld [vmem:[%s3560] sm:$0x1]
        %v3563 = vlaneseq
        %v3564 = vshrl.u32 %v3563, 7
        %v3565 = vsub.s32 0, %v3564
        %v3566 = vrot.slane %v3561, %v3565
        %v3568 = vmul.f32 %v3558, %v3566
        %v3569 = vmul.f32 %v3559, %v3566
        %s3570 = scalar_lea.vmem %s3, 5
        %v3571 = vld [vmem:[%s3570] sm:$0x1]
        %v3573 = vlaneseq
        %v3574 = vshrl.u32 %v3573, 7
        %v3575 = vsub.s32 0, %v3574
        %v3576 = vrot.slane %v3571, %v3575
        %v3578 = vadd.f32 %v3568, %v3576
        %v3579 = vadd.f32 %v3569, %v3576
        %v3580 = vadd.f32 %v3578, %v3225
        %v3581 = vadd.f32 %v3579, %v3226
        %v3582 = vmul.f32 %v3580, 0.2
        %v3583 = vmul.f32 %v3581, 0.2
        %v3584 = vmax.f32 %v3580, %v3582
        %v3585 = vmax.f32 %v3581, %v3583
        %3586 = vst [vmem:[#allocation2] sm:$0xff] 0.0
        %3587 = vst [vmem:[#allocation2 + $0x18] sm:$0xff] 0.0
        %3588 = vst [vmem:[#allocation2 + $0x8] sm:$0xff] %v3584
        %3589 = vst [vmem:[#allocation2 + $0x10] sm:$0xff] %v3585
        %v3590 = vld [vmem:[#allocation2 + $0x7] sm:$0xff]
        %v3591 = vld [vmem:[#allocation2 + $0xf] sm:$0xff]
        %v3592 = vpack.c.bf16 %v3591, %v3590
        %s3593 = scalar_lea.vmem [#allocation3], 1152
        %v3594 = vld [vmem:[%s3593] sm:$0xf]
        %v3595 = vld [vmem:[%s3593 + $0x4] sm:$0xf]
        %v3596 = vld [vmem:[%s3593 + $0x8] sm:$0xf]
        %v3597 = vld [vmem:[%s3593 + $0xc] sm:$0xf]
        %v3598 = vld [vmem:[%s3593 + $0x10] sm:$0xf]
        %v3599 = vld [vmem:[%s3593 + $0x14] sm:$0xf]
        %v3600 = vld [vmem:[%s3593 + $0x18] sm:$0xf]
        %v3601 = vld [vmem:[%s3593 + $0x1c] sm:$0xf]
        %v3602 = vld [vmem:[%s3593 + $0x20] sm:$0xf]
        %v3603 = vld [vmem:[%s3593 + $0x24] sm:$0xf]
        %v3604 = vld [vmem:[%s3593 + $0x28] sm:$0xf]
        %v3605 = vld [vmem:[%s3593 + $0x2c] sm:$0xf]
        %v3606 = vld [vmem:[%s3593 + $0x30] sm:$0xf]
        %v3607 = vld [vmem:[%s3593 + $0x34] sm:$0xf]
        %v3608 = vld [vmem:[%s3593 + $0x38] sm:$0xf]
        %v3609 = vld [vmem:[%s3593 + $0x3c] sm:$0xf]
        %v3610 = vld [vmem:[#allocation2 + $0x8] sm:$0xff]
        %v3611 = vld [vmem:[#allocation2 + $0x10] sm:$0xff]
        %v3612 = vpack.c.bf16 %v3611, %v3610
        %s3613 = scalar_lea.vmem [#allocation3], 1216
        %v3614 = vld [vmem:[%s3613] sm:$0xf]
        %v3615 = vld [vmem:[%s3613 + $0x4] sm:$0xf]
        %v3616 = vld [vmem:[%s3613 + $0x8] sm:$0xf]
        %v3617 = vld [vmem:[%s3613 + $0xc] sm:$0xf]
        %v3618 = vld [vmem:[%s3613 + $0x10] sm:$0xf]
        %v3619 = vld [vmem:[%s3613 + $0x14] sm:$0xf]
        %v3620 = vld [vmem:[%s3613 + $0x18] sm:$0xf]
        %v3621 = vld [vmem:[%s3613 + $0x1c] sm:$0xf]
        %v3622 = vld [vmem:[%s3613 + $0x20] sm:$0xf]
        %v3623 = vld [vmem:[%s3613 + $0x24] sm:$0xf]
        %v3624 = vld [vmem:[%s3613 + $0x28] sm:$0xf]
        %v3625 = vld [vmem:[%s3613 + $0x2c] sm:$0xf]
        %v3626 = vld [vmem:[%s3613 + $0x30] sm:$0xf]
        %v3627 = vld [vmem:[%s3613 + $0x34] sm:$0xf]
        %v3628 = vld [vmem:[%s3613 + $0x38] sm:$0xf]
        %v3629 = vld [vmem:[%s3613 + $0x3c] sm:$0xf]
        %v3646 = vunpack.c.l.b16 %v3614
        %v3647 = vunpack.c.l.b16 %v3615
        %v3648 = vunpack.c.l.b16 %v3616
        %v3649 = vunpack.c.l.b16 %v3617
        %v3650 = vunpack.c.l.b16 %v3618
        %v3651 = vunpack.c.l.b16 %v3619
        %v3652 = vunpack.c.l.b16 %v3620
        %v3653 = vunpack.c.l.b16 %v3621
        %v3654 = vunpack.c.l.b16 %v3622
        %v3655 = vunpack.c.l.b16 %v3623
        %v3656 = vunpack.c.l.b16 %v3624
        %v3657 = vunpack.c.l.b16 %v3625
        %v3658 = vunpack.c.l.b16 %v3626
        %v3659 = vunpack.c.l.b16 %v3627
        %v3660 = vunpack.c.l.b16 %v3628
        %v3661 = vunpack.c.l.b16 %v3629
        %v3662 = vpack.c.b16 %v3647, %v3646
        %v3663 = vpack.c.b16 %v3649, %v3648
        %v3664 = vpack.c.b16 %v3651, %v3650
        %v3665 = vpack.c.b16 %v3653, %v3652
        %v3666 = vpack.c.b16 %v3655, %v3654
        %v3667 = vpack.c.b16 %v3657, %v3656
        %v3668 = vpack.c.b16 %v3659, %v3658
        %v3669 = vpack.c.b16 %v3661, %v3660
        %3678 = vmatprep.subr.bf16.mxu0 0
        %3679 = vmatpush1.bf16.msra.mxu0 %v3662
        %3680 = vmatprep.subr.bf16.mxu0 0
        %3681 = vmatpush1.bf16.msra.mxu0 %v3663
        %3682 = vmatprep.subr.bf16.mxu0 0
        %3683 = vmatpush1.bf16.msra.mxu0 %v3664
        %3684 = vmatprep.subr.bf16.mxu0 0
        %3685 = vmatpush1.bf16.msra.mxu0 %v3665
        %3686 = vmatprep.subr.bf16.mxu0 0
        %3687 = vmatpush1.bf16.msra.mxu0 %v3666
        %3688 = vmatprep.subr.bf16.mxu0 0
        %3689 = vmatpush1.bf16.msra.mxu0 %v3667
        %3690 = vmatprep.subr.bf16.mxu0 0
        %3691 = vmatpush1.bf16.msra.mxu0 %v3668
        %3692 = vmatprep.subr.bf16.mxu0 0
        %3693 = vmatpush1.bf16.msra.mxu0 %v3669
        %3694 = vmatprep.subr.bf16.mxu0 0
        %3695 = vmatpush1.bf16.msra.mxu0 0
        %3696 = vmatprep.subr.bf16.mxu0 0
        %3697 = vmatpush1.bf16.msra.mxu0 0
        %3698 = vmatprep.subr.bf16.mxu0 0
        %3699 = vmatpush1.bf16.msra.mxu0 0
        %3700 = vmatprep.subr.bf16.mxu0 0
        %3701 = vmatpush1.bf16.msra.mxu0 0
        %3702 = vmatprep.subr.bf16.mxu0 0
        %3703 = vmatpush1.bf16.msra.mxu0 0
        %3704 = vmatprep.subr.bf16.mxu0 0
        %3705 = vmatpush1.bf16.msra.mxu0 0
        %3706 = vmatprep.subr.bf16.mxu0 0
        %3707 = vmatpush1.bf16.msra.mxu0 0
        %3708 = vmatprep.subr.bf16.mxu0 0
        %3709 = vmatpush1.bf16.msra.mxu0 0
        %3710 = vmatprep.mubr.bf16.mxu0 0
        %3711 = vmatmul.mubr.bf16.gmra.mrb[0].mxu0 %v3612
        %v3712 = vpop.f32.mrb[0].mxu0
        %v3713 = vadd.f32 0.0, %v3712
        %v3714 = vpop.f32.mrb[0].mxu0
        %v3715 = vpop.f32.mrb[0].mxu0
        %v3716 = vadd.f32 0.0, %v3715
        %v3717 = vpop.f32.mrb[0].mxu0
        %3718 = vdwg.mxu0
        %v3735 = vunpack.c.l.b16 %v3594
        %v3736 = vunpack.c.l.b16 %v3595
        %v3737 = vunpack.c.l.b16 %v3596
        %v3738 = vunpack.c.l.b16 %v3597
        %v3739 = vunpack.c.l.b16 %v3598
        %v3740 = vunpack.c.l.b16 %v3599
        %v3741 = vunpack.c.l.b16 %v3600
        %v3742 = vunpack.c.l.b16 %v3601
        %v3743 = vunpack.c.l.b16 %v3602
        %v3744 = vunpack.c.l.b16 %v3603
        %v3745 = vunpack.c.l.b16 %v3604
        %v3746 = vunpack.c.l.b16 %v3605
        %v3747 = vunpack.c.l.b16 %v3606
        %v3748 = vunpack.c.l.b16 %v3607
        %v3749 = vunpack.c.l.b16 %v3608
        %v3750 = vunpack.c.l.b16 %v3609
        %v3751 = vpack.c.b16 %v3736, %v3735
        %v3752 = vpack.c.b16 %v3738, %v3737
        %v3753 = vpack.c.b16 %v3740, %v3739
        %v3754 = vpack.c.b16 %v3742, %v3741
        %v3755 = vpack.c.b16 %v3744, %v3743
        %v3756 = vpack.c.b16 %v3746, %v3745
        %v3757 = vpack.c.b16 %v3748, %v3747
        %v3758 = vpack.c.b16 %v3750, %v3749
        %3767 = vmatprep.subr.bf16.mxu0 0
        %3768 = vmatpush1.bf16.msra.mxu0 %v3751
        %3769 = vmatprep.subr.bf16.mxu0 0
        %3770 = vmatpush1.bf16.msra.mxu0 %v3752
        %3771 = vmatprep.subr.bf16.mxu0 0
        %3772 = vmatpush1.bf16.msra.mxu0 %v3753
        %3773 = vmatprep.subr.bf16.mxu0 0
        %3774 = vmatpush1.bf16.msra.mxu0 %v3754
        %3775 = vmatprep.subr.bf16.mxu0 0
        %3776 = vmatpush1.bf16.msra.mxu0 %v3755
        %3777 = vmatprep.subr.bf16.mxu0 0
        %3778 = vmatpush1.bf16.msra.mxu0 %v3756
        %3779 = vmatprep.subr.bf16.mxu0 0
        %3780 = vmatpush1.bf16.msra.mxu0 %v3757
        %3781 = vmatprep.subr.bf16.mxu0 0
        %3782 = vmatpush1.bf16.msra.mxu0 %v3758
        %3783 = vmatprep.subr.bf16.mxu0 0
        %3784 = vmatpush1.bf16.msra.mxu0 0
        %3785 = vmatprep.subr.bf16.mxu0 0
        %3786 = vmatpush1.bf16.msra.mxu0 0
        %3787 = vmatprep.subr.bf16.mxu0 0
        %3788 = vmatpush1.bf16.msra.mxu0 0
        %3789 = vmatprep.subr.bf16.mxu0 0
        %3790 = vmatpush1.bf16.msra.mxu0 0
        %3791 = vmatprep.subr.bf16.mxu0 0
        %3792 = vmatpush1.bf16.msra.mxu0 0
        %3793 = vmatprep.subr.bf16.mxu0 0
        %3794 = vmatpush1.bf16.msra.mxu0 0
        %3795 = vmatprep.subr.bf16.mxu0 0
        %3796 = vmatpush1.bf16.msra.mxu0 0
        %3797 = vmatprep.subr.bf16.mxu0 0
        %3798 = vmatpush1.bf16.msra.mxu0 0
        %3799 = vmatprep.mubr.bf16.mxu0 0
        %3800 = vmatmul.mubr.bf16.gmra.mrb[0].mxu0 %v3592
        %v3801 = vpop.f32.mrb[0].mxu0
        %v3802 = vadd.f32 %v3713, %v3801
        %v3803 = vpop.f32.mrb[0].mxu0
        %v3804 = vpop.f32.mrb[0].mxu0
        %v3805 = vadd.f32 %v3716, %v3804
        %v3806 = vpop.f32.mrb[0].mxu0
        %3807 = vdwg.mxu0
        %v3808 = vld [vmem:[#allocation2 + $0x9] sm:$0xff]
        %v3809 = vld [vmem:[#allocation2 + $0x11] sm:$0xff]
        %v3810 = vpack.c.bf16 %v3809, %v3808
        %s3811 = scalar_lea.vmem [#allocation3], 1280
        %v3812 = vld [vmem:[%s3811] sm:$0xf]
        %v3813 = vld [vmem:[%s3811 + $0x4] sm:$0xf]
        %v3814 = vld [vmem:[%s3811 + $0x8] sm:$0xf]
        %v3815 = vld [vmem:[%s3811 + $0xc] sm:$0xf]
        %v3816 = vld [vmem:[%s3811 + $0x10] sm:$0xf]
        %v3817 = vld [vmem:[%s3811 + $0x14] sm:$0xf]
        %v3818 = vld [vmem:[%s3811 + $0x18] sm:$0xf]
        %v3819 = vld [vmem:[%s3811 + $0x1c] sm:$0xf]
        %v3820 = vld [vmem:[%s3811 + $0x20] sm:$0xf]
        %v3821 = vld [vmem:[%s3811 + $0x24] sm:$0xf]
        %v3822 = vld [vmem:[%s3811 + $0x28] sm:$0xf]
        %v3823 = vld [vmem:[%s3811 + $0x2c] sm:$0xf]
        %v3824 = vld [vmem:[%s3811 + $0x30] sm:$0xf]
        %v3825 = vld [vmem:[%s3811 + $0x34] sm:$0xf]
        %v3826 = vld [vmem:[%s3811 + $0x38] sm:$0xf]
        %v3827 = vld [vmem:[%s3811 + $0x3c] sm:$0xf]
        %v3844 = vunpack.c.l.b16 %v3812
        %v3845 = vunpack.c.l.b16 %v3813
        %v3846 = vunpack.c.l.b16 %v3814
        %v3847 = vunpack.c.l.b16 %v3815
        %v3848 = vunpack.c.l.b16 %v3816
        %v3849 = vunpack.c.l.b16 %v3817
        %v3850 = vunpack.c.l.b16 %v3818
        %v3851 = vunpack.c.l.b16 %v3819
        %v3852 = vunpack.c.l.b16 %v3820
        %v3853 = vunpack.c.l.b16 %v3821
        %v3854 = vunpack.c.l.b16 %v3822
        %v3855 = vunpack.c.l.b16 %v3823
        %v3856 = vunpack.c.l.b16 %v3824
        %v3857 = vunpack.c.l.b16 %v3825
        %v3858 = vunpack.c.l.b16 %v3826
        %v3859 = vunpack.c.l.b16 %v3827
        %v3860 = vpack.c.b16 %v3845, %v3844
        %v3861 = vpack.c.b16 %v3847, %v3846
        %v3862 = vpack.c.b16 %v3849, %v3848
        %v3863 = vpack.c.b16 %v3851, %v3850
        %v3864 = vpack.c.b16 %v3853, %v3852
        %v3865 = vpack.c.b16 %v3855, %v3854
        %v3866 = vpack.c.b16 %v3857, %v3856
        %v3867 = vpack.c.b16 %v3859, %v3858
        %3876 = vmatprep.subr.bf16.mxu0 0
        %3877 = vmatpush1.bf16.msra.mxu0 %v3860
        %3878 = vmatprep.subr.bf16.mxu0 0
        %3879 = vmatpush1.bf16.msra.mxu0 %v3861
        %3880 = vmatprep.subr.bf16.mxu0 0
        %3881 = vmatpush1.bf16.msra.mxu0 %v3862
        %3882 = vmatprep.subr.bf16.mxu0 0
        %3883 = vmatpush1.bf16.msra.mxu0 %v3863
        %3884 = vmatprep.subr.bf16.mxu0 0
        %3885 = vmatpush1.bf16.msra.mxu0 %v3864
        %3886 = vmatprep.subr.bf16.mxu0 0
        %3887 = vmatpush1.bf16.msra.mxu0 %v3865
        %3888 = vmatprep.subr.bf16.mxu0 0
        %3889 = vmatpush1.bf16.msra.mxu0 %v3866
        %3890 = vmatprep.subr.bf16.mxu0 0
        %3891 = vmatpush1.bf16.msra.mxu0 %v3867
        %3892 = vmatprep.subr.bf16.mxu0 0
        %3893 = vmatpush1.bf16.msra.mxu0 0
        %3894 = vmatprep.subr.bf16.mxu0 0
        %3895 = vmatpush1.bf16.msra.mxu0 0
        %3896 = vmatprep.subr.bf16.mxu0 0
        %3897 = vmatpush1.bf16.msra.mxu0 0
        %3898 = vmatprep.subr.bf16.mxu0 0
        %3899 = vmatpush1.bf16.msra.mxu0 0
        %3900 = vmatprep.subr.bf16.mxu0 0
        %3901 = vmatpush1.bf16.msra.mxu0 0
        %3902 = vmatprep.subr.bf16.mxu0 0
        %3903 = vmatpush1.bf16.msra.mxu0 0
        %3904 = vmatprep.subr.bf16.mxu0 0
        %3905 = vmatpush1.bf16.msra.mxu0 0
        %3906 = vmatprep.subr.bf16.mxu0 0
        %3907 = vmatpush1.bf16.msra.mxu0 0
        %3908 = vmatprep.mubr.bf16.mxu0 0
        %3909 = vmatmul.mubr.bf16.gmra.mrb[0].mxu0 %v3810
        %v3910 = vpop.f32.mrb[0].mxu0
        %v3911 = vadd.f32 0.0, %v3910
        %v3912 = vpop.f32.mrb[0].mxu0
        %v3913 = vpop.f32.mrb[0].mxu0
        %v3914 = vadd.f32 0.0, %v3913
        %v3915 = vpop.f32.mrb[0].mxu0
        %3916 = vdwg.mxu0
        %v3917 = vadd.f32 %v3802, %v3911
        %v3918 = vadd.f32 %v3805, %v3914
        %s3919 = scalar_lea.vmem %s2, 6
        %v3920 = vld [vmem:[%s3919] sm:$0x1]
        %v3922 = vlaneseq
        %v3923 = vshrl.u32 %v3922, 7
        %v3924 = vsub.s32 0, %v3923
        %v3925 = vrot.slane %v3920, %v3924
        %v3927 = vmul.f32 %v3917, %v3925
        %v3928 = vmul.f32 %v3918, %v3925
        %s3929 = scalar_lea.vmem %s3, 6
        %v3930 = vld [vmem:[%s3929] sm:$0x1]
        %v3932 = vlaneseq
        %v3933 = vshrl.u32 %v3932, 7
        %v3934 = vsub.s32 0, %v3933
        %v3935 = vrot.slane %v3930, %v3934
        %v3937 = vadd.f32 %v3927, %v3935
        %v3938 = vadd.f32 %v3928, %v3935
        %v3939 = vadd.f32 %v3937, %v2866
        %v3940 = vadd.f32 %v3938, %v2867
        %v3941 = vmax.f32 %v3939, 0.0
        %v3942 = vmax.f32 %v3940, 0.0
        %3943 = vst [vmem:[#allocation2] sm:$0xff] 0.0
        %3944 = vst [vmem:[#allocation2 + $0x18] sm:$0xff] 0.0
        %3945 = vst [vmem:[#allocation2 + $0x8] sm:$0xff] %v3941
        %3946 = vst [vmem:[#allocation2 + $0x10] sm:$0xff] %v3942
        %v3947 = vld [vmem:[%s1931] ss:$2 sm:$0xff]
        %v3948 = vpack.c.bf16 %v3947, %v3947
        %s3949 = scalar_lea.vmem [#allocation5], 512
        %v3950 = vld [vmem:[%s3949] sm:$0xf]
        %v3951 = vld [vmem:[%s3949 + $0x4] sm:$0xf]
        %v3952 = vld [vmem:[%s3949 + $0x8] sm:$0xf]
        %v3953 = vld [vmem:[%s3949 + $0xc] sm:$0xf]
        %v3954 = vld [vmem:[%s3949 + $0x10] sm:$0xf]
        %v3955 = vld [vmem:[%s3949 + $0x14] sm:$0xf]
        %v3956 = vld [vmem:[%s3949 + $0x18] sm:$0xf]
        %v3957 = vld [vmem:[%s3949 + $0x1c] sm:$0xf]
        %v3958 = vld [vmem:[%s3949 + $0x20] sm:$0xf]
        %v3959 = vld [vmem:[%s3949 + $0x24] sm:$0xf]
        %v3960 = vld [vmem:[%s3949 + $0x28] sm:$0xf]
        %v3961 = vld [vmem:[%s3949 + $0x2c] sm:$0xf]
        %v3962 = vld [vmem:[%s3949 + $0x30] sm:$0xf]
        %v3963 = vld [vmem:[%s3949 + $0x34] sm:$0xf]
        %v3964 = vld [vmem:[%s3949 + $0x38] sm:$0xf]
        %v3965 = vld [vmem:[%s3949 + $0x3c] sm:$0xf]
        %v3966 = vld [vmem:[%s1952] ss:$2 sm:$0xff]
        %v3967 = vpack.c.bf16 %v3966, %v3966
        %s3968 = scalar_lea.vmem [#allocation5], 576
        %v3969 = vld [vmem:[%s3968] sm:$0xf]
        %v3970 = vld [vmem:[%s3968 + $0x4] sm:$0xf]
        %v3971 = vld [vmem:[%s3968 + $0x8] sm:$0xf]
        %v3972 = vld [vmem:[%s3968 + $0xc] sm:$0xf]
        %v3973 = vld [vmem:[%s3968 + $0x10] sm:$0xf]
        %v3974 = vld [vmem:[%s3968 + $0x14] sm:$0xf]
        %v3975 = vld [vmem:[%s3968 + $0x18] sm:$0xf]
        %v3976 = vld [vmem:[%s3968 + $0x1c] sm:$0xf]
        %v3977 = vld [vmem:[%s3968 + $0x20] sm:$0xf]
        %v3978 = vld [vmem:[%s3968 + $0x24] sm:$0xf]
        %v3979 = vld [vmem:[%s3968 + $0x28] sm:$0xf]
        %v3980 = vld [vmem:[%s3968 + $0x2c] sm:$0xf]
        %v3981 = vld [vmem:[%s3968 + $0x30] sm:$0xf]
        %v3982 = vld [vmem:[%s3968 + $0x34] sm:$0xf]
        %v3983 = vld [vmem:[%s3968 + $0x38] sm:$0xf]
        %v3984 = vld [vmem:[%s3968 + $0x3c] sm:$0xf]
        %v4001 = vunpack.c.l.b16 %v3969
        %v4002 = vunpack.c.l.b16 %v3970
        %v4003 = vunpack.c.l.b16 %v3971
        %v4004 = vunpack.c.l.b16 %v3972
        %v4005 = vunpack.c.l.b16 %v3973
        %v4006 = vunpack.c.l.b16 %v3974
        %v4007 = vunpack.c.l.b16 %v3975
        %v4008 = vunpack.c.l.b16 %v3976
        %v4009 = vunpack.c.l.b16 %v3977
        %v4010 = vunpack.c.l.b16 %v3978
        %v4011 = vunpack.c.l.b16 %v3979
        %v4012 = vunpack.c.l.b16 %v3980
        %v4013 = vunpack.c.l.b16 %v3981
        %v4014 = vunpack.c.l.b16 %v3982
        %v4015 = vunpack.c.l.b16 %v3983
        %v4016 = vunpack.c.l.b16 %v3984
        %v4017 = vpack.c.b16 %v4002, %v4001
        %v4018 = vpack.c.b16 %v4004, %v4003
        %v4019 = vpack.c.b16 %v4006, %v4005
        %v4020 = vpack.c.b16 %v4008, %v4007
        %v4021 = vpack.c.b16 %v4010, %v4009
        %v4022 = vpack.c.b16 %v4012, %v4011
        %v4023 = vpack.c.b16 %v4014, %v4013
        %v4024 = vpack.c.b16 %v4016, %v4015
        %4033 = vmatprep.subr.bf16.mxu0 0
        %4034 = vmatpush1.bf16.msra.mxu0 %v4017
        %4035 = vmatprep.subr.bf16.mxu0 0
        %4036 = vmatpush1.bf16.msra.mxu0 %v4018
        %4037 = vmatprep.subr.bf16.mxu0 0
        %4038 = vmatpush1.bf16.msra.mxu0 %v4019
        %4039 = vmatprep.subr.bf16.mxu0 0
        %4040 = vmatpush1.bf16.msra.mxu0 %v4020
        %4041 = vmatprep.subr.bf16.mxu0 0
        %4042 = vmatpush1.bf16.msra.mxu0 %v4021
        %4043 = vmatprep.subr.bf16.mxu0 0
        %4044 = vmatpush1.bf16.msra.mxu0 %v4022
        %4045 = vmatprep.subr.bf16.mxu0 0
        %4046 = vmatpush1.bf16.msra.mxu0 %v4023
        %4047 = vmatprep.subr.bf16.mxu0 0
        %4048 = vmatpush1.bf16.msra.mxu0 %v4024
        %4049 = vmatprep.subr.bf16.mxu0 0
        %4050 = vmatpush1.bf16.msra.mxu0 0
        %4051 = vmatprep.subr.bf16.mxu0 0
        %4052 = vmatpush1.bf16.msra.mxu0 0
        %4053 = vmatprep.subr.bf16.mxu0 0
        %4054 = vmatpush1.bf16.msra.mxu0 0
        %4055 = vmatprep.subr.bf16.mxu0 0
        %4056 = vmatpush1.bf16.msra.mxu0 0
        %4057 = vmatprep.subr.bf16.mxu0 0
        %4058 = vmatpush1.bf16.msra.mxu0 0
        %4059 = vmatprep.subr.bf16.mxu0 0
        %4060 = vmatpush1.bf16.msra.mxu0 0
        %4061 = vmatprep.subr.bf16.mxu0 0
        %4062 = vmatpush1.bf16.msra.mxu0 0
        %4063 = vmatprep.subr.bf16.mxu0 0
        %4064 = vmatpush1.bf16.msra.mxu0 0
        %4065 = vmatprep.mubr.bf16.mxu0 0
        %4066 = vmatmul.mubr.bf16.gmra.mrb[0].mxu0 %v3967
        %v4067 = vpop.f32.mrb[0].mxu0
        %v4068 = vadd.f32 0.0, %v4067
        %v4069 = vpop.f32.mrb[0].mxu0
        %v4070 = vpop.f32.mrb[0].mxu0
        %v4071 = vpop.f32.mrb[0].mxu0
        %4072 = vdwg.mxu0
        %v4089 = vunpack.c.l.b16 %v3950
        %v4090 = vunpack.c.l.b16 %v3951
        %v4091 = vunpack.c.l.b16 %v3952
        %v4092 = vunpack.c.l.b16 %v3953
        %v4093 = vunpack.c.l.b16 %v3954
        %v4094 = vunpack.c.l.b16 %v3955
        %v4095 = vunpack.c.l.b16 %v3956
        %v4096 = vunpack.c.l.b16 %v3957
        %v4097 = vunpack.c.l.b16 %v3958
        %v4098 = vunpack.c.l.b16 %v3959
        %v4099 = vunpack.c.l.b16 %v3960
        %v4100 = vunpack.c.l.b16 %v3961
        %v4101 = vunpack.c.l.b16 %v3962
        %v4102 = vunpack.c.l.b16 %v3963
        %v4103 = vunpack.c.l.b16 %v3964
        %v4104 = vunpack.c.l.b16 %v3965
        %v4105 = vpack.c.b16 %v4090, %v4089
        %v4106 = vpack.c.b16 %v4092, %v4091
        %v4107 = vpack.c.b16 %v4094, %v4093
        %v4108 = vpack.c.b16 %v4096, %v4095
        %v4109 = vpack.c.b16 %v4098, %v4097
        %v4110 = vpack.c.b16 %v4100, %v4099
        %v4111 = vpack.c.b16 %v4102, %v4101
        %v4112 = vpack.c.b16 %v4104, %v4103
        %4121 = vmatprep.subr.bf16.mxu0 0
        %4122 = vmatpush1.bf16.msra.mxu0 %v4105
        %4123 = vmatprep.subr.bf16.mxu0 0
        %4124 = vmatpush1.bf16.msra.mxu0 %v4106
        %4125 = vmatprep.subr.bf16.mxu0 0
        %4126 = vmatpush1.bf16.msra.mxu0 %v4107
        %4127 = vmatprep.subr.bf16.mxu0 0
        %4128 = vmatpush1.bf16.msra.mxu0 %v4108
        %4129 = vmatprep.subr.bf16.mxu0 0
        %4130 = vmatpush1.bf16.msra.mxu0 %v4109
        %4131 = vmatprep.subr.bf16.mxu0 0
        %4132 = vmatpush1.bf16.msra.mxu0 %v4110
        %4133 = vmatprep.subr.bf16.mxu0 0
        %4134 = vmatpush1.bf16.msra.mxu0 %v4111
        %4135 = vmatprep.subr.bf16.mxu0 0
        %4136 = vmatpush1.bf16.msra.mxu0 %v4112
        %4137 = vmatprep.subr.bf16.mxu0 0
        %4138 = vmatpush1.bf16.msra.mxu0 0
        %4139 = vmatprep.subr.bf16.mxu0 0
        %4140 = vmatpush1.bf16.msra.mxu0 0
        %4141 = vmatprep.subr.bf16.mxu0 0
        %4142 = vmatpush1.bf16.msra.mxu0 0
        %4143 = vmatprep.subr.bf16.mxu0 0
        %4144 = vmatpush1.bf16.msra.mxu0 0
        %4145 = vmatprep.subr.bf16.mxu0 0
        %4146 = vmatpush1.bf16.msra.mxu0 0
        %4147 = vmatprep.subr.bf16.mxu0 0
        %4148 = vmatpush1.bf16.msra.mxu0 0
        %4149 = vmatprep.subr.bf16.mxu0 0
        %4150 = vmatpush1.bf16.msra.mxu0 0
        %4151 = vmatprep.subr.bf16.mxu0 0
        %4152 = vmatpush1.bf16.msra.mxu0 0
        %4153 = vmatprep.mubr.bf16.mxu0 0
        %4154 = vmatmul.mubr.bf16.gmra.mrb[0].mxu0 %v3948
        %v4155 = vpop.f32.mrb[0].mxu0
        %v4156 = vadd.f32 %v4068, %v4155
        %v4157 = vpop.f32.mrb[0].mxu0
        %v4158 = vpop.f32.mrb[0].mxu0
        %v4159 = vpop.f32.mrb[0].mxu0
        %4160 = vdwg.mxu0
        %v4161 = vld [vmem:[%s2152] ss:$2 sm:$0xff]
        %v4162 = vpack.c.bf16 %v4161, %v4161
        %s4163 = scalar_lea.vmem [#allocation5], 640
        %v4164 = vld [vmem:[%s4163] sm:$0xf]
        %v4165 = vld [vmem:[%s4163 + $0x4] sm:$0xf]
        %v4166 = vld [vmem:[%s4163 + $0x8] sm:$0xf]
        %v4167 = vld [vmem:[%s4163 + $0xc] sm:$0xf]
        %v4168 = vld [vmem:[%s4163 + $0x10] sm:$0xf]
        %v4169 = vld [vmem:[%s4163 + $0x14] sm:$0xf]
        %v4170 = vld [vmem:[%s4163 + $0x18] sm:$0xf]
        %v4171 = vld [vmem:[%s4163 + $0x1c] sm:$0xf]
        %v4172 = vld [vmem:[%s4163 + $0x20] sm:$0xf]
        %v4173 = vld [vmem:[%s4163 + $0x24] sm:$0xf]
        %v4174 = vld [vmem:[%s4163 + $0x28] sm:$0xf]
        %v4175 = vld [vmem:[%s4163 + $0x2c] sm:$0xf]
        %v4176 = vld [vmem:[%s4163 + $0x30] sm:$0xf]
        %v4177 = vld [vmem:[%s4163 + $0x34] sm:$0xf]
        %v4178 = vld [vmem:[%s4163 + $0x38] sm:$0xf]
        %v4179 = vld [vmem:[%s4163 + $0x3c] sm:$0xf]
        %v4196 = vunpack.c.l.b16 %v4164
        %v4197 = vunpack.c.l.b16 %v4165
        %v4198 = vunpack.c.l.b16 %v4166
        %v4199 = vunpack.c.l.b16 %v4167
        %v4200 = vunpack.c.l.b16 %v4168
        %v4201 = vunpack.c.l.b16 %v4169
        %v4202 = vunpack.c.l.b16 %v4170
        %v4203 = vunpack.c.l.b16 %v4171
        %v4204 = vunpack.c.l.b16 %v4172
        %v4205 = vunpack.c.l.b16 %v4173
        %v4206 = vunpack.c.l.b16 %v4174
        %v4207 = vunpack.c.l.b16 %v4175
        %v4208 = vunpack.c.l.b16 %v4176
        %v4209 = vunpack.c.l.b16 %v4177
        %v4210 = vunpack.c.l.b16 %v4178
        %v4211 = vunpack.c.l.b16 %v4179
        %v4212 = vpack.c.b16 %v4197, %v4196
        %v4213 = vpack.c.b16 %v4199, %v4198
        %v4214 = vpack.c.b16 %v4201, %v4200
        %v4215 = vpack.c.b16 %v4203, %v4202
        %v4216 = vpack.c.b16 %v4205, %v4204
        %v4217 = vpack.c.b16 %v4207, %v4206
        %v4218 = vpack.c.b16 %v4209, %v4208
        %v4219 = vpack.c.b16 %v4211, %v4210
        %4228 = vmatprep.subr.bf16.mxu0 0
        %4229 = vmatpush1.bf16.msra.mxu0 %v4212
        %4230 = vmatprep.subr.bf16.mxu0 0
        %4231 = vmatpush1.bf16.msra.mxu0 %v4213
        %4232 = vmatprep.subr.bf16.mxu0 0
        %4233 = vmatpush1.bf16.msra.mxu0 %v4214
        %4234 = vmatprep.subr.bf16.mxu0 0
        %4235 = vmatpush1.bf16.msra.mxu0 %v4215
        %4236 = vmatprep.subr.bf16.mxu0 0
        %4237 = vmatpush1.bf16.msra.mxu0 %v4216
        %4238 = vmatprep.subr.bf16.mxu0 0
        %4239 = vmatpush1.bf16.msra.mxu0 %v4217
        %4240 = vmatprep.subr.bf16.mxu0 0
        %4241 = vmatpush1.bf16.msra.mxu0 %v4218
        %4242 = vmatprep.subr.bf16.mxu0 0
        %4243 = vmatpush1.bf16.msra.mxu0 %v4219
        %4244 = vmatprep.subr.bf16.mxu0 0
        %4245 = vmatpush1.bf16.msra.mxu0 0
        %4246 = vmatprep.subr.bf16.mxu0 0
        %4247 = vmatpush1.bf16.msra.mxu0 0
        %4248 = vmatprep.subr.bf16.mxu0 0
        %4249 = vmatpush1.bf16.msra.mxu0 0
        %4250 = vmatprep.subr.bf16.mxu0 0
        %4251 = vmatpush1.bf16.msra.mxu0 0
        %4252 = vmatprep.subr.bf16.mxu0 0
        %4253 = vmatpush1.bf16.msra.mxu0 0
        %4254 = vmatprep.subr.bf16.mxu0 0
        %4255 = vmatpush1.bf16.msra.mxu0 0
        %4256 = vmatprep.subr.bf16.mxu0 0
        %4257 = vmatpush1.bf16.msra.mxu0 0
        %4258 = vmatprep.subr.bf16.mxu0 0
        %4259 = vmatpush1.bf16.msra.mxu0 0
        %4260 = vmatprep.mubr.bf16.mxu0 0
        %4261 = vmatmul.mubr.bf16.gmra.mrb[0].mxu0 %v4162
        %v4262 = vpop.f32.mrb[0].mxu0
        %v4263 = vadd.f32 0.0, %v4262
        %v4264 = vpop.f32.mrb[0].mxu0
        %v4265 = vpop.f32.mrb[0].mxu0
        %v4266 = vpop.f32.mrb[0].mxu0
        %4267 = vdwg.mxu0
        %v4268 = vadd.f32 %v4156, %v4263
        %v4269 = vld [vmem:[%s2265] ss:$2 sm:$0xff]
        %v4270 = vpack.c.bf16 %v4269, %v4269
        %s4271 = scalar_lea.vmem [#allocation5], 704
        %v4272 = vld [vmem:[%s4271] sm:$0xf]
        %v4273 = vld [vmem:[%s4271 + $0x4] sm:$0xf]
        %v4274 = vld [vmem:[%s4271 + $0x8] sm:$0xf]
        %v4275 = vld [vmem:[%s4271 + $0xc] sm:$0xf]
        %v4276 = vld [vmem:[%s4271 + $0x10] sm:$0xf]
        %v4277 = vld [vmem:[%s4271 + $0x14] sm:$0xf]
        %v4278 = vld [vmem:[%s4271 + $0x18] sm:$0xf]
        %v4279 = vld [vmem:[%s4271 + $0x1c] sm:$0xf]
        %v4280 = vld [vmem:[%s4271 + $0x20] sm:$0xf]
        %v4281 = vld [vmem:[%s4271 + $0x24] sm:$0xf]
        %v4282 = vld [vmem:[%s4271 + $0x28] sm:$0xf]
        %v4283 = vld [vmem:[%s4271 + $0x2c] sm:$0xf]
        %v4284 = vld [vmem:[%s4271 + $0x30] sm:$0xf]
        %v4285 = vld [vmem:[%s4271 + $0x34] sm:$0xf]
        %v4286 = vld [vmem:[%s4271 + $0x38] sm:$0xf]
        %v4287 = vld [vmem:[%s4271 + $0x3c] sm:$0xf]
        %v4304 = vunpack.c.l.b16 %v4272
        %v4305 = vunpack.c.l.b16 %v4273
        %v4306 = vunpack.c.l.b16 %v4274
        %v4307 = vunpack.c.l.b16 %v4275
        %v4308 = vunpack.c.l.b16 %v4276
        %v4309 = vunpack.c.l.b16 %v4277
        %v4310 = vunpack.c.l.b16 %v4278
        %v4311 = vunpack.c.l.b16 %v4279
        %v4312 = vunpack.c.l.b16 %v4280
        %v4313 = vunpack.c.l.b16 %v4281
        %v4314 = vunpack.c.l.b16 %v4282
        %v4315 = vunpack.c.l.b16 %v4283
        %v4316 = vunpack.c.l.b16 %v4284
        %v4317 = vunpack.c.l.b16 %v4285
        %v4318 = vunpack.c.l.b16 %v4286
        %v4319 = vunpack.c.l.b16 %v4287
        %v4320 = vpack.c.b16 %v4305, %v4304
        %v4321 = vpack.c.b16 %v4307, %v4306
        %v4322 = vpack.c.b16 %v4309, %v4308
        %v4323 = vpack.c.b16 %v4311, %v4310
        %v4324 = vpack.c.b16 %v4313, %v4312
        %v4325 = vpack.c.b16 %v4315, %v4314
        %v4326 = vpack.c.b16 %v4317, %v4316
        %v4327 = vpack.c.b16 %v4319, %v4318
        %4336 = vmatprep.subr.bf16.mxu0 0
        %4337 = vmatpush1.bf16.msra.mxu0 %v4320
        %4338 = vmatprep.subr.bf16.mxu0 0
        %4339 = vmatpush1.bf16.msra.mxu0 %v4321
        %4340 = vmatprep.subr.bf16.mxu0 0
        %4341 = vmatpush1.bf16.msra.mxu0 %v4322
        %4342 = vmatprep.subr.bf16.mxu0 0
        %4343 = vmatpush1.bf16.msra.mxu0 %v4323
        %4344 = vmatprep.subr.bf16.mxu0 0
        %4345 = vmatpush1.bf16.msra.mxu0 %v4324
        %4346 = vmatprep.subr.bf16.mxu0 0
        %4347 = vmatpush1.bf16.msra.mxu0 %v4325
        %4348 = vmatprep.subr.bf16.mxu0 0
        %4349 = vmatpush1.bf16.msra.mxu0 %v4326
        %4350 = vmatprep.subr.bf16.mxu0 0
        %4351 = vmatpush1.bf16.msra.mxu0 %v4327
        %4352 = vmatprep.subr.bf16.mxu0 0
        %4353 = vmatpush1.bf16.msra.mxu0 0
        %4354 = vmatprep.subr.bf16.mxu0 0
        %4355 = vmatpush1.bf16.msra.mxu0 0
        %4356 = vmatprep.subr.bf16.mxu0 0
        %4357 = vmatpush1.bf16.msra.mxu0 0
        %4358 = vmatprep.subr.bf16.mxu0 0
        %4359 = vmatpush1.bf16.msra.mxu0 0
        %4360 = vmatprep.subr.bf16.mxu0 0
        %4361 = vmatpush1.bf16.msra.mxu0 0
        %4362 = vmatprep.subr.bf16.mxu0 0
        %4363 = vmatpush1.bf16.msra.mxu0 0
        %4364 = vmatprep.subr.bf16.mxu0 0
        %4365 = vmatpush1.bf16.msra.mxu0 0
        %4366 = vmatprep.subr.bf16.mxu0 0
        %4367 = vmatpush1.bf16.msra.mxu0 0
        %4368 = vmatprep.mubr.bf16.mxu0 0
        %4369 = vmatmul.mubr.bf16.gmra.mrb[0].mxu0 %v4270
        %v4370 = vpop.f32.mrb[0].mxu0
        %v4371 = vadd.f32 0.0, %v4370
        %v4372 = vpop.f32.mrb[0].mxu0
        %v4373 = vpop.f32.mrb[0].mxu0
        %v4374 = vpop.f32.mrb[0].mxu0
        %4375 = vdwg.mxu0
        %v4376 = vadd.f32 %v4268, %v4371
        %s4377 = scalar_lea.vmem %s5, 2
        %v4378 = vld [vmem:[%s4377] sm:$0x1]
        %v4380 = vlaneseq
        %v4381 = vshrl.u32 %v4380, 7
        %v4382 = vsub.s32 0, %v4381
        %v4383 = vrot.slane %v4378, %v4382
        %v4385 = vmul.f32 %v4376, %v4383
        %s4386 = scalar_lea.vmem %s6, 2
        %v4387 = vld [vmem:[%s4386] sm:$0x1]
        %v4389 = vlaneseq
        %v4390 = vshrl.u32 %v4389, 7
        %v4391 = vsub.s32 0, %v4390
        %v4392 = vrot.slane %v4387, %v4391
        %v4394 = vadd.f32 %v4385, %v4392
        %4395 = vst [vmem:[#allocation2] sm:$0xff] 0.0
        %4396 = vst [vmem:[#allocation2 + $0x18] sm:$0xff] 0.0
        %4397 = vst [vmem:[#allocation2 + $0x8] sm:$0xff] %v3941
        %4398 = vst [vmem:[#allocation2 + $0x10] sm:$0xff] %v3942
        %v4399 = vld [vmem:[%s1931] ss:$2 sm:$0xff]
        %v4400 = vpack.c.bf16 %v4399, %v4399
        %s4401 = scalar_lea.vmem [#allocation5], 768
        %v4402 = vld [vmem:[%s4401] sm:$0xf]
        %v4403 = vld [vmem:[%s4401 + $0x4] sm:$0xf]
        %v4404 = vld [vmem:[%s4401 + $0x8] sm:$0xf]
        %v4405 = vld [vmem:[%s4401 + $0xc] sm:$0xf]
        %v4406 = vld [vmem:[%s4401 + $0x10] sm:$0xf]
        %v4407 = vld [vmem:[%s4401 + $0x14] sm:$0xf]
        %v4408 = vld [vmem:[%s4401 + $0x18] sm:$0xf]
        %v4409 = vld [vmem:[%s4401 + $0x1c] sm:$0xf]
        %v4410 = vld [vmem:[%s4401 + $0x20] sm:$0xf]
        %v4411 = vld [vmem:[%s4401 + $0x24] sm:$0xf]
        %v4412 = vld [vmem:[%s4401 + $0x28] sm:$0xf]
        %v4413 = vld [vmem:[%s4401 + $0x2c] sm:$0xf]
        %v4414 = vld [vmem:[%s4401 + $0x30] sm:$0xf]
        %v4415 = vld [vmem:[%s4401 + $0x34] sm:$0xf]
        %v4416 = vld [vmem:[%s4401 + $0x38] sm:$0xf]
        %v4417 = vld [vmem:[%s4401 + $0x3c] sm:$0xf]
        %v4418 = vld [vmem:[%s1952] ss:$2 sm:$0xff]
        %v4419 = vpack.c.bf16 %v4418, %v4418
        %s4420 = scalar_lea.vmem [#allocation5], 832
        %v4421 = vld [vmem:[%s4420] sm:$0xf]
        %v4422 = vld [vmem:[%s4420 + $0x4] sm:$0xf]
        %v4423 = vld [vmem:[%s4420 + $0x8] sm:$0xf]
        %v4424 = vld [vmem:[%s4420 + $0xc] sm:$0xf]
        %v4425 = vld [vmem:[%s4420 + $0x10] sm:$0xf]
        %v4426 = vld [vmem:[%s4420 + $0x14] sm:$0xf]
        %v4427 = vld [vmem:[%s4420 + $0x18] sm:$0xf]
        %v4428 = vld [vmem:[%s4420 + $0x1c] sm:$0xf]
        %v4429 = vld [vmem:[%s4420 + $0x20] sm:$0xf]
        %v4430 = vld [vmem:[%s4420 + $0x24] sm:$0xf]
        %v4431 = vld [vmem:[%s4420 + $0x28] sm:$0xf]
        %v4432 = vld [vmem:[%s4420 + $0x2c] sm:$0xf]
        %v4433 = vld [vmem:[%s4420 + $0x30] sm:$0xf]
        %v4434 = vld [vmem:[%s4420 + $0x34] sm:$0xf]
        %v4435 = vld [vmem:[%s4420 + $0x38] sm:$0xf]
        %v4436 = vld [vmem:[%s4420 + $0x3c] sm:$0xf]
        %v4453 = vunpack.c.l.b16 %v4421
        %v4454 = vunpack.c.l.b16 %v4422
        %v4455 = vunpack.c.l.b16 %v4423
        %v4456 = vunpack.c.l.b16 %v4424
        %v4457 = vunpack.c.l.b16 %v4425
        %v4458 = vunpack.c.l.b16 %v4426
        %v4459 = vunpack.c.l.b16 %v4427
        %v4460 = vunpack.c.l.b16 %v4428
        %v4461 = vunpack.c.l.b16 %v4429
        %v4462 = vunpack.c.l.b16 %v4430
        %v4463 = vunpack.c.l.b16 %v4431
        %v4464 = vunpack.c.l.b16 %v4432
        %v4465 = vunpack.c.l.b16 %v4433
        %v4466 = vunpack.c.l.b16 %v4434
        %v4467 = vunpack.c.l.b16 %v4435
        %v4468 = vunpack.c.l.b16 %v4436
        %v4469 = vpack.c.b16 %v4454, %v4453
        %v4470 = vpack.c.b16 %v4456, %v4455
        %v4471 = vpack.c.b16 %v4458, %v4457
        %v4472 = vpack.c.b16 %v4460, %v4459
        %v4473 = vpack.c.b16 %v4462, %v4461
        %v4474 = vpack.c.b16 %v4464, %v4463
        %v4475 = vpack.c.b16 %v4466, %v4465
        %v4476 = vpack.c.b16 %v4468, %v4467
        %4485 = vmatprep.subr.bf16.mxu0 0
        %4486 = vmatpush1.bf16.msra.mxu0 %v4469
        %4487 = vmatprep.subr.bf16.mxu0 0
        %4488 = vmatpush1.bf16.msra.mxu0 %v4470
        %4489 = vmatprep.subr.bf16.mxu0 0
        %4490 = vmatpush1.bf16.msra.mxu0 %v4471
        %4491 = vmatprep.subr.bf16.mxu0 0
        %4492 = vmatpush1.bf16.msra.mxu0 %v4472
        %4493 = vmatprep.subr.bf16.mxu0 0
        %4494 = vmatpush1.bf16.msra.mxu0 %v4473
        %4495 = vmatprep.subr.bf16.mxu0 0
        %4496 = vmatpush1.bf16.msra.mxu0 %v4474
        %4497 = vmatprep.subr.bf16.mxu0 0
        %4498 = vmatpush1.bf16.msra.mxu0 %v4475
        %4499 = vmatprep.subr.bf16.mxu0 0
        %4500 = vmatpush1.bf16.msra.mxu0 %v4476
        %4501 = vmatprep.subr.bf16.mxu0 0
        %4502 = vmatpush1.bf16.msra.mxu0 0
        %4503 = vmatprep.subr.bf16.mxu0 0
        %4504 = vmatpush1.bf16.msra.mxu0 0
        %4505 = vmatprep.subr.bf16.mxu0 0
        %4506 = vmatpush1.bf16.msra.mxu0 0
        %4507 = vmatprep.subr.bf16.mxu0 0
        %4508 = vmatpush1.bf16.msra.mxu0 0
        %4509 = vmatprep.subr.bf16.mxu0 0
        %4510 = vmatpush1.bf16.msra.mxu0 0
        %4511 = vmatprep.subr.bf16.mxu0 0
        %4512 = vmatpush1.bf16.msra.mxu0 0
        %4513 = vmatprep.subr.bf16.mxu0 0
        %4514 = vmatpush1.bf16.msra.mxu0 0
        %4515 = vmatprep.subr.bf16.mxu0 0
        %4516 = vmatpush1.bf16.msra.mxu0 0
        %4517 = vmatprep.mubr.bf16.mxu0 0
        %4518 = vmatmul.mubr.bf16.gmra.mrb[0].mxu0 %v4419
        %v4519 = vpop.f32.mrb[0].mxu0
        %v4520 = vadd.f32 0.0, %v4519
        %v4521 = vpop.f32.mrb[0].mxu0
        %v4522 = vpop.f32.mrb[0].mxu0
        %v4523 = vpop.f32.mrb[0].mxu0
        %4524 = vdwg.mxu0
        %v4541 = vunpack.c.l.b16 %v4402
        %v4542 = vunpack.c.l.b16 %v4403
        %v4543 = vunpack.c.l.b16 %v4404
        %v4544 = vunpack.c.l.b16 %v4405
        %v4545 = vunpack.c.l.b16 %v4406
        %v4546 = vunpack.c.l.b16 %v4407
        %v4547 = vunpack.c.l.b16 %v4408
        %v4548 = vunpack.c.l.b16 %v4409
        %v4549 = vunpack.c.l.b16 %v4410
        %v4550 = vunpack.c.l.b16 %v4411
        %v4551 = vunpack.c.l.b16 %v4412
        %v4552 = vunpack.c.l.b16 %v4413
        %v4553 = vunpack.c.l.b16 %v4414
        %v4554 = vunpack.c.l.b16 %v4415
        %v4555 = vunpack.c.l.b16 %v4416
        %v4556 = vunpack.c.l.b16 %v4417
        %v4557 = vpack.c.b16 %v4542, %v4541
        %v4558 = vpack.c.b16 %v4544, %v4543
        %v4559 = vpack.c.b16 %v4546, %v4545
        %v4560 = vpack.c.b16 %v4548, %v4547
        %v4561 = vpack.c.b16 %v4550, %v4549
        %v4562 = vpack.c.b16 %v4552, %v4551
        %v4563 = vpack.c.b16 %v4554, %v4553
        %v4564 = vpack.c.b16 %v4556, %v4555
        %4573 = vmatprep.subr.bf16.mxu0 0
        %4574 = vmatpush1.bf16.msra.mxu0 %v4557
        %4575 = vmatprep.subr.bf16.mxu0 0
        %4576 = vmatpush1.bf16.msra.mxu0 %v4558
        %4577 = vmatprep.subr.bf16.mxu0 0
        %4578 = vmatpush1.bf16.msra.mxu0 %v4559
        %4579 = vmatprep.subr.bf16.mxu0 0
        %4580 = vmatpush1.bf16.msra.mxu0 %v4560
        %4581 = vmatprep.subr.bf16.mxu0 0
        %4582 = vmatpush1.bf16.msra.mxu0 %v4561
        %4583 = vmatprep.subr.bf16.mxu0 0
        %4584 = vmatpush1.bf16.msra.mxu0 %v4562
        %4585 = vmatprep.subr.bf16.mxu0 0
        %4586 = vmatpush1.bf16.msra.mxu0 %v4563
        %4587 = vmatprep.subr.bf16.mxu0 0
        %4588 = vmatpush1.bf16.msra.mxu0 %v4564
        %4589 = vmatprep.subr.bf16.mxu0 0
        %4590 = vmatpush1.bf16.msra.mxu0 0
        %4591 = vmatprep.subr.bf16.mxu0 0
        %4592 = vmatpush1.bf16.msra.mxu0 0
        %4593 = vmatprep.subr.bf16.mxu0 0
        %4594 = vmatpush1.bf16.msra.mxu0 0
        %4595 = vmatprep.subr.bf16.mxu0 0
        %4596 = vmatpush1.bf16.msra.mxu0 0
        %4597 = vmatprep.subr.bf16.mxu0 0
        %4598 = vmatpush1.bf16.msra.mxu0 0
        %4599 = vmatprep.subr.bf16.mxu0 0
        %4600 = vmatpush1.bf16.msra.mxu0 0
        %4601 = vmatprep.subr.bf16.mxu0 0
        %4602 = vmatpush1.bf16.msra.mxu0 0
        %4603 = vmatprep.subr.bf16.mxu0 0
        %4604 = vmatpush1.bf16.msra.mxu0 0
        %4605 = vmatprep.mubr.bf16.mxu0 0
        %4606 = vmatmul.mubr.bf16.gmra.mrb[0].mxu0 %v4400
        %v4607 = vpop.f32.mrb[0].mxu0
        %v4608 = vadd.f32 %v4520, %v4607
        %v4609 = vpop.f32.mrb[0].mxu0
        %v4610 = vpop.f32.mrb[0].mxu0
        %v4611 = vpop.f32.mrb[0].mxu0
        %4612 = vdwg.mxu0
        %v4613 = vld [vmem:[%s2152] ss:$2 sm:$0xff]
        %v4614 = vpack.c.bf16 %v4613, %v4613
        %s4615 = scalar_lea.vmem [#allocation5], 896
        %v4616 = vld [vmem:[%s4615] sm:$0xf]
        %v4617 = vld [vmem:[%s4615 + $0x4] sm:$0xf]
        %v4618 = vld [vmem:[%s4615 + $0x8] sm:$0xf]
        %v4619 = vld [vmem:[%s4615 + $0xc] sm:$0xf]
        %v4620 = vld [vmem:[%s4615 + $0x10] sm:$0xf]
        %v4621 = vld [vmem:[%s4615 + $0x14] sm:$0xf]
        %v4622 = vld [vmem:[%s4615 + $0x18] sm:$0xf]
        %v4623 = vld [vmem:[%s4615 + $0x1c] sm:$0xf]
        %v4624 = vld [vmem:[%s4615 + $0x20] sm:$0xf]
        %v4625 = vld [vmem:[%s4615 + $0x24] sm:$0xf]
        %v4626 = vld [vmem:[%s4615 + $0x28] sm:$0xf]
        %v4627 = vld [vmem:[%s4615 + $0x2c] sm:$0xf]
        %v4628 = vld [vmem:[%s4615 + $0x30] sm:$0xf]
        %v4629 = vld [vmem:[%s4615 + $0x34] sm:$0xf]
        %v4630 = vld [vmem:[%s4615 + $0x38] sm:$0xf]
        %v4631 = vld [vmem:[%s4615 + $0x3c] sm:$0xf]
        %v4648 = vunpack.c.l.b16 %v4616
        %v4649 = vunpack.c.l.b16 %v4617
        %v4650 = vunpack.c.l.b16 %v4618
        %v4651 = vunpack.c.l.b16 %v4619
        %v4652 = vunpack.c.l.b16 %v4620
        %v4653 = vunpack.c.l.b16 %v4621
        %v4654 = vunpack.c.l.b16 %v4622
        %v4655 = vunpack.c.l.b16 %v4623
        %v4656 = vunpack.c.l.b16 %v4624
        %v4657 = vunpack.c.l.b16 %v4625
        %v4658 = vunpack.c.l.b16 %v4626
        %v4659 = vunpack.c.l.b16 %v4627
        %v4660 = vunpack.c.l.b16 %v4628
        %v4661 = vunpack.c.l.b16 %v4629
        %v4662 = vunpack.c.l.b16 %v4630
        %v4663 = vunpack.c.l.b16 %v4631
        %v4664 = vpack.c.b16 %v4649, %v4648
        %v4665 = vpack.c.b16 %v4651, %v4650
        %v4666 = vpack.c.b16 %v4653, %v4652
        %v4667 = vpack.c.b16 %v4655, %v4654
        %v4668 = vpack.c.b16 %v4657, %v4656
        %v4669 = vpack.c.b16 %v4659, %v4658
        %v4670 = vpack.c.b16 %v4661, %v4660
        %v4671 = vpack.c.b16 %v4663, %v4662
        %4680 = vmatprep.subr.bf16.mxu0 0
        %4681 = vmatpush1.bf16.msra.mxu0 %v4664
        %4682 = vmatprep.subr.bf16.mxu0 0
        %4683 = vmatpush1.bf16.msra.mxu0 %v4665
        %4684 = vmatprep.subr.bf16.mxu0 0
        %4685 = vmatpush1.bf16.msra.mxu0 %v4666
        %4686 = vmatprep.subr.bf16.mxu0 0
        %4687 = vmatpush1.bf16.msra.mxu0 %v4667
        %4688 = vmatprep.subr.bf16.mxu0 0
        %4689 = vmatpush1.bf16.msra.mxu0 %v4668
        %4690 = vmatprep.subr.bf16.mxu0 0
        %4691 = vmatpush1.bf16.msra.mxu0 %v4669
        %4692 = vmatprep.subr.bf16.mxu0 0
        %4693 = vmatpush1.bf16.msra.mxu0 %v4670
        %4694 = vmatprep.subr.bf16.mxu0 0
        %4695 = vmatpush1.bf16.msra.mxu0 %v4671
        %4696 = vmatprep.subr.bf16.mxu0 0
        %4697 = vmatpush1.bf16.msra.mxu0 0
        %4698 = vmatprep.subr.bf16.mxu0 0
        %4699 = vmatpush1.bf16.msra.mxu0 0
        %4700 = vmatprep.subr.bf16.mxu0 0
        %4701 = vmatpush1.bf16.msra.mxu0 0
        %4702 = vmatprep.subr.bf16.mxu0 0
        %4703 = vmatpush1.bf16.msra.mxu0 0
        %4704 = vmatprep.subr.bf16.mxu0 0
        %4705 = vmatpush1.bf16.msra.mxu0 0
        %4706 = vmatprep.subr.bf16.mxu0 0
        %4707 = vmatpush1.bf16.msra.mxu0 0
        %4708 = vmatprep.subr.bf16.mxu0 0
        %4709 = vmatpush1.bf16.msra.mxu0 0
        %4710 = vmatprep.subr.bf16.mxu0 0
        %4711 = vmatpush1.bf16.msra.mxu0 0
        %4712 = vmatprep.mubr.bf16.mxu0 0
        %4713 = vmatmul.mubr.bf16.gmra.mrb[0].mxu0 %v4614
        %v4714 = vpop.f32.mrb[0].mxu0
        %v4715 = vadd.f32 0.0, %v4714
        %v4716 = vpop.f32.mrb[0].mxu0
        %v4717 = vpop.f32.mrb[0].mxu0
        %v4718 = vpop.f32.mrb[0].mxu0
        %4719 = vdwg.mxu0
        %v4720 = vadd.f32 %v4608, %v4715
        %v4721 = vld [vmem:[%s2265] ss:$2 sm:$0xff]
        %v4722 = vpack.c.bf16 %v4721, %v4721
        %s4723 = scalar_lea.vmem [#allocation5], 960
        %v4724 = vld [vmem:[%s4723] sm:$0xf]
        %v4725 = vld [vmem:[%s4723 + $0x4] sm:$0xf]
        %v4726 = vld [vmem:[%s4723 + $0x8] sm:$0xf]
        %v4727 = vld [vmem:[%s4723 + $0xc] sm:$0xf]
        %v4728 = vld [vmem:[%s4723 + $0x10] sm:$0xf]
        %v4729 = vld [vmem:[%s4723 + $0x14] sm:$0xf]
        %v4730 = vld [vmem:[%s4723 + $0x18] sm:$0xf]
        %v4731 = vld [vmem:[%s4723 + $0x1c] sm:$0xf]
        %v4732 = vld [vmem:[%s4723 + $0x20] sm:$0xf]
        %v4733 = vld [vmem:[%s4723 + $0x24] sm:$0xf]
        %v4734 = vld [vmem:[%s4723 + $0x28] sm:$0xf]
        %v4735 = vld [vmem:[%s4723 + $0x2c] sm:$0xf]
        %v4736 = vld [vmem:[%s4723 + $0x30] sm:$0xf]
        %v4737 = vld [vmem:[%s4723 + $0x34] sm:$0xf]
        %v4738 = vld [vmem:[%s4723 + $0x38] sm:$0xf]
        %v4739 = vld [vmem:[%s4723 + $0x3c] sm:$0xf]
        %v4756 = vunpack.c.l.b16 %v4724
        %v4757 = vunpack.c.l.b16 %v4725
        %v4758 = vunpack.c.l.b16 %v4726
        %v4759 = vunpack.c.l.b16 %v4727
        %v4760 = vunpack.c.l.b16 %v4728
        %v4761 = vunpack.c.l.b16 %v4729
        %v4762 = vunpack.c.l.b16 %v4730
        %v4763 = vunpack.c.l.b16 %v4731
        %v4764 = vunpack.c.l.b16 %v4732
        %v4765 = vunpack.c.l.b16 %v4733
        %v4766 = vunpack.c.l.b16 %v4734
        %v4767 = vunpack.c.l.b16 %v4735
        %v4768 = vunpack.c.l.b16 %v4736
        %v4769 = vunpack.c.l.b16 %v4737
        %v4770 = vunpack.c.l.b16 %v4738
        %v4771 = vunpack.c.l.b16 %v4739
        %v4772 = vpack.c.b16 %v4757, %v4756
        %v4773 = vpack.c.b16 %v4759, %v4758
        %v4774 = vpack.c.b16 %v4761, %v4760
        %v4775 = vpack.c.b16 %v4763, %v4762
        %v4776 = vpack.c.b16 %v4765, %v4764
        %v4777 = vpack.c.b16 %v4767, %v4766
        %v4778 = vpack.c.b16 %v4769, %v4768
        %v4779 = vpack.c.b16 %v4771, %v4770
        %4788 = vmatprep.subr.bf16.mxu0 0
        %4789 = vmatpush1.bf16.msra.mxu0 %v4772
        %4790 = vmatprep.subr.bf16.mxu0 0
        %4791 = vmatpush1.bf16.msra.mxu0 %v4773
        %4792 = vmatprep.subr.bf16.mxu0 0
        %4793 = vmatpush1.bf16.msra.mxu0 %v4774
        %4794 = vmatprep.subr.bf16.mxu0 0
        %4795 = vmatpush1.bf16.msra.mxu0 %v4775
        %4796 = vmatprep.subr.bf16.mxu0 0
        %4797 = vmatpush1.bf16.msra.mxu0 %v4776
        %4798 = vmatprep.subr.bf16.mxu0 0
        %4799 = vmatpush1.bf16.msra.mxu0 %v4777
        %4800 = vmatprep.subr.bf16.mxu0 0
        %4801 = vmatpush1.bf16.msra.mxu0 %v4778
        %4802 = vmatprep.subr.bf16.mxu0 0
        %4803 = vmatpush1.bf16.msra.mxu0 %v4779
        %4804 = vmatprep.subr.bf16.mxu0 0
        %4805 = vmatpush1.bf16.msra.mxu0 0
        %4806 = vmatprep.subr.bf16.mxu0 0
        %4807 = vmatpush1.bf16.msra.mxu0 0
        %4808 = vmatprep.subr.bf16.mxu0 0
        %4809 = vmatpush1.bf16.msra.mxu0 0
        %4810 = vmatprep.subr.bf16.mxu0 0
        %4811 = vmatpush1.bf16.msra.mxu0 0
        %4812 = vmatprep.subr.bf16.mxu0 0
        %4813 = vmatpush1.bf16.msra.mxu0 0
        %4814 = vmatprep.subr.bf16.mxu0 0
        %4815 = vmatpush1.bf16.msra.mxu0 0
        %4816 = vmatprep.subr.bf16.mxu0 0
        %4817 = vmatpush1.bf16.msra.mxu0 0
        %4818 = vmatprep.subr.bf16.mxu0 0
        %4819 = vmatpush1.bf16.msra.mxu0 0
        %4820 = vmatprep.mubr.bf16.mxu0 0
        %4821 = vmatmul.mubr.bf16.gmra.mrb[0].mxu0 %v4722
        %v4822 = vpop.f32.mrb[0].mxu0
        %v4823 = vadd.f32 0.0, %v4822
        %v4824 = vpop.f32.mrb[0].mxu0
        %v4825 = vpop.f32.mrb[0].mxu0
        %v4826 = vpop.f32.mrb[0].mxu0
        %4827 = vdwg.mxu0
        %v4828 = vadd.f32 %v4720, %v4823
        %s4829 = scalar_lea.vmem %s5, 3
        %v4830 = vld [vmem:[%s4829] sm:$0x1]
        %v4832 = vlaneseq
        %v4833 = vshrl.u32 %v4832, 7
        %v4834 = vsub.s32 0, %v4833
        %v4835 = vrot.slane %v4830, %v4834
        %v4837 = vmul.f32 %v4828, %v4835
        %s4838 = scalar_lea.vmem %s6, 3
        %v4839 = vld [vmem:[%s4838] sm:$0x1]
        %v4841 = vlaneseq
        %v4842 = vshrl.u32 %v4841, 7
        %v4843 = vsub.s32 0, %v4842
        %v4844 = vrot.slane %v4839, %v4843
        %v4846 = vadd.f32 %v4837, %v4844
        %v4847 = vadd.f32 %v4394, %v4846
        %v4848 = vmul.f32 %v4847, 0.2
        %v4849 = vmax.f32 %v4847, %v4848
        %4850 = vst [vmem:[#allocation2] sm:$0xff] 0.0
        %4851 = vst [vmem:[#allocation2 + $0x10] sm:$0xff] 0.0
        %4852 = vst [vmem:[#allocation2 + $0x8] sm:$0xff] %v4849
        %v4853 = vld [vmem:[#allocation2 + $0x7] sm:$0xff]
        %v4854 = vpack.c.bf16 %v4853, %v4853
        %s4855 = scalar_lea.vmem [#allocation3], 1344
        %v4856 = vld [vmem:[%s4855] sm:$0xf]
        %v4857 = vld [vmem:[%s4855 + $0x4] sm:$0xf]
        %v4858 = vld [vmem:[%s4855 + $0x8] sm:$0xf]
        %v4859 = vld [vmem:[%s4855 + $0xc] sm:$0xf]
        %v4860 = vld [vmem:[%s4855 + $0x10] sm:$0xf]
        %v4861 = vld [vmem:[%s4855 + $0x14] sm:$0xf]
        %v4862 = vld [vmem:[%s4855 + $0x18] sm:$0xf]
        %v4863 = vld [vmem:[%s4855 + $0x1c] sm:$0xf]
        %v4864 = vld [vmem:[%s4855 + $0x20] sm:$0xf]
        %v4865 = vld [vmem:[%s4855 + $0x24] sm:$0xf]
        %v4866 = vld [vmem:[%s4855 + $0x28] sm:$0xf]
        %v4867 = vld [vmem:[%s4855 + $0x2c] sm:$0xf]
        %v4868 = vld [vmem:[%s4855 + $0x30] sm:$0xf]
        %v4869 = vld [vmem:[%s4855 + $0x34] sm:$0xf]
        %v4870 = vld [vmem:[%s4855 + $0x38] sm:$0xf]
        %v4871 = vld [vmem:[%s4855 + $0x3c] sm:$0xf]
        %v4872 = vld [vmem:[#allocation2 + $0x8] sm:$0xff]
        %v4873 = vpack.c.bf16 %v4872, %v4872
        %s4874 = scalar_lea.vmem [#allocation3], 1408
        %v4875 = vld [vmem:[%s4874] sm:$0xf]
        %v4876 = vld [vmem:[%s4874 + $0x4] sm:$0xf]
        %v4877 = vld [vmem:[%s4874 + $0x8] sm:$0xf]
        %v4878 = vld [vmem:[%s4874 + $0xc] sm:$0xf]
        %v4879 = vld [vmem:[%s4874 + $0x10] sm:$0xf]
        %v4880 = vld [vmem:[%s4874 + $0x14] sm:$0xf]
        %v4881 = vld [vmem:[%s4874 + $0x18] sm:$0xf]
        %v4882 = vld [vmem:[%s4874 + $0x1c] sm:$0xf]
        %v4883 = vld [vmem:[%s4874 + $0x20] sm:$0xf]
        %v4884 = vld [vmem:[%s4874 + $0x24] sm:$0xf]
        %v4885 = vld [vmem:[%s4874 + $0x28] sm:$0xf]
        %v4886 = vld [vmem:[%s4874 + $0x2c] sm:$0xf]
        %v4887 = vld [vmem:[%s4874 + $0x30] sm:$0xf]
        %v4888 = vld [vmem:[%s4874 + $0x34] sm:$0xf]
        %v4889 = vld [vmem:[%s4874 + $0x38] sm:$0xf]
        %v4890 = vld [vmem:[%s4874 + $0x3c] sm:$0xf]
        %v4907 = vunpack.c.l.b16 %v4875
        %v4908 = vunpack.c.l.b16 %v4876
        %v4909 = vunpack.c.l.b16 %v4877
        %v4910 = vunpack.c.l.b16 %v4878
        %v4911 = vunpack.c.l.b16 %v4879
        %v4912 = vunpack.c.l.b16 %v4880
        %v4913 = vunpack.c.l.b16 %v4881
        %v4914 = vunpack.c.l.b16 %v4882
        %v4915 = vunpack.c.l.b16 %v4883
        %v4916 = vunpack.c.l.b16 %v4884
        %v4917 = vunpack.c.l.b16 %v4885
        %v4918 = vunpack.c.l.b16 %v4886
        %v4919 = vunpack.c.l.b16 %v4887
        %v4920 = vunpack.c.l.b16 %v4888
        %v4921 = vunpack.c.l.b16 %v4889
        %v4922 = vunpack.c.l.b16 %v4890
        %v4923 = vpack.c.b16 %v4908, %v4907
        %v4924 = vpack.c.b16 %v4910, %v4909
        %v4925 = vpack.c.b16 %v4912, %v4911
        %v4926 = vpack.c.b16 %v4914, %v4913
        %v4927 = vpack.c.b16 %v4916, %v4915
        %v4928 = vpack.c.b16 %v4918, %v4917
        %v4929 = vpack.c.b16 %v4920, %v4919
        %v4930 = vpack.c.b16 %v4922, %v4921
        %4939 = vmatprep.subr.bf16.mxu0 0
        %4940 = vmatpush1.bf16.msra.mxu0 %v4923
        %4941 = vmatprep.subr.bf16.mxu0 0
        %4942 = vmatpush1.bf16.msra.mxu0 %v4924
        %4943 = vmatprep.subr.bf16.mxu0 0
        %4944 = vmatpush1.bf16.msra.mxu0 %v4925
        %4945 = vmatprep.subr.bf16.mxu0 0
        %4946 = vmatpush1.bf16.msra.mxu0 %v4926
        %4947 = vmatprep.subr.bf16.mxu0 0
        %4948 = vmatpush1.bf16.msra.mxu0 %v4927
        %4949 = vmatprep.subr.bf16.mxu0 0
        %4950 = vmatpush1.bf16.msra.mxu0 %v4928
        %4951 = vmatprep.subr.bf16.mxu0 0
        %4952 = vmatpush1.bf16.msra.mxu0 %v4929
        %4953 = vmatprep.subr.bf16.mxu0 0
        %4954 = vmatpush1.bf16.msra.mxu0 %v4930
        %4955 = vmatprep.subr.bf16.mxu0 0
        %4956 = vmatpush1.bf16.msra.mxu0 0
        %4957 = vmatprep.subr.bf16.mxu0 0
        %4958 = vmatpush1.bf16.msra.mxu0 0
        %4959 = vmatprep.subr.bf16.mxu0 0
        %4960 = vmatpush1.bf16.msra.mxu0 0
        %4961 = vmatprep.subr.bf16.mxu0 0
        %4962 = vmatpush1.bf16.msra.mxu0 0
        %4963 = vmatprep.subr.bf16.mxu0 0
        %4964 = vmatpush1.bf16.msra.mxu0 0
        %4965 = vmatprep.subr.bf16.mxu0 0
        %4966 = vmatpush1.bf16.msra.mxu0 0
        %4967 = vmatprep.subr.bf16.mxu0 0
        %4968 = vmatpush1.bf16.msra.mxu0 0
        %4969 = vmatprep.subr.bf16.mxu0 0
        %4970 = vmatpush1.bf16.msra.mxu0 0
        %4971 = vmatprep.mubr.bf16.mxu0 0
        %4972 = vmatmul.mubr.bf16.gmra.mrb[0].mxu0 %v4873
        %v4973 = vpop.f32.mrb[0].mxu0
        %v4974 = vadd.f32 0.0, %v4973
        %v4975 = vpop.f32.mrb[0].mxu0
        %v4976 = vpop.f32.mrb[0].mxu0
        %v4977 = vpop.f32.mrb[0].mxu0
        %4978 = vdwg.mxu0
        %v4995 = vunpack.c.l.b16 %v4856
        %v4996 = vunpack.c.l.b16 %v4857
        %v4997 = vunpack.c.l.b16 %v4858
        %v4998 = vunpack.c.l.b16 %v4859
        %v4999 = vunpack.c.l.b16 %v4860
        %v5000 = vunpack.c.l.b16 %v4861
        %v5001 = vunpack.c.l.b16 %v4862
        %v5002 = vunpack.c.l.b16 %v4863
        %v5003 = vunpack.c.l.b16 %v4864
        %v5004 = vunpack.c.l.b16 %v4865
        %v5005 = vunpack.c.l.b16 %v4866
        %v5006 = vunpack.c.l.b16 %v4867
        %v5007 = vunpack.c.l.b16 %v4868
        %v5008 = vunpack.c.l.b16 %v4869
        %v5009 = vunpack.c.l.b16 %v4870
        %v5010 = vunpack.c.l.b16 %v4871
        %v5011 = vpack.c.b16 %v4996, %v4995
        %v5012 = vpack.c.b16 %v4998, %v4997
        %v5013 = vpack.c.b16 %v5000, %v4999
        %v5014 = vpack.c.b16 %v5002, %v5001
        %v5015 = vpack.c.b16 %v5004, %v5003
        %v5016 = vpack.c.b16 %v5006, %v5005
        %v5017 = vpack.c.b16 %v5008, %v5007
        %v5018 = vpack.c.b16 %v5010, %v5009
        %5027 = vmatprep.subr.bf16.mxu0 0
        %5028 = vmatpush1.bf16.msra.mxu0 %v5011
        %5029 = vmatprep.subr.bf16.mxu0 0
        %5030 = vmatpush1.bf16.msra.mxu0 %v5012
        %5031 = vmatprep.subr.bf16.mxu0 0
        %5032 = vmatpush1.bf16.msra.mxu0 %v5013
        %5033 = vmatprep.subr.bf16.mxu0 0
        %5034 = vmatpush1.bf16.msra.mxu0 %v5014
        %5035 = vmatprep.subr.bf16.mxu0 0
        %5036 = vmatpush1.bf16.msra.mxu0 %v5015
        %5037 = vmatprep.subr.bf16.mxu0 0
        %5038 = vmatpush1.bf16.msra.mxu0 %v5016
        %5039 = vmatprep.subr.bf16.mxu0 0
        %5040 = vmatpush1.bf16.msra.mxu0 %v5017
        %5041 = vmatprep.subr.bf16.mxu0 0
        %5042 = vmatpush1.bf16.msra.mxu0 %v5018
        %5043 = vmatprep.subr.bf16.mxu0 0
        %5044 = vmatpush1.bf16.msra.mxu0 0
        %5045 = vmatprep.subr.bf16.mxu0 0
        %5046 = vmatpush1.bf16.msra.mxu0 0
        %5047 = vmatprep.subr.bf16.mxu0 0
        %5048 = vmatpush1.bf16.msra.mxu0 0
        %5049 = vmatprep.subr.bf16.mxu0 0
        %5050 = vmatpush1.bf16.msra.mxu0 0
        %5051 = vmatprep.subr.bf16.mxu0 0
        %5052 = vmatpush1.bf16.msra.mxu0 0
        %5053 = vmatprep.subr.bf16.mxu0 0
        %5054 = vmatpush1.bf16.msra.mxu0 0
        %5055 = vmatprep.subr.bf16.mxu0 0
        %5056 = vmatpush1.bf16.msra.mxu0 0
        %5057 = vmatprep.subr.bf16.mxu0 0
        %5058 = vmatpush1.bf16.msra.mxu0 0
        %5059 = vmatprep.mubr.bf16.mxu0 0
        %5060 = vmatmul.mubr.bf16.gmra.mrb[0].mxu0 %v4854
        %v5061 = vpop.f32.mrb[0].mxu0
        %v5062 = vadd.f32 %v4974, %v5061
        %v5063 = vpop.f32.mrb[0].mxu0
        %v5064 = vpop.f32.mrb[0].mxu0
        %v5065 = vpop.f32.mrb[0].mxu0
        %5066 = vdwg.mxu0
        %v5067 = vld [vmem:[#allocation2 + $0x9] sm:$0xff]
        %v5068 = vpack.c.bf16 %v5067, %v5067
        %s5069 = scalar_lea.vmem [#allocation3], 1472
        %v5070 = vld [vmem:[%s5069] sm:$0xf]
        %v5071 = vld [vmem:[%s5069 + $0x4] sm:$0xf]
        %v5072 = vld [vmem:[%s5069 + $0x8] sm:$0xf]
        %v5073 = vld [vmem:[%s5069 + $0xc] sm:$0xf]
        %v5074 = vld [vmem:[%s5069 + $0x10] sm:$0xf]
        %v5075 = vld [vmem:[%s5069 + $0x14] sm:$0xf]
        %v5076 = vld [vmem:[%s5069 + $0x18] sm:$0xf]
        %v5077 = vld [vmem:[%s5069 + $0x1c] sm:$0xf]
        %v5078 = vld [vmem:[%s5069 + $0x20] sm:$0xf]
        %v5079 = vld [vmem:[%s5069 + $0x24] sm:$0xf]
        %v5080 = vld [vmem:[%s5069 + $0x28] sm:$0xf]
        %v5081 = vld [vmem:[%s5069 + $0x2c] sm:$0xf]
        %v5082 = vld [vmem:[%s5069 + $0x30] sm:$0xf]
        %v5083 = vld [vmem:[%s5069 + $0x34] sm:$0xf]
        %v5084 = vld [vmem:[%s5069 + $0x38] sm:$0xf]
        %v5085 = vld [vmem:[%s5069 + $0x3c] sm:$0xf]
        %v5102 = vunpack.c.l.b16 %v5070
        %v5103 = vunpack.c.l.b16 %v5071
        %v5104 = vunpack.c.l.b16 %v5072
        %v5105 = vunpack.c.l.b16 %v5073
        %v5106 = vunpack.c.l.b16 %v5074
        %v5107 = vunpack.c.l.b16 %v5075
        %v5108 = vunpack.c.l.b16 %v5076
        %v5109 = vunpack.c.l.b16 %v5077
        %v5110 = vunpack.c.l.b16 %v5078
        %v5111 = vunpack.c.l.b16 %v5079
        %v5112 = vunpack.c.l.b16 %v5080
        %v5113 = vunpack.c.l.b16 %v5081
        %v5114 = vunpack.c.l.b16 %v5082
        %v5115 = vunpack.c.l.b16 %v5083
        %v5116 = vunpack.c.l.b16 %v5084
        %v5117 = vunpack.c.l.b16 %v5085
        %v5118 = vpack.c.b16 %v5103, %v5102
        %v5119 = vpack.c.b16 %v5105, %v5104
        %v5120 = vpack.c.b16 %v5107, %v5106
        %v5121 = vpack.c.b16 %v5109, %v5108
        %v5122 = vpack.c.b16 %v5111, %v5110
        %v5123 = vpack.c.b16 %v5113, %v5112
        %v5124 = vpack.c.b16 %v5115, %v5114
        %v5125 = vpack.c.b16 %v5117, %v5116
        %5134 = vmatprep.subr.bf16.mxu0 0
        %5135 = vmatpush1.bf16.msra.mxu0 %v5118
        %5136 = vmatprep.subr.bf16.mxu0 0
        %5137 = vmatpush1.bf16.msra.mxu0 %v5119
        %5138 = vmatprep.subr.bf16.mxu0 0
        %5139 = vmatpush1.bf16.msra.mxu0 %v5120
        %5140 = vmatprep.subr.bf16.mxu0 0
        %5141 = vmatpush1.bf16.msra.mxu0 %v5121
        %5142 = vmatprep.subr.bf16.mxu0 0
        %5143 = vmatpush1.bf16.msra.mxu0 %v5122
        %5144 = vmatprep.subr.bf16.mxu0 0
        %5145 = vmatpush1.bf16.msra.mxu0 %v5123
        %5146 = vmatprep.subr.bf16.mxu0 0
        %5147 = vmatpush1.bf16.msra.mxu0 %v5124
        %5148 = vmatprep.subr.bf16.mxu0 0
        %5149 = vmatpush1.bf16.msra.mxu0 %v5125
        %5150 = vmatprep.subr.bf16.mxu0 0
        %5151 = vmatpush1.bf16.msra.mxu0 0
        %5152 = vmatprep.subr.bf16.mxu0 0
        %5153 = vmatpush1.bf16.msra.mxu0 0
        %5154 = vmatprep.subr.bf16.mxu0 0
        %5155 = vmatpush1.bf16.msra.mxu0 0
        %5156 = vmatprep.subr.bf16.mxu0 0
        %5157 = vmatpush1.bf16.msra.mxu0 0
        %5158 = vmatprep.subr.bf16.mxu0 0
        %5159 = vmatpush1.bf16.msra.mxu0 0
        %5160 = vmatprep.subr.bf16.mxu0 0
        %5161 = vmatpush1.bf16.msra.mxu0 0
        %5162 = vmatprep.subr.bf16.mxu0 0
        %5163 = vmatpush1.bf16.msra.mxu0 0
        %5164 = vmatprep.subr.bf16.mxu0 0
        %5165 = vmatpush1.bf16.msra.mxu0 0
        %5166 = vmatprep.mubr.bf16.mxu0 0
        %5167 = vmatmul.mubr.bf16.gmra.mrb[0].mxu0 %v5068
        %v5168 = vpop.f32.mrb[0].mxu0
        %v5169 = vadd.f32 0.0, %v5168
        %v5170 = vpop.f32.mrb[0].mxu0
        %v5171 = vpop.f32.mrb[0].mxu0
        %v5172 = vpop.f32.mrb[0].mxu0
        %5173 = vdwg.mxu0
        %v5174 = vadd.f32 %v5062, %v5169
        %s5175 = scalar_lea.vmem %s2, 7
        %v5176 = vld [vmem:[%s5175] sm:$0x1]
        %v5178 = vlaneseq
        %v5179 = vshrl.u32 %v5178, 7
        %v5180 = vsub.s32 0, %v5179
        %v5181 = vrot.slane %v5176, %v5180
        %v5183 = vmul.f32 %v5174, %v5181
        %s5184 = scalar_lea.vmem %s3, 7
        %v5185 = vld [vmem:[%s5184] sm:$0x1]
        %v5187 = vlaneseq
        %v5188 = vshrl.u32 %v5187, 7
        %v5189 = vsub.s32 0, %v5188
        %v5190 = vrot.slane %v5185, %v5189
        %v5192 = vadd.f32 %v5183, %v5190
        %v5193 = vadd.f32 %v5192, %v4849
        %v5194 = vmul.f32 %v5193, 0.2
        %v5195 = vmax.f32 %v5193, %v5194
        %5196 = vst [vmem:[#allocation2] sm:$0xff] 0.0
        %5197 = vst [vmem:[#allocation2 + $0x10] sm:$0xff] 0.0
        %5198 = vst [vmem:[#allocation2 + $0x8] sm:$0xff] %v5195
        %v5199 = vld [vmem:[#allocation2 + $0x7] sm:$0xff]
        %v5200 = vpack.c.bf16 %v5199, %v5199
        %s5201 = scalar_lea.vmem [#allocation3], 1536
        %v5202 = vld [vmem:[%s5201] sm:$0xf]
        %v5203 = vld [vmem:[%s5201 + $0x4] sm:$0xf]
        %v5204 = vld [vmem:[%s5201 + $0x8] sm:$0xf]
        %v5205 = vld [vmem:[%s5201 + $0xc] sm:$0xf]
        %v5206 = vld [vmem:[%s5201 + $0x10] sm:$0xf]
        %v5207 = vld [vmem:[%s5201 + $0x14] sm:$0xf]
        %v5208 = vld [vmem:[%s5201 + $0x18] sm:$0xf]
        %v5209 = vld [vmem:[%s5201 + $0x1c] sm:$0xf]
        %v5210 = vld [vmem:[%s5201 + $0x20] sm:$0xf]
        %v5211 = vld [vmem:[%s5201 + $0x24] sm:$0xf]
        %v5212 = vld [vmem:[%s5201 + $0x28] sm:$0xf]
        %v5213 = vld [vmem:[%s5201 + $0x2c] sm:$0xf]
        %v5214 = vld [vmem:[%s5201 + $0x30] sm:$0xf]
        %v5215 = vld [vmem:[%s5201 + $0x34] sm:$0xf]
        %v5216 = vld [vmem:[%s5201 + $0x38] sm:$0xf]
        %v5217 = vld [vmem:[%s5201 + $0x3c] sm:$0xf]
        %v5218 = vld [vmem:[#allocation2 + $0x8] sm:$0xff]
        %v5219 = vpack.c.bf16 %v5218, %v5218
        %s5220 = scalar_lea.vmem [#allocation3], 1600
        %v5221 = vld [vmem:[%s5220] sm:$0xf]
        %v5222 = vld [vmem:[%s5220 + $0x4] sm:$0xf]
        %v5223 = vld [vmem:[%s5220 + $0x8] sm:$0xf]
        %v5224 = vld [vmem:[%s5220 + $0xc] sm:$0xf]
        %v5225 = vld [vmem:[%s5220 + $0x10] sm:$0xf]
        %v5226 = vld [vmem:[%s5220 + $0x14] sm:$0xf]
        %v5227 = vld [vmem:[%s5220 + $0x18] sm:$0xf]
        %v5228 = vld [vmem:[%s5220 + $0x1c] sm:$0xf]
        %v5229 = vld [vmem:[%s5220 + $0x20] sm:$0xf]
        %v5230 = vld [vmem:[%s5220 + $0x24] sm:$0xf]
        %v5231 = vld [vmem:[%s5220 + $0x28] sm:$0xf]
        %v5232 = vld [vmem:[%s5220 + $0x2c] sm:$0xf]
        %v5233 = vld [vmem:[%s5220 + $0x30] sm:$0xf]
        %v5234 = vld [vmem:[%s5220 + $0x34] sm:$0xf]
        %v5235 = vld [vmem:[%s5220 + $0x38] sm:$0xf]
        %v5236 = vld [vmem:[%s5220 + $0x3c] sm:$0xf]
        %v5253 = vunpack.c.l.b16 %v5221
        %v5254 = vunpack.c.l.b16 %v5222
        %v5255 = vunpack.c.l.b16 %v5223
        %v5256 = vunpack.c.l.b16 %v5224
        %v5257 = vunpack.c.l.b16 %v5225
        %v5258 = vunpack.c.l.b16 %v5226
        %v5259 = vunpack.c.l.b16 %v5227
        %v5260 = vunpack.c.l.b16 %v5228
        %v5261 = vunpack.c.l.b16 %v5229
        %v5262 = vunpack.c.l.b16 %v5230
        %v5263 = vunpack.c.l.b16 %v5231
        %v5264 = vunpack.c.l.b16 %v5232
        %v5265 = vunpack.c.l.b16 %v5233
        %v5266 = vunpack.c.l.b16 %v5234
        %v5267 = vunpack.c.l.b16 %v5235
        %v5268 = vunpack.c.l.b16 %v5236
        %v5269 = vpack.c.b16 %v5254, %v5253
        %v5270 = vpack.c.b16 %v5256, %v5255
        %v5271 = vpack.c.b16 %v5258, %v5257
        %v5272 = vpack.c.b16 %v5260, %v5259
        %v5273 = vpack.c.b16 %v5262, %v5261
        %v5274 = vpack.c.b16 %v5264, %v5263
        %v5275 = vpack.c.b16 %v5266, %v5265
        %v5276 = vpack.c.b16 %v5268, %v5267
        %5285 = vmatprep.subr.bf16.mxu0 0
        %5286 = vmatpush1.bf16.msra.mxu0 %v5269
        %5287 = vmatprep.subr.bf16.mxu0 0
        %5288 = vmatpush1.bf16.msra.mxu0 %v5270
        %5289 = vmatprep.subr.bf16.mxu0 0
        %5290 = vmatpush1.bf16.msra.mxu0 %v5271
        %5291 = vmatprep.subr.bf16.mxu0 0
        %5292 = vmatpush1.bf16.msra.mxu0 %v5272
        %5293 = vmatprep.subr.bf16.mxu0 0
        %5294 = vmatpush1.bf16.msra.mxu0 %v5273
        %5295 = vmatprep.subr.bf16.mxu0 0
        %5296 = vmatpush1.bf16.msra.mxu0 %v5274
        %5297 = vmatprep.subr.bf16.mxu0 0
        %5298 = vmatpush1.bf16.msra.mxu0 %v5275
        %5299 = vmatprep.subr.bf16.mxu0 0
        %5300 = vmatpush1.bf16.msra.mxu0 %v5276
        %5301 = vmatprep.subr.bf16.mxu0 0
        %5302 = vmatpush1.bf16.msra.mxu0 0
        %5303 = vmatprep.subr.bf16.mxu0 0
        %5304 = vmatpush1.bf16.msra.mxu0 0
        %5305 = vmatprep.subr.bf16.mxu0 0
        %5306 = vmatpush1.bf16.msra.mxu0 0
        %5307 = vmatprep.subr.bf16.mxu0 0
        %5308 = vmatpush1.bf16.msra.mxu0 0
        %5309 = vmatprep.subr.bf16.mxu0 0
        %5310 = vmatpush1.bf16.msra.mxu0 0
        %5311 = vmatprep.subr.bf16.mxu0 0
        %5312 = vmatpush1.bf16.msra.mxu0 0
        %5313 = vmatprep.subr.bf16.mxu0 0
        %5314 = vmatpush1.bf16.msra.mxu0 0
        %5315 = vmatprep.subr.bf16.mxu0 0
        %5316 = vmatpush1.bf16.msra.mxu0 0
        %5317 = vmatprep.mubr.bf16.mxu0 0
        %5318 = vmatmul.mubr.bf16.gmra.mrb[0].mxu0 %v5219
        %v5319 = vpop.f32.mrb[0].mxu0
        %v5320 = vadd.f32 0.0, %v5319
        %v5321 = vpop.f32.mrb[0].mxu0
        %v5322 = vpop.f32.mrb[0].mxu0
        %v5323 = vpop.f32.mrb[0].mxu0
        %5324 = vdwg.mxu0
        %v5341 = vunpack.c.l.b16 %v5202
        %v5342 = vunpack.c.l.b16 %v5203
        %v5343 = vunpack.c.l.b16 %v5204
        %v5344 = vunpack.c.l.b16 %v5205
        %v5345 = vunpack.c.l.b16 %v5206
        %v5346 = vunpack.c.l.b16 %v5207
        %v5347 = vunpack.c.l.b16 %v5208
        %v5348 = vunpack.c.l.b16 %v5209
        %v5349 = vunpack.c.l.b16 %v5210
        %v5350 = vunpack.c.l.b16 %v5211
        %v5351 = vunpack.c.l.b16 %v5212
        %v5352 = vunpack.c.l.b16 %v5213
        %v5353 = vunpack.c.l.b16 %v5214
        %v5354 = vunpack.c.l.b16 %v5215
        %v5355 = vunpack.c.l.b16 %v5216
        %v5356 = vunpack.c.l.b16 %v5217
        %v5357 = vpack.c.b16 %v5342, %v5341
        %v5358 = vpack.c.b16 %v5344, %v5343
        %v5359 = vpack.c.b16 %v5346, %v5345
        %v5360 = vpack.c.b16 %v5348, %v5347
        %v5361 = vpack.c.b16 %v5350, %v5349
        %v5362 = vpack.c.b16 %v5352, %v5351
        %v5363 = vpack.c.b16 %v5354, %v5353
        %v5364 = vpack.c.b16 %v5356, %v5355
        %5373 = vmatprep.subr.bf16.mxu0 0
        %5374 = vmatpush1.bf16.msra.mxu0 %v5357
        %5375 = vmatprep.subr.bf16.mxu0 0
        %5376 = vmatpush1.bf16.msra.mxu0 %v5358
        %5377 = vmatprep.subr.bf16.mxu0 0
        %5378 = vmatpush1.bf16.msra.mxu0 %v5359
        %5379 = vmatprep.subr.bf16.mxu0 0
        %5380 = vmatpush1.bf16.msra.mxu0 %v5360
        %5381 = vmatprep.subr.bf16.mxu0 0
        %5382 = vmatpush1.bf16.msra.mxu0 %v5361
        %5383 = vmatprep.subr.bf16.mxu0 0
        %5384 = vmatpush1.bf16.msra.mxu0 %v5362
        %5385 = vmatprep.subr.bf16.mxu0 0
        %5386 = vmatpush1.bf16.msra.mxu0 %v5363
        %5387 = vmatprep.subr.bf16.mxu0 0
        %5388 = vmatpush1.bf16.msra.mxu0 %v5364
        %5389 = vmatprep.subr.bf16.mxu0 0
        %5390 = vmatpush1.bf16.msra.mxu0 0
        %5391 = vmatprep.subr.bf16.mxu0 0
        %5392 = vmatpush1.bf16.msra.mxu0 0
        %5393 = vmatprep.subr.bf16.mxu0 0
        %5394 = vmatpush1.bf16.msra.mxu0 0
        %5395 = vmatprep.subr.bf16.mxu0 0
        %5396 = vmatpush1.bf16.msra.mxu0 0
        %5397 = vmatprep.subr.bf16.mxu0 0
        %5398 = vmatpush1.bf16.msra.mxu0 0
        %5399 = vmatprep.subr.bf16.mxu0 0
        %5400 = vmatpush1.bf16.msra.mxu0 0
        %5401 = vmatprep.subr.bf16.mxu0 0
        %5402 = vmatpush1.bf16.msra.mxu0 0
        %5403 = vmatprep.subr.bf16.mxu0 0
        %5404 = vmatpush1.bf16.msra.mxu0 0
        %5405 = vmatprep.mubr.bf16.mxu0 0
        %5406 = vmatmul.mubr.bf16.gmra.mrb[0].mxu0 %v5200
        %v5407 = vpop.f32.mrb[0].mxu0
        %v5408 = vadd.f32 %v5320, %v5407
        %v5409 = vpop.f32.mrb[0].mxu0
        %v5410 = vpop.f32.mrb[0].mxu0
        %v5411 = vpop.f32.mrb[0].mxu0
        %5412 = vdwg.mxu0
        %v5413 = vld [vmem:[#allocation2 + $0x9] sm:$0xff]
        %v5414 = vpack.c.bf16 %v5413, %v5413
        %s5415 = scalar_lea.vmem [#allocation3], 1664
        %v5416 = vld [vmem:[%s5415] sm:$0xf]
        %v5417 = vld [vmem:[%s5415 + $0x4] sm:$0xf]
        %v5418 = vld [vmem:[%s5415 + $0x8] sm:$0xf]
        %v5419 = vld [vmem:[%s5415 + $0xc] sm:$0xf]
        %v5420 = vld [vmem:[%s5415 + $0x10] sm:$0xf]
        %v5421 = vld [vmem:[%s5415 + $0x14] sm:$0xf]
        %v5422 = vld [vmem:[%s5415 + $0x18] sm:$0xf]
        %v5423 = vld [vmem:[%s5415 + $0x1c] sm:$0xf]
        %v5424 = vld [vmem:[%s5415 + $0x20] sm:$0xf]
        %v5425 = vld [vmem:[%s5415 + $0x24] sm:$0xf]
        %v5426 = vld [vmem:[%s5415 + $0x28] sm:$0xf]
        %v5427 = vld [vmem:[%s5415 + $0x2c] sm:$0xf]
        %v5428 = vld [vmem:[%s5415 + $0x30] sm:$0xf]
        %v5429 = vld [vmem:[%s5415 + $0x34] sm:$0xf]
        %v5430 = vld [vmem:[%s5415 + $0x38] sm:$0xf]
        %v5431 = vld [vmem:[%s5415 + $0x3c] sm:$0xf]
        %v5448 = vunpack.c.l.b16 %v5416
        %v5449 = vunpack.c.l.b16 %v5417
        %v5450 = vunpack.c.l.b16 %v5418
        %v5451 = vunpack.c.l.b16 %v5419
        %v5452 = vunpack.c.l.b16 %v5420
        %v5453 = vunpack.c.l.b16 %v5421
        %v5454 = vunpack.c.l.b16 %v5422
        %v5455 = vunpack.c.l.b16 %v5423
        %v5456 = vunpack.c.l.b16 %v5424
        %v5457 = vunpack.c.l.b16 %v5425
        %v5458 = vunpack.c.l.b16 %v5426
        %v5459 = vunpack.c.l.b16 %v5427
        %v5460 = vunpack.c.l.b16 %v5428
        %v5461 = vunpack.c.l.b16 %v5429
        %v5462 = vunpack.c.l.b16 %v5430
        %v5463 = vunpack.c.l.b16 %v5431
        %v5464 = vpack.c.b16 %v5449, %v5448
        %v5465 = vpack.c.b16 %v5451, %v5450
        %v5466 = vpack.c.b16 %v5453, %v5452
        %v5467 = vpack.c.b16 %v5455, %v5454
        %v5468 = vpack.c.b16 %v5457, %v5456
        %v5469 = vpack.c.b16 %v5459, %v5458
        %v5470 = vpack.c.b16 %v5461, %v5460
        %v5471 = vpack.c.b16 %v5463, %v5462
        %5480 = vmatprep.subr.bf16.mxu0 0
        %5481 = vmatpush1.bf16.msra.mxu0 %v5464
        %5482 = vmatprep.subr.bf16.mxu0 0
        %5483 = vmatpush1.bf16.msra.mxu0 %v5465
        %5484 = vmatprep.subr.bf16.mxu0 0
        %5485 = vmatpush1.bf16.msra.mxu0 %v5466
        %5486 = vmatprep.subr.bf16.mxu0 0
        %5487 = vmatpush1.bf16.msra.mxu0 %v5467
        %5488 = vmatprep.subr.bf16.mxu0 0
        %5489 = vmatpush1.bf16.msra.mxu0 %v5468
        %5490 = vmatprep.subr.bf16.mxu0 0
        %5491 = vmatpush1.bf16.msra.mxu0 %v5469
        %5492 = vmatprep.subr.bf16.mxu0 0
        %5493 = vmatpush1.bf16.msra.mxu0 %v5470
        %5494 = vmatprep.subr.bf16.mxu0 0
        %5495 = vmatpush1.bf16.msra.mxu0 %v5471
        %5496 = vmatprep.subr.bf16.mxu0 0
        %5497 = vmatpush1.bf16.msra.mxu0 0
        %5498 = vmatprep.subr.bf16.mxu0 0
        %5499 = vmatpush1.bf16.msra.mxu0 0
        %5500 = vmatprep.subr.bf16.mxu0 0
        %5501 = vmatpush1.bf16.msra.mxu0 0
        %5502 = vmatprep.subr.bf16.mxu0 0
        %5503 = vmatpush1.bf16.msra.mxu0 0
        %5504 = vmatprep.subr.bf16.mxu0 0
        %5505 = vmatpush1.bf16.msra.mxu0 0
        %5506 = vmatprep.subr.bf16.mxu0 0
        %5507 = vmatpush1.bf16.msra.mxu0 0
        %5508 = vmatprep.subr.bf16.mxu0 0
        %5509 = vmatpush1.bf16.msra.mxu0 0
        %5510 = vmatprep.subr.bf16.mxu0 0
        %5511 = vmatpush1.bf16.msra.mxu0 0
        %5512 = vmatprep.mubr.bf16.mxu0 0
        %5513 = vmatmul.mubr.bf16.gmra.mrb[0].mxu0 %v5414
        %v5514 = vpop.f32.mrb[0].mxu0
        %v5515 = vadd.f32 0.0, %v5514
        %v5516 = vpop.f32.mrb[0].mxu0
        %v5517 = vpop.f32.mrb[0].mxu0
        %v5518 = vpop.f32.mrb[0].mxu0
        %5519 = vdwg.mxu0
        %v5520 = vadd.f32 %v5408, %v5515
        %s5521 = scalar_lea.vmem %s2, 8
        %v5522 = vld [vmem:[%s5521] sm:$0x1]
        %v5524 = vlaneseq
        %v5525 = vshrl.u32 %v5524, 7
        %v5526 = vsub.s32 0, %v5525
        %v5527 = vrot.slane %v5522, %v5526
        %v5529 = vmul.f32 %v5520, %v5527
        %s5530 = scalar_lea.vmem %s3, 8
        %v5531 = vld [vmem:[%s5530] sm:$0x1]
        %v5533 = vlaneseq
        %v5534 = vshrl.u32 %v5533, 7
        %v5535 = vsub.s32 0, %v5534
        %v5536 = vrot.slane %v5531, %v5535
        %v5538 = vadd.f32 %v5529, %v5536
        %v5539 = vadd.f32 %v5538, %v5195
        %v5540 = vmul.f32 %v5539, 0.2
        %v5541 = vmax.f32 %v5539, %v5540
        %5542 = vst [vmem:[#allocation2] sm:$0xff] 0.0
        %5543 = vst [vmem:[#allocation2 + $0x10] sm:$0xff] 0.0
        %5544 = vst [vmem:[#allocation2 + $0x8] sm:$0xff] %v5541
        %v5545 = vld [vmem:[#allocation2 + $0x7] sm:$0xff]
        %v5546 = vpack.c.bf16 %v5545, %v5545
        %s5547 = scalar_lea.vmem [#allocation3], 1728
        %v5548 = vld [vmem:[%s5547] sm:$0xf]
        %v5549 = vld [vmem:[%s5547 + $0x4] sm:$0xf]
        %v5550 = vld [vmem:[%s5547 + $0x8] sm:$0xf]
        %v5551 = vld [vmem:[%s5547 + $0xc] sm:$0xf]
        %v5552 = vld [vmem:[%s5547 + $0x10] sm:$0xf]
        %v5553 = vld [vmem:[%s5547 + $0x14] sm:$0xf]
        %v5554 = vld [vmem:[%s5547 + $0x18] sm:$0xf]
        %v5555 = vld [vmem:[%s5547 + $0x1c] sm:$0xf]
        %v5556 = vld [vmem:[%s5547 + $0x20] sm:$0xf]
        %v5557 = vld [vmem:[%s5547 + $0x24] sm:$0xf]
        %v5558 = vld [vmem:[%s5547 + $0x28] sm:$0xf]
        %v5559 = vld [vmem:[%s5547 + $0x2c] sm:$0xf]
        %v5560 = vld [vmem:[%s5547 + $0x30] sm:$0xf]
        %v5561 = vld [vmem:[%s5547 + $0x34] sm:$0xf]
        %v5562 = vld [vmem:[%s5547 + $0x38] sm:$0xf]
        %v5563 = vld [vmem:[%s5547 + $0x3c] sm:$0xf]
        %v5564 = vld [vmem:[#allocation2 + $0x8] sm:$0xff]
        %v5565 = vpack.c.bf16 %v5564, %v5564
        %s5566 = scalar_lea.vmem [#allocation3], 1792
        %v5567 = vld [vmem:[%s5566] sm:$0xf]
        %v5568 = vld [vmem:[%s5566 + $0x4] sm:$0xf]
        %v5569 = vld [vmem:[%s5566 + $0x8] sm:$0xf]
        %v5570 = vld [vmem:[%s5566 + $0xc] sm:$0xf]
        %v5571 = vld [vmem:[%s5566 + $0x10] sm:$0xf]
        %v5572 = vld [vmem:[%s5566 + $0x14] sm:$0xf]
        %v5573 = vld [vmem:[%s5566 + $0x18] sm:$0xf]
        %v5574 = vld [vmem:[%s5566 + $0x1c] sm:$0xf]
        %v5575 = vld [vmem:[%s5566 + $0x20] sm:$0xf]
        %v5576 = vld [vmem:[%s5566 + $0x24] sm:$0xf]
        %v5577 = vld [vmem:[%s5566 + $0x28] sm:$0xf]
        %v5578 = vld [vmem:[%s5566 + $0x2c] sm:$0xf]
        %v5579 = vld [vmem:[%s5566 + $0x30] sm:$0xf]
        %v5580 = vld [vmem:[%s5566 + $0x34] sm:$0xf]
        %v5581 = vld [vmem:[%s5566 + $0x38] sm:$0xf]
        %v5582 = vld [vmem:[%s5566 + $0x3c] sm:$0xf]
        %v5599 = vunpack.c.l.b16 %v5567
        %v5600 = vunpack.c.l.b16 %v5568
        %v5601 = vunpack.c.l.b16 %v5569
        %v5602 = vunpack.c.l.b16 %v5570
        %v5603 = vunpack.c.l.b16 %v5571
        %v5604 = vunpack.c.l.b16 %v5572
        %v5605 = vunpack.c.l.b16 %v5573
        %v5606 = vunpack.c.l.b16 %v5574
        %v5607 = vunpack.c.l.b16 %v5575
        %v5608 = vunpack.c.l.b16 %v5576
        %v5609 = vunpack.c.l.b16 %v5577
        %v5610 = vunpack.c.l.b16 %v5578
        %v5611 = vunpack.c.l.b16 %v5579
        %v5612 = vunpack.c.l.b16 %v5580
        %v5613 = vunpack.c.l.b16 %v5581
        %v5614 = vunpack.c.l.b16 %v5582
        %v5615 = vpack.c.b16 %v5600, %v5599
        %v5616 = vpack.c.b16 %v5602, %v5601
        %v5617 = vpack.c.b16 %v5604, %v5603
        %v5618 = vpack.c.b16 %v5606, %v5605
        %v5619 = vpack.c.b16 %v5608, %v5607
        %v5620 = vpack.c.b16 %v5610, %v5609
        %v5621 = vpack.c.b16 %v5612, %v5611
        %v5622 = vpack.c.b16 %v5614, %v5613
        %5631 = vmatprep.subr.bf16.mxu0 0
        %5632 = vmatpush1.bf16.msra.mxu0 %v5615
        %5633 = vmatprep.subr.bf16.mxu0 0
        %5634 = vmatpush1.bf16.msra.mxu0 %v5616
        %5635 = vmatprep.subr.bf16.mxu0 0
        %5636 = vmatpush1.bf16.msra.mxu0 %v5617
        %5637 = vmatprep.subr.bf16.mxu0 0
        %5638 = vmatpush1.bf16.msra.mxu0 %v5618
        %5639 = vmatprep.subr.bf16.mxu0 0
        %5640 = vmatpush1.bf16.msra.mxu0 %v5619
        %5641 = vmatprep.subr.bf16.mxu0 0
        %5642 = vmatpush1.bf16.msra.mxu0 %v5620
        %5643 = vmatprep.subr.bf16.mxu0 0
        %5644 = vmatpush1.bf16.msra.mxu0 %v5621
        %5645 = vmatprep.subr.bf16.mxu0 0
        %5646 = vmatpush1.bf16.msra.mxu0 %v5622
        %5647 = vmatprep.subr.bf16.mxu0 0
        %5648 = vmatpush1.bf16.msra.mxu0 0
        %5649 = vmatprep.subr.bf16.mxu0 0
        %5650 = vmatpush1.bf16.msra.mxu0 0
        %5651 = vmatprep.subr.bf16.mxu0 0
        %5652 = vmatpush1.bf16.msra.mxu0 0
        %5653 = vmatprep.subr.bf16.mxu0 0
        %5654 = vmatpush1.bf16.msra.mxu0 0
        %5655 = vmatprep.subr.bf16.mxu0 0
        %5656 = vmatpush1.bf16.msra.mxu0 0
        %5657 = vmatprep.subr.bf16.mxu0 0
        %5658 = vmatpush1.bf16.msra.mxu0 0
        %5659 = vmatprep.subr.bf16.mxu0 0
        %5660 = vmatpush1.bf16.msra.mxu0 0
        %5661 = vmatprep.subr.bf16.mxu0 0
        %5662 = vmatpush1.bf16.msra.mxu0 0
        %5663 = vmatprep.mubr.bf16.mxu0 0
        %5664 = vmatmul.mubr.bf16.gmra.mrb[0].mxu0 %v5565
        %v5665 = vpop.f32.mrb[0].mxu0
        %v5666 = vadd.f32 0.0, %v5665
        %v5667 = vpop.f32.mrb[0].mxu0
        %v5668 = vpop.f32.mrb[0].mxu0
        %v5669 = vpop.f32.mrb[0].mxu0
        %5670 = vdwg.mxu0
        %v5687 = vunpack.c.l.b16 %v5548
        %v5688 = vunpack.c.l.b16 %v5549
        %v5689 = vunpack.c.l.b16 %v5550
        %v5690 = vunpack.c.l.b16 %v5551
        %v5691 = vunpack.c.l.b16 %v5552
        %v5692 = vunpack.c.l.b16 %v5553
        %v5693 = vunpack.c.l.b16 %v5554
        %v5694 = vunpack.c.l.b16 %v5555
        %v5695 = vunpack.c.l.b16 %v5556
        %v5696 = vunpack.c.l.b16 %v5557
        %v5697 = vunpack.c.l.b16 %v5558
        %v5698 = vunpack.c.l.b16 %v5559
        %v5699 = vunpack.c.l.b16 %v5560
        %v5700 = vunpack.c.l.b16 %v5561
        %v5701 = vunpack.c.l.b16 %v5562
        %v5702 = vunpack.c.l.b16 %v5563
        %v5703 = vpack.c.b16 %v5688, %v5687
        %v5704 = vpack.c.b16 %v5690, %v5689
        %v5705 = vpack.c.b16 %v5692, %v5691
        %v5706 = vpack.c.b16 %v5694, %v5693
        %v5707 = vpack.c.b16 %v5696, %v5695
        %v5708 = vpack.c.b16 %v5698, %v5697
        %v5709 = vpack.c.b16 %v5700, %v5699
        %v5710 = vpack.c.b16 %v5702, %v5701
        %5719 = vmatprep.subr.bf16.mxu0 0
        %5720 = vmatpush1.bf16.msra.mxu0 %v5703
        %5721 = vmatprep.subr.bf16.mxu0 0
        %5722 = vmatpush1.bf16.msra.mxu0 %v5704
        %5723 = vmatprep.subr.bf16.mxu0 0
        %5724 = vmatpush1.bf16.msra.mxu0 %v5705
        %5725 = vmatprep.subr.bf16.mxu0 0
        %5726 = vmatpush1.bf16.msra.mxu0 %v5706
        %5727 = vmatprep.subr.bf16.mxu0 0
        %5728 = vmatpush1.bf16.msra.mxu0 %v5707
        %5729 = vmatprep.subr.bf16.mxu0 0
        %5730 = vmatpush1.bf16.msra.mxu0 %v5708
        %5731 = vmatprep.subr.bf16.mxu0 0
        %5732 = vmatpush1.bf16.msra.mxu0 %v5709
        %5733 = vmatprep.subr.bf16.mxu0 0
        %5734 = vmatpush1.bf16.msra.mxu0 %v5710
        %5735 = vmatprep.subr.bf16.mxu0 0
        %5736 = vmatpush1.bf16.msra.mxu0 0
        %5737 = vmatprep.subr.bf16.mxu0 0
        %5738 = vmatpush1.bf16.msra.mxu0 0
        %5739 = vmatprep.subr.bf16.mxu0 0
        %5740 = vmatpush1.bf16.msra.mxu0 0
        %5741 = vmatprep.subr.bf16.mxu0 0
        %5742 = vmatpush1.bf16.msra.mxu0 0
        %5743 = vmatprep.subr.bf16.mxu0 0
        %5744 = vmatpush1.bf16.msra.mxu0 0
        %5745 = vmatprep.subr.bf16.mxu0 0
        %5746 = vmatpush1.bf16.msra.mxu0 0
        %5747 = vmatprep.subr.bf16.mxu0 0
        %5748 = vmatpush1.bf16.msra.mxu0 0
        %5749 = vmatprep.subr.bf16.mxu0 0
        %5750 = vmatpush1.bf16.msra.mxu0 0
        %5751 = vmatprep.mubr.bf16.mxu0 0
        %5752 = vmatmul.mubr.bf16.gmra.mrb[0].mxu0 %v5546
        %v5753 = vpop.f32.mrb[0].mxu0
        %v5754 = vadd.f32 %v5666, %v5753
        %v5755 = vpop.f32.mrb[0].mxu0
        %v5756 = vpop.f32.mrb[0].mxu0
        %v5757 = vpop.f32.mrb[0].mxu0
        %5758 = vdwg.mxu0
        %v5759 = vld [vmem:[#allocation2 + $0x9] sm:$0xff]
        %v5760 = vpack.c.bf16 %v5759, %v5759
        %s5761 = scalar_lea.vmem [#allocation3], 1856
        %v5762 = vld [vmem:[%s5761] sm:$0xf]
        %v5763 = vld [vmem:[%s5761 + $0x4] sm:$0xf]
        %v5764 = vld [vmem:[%s5761 + $0x8] sm:$0xf]
        %v5765 = vld [vmem:[%s5761 + $0xc] sm:$0xf]
        %v5766 = vld [vmem:[%s5761 + $0x10] sm:$0xf]
        %v5767 = vld [vmem:[%s5761 + $0x14] sm:$0xf]
        %v5768 = vld [vmem:[%s5761 + $0x18] sm:$0xf]
        %v5769 = vld [vmem:[%s5761 + $0x1c] sm:$0xf]
        %v5770 = vld [vmem:[%s5761 + $0x20] sm:$0xf]
        %v5771 = vld [vmem:[%s5761 + $0x24] sm:$0xf]
        %v5772 = vld [vmem:[%s5761 + $0x28] sm:$0xf]
        %v5773 = vld [vmem:[%s5761 + $0x2c] sm:$0xf]
        %v5774 = vld [vmem:[%s5761 + $0x30] sm:$0xf]
        %v5775 = vld [vmem:[%s5761 + $0x34] sm:$0xf]
        %v5776 = vld [vmem:[%s5761 + $0x38] sm:$0xf]
        %v5777 = vld [vmem:[%s5761 + $0x3c] sm:$0xf]
        %v5794 = vunpack.c.l.b16 %v5762
        %v5795 = vunpack.c.l.b16 %v5763
        %v5796 = vunpack.c.l.b16 %v5764
        %v5797 = vunpack.c.l.b16 %v5765
        %v5798 = vunpack.c.l.b16 %v5766
        %v5799 = vunpack.c.l.b16 %v5767
        %v5800 = vunpack.c.l.b16 %v5768
        %v5801 = vunpack.c.l.b16 %v5769
        %v5802 = vunpack.c.l.b16 %v5770
        %v5803 = vunpack.c.l.b16 %v5771
        %v5804 = vunpack.c.l.b16 %v5772
        %v5805 = vunpack.c.l.b16 %v5773
        %v5806 = vunpack.c.l.b16 %v5774
        %v5807 = vunpack.c.l.b16 %v5775
        %v5808 = vunpack.c.l.b16 %v5776
        %v5809 = vunpack.c.l.b16 %v5777
        %v5810 = vpack.c.b16 %v5795, %v5794
        %v5811 = vpack.c.b16 %v5797, %v5796
        %v5812 = vpack.c.b16 %v5799, %v5798
        %v5813 = vpack.c.b16 %v5801, %v5800
        %v5814 = vpack.c.b16 %v5803, %v5802
        %v5815 = vpack.c.b16 %v5805, %v5804
        %v5816 = vpack.c.b16 %v5807, %v5806
        %v5817 = vpack.c.b16 %v5809, %v5808
        %5826 = vmatprep.subr.bf16.mxu0 0
        %5827 = vmatpush1.bf16.msra.mxu0 %v5810
        %5828 = vmatprep.subr.bf16.mxu0 0
        %5829 = vmatpush1.bf16.msra.mxu0 %v5811
        %5830 = vmatprep.subr.bf16.mxu0 0
        %5831 = vmatpush1.bf16.msra.mxu0 %v5812
        %5832 = vmatprep.subr.bf16.mxu0 0
        %5833 = vmatpush1.bf16.msra.mxu0 %v5813
        %5834 = vmatprep.subr.bf16.mxu0 0
        %5835 = vmatpush1.bf16.msra.mxu0 %v5814
        %5836 = vmatprep.subr.bf16.mxu0 0
        %5837 = vmatpush1.bf16.msra.mxu0 %v5815
        %5838 = vmatprep.subr.bf16.mxu0 0
        %5839 = vmatpush1.bf16.msra.mxu0 %v5816
        %5840 = vmatprep.subr.bf16.mxu0 0
        %5841 = vmatpush1.bf16.msra.mxu0 %v5817
        %5842 = vmatprep.subr.bf16.mxu0 0
        %5843 = vmatpush1.bf16.msra.mxu0 0
        %5844 = vmatprep.subr.bf16.mxu0 0
        %5845 = vmatpush1.bf16.msra.mxu0 0
        %5846 = vmatprep.subr.bf16.mxu0 0
        %5847 = vmatpush1.bf16.msra.mxu0 0
        %5848 = vmatprep.subr.bf16.mxu0 0
        %5849 = vmatpush1.bf16.msra.mxu0 0
        %5850 = vmatprep.subr.bf16.mxu0 0
        %5851 = vmatpush1.bf16.msra.mxu0 0
        %5852 = vmatprep.subr.bf16.mxu0 0
        %5853 = vmatpush1.bf16.msra.mxu0 0
        %5854 = vmatprep.subr.bf16.mxu0 0
        %5855 = vmatpush1.bf16.msra.mxu0 0
        %5856 = vmatprep.subr.bf16.mxu0 0
        %5857 = vmatpush1.bf16.msra.mxu0 0
        %5858 = vmatprep.mubr.bf16.mxu0 0
        %5859 = vmatmul.mubr.bf16.gmra.mrb[0].mxu0 %v5760
        %v5860 = vpop.f32.mrb[0].mxu0
        %v5861 = vadd.f32 0.0, %v5860
        %v5862 = vpop.f32.mrb[0].mxu0
        %v5863 = vpop.f32.mrb[0].mxu0
        %v5864 = vpop.f32.mrb[0].mxu0
        %5865 = vdwg.mxu0
        %v5866 = vadd.f32 %v5754, %v5861
        %s5867 = scalar_lea.vmem %s2, 9
        %v5868 = vld [vmem:[%s5867] sm:$0x1]
        %v5870 = vlaneseq
        %v5871 = vshrl.u32 %v5870, 7
        %v5872 = vsub.s32 0, %v5871
        %v5873 = vrot.slane %v5868, %v5872
        %v5875 = vmul.f32 %v5866, %v5873
        %s5876 = scalar_lea.vmem %s3, 9
        %v5877 = vld [vmem:[%s5876] sm:$0x1]
        %v5879 = vlaneseq
        %v5880 = vshrl.u32 %v5879, 7
        %v5881 = vsub.s32 0, %v5880
        %v5882 = vrot.slane %v5877, %v5881
        %v5884 = vadd.f32 %v5875, %v5882
        %v5885 = vadd.f32 %v5884, %v4849
        %v5886 = vmax.f32 %v5885, 0.0
        %5887 = vst [vmem:[%s306] sm:$0xff] %v5886
        %p5888 = scmp.lt.s32.totalorder %s20, 1
        %s5889 = scalar_select %p5888, %s20, 1
        %s5890 = smul.addr %s5889, 8
        %s5891 = scalar_lea.vmem %s7, %s5890
        // Predicated region
        $region57: #{audio_encoder_forward.1} parent=47 // pred_check
          %p5892 = pneg %p190
        $region58: #{audio_encoder_forward.1} parent=47 // pred_check_branch
          %5894 = sbr.rel (%p5892) target = $region60
        $region59: #{audio_encoder_forward.1} parent=47 // pred_region
          _
        $region60: #{audio_encoder_forward.1} parent=47 // pred_fallthru
          _
      $region48: #{audio_encoder_forward.1} parent=5 // pred_fallthru
        _
      %p5895 = scmp.le.s32.totalorder 2, %s15
      // Predicated region
      $region61: #{audio_encoder_forward.1} parent=5 // pred_check
        %p5896 = pneg %p5895
      $region62: #{audio_encoder_forward.1} parent=5 // pred_check_branch
        %5898 = sbr.rel (%p5896) target = $region64
      $region63: #{audio_encoder_forward.1} parent=5 // pred_region
        %s5899 = ssub.s32 %s15, 2
        // Predicated region
        $region65: #{audio_encoder_forward.1} parent=63 // pred_check
          %p5900 = pneg %p196
        $region66: #{audio_encoder_forward.1} parent=63 // pred_check_branch
          %5902 = sbr.rel (%p5900) target = $region68
        $region67: #{audio_encoder_forward.1} parent=63 // pred_region
          %p5903 = scmp.lt.s32.totalorder %s21, 1
          %s5904 = scalar_select %p5903, %s21, 1
          %s5905 = smul.addr %s5904, 8
          %s5906 = scalar_lea.vmem %s7, %s5905
        $region68: #{audio_encoder_forward.1} parent=63 // pred_fallthru
          _
      $region64: #{audio_encoder_forward.1} parent=5 // pred_fallthru
        _
    $region6: #{audio_encoder_forward.1} parent=1 // loop_footer
      %s19 = sadd.s32 1, %s15
    $region7: #{audio_encoder_forward.1} parent=1 // loop_footer_branch
      %14 = sbr.rel target = $region3
    $region8: #{audio_encoder_forward.1} parent=1 // loop_exit
      _
    %5907 = vsyncpa [#allocation4], 1
    %s5908 = scalar_lea.sflag [#allocation4], 1
    %5909 = vsyncpa %s5908, 1
    %5910 = vsyncpa [#allocation6], 1

</llo_original>
